<compile_context>
chip_gen: v7x
topology: tpu7x:2x2x1
jax: 0.10.0
libtpu: 0.0.40
codegen_flags: <defaults>
</compile_context>

<pallas_src>
import functools

import numpy as np

import jax
import jax.numpy as jnp
from jax import lax
from jax.experimental import pallas as pl
from jax.experimental.pallas import tpu as pltpu

BN_EPS = 1e-5
_ROW_SENTINEL = 1 << 20   # marks flat positions whose column is outside the image


def _strip_geometry(th, w4):
    m1 = -(-((th + 2) * w4 + 2) // 8) * 8   # h1 rows conv2 actually needs (8-aligned)
    m2 = th * w4                            # output rows per strip
    lx = -(-(m1 + 2 * w4 + 2) // 8) * 8     # input rows fetched per strip (with halo)
    return m1, m2, lx


def _vmem_estimate(th, w4, cp):
    m1, m2, lx = _strip_geometry(th, w4)
    return (2 * lx * cp * 2              # double-buffered input strips (bf16)
            + m1 * cp * 2                # h1 scratch (bf16)
            + 2 * m2 * cp * 2            # double-buffered output block (bf16)
            + 2 * 2 * 9 * cp * cp * 2    # conv weights (2x pipeline buffers)
            + (m1 + m2) * cp * 4         # f32 accumulator spill headroom
            + 2 * m1 * 4 + 4 * cp * 4)   # column code + biases


def _make_fused_basicblock_kernel(th, w, h, cp, ns, m1, m2, lx):
    """Fused conv3x3+BN1+ReLU -> conv3x3+BN2 -> +residual -> ReLU kernel."""
    w4 = w + 4
    thw4 = th * w4

    def kernel(x_hbm, ycode_ref, w1_ref, b1_ref, w2_ref, b2_ref, o_ref,
               xbuf, h1_ref, sem):
        b = pl.program_id(0)          # image index
        i = pl.program_id(1)          # row-strip index (sequential per image)
        slot = i & 1

        def strip_copy(strip_idx, slot_idx):
            start = strip_idx * thw4
            if thw4 % 8 == 0:
                start = pl.multiple_of(start, 8)
            return pltpu.make_async_copy(
                x_hbm.at[b, pl.ds(start, lx)], xbuf.at[slot_idx], sem.at[slot_idx])

        # Prime the first strip of this image.
        @pl.when(i == 0)
        def _():
            strip_copy(0, 0).start()

        # Prefetch the next strip of the same image: its DMA hides under the
        # GEMMs of this step (manual double buffering).
        if ns > 1:
            @pl.when(i + 1 < ns)
            def _():
                strip_copy(jnp.minimum(i + 1, ns - 1), 1 - slot).start()

        strip_copy(i, slot).wait()
        xcur = xbuf.at[slot]

        # ---- conv1 + folded BN1: 9 accumulating MXU GEMMs (no im2col) -------
        acc1 = jnp.dot(xcur[0:m1, :], w1_ref[0:cp, :],
                       preferred_element_type=jnp.float32)
        for t in range(1, 9):
            dy, dx = divmod(t, 3)
            off = dy * w4 + dx
            acc1 = acc1 + jnp.dot(xcur[off:off + m1, :],
                                  w1_ref[t * cp:(t + 1) * cp, :],
                                  preferred_element_type=jnp.float32)

        # ReLU, then zero h1 wherever it falls outside the image so conv2 sees
        # its zero padding.  ycode holds the strip-local row index (or a huge
        # sentinel at invalid columns); the row window comes from program_id.
        rh = i * th - 1 + ycode_ref[...]                   # (m1, 1) image row
        mask = jnp.where((rh >= 0) & (rh < h), 1.0, 0.0)
        h1 = jnp.maximum(acc1 + b1_ref[...], 0.0) * mask
        h1_ref[...] = h1.astype(jnp.bfloat16)              # stays in VMEM

        # ---- conv2 + folded BN2: 9 accumulating MXU GEMMs on resident h1 ----
        acc2 = jnp.dot(h1_ref[0:m2, :], w2_ref[0:cp, :],
                       preferred_element_type=jnp.float32)
        for t in range(1, 9):
            dy, dx = divmod(t, 3)
            off = dy * w4 + dx
            acc2 = acc2 + jnp.dot(h1_ref[off:off + m2, :],
                                  w2_ref[t * cp:(t + 1) * cp, :],
                                  preferred_element_type=jnp.float32)

        # ---- residual (reused from the resident input strip) + final ReLU ---
        res = xcur[2 * w4 + 2:2 * w4 + 2 + m2, :].astype(jnp.float32)
        out = jnp.maximum(acc2 + b2_ref[...] + res, 0.0)
        o_ref[...] = out.reshape(1, m2, cp).astype(o_ref.dtype)

    return kernel


def _fold_bn(gamma, beta, mean, var):
    scale = gamma / jnp.sqrt(var + BN_EPS)
    bias = beta - mean * scale
    return scale, bias


def _prep_weight(w_torch, scale, cp):
    """torch (Cout, Cin, 3, 3) -> lane-dense (9*cp, cp) bf16 with BN scale folded."""
    wk = jnp.transpose(w_torch, (2, 3, 1, 0)) * scale[None, None, None, :]
    cin, cout = wk.shape[2], wk.shape[3]
    wk = jnp.pad(wk, ((0, 0), (0, 0), (0, cp - cin), (0, cp - cout)))
    return wk.reshape(9 * cp, cp).astype(jnp.bfloat16)


@functools.partial(jax.jit, static_argnames=("row_tile", "vmem_budget_bytes"))
def basic_block_forward(x_nhwc, params, *, row_tile=64, vmem_budget_bytes=24 << 20):
    """BasicBlock forward (stride=1, downsample=None => inplanes == planes)."""
    n, h, w, c = x_nhwc.shape
    planes = params["conv1_w"].shape[0]
    assert planes == c, "stride=1 / downsample=None BasicBlock needs inplanes == planes"

    cp = max(128, -(-c // 128) * 128)          # lane-dense padded channel count
    w4 = w + 4

    # Strip height: largest divisor of H <= row_tile keeping the output block
    # sublane-aligned and the per-strip VMEM footprint under budget
    # (generation-safe for v7x's 64 MiB VMEM and v5e's scoped default).
    th = None
    for cand in range(min(row_tile, h), 0, -1):
        if h % cand:
            continue
        if (cand * w4) % 8:
            continue
        if _vmem_estimate(cand, w4, cp) <= vmem_budget_bytes:
            th = cand
            break
    if th is None:
        # Single full-height strip: the output block then equals the full array
        # dims, so the (8,128) divisibility requirement does not apply.
        th = h
    ns = h // th
    m1, m2, lx = _strip_geometry(th, w4)
    assert lx <= (th + 6) * w4                 # strip DMA stays inside padded input

    # ---- fold BatchNorm (eval mode) into the conv weights / biases ----------
    s1, b1 = _fold_bn(params["bn1_gamma"], params["bn1_beta"],
                      params["bn1_mean"], params["bn1_var"])
    s2, b2 = _fold_bn(params["bn2_gamma"], params["bn2_beta"],
                      params["bn2_mean"], params["bn2_var"])
    w1m = _prep_weight(params["conv1_w"], s1, cp)     # (9*cp, cp) bf16, BN1 folded
    w2m = _prep_weight(params["conv2_w"], s2, cp)     # (9*cp, cp) bf16, BN2 folded
    b1p = jnp.pad(b1, (0, cp - c)).reshape(1, cp).astype(jnp.float32)
    b2p = jnp.pad(b2, (0, cp - c)).reshape(1, cp).astype(jnp.float32)

    # ---- channel-pad, spatial zero-pad (2 top / 4 bottom / 2 left / 2 right),
    #      flatten spatial dims row-major with pitch W+4, cast bf16 ------------
    xpad = jnp.pad(x_nhwc, ((0, 0), (2, 4), (2, 2), (0, cp - c)))
    xflat = xpad.reshape(n, (h + 6) * w4, cp).astype(jnp.bfloat16)

    # Per-flat-row code: strip-local row index, or a huge sentinel where the
    # column lies outside the image.  Strip/batch independent -> fetched once.
    tt = np.arange(m1)
    col_ok = (tt % w4 >= 1) & (tt % w4 <= w)
    ycode = jnp.asarray(
        np.where(col_ok, tt // w4, _ROW_SENTINEL).astype(np.int32).reshape(m1, 1))

    kernel = _make_fused_basicblock_kernel(th, w, h, cp, ns, m1, m2, lx)
    est = _vmem_estimate(th, w4, cp)
    vmem_limit = int(min(112 << 20, max(32 << 20, 2 * est + (8 << 20))))

    out_flat = pl.pallas_call(
        kernel,
        out_shape=jax.ShapeDtypeStruct((n, h * w4, cp), jnp.bfloat16),
        grid=(n, ns),
        in_specs=[
            pl.BlockSpec(memory_space=pl.ANY),                  # flat input, manual DMA
            pl.BlockSpec((m1, 1), lambda b, i: (0, 0)),         # row/column validity code
            pl.BlockSpec((9 * cp, cp), lambda b, i: (0, 0)),    # w1 (BN1 folded)
            pl.BlockSpec((1, cp), lambda b, i: (0, 0)),         # b1
            pl.BlockSpec((9 * cp, cp), lambda b, i: (0, 0)),    # w2 (BN2 folded)
            pl.BlockSpec((1, cp), lambda b, i: (0, 0)),         # b2
        ],
        out_specs=pl.BlockSpec((1, m2, cp), lambda b, i: (b, i, 0)),
        scratch_shapes=[
            pltpu.VMEM((2, lx, cp), jnp.bfloat16),   # double-buffered input strips
            pltpu.VMEM((m1, cp), jnp.bfloat16),      # h1 (post-BN1-ReLU) scratch
            pltpu.SemaphoreType.DMA((2,)),           # per-slot DMA semaphores
        ],
        compiler_params=pltpu.CompilerParams(
            dimension_semantics=("parallel", "arbitrary"),
            vmem_limit_bytes=vmem_limit),
    )(xflat, ycode, w1m, b1p, w2m, b2p)

    # un-flatten, drop column/channel padding, return f32 (module semantics)
    return out_flat.reshape(n, h, w4, cp)[:, :, :w, :c].astype(jnp.float32)


def basic_block_reference(x_nhwc, params):
    """lax.conv reference matching the kernel's bf16 rounding points."""
    s1, b1 = _fold_bn(params["bn1_gamma"], params["bn1_beta"],
                      params["bn1_mean"], params["bn1_var"])
    s2, b2 = _fold_bn(params["bn2_gamma"], params["bn2_beta"],
                      params["bn2_mean"], params["bn2_var"])

    def conv(x, w_torch, scale):
        wk = jnp.transpose(w_torch, (2, 3, 1, 0)) * scale[None, None, None, :]
        wk = wk.astype(jnp.bfloat16).astype(jnp.float32)   # same rounding as kernel
        return lax.conv_general_dilated(
            x, wk, window_strides=(1, 1), padding=((1, 1), (1, 1)),
            dimension_numbers=("NHWC", "HWIO", "NHWC"),
            precision=lax.Precision.HIGHEST)

    xr = x_nhwc.astype(jnp.bfloat16).astype(jnp.float32)
    h1 = jnp.maximum(conv(xr, params["conv1_w"], s1) + b1, 0.0)
    h1 = h1.astype(jnp.bfloat16).astype(jnp.float32)       # kernel keeps h1 in bf16
    return jnp.maximum(conv(h1, params["conv2_w"], s2) + b2 + xr, 0.0)


if __name__ == "__main__":
    key = jax.random.PRNGKey(0)
    n, c, h, w = 2, 4, 16, 16            # PyTorch NCHW input shape
    planes = c                           # stride=1, downsample=None => inplanes == planes
    ks = jax.random.split(key, 11)

    x_nchw = jax.random.normal(ks[0], (n, c, h, w), jnp.float32)
    params = {
        "conv1_w": 0.2 * jax.random.normal(ks[1], (planes, c, 3, 3), jnp.float32),
        "conv2_w": 0.2 * jax.random.normal(ks[2], (planes, planes, 3, 3), jnp.float32),
        "bn1_gamma": 1.0 + 0.1 * jax.random.normal(ks[3], (planes,), jnp.float32),
        "bn1_beta": 0.1 * jax.random.normal(ks[4], (planes,), jnp.float32),
        "bn1_mean": 0.1 * jax.random.normal(ks[5], (planes,), jnp.float32),
        "bn1_var": jax.random.uniform(ks[6], (planes,), jnp.float32, 0.5, 1.5),
        "bn2_gamma": 1.0 + 0.1 * jax.random.normal(ks[7], (planes,), jnp.float32),
        "bn2_beta": 0.1 * jax.random.normal(ks[8], (planes,), jnp.float32),
        "bn2_mean": 0.1 * jax.random.normal(ks[9], (planes,), jnp.float32),
        "bn2_var": jax.random.uniform(ks[10], (planes,), jnp.float32, 0.5, 1.5),
    }

    x_nhwc = jnp.transpose(x_nchw, (0, 2, 3, 1))     # NCHW -> NHWC for the kernel

    out = basic_block_forward(x_nhwc, params)
    out = jax.block_until_ready(out)

    ref = basic_block_reference(x_nhwc, params)
    assert out.shape == (n, h, w, planes)
    err = float(jnp.max(jnp.abs(out - ref)))
    tol = 3e-2 + 1e-2 * float(jnp.max(jnp.abs(ref)))   # bf16 MXU / bf16 output vs f32 ref
    if err > tol:
        raise AssertionError(f"mismatch vs reference: max abs err {err} > tol {tol}")
    print("KERNEL_OK")
</pallas_src>

<mosaic_0001>
module attributes {stable_mosaic.version = 11 : i64} {
  func.func @kernel(%arg0: i32, %arg1: i32, %arg2: memref<2x440x128xbf16, #tpu.memory_space<any>>, %arg3: memref<368x1xi32, #tpu.memory_space<vmem>>, %arg4: memref<1152x128xbf16, #tpu.memory_space<vmem>>, %arg5: memref<1x128xf32, #tpu.memory_space<vmem>>, %arg6: memref<1152x128xbf16, #tpu.memory_space<vmem>>, %arg7: memref<1x128xf32, #tpu.memory_space<vmem>>, %arg8: memref<1x320x128xbf16, #tpu.memory_space<vmem>>, %arg9: memref<2x416x128xbf16, #tpu.memory_space<vmem>>, %arg10: memref<368x128xbf16, #tpu.memory_space<vmem>>, %arg11: memref<2x!tpu.dma_semaphore, #tpu.memory_space<semaphore_mem>>) attributes {dimension_semantics = [#tpu.dimension_semantics<parallel>, #tpu.dimension_semantics<arbitrary>], iteration_bounds = array<i64: 2, 1>, scalar_prefetch = 0 : i64, scratch_operands = 3 : i64, tpu.core_type = #tpu.core_type<tc>, window_params = [{}, {pipeline_mode = #tpu.pipeline_mode<synchronous>, transform_indices = @transform_1, window_bounds = array<i64: 368, 1>}, {pipeline_mode = #tpu.pipeline_mode<synchronous>, transform_indices = @transform_2, window_bounds = array<i64: 1152, 128>}, {pipeline_mode = #tpu.pipeline_mode<synchronous>, transform_indices = @transform_3, window_bounds = array<i64: 1, 128>}, {pipeline_mode = #tpu.pipeline_mode<synchronous>, transform_indices = @transform_4, window_bounds = array<i64: 1152, 128>}, {pipeline_mode = #tpu.pipeline_mode<synchronous>, transform_indices = @transform_5, window_bounds = array<i64: 1, 128>}, {transform_indices = @transform_6, window_bounds = array<i64: 1, 320, 128>}]} {
    %c1_i32 = arith.constant 1 : i32
    %0 = arith.andi %arg1, %c1_i32 : i32
    %c0_i32 = arith.constant 0 : i32
    %1 = arith.cmpi eq, %arg1, %c0_i32 : i32
    %2 = arith.extui %1 : i1 to i32
    %c0_i32_0 = arith.constant 0 : i32
    %3 = arith.cmpi ne, %2, %c0_i32_0 : i32
    scf.if %3 {
      %c0_i32_116 = arith.constant 0 : i32
      %135 = tpu.assume_multiple %c0_i32_116, 8 : i32
      %c0_i32_117 = arith.constant 0 : i32
      %c0_i32_118 = arith.constant 0 : i32
      %c0_i32_119 = arith.constant 0 : i32
      %136 = tpu.memref_slice %arg2[%arg0, %135, %c0_i32_119] : memref<2x440x128xbf16, #tpu.memory_space<any>> -> memref<1x416x128xbf16, #tpu.memory_space<any>>
      %137 = tpu.memref_squeeze %136 : memref<1x416x128xbf16, #tpu.memory_space<any>> -> memref<416x128xbf16, #tpu.memory_space<any>>
      %c0_i32_120 = arith.constant 0 : i32
      %c0_i32_121 = arith.constant 0 : i32
      %138 = tpu.memref_slice %arg9[%c0_i32_117, %c0_i32_120, %c0_i32_121] : memref<2x416x128xbf16, #tpu.memory_space<vmem>> -> memref<1x416x128xbf16, #tpu.memory_space<vmem>>
      %139 = tpu.memref_squeeze %138 : memref<1x416x128xbf16, #tpu.memory_space<vmem>> -> memref<416x128xbf16, #tpu.memory_space<vmem>>
      %140 = tpu.memref_slice %arg11[%c0_i32_118] : memref<2x!tpu.dma_semaphore, #tpu.memory_space<semaphore_mem>> -> memref<1x!tpu.dma_semaphore, #tpu.memory_space<semaphore_mem>>
      %141 = tpu.memref_squeeze %140 : memref<1x!tpu.dma_semaphore, #tpu.memory_space<semaphore_mem>> -> memref<!tpu.dma_semaphore, #tpu.memory_space<semaphore_mem>>
      tpu.enqueue_dma source(%137 : memref<416x128xbf16, #tpu.memory_space<any>>) target(%139 : memref<416x128xbf16, #tpu.memory_space<vmem>>) target_semaphore(%141 : memref<!tpu.dma_semaphore, #tpu.memory_space<semaphore_mem>>)
    } else {
    }
    %c320_i32 = arith.constant 320 : i32
    %4 = arith.muli %arg1, %c320_i32 : i32
    %5 = tpu.assume_multiple %4, 8 : i32
    %c0_i32_1 = arith.constant 0 : i32
    %6 = tpu.memref_slice %arg2[%arg0, %5, %c0_i32_1] : memref<2x440x128xbf16, #tpu.memory_space<any>> -> memref<1x416x128xbf16, #tpu.memory_space<any>>
    %7 = tpu.memref_squeeze %6 : memref<1x416x128xbf16, #tpu.memory_space<any>> -> memref<416x128xbf16, #tpu.memory_space<any>>
    %c0_i32_2 = arith.constant 0 : i32
    %c0_i32_3 = arith.constant 0 : i32
    %8 = tpu.memref_slice %arg9[%0, %c0_i32_2, %c0_i32_3] : memref<2x416x128xbf16, #tpu.memory_space<vmem>> -> memref<1x416x128xbf16, #tpu.memory_space<vmem>>
    %9 = tpu.memref_squeeze %8 : memref<1x416x128xbf16, #tpu.memory_space<vmem>> -> memref<416x128xbf16, #tpu.memory_space<vmem>>
    %10 = tpu.memref_slice %arg11[%0] : memref<2x!tpu.dma_semaphore, #tpu.memory_space<semaphore_mem>> -> memref<1x!tpu.dma_semaphore, #tpu.memory_space<semaphore_mem>>
    %11 = tpu.memref_squeeze %10 : memref<1x!tpu.dma_semaphore, #tpu.memory_space<semaphore_mem>> -> memref<!tpu.dma_semaphore, #tpu.memory_space<semaphore_mem>>
    tpu.wait_dma2 semaphore(%11 : memref<!tpu.dma_semaphore, #tpu.memory_space<semaphore_mem>>) src(%7 : memref<416x128xbf16, #tpu.memory_space<any>>) dst(%9 : memref<416x128xbf16, #tpu.memory_space<vmem>>)
    %c0_i32_4 = arith.constant 0 : i32
    %c0_i32_5 = arith.constant 0 : i32
    %12 = tpu.memref_slice %arg9[%0, %c0_i32_4, %c0_i32_5] : memref<2x416x128xbf16, #tpu.memory_space<vmem>> -> memref<1x416x128xbf16, #tpu.memory_space<vmem>>
    %13 = tpu.memref_squeeze %12 : memref<1x416x128xbf16, #tpu.memory_space<vmem>> -> memref<416x128xbf16, #tpu.memory_space<vmem>>
    %c0 = arith.constant 0 : index
    %c0_6 = arith.constant 0 : index
    %14 = vector.load %13[%c0, %c0_6] : memref<416x128xbf16, #tpu.memory_space<vmem>>, vector<368x128xbf16>
    %c0_7 = arith.constant 0 : index
    %c0_8 = arith.constant 0 : index
    %15 = vector.load %arg4[%c0_7, %c0_8] : memref<1152x128xbf16, #tpu.memory_space<vmem>>, vector<128x128xbf16>
    %cst = arith.constant dense<0.000000e+00> : vector<368x128xf32>
    %16 = tpu.matmul %14, %15, %cst {dimension_numbers = #tpu.dot_dimension_numbers<[1], [0], [0], [1], [0, 0, 1, 1], [], []>} : vector<368x128xbf16>, vector<128x128xbf16>, vector<368x128xf32> -> vector<368x128xf32>
    %c0_i32_9 = arith.constant 0 : i32
    %c0_i32_10 = arith.constant 0 : i32
    %17 = tpu.memref_slice %arg9[%0, %c0_i32_9, %c0_i32_10] : memref<2x416x128xbf16, #tpu.memory_space<vmem>> -> memref<1x416x128xbf16, #tpu.memory_space<vmem>>
    %18 = tpu.memref_squeeze %17 : memref<1x416x128xbf16, #tpu.memory_space<vmem>> -> memref<416x128xbf16, #tpu.memory_space<vmem>>
    %c1 = arith.constant 1 : index
    %c0_11 = arith.constant 0 : index
    %19 = vector.load %18[%c1, %c0_11] : memref<416x128xbf16, #tpu.memory_space<vmem>>, vector<368x128xbf16>
    %c128 = arith.constant 128 : index
    %c0_12 = arith.constant 0 : index
    %20 = vector.load %arg4[%c128, %c0_12] : memref<1152x128xbf16, #tpu.memory_space<vmem>>, vector<128x128xbf16>
    %cst_13 = arith.constant dense<0.000000e+00> : vector<368x128xf32>
    %21 = tpu.matmul %19, %20, %cst_13 {dimension_numbers = #tpu.dot_dimension_numbers<[1], [0], [0], [1], [0, 0, 1, 1], [], []>} : vector<368x128xbf16>, vector<128x128xbf16>, vector<368x128xf32> -> vector<368x128xf32>
    %22 = arith.addf %16, %21 : vector<368x128xf32>
    %c0_i32_14 = arith.constant 0 : i32
    %c0_i32_15 = arith.constant 0 : i32
    %23 = tpu.memref_slice %arg9[%0, %c0_i32_14, %c0_i32_15] : memref<2x416x128xbf16, #tpu.memory_space<vmem>> -> memref<1x416x128xbf16, #tpu.memory_space<vmem>>
    %24 = tpu.memref_squeeze %23 : memref<1x416x128xbf16, #tpu.memory_space<vmem>> -> memref<416x128xbf16, #tpu.memory_space<vmem>>
    %c2 = arith.constant 2 : index
    %c0_16 = arith.constant 0 : index
    %25 = vector.load %24[%c2, %c0_16] : memref<416x128xbf16, #tpu.memory_space<vmem>>, vector<368x128xbf16>
    %c256 = arith.constant 256 : index
    %c0_17 = arith.constant 0 : index
    %26 = vector.load %arg4[%c256, %c0_17] : memref<1152x128xbf16, #tpu.memory_space<vmem>>, vector<128x128xbf16>
    %cst_18 = arith.constant dense<0.000000e+00> : vector<368x128xf32>
    %27 = tpu.matmul %25, %26, %cst_18 {dimension_numbers = #tpu.dot_dimension_numbers<[1], [0], [0], [1], [0, 0, 1, 1], [], []>} : vector<368x128xbf16>, vector<128x128xbf16>, vector<368x128xf32> -> vector<368x128xf32>
    %28 = arith.addf %22, %27 : vector<368x128xf32>
    %c0_i32_19 = arith.constant 0 : i32
    %c0_i32_20 = arith.constant 0 : i32
    %29 = tpu.memref_slice %arg9[%0, %c0_i32_19, %c0_i32_20] : memref<2x416x128xbf16, #tpu.memory_space<vmem>> -> memref<1x416x128xbf16, #tpu.memory_space<vmem>>
    %30 = tpu.memref_squeeze %29 : memref<1x416x128xbf16, #tpu.memory_space<vmem>> -> memref<416x128xbf16, #tpu.memory_space<vmem>>
    %c20 = arith.constant 20 : index
    %c0_21 = arith.constant 0 : index
    %31 = vector.load %30[%c20, %c0_21] : memref<416x128xbf16, #tpu.memory_space<vmem>>, vector<368x128xbf16>
    %c384 = arith.constant 384 : index
    %c0_22 = arith.constant 0 : index
    %32 = vector.load %arg4[%c384, %c0_22] : memref<1152x128xbf16, #tpu.memory_space<vmem>>, vector<128x128xbf16>
    %cst_23 = arith.constant dense<0.000000e+00> : vector<368x128xf32>
    %33 = tpu.matmul %31, %32, %cst_23 {dimension_numbers = #tpu.dot_dimension_numbers<[1], [0], [0], [1], [0, 0, 1, 1], [], []>} : vector<368x128xbf16>, vector<128x128xbf16>, vector<368x128xf32> -> vector<368x128xf32>
    %34 = arith.addf %28, %33 : vector<368x128xf32>
    %c0_i32_24 = arith.constant 0 : i32
    %c0_i32_25 = arith.constant 0 : i32
    %35 = tpu.memref_slice %arg9[%0, %c0_i32_24, %c0_i32_25] : memref<2x416x128xbf16, #tpu.memory_space<vmem>> -> memref<1x416x128xbf16, #tpu.memory_space<vmem>>
    %36 = tpu.memref_squeeze %35 : memref<1x416x128xbf16, #tpu.memory_space<vmem>> -> memref<416x128xbf16, #tpu.memory_space<vmem>>
    %c21 = arith.constant 21 : index
    %c0_26 = arith.constant 0 : index
    %37 = vector.load %36[%c21, %c0_26] : memref<416x128xbf16, #tpu.memory_space<vmem>>, vector<368x128xbf16>
    %c512 = arith.constant 512 : index
    %c0_27 = arith.constant 0 : index
    %38 = vector.load %arg4[%c512, %c0_27] : memref<1152x128xbf16, #tpu.memory_space<vmem>>, vector<128x128xbf16>
    %cst_28 = arith.constant dense<0.000000e+00> : vector<368x128xf32>
    %39 = tpu.matmul %37, %38, %cst_28 {dimension_numbers = #tpu.dot_dimension_numbers<[1], [0], [0], [1], [0, 0, 1, 1], [], []>} : vector<368x128xbf16>, vector<128x128xbf16>, vector<368x128xf32> -> vector<368x128xf32>
    %40 = arith.addf %34, %39 : vector<368x128xf32>
    %c0_i32_29 = arith.constant 0 : i32
    %c0_i32_30 = arith.constant 0 : i32
    %41 = tpu.memref_slice %arg9[%0, %c0_i32_29, %c0_i32_30] : memref<2x416x128xbf16, #tpu.memory_space<vmem>> -> memref<1x416x128xbf16, #tpu.memory_space<vmem>>
    %42 = tpu.memref_squeeze %41 : memref<1x416x128xbf16, #tpu.memory_space<vmem>> -> memref<416x128xbf16, #tpu.memory_space<vmem>>
    %c22 = arith.constant 22 : index
    %c0_31 = arith.constant 0 : index
    %43 = vector.load %42[%c22, %c0_31] : memref<416x128xbf16, #tpu.memory_space<vmem>>, vector<368x128xbf16>
    %c640 = arith.constant 640 : index
    %c0_32 = arith.constant 0 : index
    %44 = vector.load %arg4[%c640, %c0_32] : memref<1152x128xbf16, #tpu.memory_space<vmem>>, vector<128x128xbf16>
    %cst_33 = arith.constant dense<0.000000e+00> : vector<368x128xf32>
    %45 = tpu.matmul %43, %44, %cst_33 {dimension_numbers = #tpu.dot_dimension_numbers<[1], [0], [0], [1], [0, 0, 1, 1], [], []>} : vector<368x128xbf16>, vector<128x128xbf16>, vector<368x128xf32> -> vector<368x128xf32>
    %46 = arith.addf %40, %45 : vector<368x128xf32>
    %c0_i32_34 = arith.constant 0 : i32
    %c0_i32_35 = arith.constant 0 : i32
    %47 = tpu.memref_slice %arg9[%0, %c0_i32_34, %c0_i32_35] : memref<2x416x128xbf16, #tpu.memory_space<vmem>> -> memref<1x416x128xbf16, #tpu.memory_space<vmem>>
    %48 = tpu.memref_squeeze %47 : memref<1x416x128xbf16, #tpu.memory_space<vmem>> -> memref<416x128xbf16, #tpu.memory_space<vmem>>
    %c40 = arith.constant 40 : index
    %c0_36 = arith.constant 0 : index
    %49 = vector.load %48[%c40, %c0_36] : memref<416x128xbf16, #tpu.memory_space<vmem>>, vector<368x128xbf16>
    %c768 = arith.constant 768 : index
    %c0_37 = arith.constant 0 : index
    %50 = vector.load %arg4[%c768, %c0_37] : memref<1152x128xbf16, #tpu.memory_space<vmem>>, vector<128x128xbf16>
    %cst_38 = arith.constant dense<0.000000e+00> : vector<368x128xf32>
    %51 = tpu.matmul %49, %50, %cst_38 {dimension_numbers = #tpu.dot_dimension_numbers<[1], [0], [0], [1], [0, 0, 1, 1], [], []>} : vector<368x128xbf16>, vector<128x128xbf16>, vector<368x128xf32> -> vector<368x128xf32>
    %52 = arith.addf %46, %51 : vector<368x128xf32>
    %c0_i32_39 = arith.constant 0 : i32
    %c0_i32_40 = arith.constant 0 : i32
    %53 = tpu.memref_slice %arg9[%0, %c0_i32_39, %c0_i32_40] : memref<2x416x128xbf16, #tpu.memory_space<vmem>> -> memref<1x416x128xbf16, #tpu.memory_space<vmem>>
    %54 = tpu.memref_squeeze %53 : memref<1x416x128xbf16, #tpu.memory_space<vmem>> -> memref<416x128xbf16, #tpu.memory_space<vmem>>
    %c41 = arith.constant 41 : index
    %c0_41 = arith.constant 0 : index
    %55 = vector.load %54[%c41, %c0_41] : memref<416x128xbf16, #tpu.memory_space<vmem>>, vector<368x128xbf16>
    %c896 = arith.constant 896 : index
    %c0_42 = arith.constant 0 : index
    %56 = vector.load %arg4[%c896, %c0_42] : memref<1152x128xbf16, #tpu.memory_space<vmem>>, vector<128x128xbf16>
    %cst_43 = arith.constant dense<0.000000e+00> : vector<368x128xf32>
    %57 = tpu.matmul %55, %56, %cst_43 {dimension_numbers = #tpu.dot_dimension_numbers<[1], [0], [0], [1], [0, 0, 1, 1], [], []>} : vector<368x128xbf16>, vector<128x128xbf16>, vector<368x128xf32> -> vector<368x128xf32>
    %58 = arith.addf %52, %57 : vector<368x128xf32>
    %c0_i32_44 = arith.constant 0 : i32
    %c0_i32_45 = arith.constant 0 : i32
    %59 = tpu.memref_slice %arg9[%0, %c0_i32_44, %c0_i32_45] : memref<2x416x128xbf16, #tpu.memory_space<vmem>> -> memref<1x416x128xbf16, #tpu.memory_space<vmem>>
    %60 = tpu.memref_squeeze %59 : memref<1x416x128xbf16, #tpu.memory_space<vmem>> -> memref<416x128xbf16, #tpu.memory_space<vmem>>
    %c42 = arith.constant 42 : index
    %c0_46 = arith.constant 0 : index
    %61 = vector.load %60[%c42, %c0_46] : memref<416x128xbf16, #tpu.memory_space<vmem>>, vector<368x128xbf16>
    %c1024 = arith.constant 1024 : index
    %c0_47 = arith.constant 0 : index
    %62 = vector.load %arg4[%c1024, %c0_47] : memref<1152x128xbf16, #tpu.memory_space<vmem>>, vector<128x128xbf16>
    %cst_48 = arith.constant dense<0.000000e+00> : vector<368x128xf32>
    %63 = tpu.matmul %61, %62, %cst_48 {dimension_numbers = #tpu.dot_dimension_numbers<[1], [0], [0], [1], [0, 0, 1, 1], [], []>} : vector<368x128xbf16>, vector<128x128xbf16>, vector<368x128xf32> -> vector<368x128xf32>
    %64 = arith.addf %58, %63 : vector<368x128xf32>
    %c16_i32 = arith.constant 16 : i32
    %65 = arith.muli %arg1, %c16_i32 : i32
    %c1_i32_49 = arith.constant 1 : i32
    %66 = arith.subi %65, %c1_i32_49 : i32
    %c0_50 = arith.constant 0 : index
    %c0_51 = arith.constant 0 : index
    %67 = vector.load %arg3[%c0_50, %c0_51] : memref<368x1xi32, #tpu.memory_space<vmem>>, vector<368x1xi32>
    %68 = vector.broadcast %66 : i32 to vector<368x1xi32>
    %69 = arith.addi %68, %67 : vector<368x1xi32>
    %c0_i32_52 = arith.constant 0 : i32
    %70 = vector.broadcast %c0_i32_52 : i32 to vector<368x1xi32>
    %71 = arith.cmpi sge, %69, %70 : vector<368x1xi32>
    %c16_i32_53 = arith.constant 16 : i32
    %72 = vector.broadcast %c16_i32_53 : i32 to vector<368x1xi32>
    %73 = arith.cmpi slt, %69, %72 : vector<368x1xi32>
    %74 = arith.andi %71, %73 : vector<368x1xi1>
    %cst_54 = arith.constant 1.000000e+00 : f32
    %cst_55 = arith.constant 0.000000e+00 : f32
    %75 = vector.broadcast %cst_54 : f32 to vector<368x1xf32>
    %76 = vector.broadcast %cst_55 : f32 to vector<368x1xf32>
    %77 = arith.select %74, %75, %76 : vector<368x1xi1>, vector<368x1xf32>
    %c0_56 = arith.constant 0 : index
    %c0_57 = arith.constant 0 : index
    %78 = vector.load %arg5[%c0_56, %c0_57] : memref<1x128xf32, #tpu.memory_space<vmem>>, vector<1x128xf32>
    %79 = vector.broadcast %78 : vector<1x128xf32> to vector<368x128xf32>
    %80 = arith.addf %64, %79 : vector<368x128xf32>
    %cst_58 = arith.constant 0.000000e+00 : f32
    %81 = vector.broadcast %cst_58 : f32 to vector<368x128xf32>
    %82 = arith.maximumf %80, %81 : vector<368x128xf32>
    %83 = vector.broadcast %77 : vector<368x1xf32> to vector<368x128xf32>
    %84 = arith.mulf %82, %83 : vector<368x128xf32>
    %85 = arith.truncf %84 : vector<368x128xf32> to vector<368x128xbf16>
    %c0_59 = arith.constant 0 : index
    %c0_60 = arith.constant 0 : index
    %86 = vector.load %arg10[%c0_59, %c0_60] : memref<368x128xbf16, #tpu.memory_space<vmem>>, vector<368x128xbf16>
    tpu.vector_store %arg10[%c0_59, %c0_60], %85 {strides = array<i32>} : memref<368x128xbf16, #tpu.memory_space<vmem>>, vector<368x128xbf16>,
    %c0_61 = arith.constant 0 : index
    %c0_62 = arith.constant 0 : index
    %87 = vector.load %arg10[%c0_61, %c0_62] : memref<368x128xbf16, #tpu.memory_space<vmem>>, vector<320x128xbf16>
    %c0_63 = arith.constant 0 : index
    %c0_64 = arith.constant 0 : index
    %88 = vector.load %arg6[%c0_63, %c0_64] : memref<1152x128xbf16, #tpu.memory_space<vmem>>, vector<128x128xbf16>
    %cst_65 = arith.constant dense<0.000000e+00> : vector<320x128xf32>
    %89 = tpu.matmul %87, %88, %cst_65 {dimension_numbers = #tpu.dot_dimension_numbers<[1], [0], [0], [1], [0, 0, 1, 1], [], []>} : vector<320x128xbf16>, vector<128x128xbf16>, vector<320x128xf32> -> vector<320x128xf32>
    %c1_66 = arith.constant 1 : index
    %c0_67 = arith.constant 0 : index
    %90 = vector.load %arg10[%c1_66, %c0_67] : memref<368x128xbf16, #tpu.memory_space<vmem>>, vector<320x128xbf16>
    %c128_68 = arith.constant 128 : index
    %c0_69 = arith.constant 0 : index
    %91 = vector.load %arg6[%c128_68, %c0_69] : memref<1152x128xbf16, #tpu.memory_space<vmem>>, vector<128x128xbf16>
    %cst_70 = arith.constant dense<0.000000e+00> : vector<320x128xf32>
    %92 = tpu.matmul %90, %91, %cst_70 {dimension_numbers = #tpu.dot_dimension_numbers<[1], [0], [0], [1], [0, 0, 1, 1], [], []>} : vector<320x128xbf16>, vector<128x128xbf16>, vector<320x128xf32> -> vector<320x128xf32>
    %93 = arith.addf %89, %92 : vector<320x128xf32>
    %c2_71 = arith.constant 2 : index
    %c0_72 = arith.constant 0 : index
    %94 = vector.load %arg10[%c2_71, %c0_72] : memref<368x128xbf16, #tpu.memory_space<vmem>>, vector<320x128xbf16>
    %c256_73 = arith.constant 256 : index
    %c0_74 = arith.constant 0 : index
    %95 = vector.load %arg6[%c256_73, %c0_74] : memref<1152x128xbf16, #tpu.memory_space<vmem>>, vector<128x128xbf16>
    %cst_75 = arith.constant dense<0.000000e+00> : vector<320x128xf32>
    %96 = tpu.matmul %94, %95, %cst_75 {dimension_numbers = #tpu.dot_dimension_numbers<[1], [0], [0], [1], [0, 0, 1, 1], [], []>} : vector<320x128xbf16>, vector<128x128xbf16>, vector<320x128xf32> -> vector<320x128xf32>
    %97 = arith.addf %93, %96 : vector<320x128xf32>
    %c20_76 = arith.constant 20 : index
    %c0_77 = arith.constant 0 : index
    %98 = vector.load %arg10[%c20_76, %c0_77] : memref<368x128xbf16, #tpu.memory_space<vmem>>, vector<320x128xbf16>
    %c384_78 = arith.constant 384 : index
    %c0_79 = arith.constant 0 : index
    %99 = vector.load %arg6[%c384_78, %c0_79] : memref<1152x128xbf16, #tpu.memory_space<vmem>>, vector<128x128xbf16>
    %cst_80 = arith.constant dense<0.000000e+00> : vector<320x128xf32>
    %100 = tpu.matmul %98, %99, %cst_80 {dimension_numbers = #tpu.dot_dimension_numbers<[1], [0], [0], [1], [0, 0, 1, 1], [], []>} : vector<320x128xbf16>, vector<128x128xbf16>, vector<320x128xf32> -> vector<320x128xf32>
    %101 = arith.addf %97, %100 : vector<320x128xf32>
    %c21_81 = arith.constant 21 : index
    %c0_82 = arith.constant 0 : index
    %102 = vector.load %arg10[%c21_81, %c0_82] : memref<368x128xbf16, #tpu.memory_space<vmem>>, vector<320x128xbf16>
    %c512_83 = arith.constant 512 : index
    %c0_84 = arith.constant 0 : index
    %103 = vector.load %arg6[%c512_83, %c0_84] : memref<1152x128xbf16, #tpu.memory_space<vmem>>, vector<128x128xbf16>
    %cst_85 = arith.constant dense<0.000000e+00> : vector<320x128xf32>
    %104 = tpu.matmul %102, %103, %cst_85 {dimension_numbers = #tpu.dot_dimension_numbers<[1], [0], [0], [1], [0, 0, 1, 1], [], []>} : vector<320x128xbf16>, vector<128x128xbf16>, vector<320x128xf32> -> vector<320x128xf32>
    %105 = arith.addf %101, %104 : vector<320x128xf32>
    %c22_86 = arith.constant 22 : index
    %c0_87 = arith.constant 0 : index
    %106 = vector.load %arg10[%c22_86, %c0_87] : memref<368x128xbf16, #tpu.memory_space<vmem>>, vector<320x128xbf16>
    %c640_88 = arith.constant 640 : index
    %c0_89 = arith.constant 0 : index
    %107 = vector.load %arg6[%c640_88, %c0_89] : memref<1152x128xbf16, #tpu.memory_space<vmem>>, vector<128x128xbf16>
    %cst_90 = arith.constant dense<0.000000e+00> : vector<320x128xf32>
    %108 = tpu.matmul %106, %107, %cst_90 {dimension_numbers = #tpu.dot_dimension_numbers<[1], [0], [0], [1], [0, 0, 1, 1], [], []>} : vector<320x128xbf16>, vector<128x128xbf16>, vector<320x128xf32> -> vector<320x128xf32>
    %109 = arith.addf %105, %108 : vector<320x128xf32>
    %c40_91 = arith.constant 40 : index
    %c0_92 = arith.constant 0 : index
    %110 = vector.load %arg10[%c40_91, %c0_92] : memref<368x128xbf16, #tpu.memory_space<vmem>>, vector<320x128xbf16>
    %c768_93 = arith.constant 768 : index
    %c0_94 = arith.constant 0 : index
    %111 = vector.load %arg6[%c768_93, %c0_94] : memref<1152x128xbf16, #tpu.memory_space<vmem>>, vector<128x128xbf16>
    %cst_95 = arith.constant dense<0.000000e+00> : vector<320x128xf32>
    %112 = tpu.matmul %110, %111, %cst_95 {dimension_numbers = #tpu.dot_dimension_numbers<[1], [0], [0], [1], [0, 0, 1, 1], [], []>} : vector<320x128xbf16>, vector<128x128xbf16>, vector<320x128xf32> -> vector<320x128xf32>
    %113 = arith.addf %109, %112 : vector<320x128xf32>
    %c41_96 = arith.constant 41 : index
    %c0_97 = arith.constant 0 : index
    %114 = vector.load %arg10[%c41_96, %c0_97] : memref<368x128xbf16, #tpu.memory_space<vmem>>, vector<320x128xbf16>
    %c896_98 = arith.constant 896 : index
    %c0_99 = arith.constant 0 : index
    %115 = vector.load %arg6[%c896_98, %c0_99] : memref<1152x128xbf16, #tpu.memory_space<vmem>>, vector<128x128xbf16>
    %cst_100 = arith.constant dense<0.000000e+00> : vector<320x128xf32>
    %116 = tpu.matmul %114, %115, %cst_100 {dimension_numbers = #tpu.dot_dimension_numbers<[1], [0], [0], [1], [0, 0, 1, 1], [], []>} : vector<320x128xbf16>, vector<128x128xbf16>, vector<320x128xf32> -> vector<320x128xf32>
    %117 = arith.addf %113, %116 : vector<320x128xf32>
    %c42_101 = arith.constant 42 : index
    %c0_102 = arith.constant 0 : index
    %118 = vector.load %arg10[%c42_101, %c0_102] : memref<368x128xbf16, #tpu.memory_space<vmem>>, vector<320x128xbf16>
    %c1024_103 = arith.constant 1024 : index
    %c0_104 = arith.constant 0 : index
    %119 = vector.load %arg6[%c1024_103, %c0_104] : memref<1152x128xbf16, #tpu.memory_space<vmem>>, vector<128x128xbf16>
    %cst_105 = arith.constant dense<0.000000e+00> : vector<320x128xf32>
    %120 = tpu.matmul %118, %119, %cst_105 {dimension_numbers = #tpu.dot_dimension_numbers<[1], [0], [0], [1], [0, 0, 1, 1], [], []>} : vector<320x128xbf16>, vector<128x128xbf16>, vector<320x128xf32> -> vector<320x128xf32>
    %121 = arith.addf %117, %120 : vector<320x128xf32>
    %c0_i32_106 = arith.constant 0 : i32
    %c0_i32_107 = arith.constant 0 : i32
    %122 = tpu.memref_slice %arg9[%0, %c0_i32_106, %c0_i32_107] : memref<2x416x128xbf16, #tpu.memory_space<vmem>> -> memref<1x416x128xbf16, #tpu.memory_space<vmem>>
    %123 = tpu.memref_squeeze %122 : memref<1x416x128xbf16, #tpu.memory_space<vmem>> -> memref<416x128xbf16, #tpu.memory_space<vmem>>
    %c42_108 = arith.constant 42 : index
    %c0_109 = arith.constant 0 : index
    %124 = vector.load %123[%c42_108, %c0_109] : memref<416x128xbf16, #tpu.memory_space<vmem>>, vector<320x128xbf16>
    %125 = arith.extf %124 : vector<320x128xbf16> to vector<320x128xf32>
    %c0_110 = arith.constant 0 : index
    %c0_111 = arith.constant 0 : index
    %126 = vector.load %arg7[%c0_110, %c0_111] : memref<1x128xf32, #tpu.memory_space<vmem>>, vector<1x128xf32>
    %127 = vector.broadcast %126 : vector<1x128xf32> to vector<320x128xf32>
    %128 = arith.addf %121, %127 : vector<320x128xf32>
    %129 = arith.addf %128, %125 : vector<320x128xf32>
    %cst_112 = arith.constant 0.000000e+00 : f32
    %130 = vector.broadcast %cst_112 : f32 to vector<320x128xf32>
    %131 = arith.maximumf %129, %130 : vector<320x128xf32>
    %132 = vector.shape_cast %131 : vector<320x128xf32> to vector<1x320x128xf32>
    %133 = arith.truncf %132 : vector<1x320x128xf32> to vector<1x320x128xbf16>
    %c0_113 = arith.constant 0 : index
    %c0_114 = arith.constant 0 : index
    %c0_115 = arith.constant 0 : index
    %134 = vector.load %arg8[%c0_113, %c0_114, %c0_115] : memref<1x320x128xbf16, #tpu.memory_space<vmem>>, vector<1x320x128xbf16>
    tpu.vector_store %arg8[%c0_113, %c0_114, %c0_115], %133 {strides = array<i32>} : memref<1x320x128xbf16, #tpu.memory_space<vmem>>, vector<1x320x128xbf16>,
    return
  }
  func.func @transform_1(%arg0: i32, %arg1: i32) -> (i32, i32) {
    %c0_i32 = arith.constant 0 : i32
    %c0_i32_0 = arith.constant 0 : i32
    %c0_i32_1 = arith.constant 0 : i32
    return %c0_i32, %c0_i32_0 : i32, i32
  }
  func.func @transform_2(%arg0: i32, %arg1: i32) -> (i32, i32) {
    %c0_i32 = arith.constant 0 : i32
    %c0_i32_0 = arith.constant 0 : i32
    %c0_i32_1 = arith.constant 0 : i32
    return %c0_i32, %c0_i32_0 : i32, i32
  }
  func.func @transform_3(%arg0: i32, %arg1: i32) -> (i32, i32) {
    %c0_i32 = arith.constant 0 : i32
    %c0_i32_0 = arith.constant 0 : i32
    %c0_i32_1 = arith.constant 0 : i32
    return %c0_i32, %c0_i32_0 : i32, i32
  }
  func.func @transform_4(%arg0: i32, %arg1: i32) -> (i32, i32) {
    %c0_i32 = arith.constant 0 : i32
    %c0_i32_0 = arith.constant 0 : i32
    %c0_i32_1 = arith.constant 0 : i32
    return %c0_i32, %c0_i32_0 : i32, i32
  }
  func.func @transform_5(%arg0: i32, %arg1: i32) -> (i32, i32) {
    %c0_i32 = arith.constant 0 : i32
    %c0_i32_0 = arith.constant 0 : i32
    %c0_i32_1 = arith.constant 0 : i32
    return %c0_i32, %c0_i32_0 : i32, i32
  }
  func.func @transform_6(%arg0: i32, %arg1: i32) -> (i32, i32, i32) {
    %c0_i32 = arith.constant 0 : i32
    %c0_i32_0 = arith.constant 0 : i32
    return %arg0, %arg1, %c0_i32 : i32, i32, i32
  }
}

</mosaic_0001>

<llo_original>
// kernel: basic_block_forward.1
$region0: #{basic_block_forward.1}
  #allocation0 [shape = 'u32[]', space=smem, size = 0x4, offset = 0x4, fixed_abs, tag = 'smem constant byte address 0x4 - core index']
  #allocation1 [shape = 'u32[144,128]{1,0:T(1,128)}', space=vmem, size = 0x12000, scoped, tag = 'internal scratch']
  #allocation2 [shape = 'bf16[2,416,128]{2,1,0:T(16,128)(2,1)}', space=vmem, size = 0x34000, scoped, tag = 'scratch operand']
  #allocation3 [shape = 'bf16[368,128]{1,0:T(16,128)(2,1)}', space=vmem, size = 0x17000, scoped, tag = 'scratch operand']
  #allocation4 [shape = 's32[2]{0}', space=sflag, size = 0x8, scoped, tag = 'scratch operand']
  #allocation5 [shape = 's32[]', space=sflag, size = 0x4, offset = 0, fixed_abs, tag = 'sflag constant byte address 0x0 - dummy sync flag']
  %s0 = inlined_call_operand.vmem [shape: bf16[2,440,128], index: 0, kind: input, shape index: {}]
  %s1 = inlined_call_operand.vmem [shape: s32[368,1], index: 1, kind: input, shape index: {}]
  %s2 = inlined_call_operand.vmem [shape: bf16[1152,128], index: 2, kind: input, shape index: {}]
  %s3 = inlined_call_operand.vmem [shape: f32[1,128], index: 3, kind: input, shape index: {}]
  %s4 = inlined_call_operand.vmem [shape: bf16[1152,128], index: 4, kind: input, shape index: {}]
  %s5 = inlined_call_operand.vmem [shape: f32[1,128], index: 5, kind: input, shape index: {}]
  %s6 = inlined_call_operand.vmem [shape: bf16[2,320,128], index: 6, kind: output, shape index: {}]
  %s7 = sld [smem:[#allocation0]]
  $region91: #{basic_block_forward.1} parent=0
    _
  %s9 = ssub.s32 1, %s7
  %s10 = scalar_select 0, %s9, %s7
  loop: start=0, step=1, limit=4
  $region2: #{basic_block_forward.1} parent=0 // loop_pre_header
    _
  $region3: #{basic_block_forward.1} parent=0 // loop_header
    %s12 = sphi 0, %s16
    %p13 = scmp.ge.s32.totalorder %s12, 4
    %s19 = sphi 0, %s31
    %s20 = sphi 0, %s27
    %s21 = sphi 0, %s19
    %s22 = sphi 0, %s20
    %s23 = sphi 0, %s21
    %s24 = sphi 0, %s22
    %s32 = sphi 0, %s32
    %s34 = sphi 0, %s32
    %s35 = sphi 0, %s34
    %s49 = sphi 0, %s35
    %s53 = sphi 0, %s53
    %s55 = sphi 0, %s53
    %s56 = sphi 0, %s55
    %s70 = sphi 0, %s56
    %s74 = sphi 0, %s74
    %s76 = sphi 0, %s74
    %s77 = sphi 0, %s76
    %s91 = sphi 0, %s77
    %s95 = sphi 0, %s95
    %s97 = sphi 0, %s95
    %s98 = sphi 0, %s97
    %s112 = sphi 0, %s98
    %s116 = sphi 0, %s116
    %s118 = sphi 0, %s116
    %s119 = sphi 0, %s118
    %s133 = sphi 0, %s119
    %s141 = sphi 0, %s143
    %s144 = sphi 0, %s141
    %s145 = sphi 0, %s144
    %s161 = sphi 0, %s145
  $region4: #{basic_block_forward.1} parent=0 // loop_header_branch
    %15 = sbr.rel (%p13) target = $region8
  $region5: #{basic_block_forward.1} parent=0 // loop_body
    %s17 = ssub.s32 %s12, 1
    %s18 = ssub.s32 %s12, 2
    %s25 = sadd.s32 1, %s20
    %p26 = scmp.ge.s32.totalorder %s25, 1
    %s27 = scalar_select %p26, 0, %s25
    %s28 = sadd.s32 1, %s19
    %s29 = scalar_select %p26, %s28, %s19
    %p30 = scmp.ge.s32.totalorder %s29, 2
    %s31 = scalar_select %p30, 0, %s29
    %s33 = sadd.s32 %s32, 1
    %p36 = scmp.eq.s32.totalorder %s12, 1
    %p37 = scmp.ne.s32.totalorder %s32, %s34
    %p38 = scmp.eq.s32.totalorder %s12, 0
    %p39 = por %p37, %p38
    %p40 = scmp.ne.s32.totalorder %s32, %s34
    %p41 = scmp.eq.s32.totalorder %s17, 1
    %p42 = por %p40, %p41
    %p43 = scmp.ne.s32.totalorder %s34, %s35
    %p44 = scmp.eq.s32.totalorder %s17, 0
    %p45 = por %p43, %p44
    %p46 = scmp.ne.s32.totalorder %s34, %s35
    %p47 = scmp.eq.s32.totalorder %s18, 1
    %p48 = por %p46, %p47
    %p50 = scmp.ne.s32.totalorder %s35, %s49
    %p51 = scmp.eq.s32.totalorder %s18, 0
    %p52 = por %p50, %p51
    %s54 = sadd.s32 %s53, 1
    %p57 = scmp.eq.s32.totalorder %s12, 1
    %p58 = scmp.ne.s32.totalorder %s53, %s55
    %p59 = scmp.eq.s32.totalorder %s12, 0
    %p60 = por %p58, %p59
    %p61 = scmp.ne.s32.totalorder %s53, %s55
    %p62 = scmp.eq.s32.totalorder %s17, 1
    %p63 = por %p61, %p62
    %p64 = scmp.ne.s32.totalorder %s55, %s56
    %p65 = scmp.eq.s32.totalorder %s17, 0
    %p66 = por %p64, %p65
    %p67 = scmp.ne.s32.totalorder %s55, %s56
    %p68 = scmp.eq.s32.totalorder %s18, 1
    %p69 = por %p67, %p68
    %p71 = scmp.ne.s32.totalorder %s56, %s70
    %p72 = scmp.eq.s32.totalorder %s18, 0
    %p73 = por %p71, %p72
    %s75 = sadd.s32 %s74, 1
    %p78 = scmp.eq.s32.totalorder %s12, 1
    %p79 = scmp.ne.s32.totalorder %s74, %s76
    %p80 = scmp.eq.s32.totalorder %s12, 0
    %p81 = por %p79, %p80
    %p82 = scmp.ne.s32.totalorder %s74, %s76
    %p83 = scmp.eq.s32.totalorder %s17, 1
    %p84 = por %p82, %p83
    %p85 = scmp.ne.s32.totalorder %s76, %s77
    %p86 = scmp.eq.s32.totalorder %s17, 0
    %p87 = por %p85, %p86
    %p88 = scmp.ne.s32.totalorder %s76, %s77
    %p89 = scmp.eq.s32.totalorder %s18, 1
    %p90 = por %p88, %p89
    %p92 = scmp.ne.s32.totalorder %s77, %s91
    %p93 = scmp.eq.s32.totalorder %s18, 0
    %p94 = por %p92, %p93
    %s96 = sadd.s32 %s95, 1
    %p99 = scmp.eq.s32.totalorder %s12, 1
    %p100 = scmp.ne.s32.totalorder %s95, %s97
    %p101 = scmp.eq.s32.totalorder %s12, 0
    %p102 = por %p100, %p101
    %p103 = scmp.ne.s32.totalorder %s95, %s97
    %p104 = scmp.eq.s32.totalorder %s17, 1
    %p105 = por %p103, %p104
    %p106 = scmp.ne.s32.totalorder %s97, %s98
    %p107 = scmp.eq.s32.totalorder %s17, 0
    %p108 = por %p106, %p107
    %p109 = scmp.ne.s32.totalorder %s97, %s98
    %p110 = scmp.eq.s32.totalorder %s18, 1
    %p111 = por %p109, %p110
    %p113 = scmp.ne.s32.totalorder %s98, %s112
    %p114 = scmp.eq.s32.totalorder %s18, 0
    %p115 = por %p113, %p114
    %s117 = sadd.s32 %s116, 1
    %p120 = scmp.eq.s32.totalorder %s12, 1
    %p121 = scmp.ne.s32.totalorder %s116, %s118
    %p122 = scmp.eq.s32.totalorder %s12, 0
    %p123 = por %p121, %p122
    %p124 = scmp.ne.s32.totalorder %s116, %s118
    %p125 = scmp.eq.s32.totalorder %s17, 1
    %p126 = por %p124, %p125
    %p127 = scmp.ne.s32.totalorder %s118, %s119
    %p128 = scmp.eq.s32.totalorder %s17, 0
    %p129 = por %p127, %p128
    %p130 = scmp.ne.s32.totalorder %s118, %s119
    %p131 = scmp.eq.s32.totalorder %s18, 1
    %p132 = por %p130, %p131
    %p134 = scmp.ne.s32.totalorder %s119, %s133
    %p135 = scmp.eq.s32.totalorder %s18, 0
    %p136 = por %p134, %p135
    %s137 = ssub.s32 %s19, %s31
    %s138 = ssub.s32 %s20, %s27
    %s139 = sor.u32 %s137, %s138
    %p140 = scmp.eq.s32.totalorder %s139, 0
    %s142 = sadd.s32 %s141, 1
    %s143 = scalar_select %p140, %s141, %s142
    %p146 = pneg %p140
    %p147 = scmp.eq.s32.totalorder %s12, 1
    %p148 = por %p146, %p147
    %p149 = scmp.ne.s32.totalorder %s141, %s144
    %p150 = scmp.eq.s32.totalorder %s12, 0
    %p151 = por %p149, %p150
    %p152 = scmp.ne.s32.totalorder %s141, %s144
    %p153 = scmp.eq.s32.totalorder %s17, 1
    %p154 = por %p152, %p153
    %p155 = scmp.ne.s32.totalorder %s144, %s145
    %p156 = scmp.eq.s32.totalorder %s17, 0
    %p157 = por %p155, %p156
    %p158 = scmp.ne.s32.totalorder %s144, %s145
    %p159 = scmp.eq.s32.totalorder %s18, 1
    %p160 = por %p158, %p159
    %p162 = scmp.ne.s32.totalorder %s145, %s161
    %p163 = scmp.eq.s32.totalorder %s18, 0
    %p164 = por %p162, %p163
    %p165 = scmp.le.s32.totalorder 1, %s12
    %p166 = scmp.lt.s32.totalorder %s12, 3
    %p167 = pnand %p165, %p166
    %p168 = pneg %p167
    // Predicated region
    $region9: #{basic_block_forward.1} parent=5 // pred_check
      _
    $region10: #{basic_block_forward.1} parent=5 // pred_check_branch
      %170 = sbr.rel (%p167) target = $region12
    $region11: #{basic_block_forward.1} parent=5 // pred_region
      %s171 = ssub.s32 %s12, 1
      // Predicated region
      $region13: #{basic_block_forward.1} parent=11 // pred_check
        %p172 = pneg %p45
      $region14: #{basic_block_forward.1} parent=11 // pred_check_branch
        %174 = sbr.rel (%p172) target = $region16
      $region15: #{basic_block_forward.1} parent=11 // pred_region
        _
      $region16: #{basic_block_forward.1} parent=11 // pred_fallthru
        _
      // Predicated region
      $region17: #{basic_block_forward.1} parent=11 // pred_check
        %p175 = pneg %p66
      $region18: #{basic_block_forward.1} parent=11 // pred_check_branch
        %177 = sbr.rel (%p175) target = $region20
      $region19: #{basic_block_forward.1} parent=11 // pred_region
        _
      $region20: #{basic_block_forward.1} parent=11 // pred_fallthru
        _
      // Predicated region
      $region21: #{basic_block_forward.1} parent=11 // pred_check
        %p178 = pneg %p87
      $region22: #{basic_block_forward.1} parent=11 // pred_check_branch
        %180 = sbr.rel (%p178) target = $region24
      $region23: #{basic_block_forward.1} parent=11 // pred_region
        _
      $region24: #{basic_block_forward.1} parent=11 // pred_fallthru
        _
      // Predicated region
      $region25: #{basic_block_forward.1} parent=11 // pred_check
        %p181 = pneg %p108
      $region26: #{basic_block_forward.1} parent=11 // pred_check_branch
        %183 = sbr.rel (%p181) target = $region28
      $region27: #{basic_block_forward.1} parent=11 // pred_region
        _
      $region28: #{basic_block_forward.1} parent=11 // pred_fallthru
        _
      // Predicated region
      $region29: #{basic_block_forward.1} parent=11 // pred_check
        %p184 = pneg %p129
      $region30: #{basic_block_forward.1} parent=11 // pred_check_branch
        %186 = sbr.rel (%p184) target = $region32
      $region31: #{basic_block_forward.1} parent=11 // pred_region
        _
      $region32: #{basic_block_forward.1} parent=11 // pred_fallthru
        _
    $region12: #{basic_block_forward.1} parent=5 // pred_fallthru
      _
    %p187 = scmp.lt.s32.totalorder %s12, 2
    // Predicated region
    $region33: #{basic_block_forward.1} parent=5 // pred_check
      %p188 = pneg %p187
    $region34: #{basic_block_forward.1} parent=5 // pred_check_branch
      %190 = sbr.rel (%p188) target = $region36
    $region35: #{basic_block_forward.1} parent=5 // pred_region
      _
    $region36: #{basic_block_forward.1} parent=5 // pred_fallthru
      _
    %p191 = scmp.le.s32.totalorder 1, %s12
    %p192 = scmp.lt.s32.totalorder %s12, 3
    %p193 = pnand %p191, %p192
    %p194 = pneg %p193
    // Predicated region
    $region37: #{basic_block_forward.1} parent=5 // pred_check
      _
    $region38: #{basic_block_forward.1} parent=5 // pred_check_branch
      %196 = sbr.rel (%p193) target = $region40
    $region39: #{basic_block_forward.1} parent=5 // pred_region
      %s197 = ssub.s32 %s12, 1
      %p198 = pneg %p45
      %p199 = pneg %p42
      %p200 = pneg %p66
      %p201 = pneg %p63
      %p202 = pneg %p87
      %p203 = pneg %p84
      %p204 = pneg %p108
      %p205 = pneg %p105
      %p206 = pneg %p129
      %p207 = pneg %p126
      %p208 = pneg %p157
      %p209 = pneg %p154
      %s210 = smul.u32 40, %s22
      %p211 = scmp.lt.s32.totalorder %s21, 1
      %s212 = scalar_select %p211, %s21, 1
      %p213 = scmp.lt.s32.totalorder %s210, 39
      %s214 = scalar_select %p213, %s210, 39
      %s215 = smul.addr %s212, 40
      %s216 = sadd.s32 %s214, %s215
      %s217 = smul.addr %s216, 4
      %s218 = scalar_lea.vmem %s6, %s217
      %s219 = smul.u32 40, %s22
      %p220 = scmp.lt.s32.totalorder %s21, 1
      %s221 = scalar_select %p220, %s21, 1
      %p222 = scmp.lt.s32.totalorder %s219, 39
      %s223 = scalar_select %p222, %s219, 39
      %s224 = smul.addr %s221, 40
      %s225 = sadd.s32 %s223, %s224
      %s226 = smul.addr %s225, 4
      %s227 = scalar_lea.vmem %s6, %s226
      %s228 = smul.u32 40, %s22
      %s230 = sand.u32 %s22, 1
      %p231 = scmp.eq.s32.totalorder %s22, 0
      // Predicated region
      $region41: #{basic_block_forward.1} parent=39 // pred_check
        %p232 = pneg %p231
      $region42: #{basic_block_forward.1} parent=39 // pred_check_branch
        %234 = sbr.rel (%p232) target = $region44
      $region43: #{basic_block_forward.1} parent=39 // pred_region
        %s235 = smul.u32 %s21, 55
        %s236 = sadd.s32 0, %s235
        %s237 = smul.addr %s236, 4
        %s238 = scalar_lea.vmem %s0, %s237
        %p240 = scmp.lt.u32.totalorder 208, 8
        %p241 = pneg %p240
        // Predicated region
        $region45: #{basic_block_forward.1} parent=43 // pred_check
          _
        $region46: #{basic_block_forward.1} parent=43 // pred_check_branch
          %243 = sbr.rel (%p240) target = $region48
        $region47: #{basic_block_forward.1} parent=43 // pred_region
          %s258 = sand.u32 208, 7
          %p259 = scmp.eq.s32.totalorder %s258, 0
          // Predicated region
          $region60: #{basic_block_forward.1} parent=47 // pred_check
            %p260 = pneg %p259
          $region61: #{basic_block_forward.1} parent=47 // pred_check_branch
            %262 = sbr.rel (%p260) target = $region63
          $region62: #{basic_block_forward.1} parent=47 // pred_region
            loop: start=0, step=1, limit=1
            $region64: #{basic_block_forward.1} parent=62 // loop_pre_header
              _
            $region65: #{basic_block_forward.1} parent=62 // loop_header
              %s264 = sphi 0, %s268
              %p265 = scmp.ge.s32.totalorder %s264, 1
              %s269 = sphi %s238, %s238
              %s270 = sphi [#allocation2], [#allocation2]
            $region66: #{basic_block_forward.1} parent=62 // loop_header_branch
              %267 = sbr.rel (%p265) target = $region70
            $region67: #{basic_block_forward.1} parent=62 // loop_body
              %v271 = vld [vmem:[%s269] sm:$0xff]
              %272 = vst [vmem:[%s270] sm:$0xff] %v271
              %v273 = vld [vmem:[%s269 + $0x8] sm:$0xff]
              %274 = vst [vmem:[%s270 + $0x8] sm:$0xff] %v273
              %v275 = vld [vmem:[%s269 + $0x10] sm:$0xff]
              %276 = vst [vmem:[%s270 + $0x10] sm:$0xff] %v275
              %v277 = vld [vmem:[%s269 + $0x18] sm:$0xff]
              %278 = vst [vmem:[%s270 + $0x18] sm:$0xff] %v277
              %v279 = vld [vmem:[%s269 + $0x20] sm:$0xff]
              %280 = vst [vmem:[%s270 + $0x20] sm:$0xff] %v279
              %v281 = vld [vmem:[%s269 + $0x28] sm:$0xff]
              %282 = vst [vmem:[%s270 + $0x28] sm:$0xff] %v281
              %v283 = vld [vmem:[%s269 + $0x30] sm:$0xff]
              %284 = vst [vmem:[%s270 + $0x30] sm:$0xff] %v283
              %v285 = vld [vmem:[%s269 + $0x38] sm:$0xff]
              %286 = vst [vmem:[%s270 + $0x38] sm:$0xff] %v285
              %v287 = vld [vmem:[%s269 + $0x40] sm:$0xff]
              %288 = vst [vmem:[%s270 + $0x40] sm:$0xff] %v287
              %v289 = vld [vmem:[%s269 + $0x48] sm:$0xff]
              %290 = vst [vmem:[%s270 + $0x48] sm:$0xff] %v289
              %v291 = vld [vmem:[%s269 + $0x50] sm:$0xff]
              %292 = vst [vmem:[%s270 + $0x50] sm:$0xff] %v291
              %v293 = vld [vmem:[%s269 + $0x58] sm:$0xff]
              %294 = vst [vmem:[%s270 + $0x58] sm:$0xff] %v293
              %v295 = vld [vmem:[%s269 + $0x60] sm:$0xff]
              %296 = vst [vmem:[%s270 + $0x60] sm:$0xff] %v295
              %v297 = vld [vmem:[%s269 + $0x68] sm:$0xff]
              %298 = vst [vmem:[%s270 + $0x68] sm:$0xff] %v297
              %v299 = vld [vmem:[%s269 + $0x70] sm:$0xff]
              %300 = vst [vmem:[%s270 + $0x70] sm:$0xff] %v299
              %v301 = vld [vmem:[%s269 + $0x78] sm:$0xff]
              %302 = vst [vmem:[%s270 + $0x78] sm:$0xff] %v301
              %v303 = vld [vmem:[%s269 + $0x80] sm:$0xff]
              %304 = vst [vmem:[%s270 + $0x80] sm:$0xff] %v303
              %v305 = vld [vmem:[%s269 + $0x88] sm:$0xff]
              %306 = vst [vmem:[%s270 + $0x88] sm:$0xff] %v305
              %v307 = vld [vmem:[%s269 + $0x90] sm:$0xff]
              %308 = vst [vmem:[%s270 + $0x90] sm:$0xff] %v307
              %v309 = vld [vmem:[%s269 + $0x98] sm:$0xff]
              %310 = vst [vmem:[%s270 + $0x98] sm:$0xff] %v309
              %v311 = vld [vmem:[%s269 + $0xa0] sm:$0xff]
              %312 = vst [vmem:[%s270 + $0xa0] sm:$0xff] %v311
              %v313 = vld [vmem:[%s269 + $0xa8] sm:$0xff]
              %314 = vst [vmem:[%s270 + $0xa8] sm:$0xff] %v313
              %v315 = vld [vmem:[%s269 + $0xb0] sm:$0xff]
              %316 = vst [vmem:[%s270 + $0xb0] sm:$0xff] %v315
              %v317 = vld [vmem:[%s269 + $0xb8] sm:$0xff]
              %318 = vst [vmem:[%s270 + $0xb8] sm:$0xff] %v317
              %v319 = vld [vmem:[%s269 + $0xc0] sm:$0xff]
              %320 = vst [vmem:[%s270 + $0xc0] sm:$0xff] %v319
              %v321 = vld [vmem:[%s269 + $0xc8] sm:$0xff]
              %322 = vst [vmem:[%s270 + $0xc8] sm:$0xff] %v321
            $region68: #{basic_block_forward.1} parent=62 // loop_footer
              %s268 = sadd.s32 1, %s264
            $region69: #{basic_block_forward.1} parent=62 // loop_footer_branch
              %263 = sbr.rel target = $region65
            $region70: #{basic_block_forward.1} parent=62 // loop_exit
              _
          $region63: #{basic_block_forward.1} parent=47 // pred_fallthru
            _
          %p323 = pneg %p259
          // Predicated region
          $region71: #{basic_block_forward.1} parent=47 // pred_check
            _
          $region72: #{basic_block_forward.1} parent=47 // pred_check_branch
            %325 = sbr.rel (%p259) target = $region74
          $region73: #{basic_block_forward.1} parent=47 // pred_region
            %s326 = sand.u32 208, 7
          $region74: #{basic_block_forward.1} parent=47 // pred_fallthru
            _
        $region48: #{basic_block_forward.1} parent=43 // pred_fallthru
          _
        // Predicated region
        $region49: #{basic_block_forward.1} parent=43 // pred_check
          %p244 = pneg %p240
        $region50: #{basic_block_forward.1} parent=43 // pred_check_branch
          %246 = sbr.rel (%p244) target = $region52
        $region51: #{basic_block_forward.1} parent=43 // pred_region
          %s247 = sshllo.u32 0, 208
          loop: start=0, step=1, limit=1
          $region53: #{basic_block_forward.1} parent=51 // loop_pre_header
            _
          $region54: #{basic_block_forward.1} parent=51 // loop_header
            %s249 = sphi 0, %s253
            %p250 = scmp.ge.s32.totalorder %s249, 1
            %s254 = sphi %s238, %s238
            %s255 = sphi [#allocation2], [#allocation2]
          $region55: #{basic_block_forward.1} parent=51 // loop_header_branch
            %252 = sbr.rel (%p250) target = $region59
          $region56: #{basic_block_forward.1} parent=51 // loop_body
            %v256 = vld [vmem:[%s254] sm:%s247]
            %257 = vst [vmem:[%s255] sm:%s247] %v256
          $region57: #{basic_block_forward.1} parent=51 // loop_footer
            %s253 = sadd.s32 1, %s249
          $region58: #{basic_block_forward.1} parent=51 // loop_footer_branch
            %248 = sbr.rel target = $region54
          $region59: #{basic_block_forward.1} parent=51 // loop_exit
            _
        $region52: #{basic_block_forward.1} parent=43 // pred_fallthru
          _
        // Predicated region
        $region75: #{basic_block_forward.1} parent=43 // pred_check
          _
        $region76: #{basic_block_forward.1} parent=43 // pred_check_branch
          %329 = sbr.rel (0) target = $region78
        $region77: #{basic_block_forward.1} parent=43 // pred_region
          %330 = vsyncadd [#allocation4], 3328
        $region78: #{basic_block_forward.1} parent=43 // pred_fallthru
          _
      $region44: #{basic_block_forward.1} parent=39 // pred_fallthru
        _
      %s331 = smul.u32 %s22, 320
      %s332 = smul.u32 %s230, 26
      %s333 = smul.addr %s332, 8
      %s334 = scalar_lea.vmem [#allocation2], %s333
      %s335 = scalar_lea.sflag [#allocation4], %s230
      %s336 = smul.u32 4, 52
      %s337 = smul.u32 %s336, 1
      %s338 = sshll.u32 %s337, 4
      %339 = dma.done %s335, %s338
      %v340 = vld [vmem:[%s334] sm:$0xff]
      %v341 = vld [vmem:[%s334 + $0x8] sm:$0xff]
      %v342 = vld [vmem:[%s334 + $0x10] sm:$0xff]
      %v343 = vld [vmem:[%s334 + $0x18] sm:$0xff]
      %v344 = vld [vmem:[%s334 + $0x20] sm:$0xff]
      %v345 = vld [vmem:[%s334 + $0x28] sm:$0xff]
      %v346 = vld [vmem:[%s334 + $0x30] sm:$0xff]
      %v347 = vld [vmem:[%s334 + $0x38] sm:$0xff]
      %v348 = vld [vmem:[%s334 + $0x40] sm:$0xff]
      %v349 = vld [vmem:[%s334 + $0x48] sm:$0xff]
      %v350 = vld [vmem:[%s334 + $0x50] sm:$0xff]
      %v351 = vld [vmem:[%s334 + $0x58] sm:$0xff]
      %v352 = vld [vmem:[%s334 + $0x60] sm:$0xff]
      %v353 = vld [vmem:[%s334 + $0x68] sm:$0xff]
      %v354 = vld [vmem:[%s334 + $0x70] sm:$0xff]
      %v355 = vld [vmem:[%s334 + $0x78] sm:$0xff]
      %v356 = vld [vmem:[%s334 + $0x80] sm:$0xff]
      %v357 = vld [vmem:[%s334 + $0x88] sm:$0xff]
      %v358 = vld [vmem:[%s334 + $0x90] sm:$0xff]
      %v359 = vld [vmem:[%s334 + $0x98] sm:$0xff]
      %v360 = vld [vmem:[%s334 + $0xa0] sm:$0xff]
      %v361 = vld [vmem:[%s334 + $0xa8] sm:$0xff]
      %v362 = vld [vmem:[%s334 + $0xb0] sm:$0xff]
      %v363 = vld [vmem:[%s2] sm:$0xf]
      %v364 = vld [vmem:[%s2 + $0x4] sm:$0xf]
      %v365 = vld [vmem:[%s2 + $0x8] sm:$0xf]
      %v366 = vld [vmem:[%s2 + $0xc] sm:$0xf]
      %v367 = vld [vmem:[%s2 + $0x10] sm:$0xf]
      %v368 = vld [vmem:[%s2 + $0x14] sm:$0xf]
      %v369 = vld [vmem:[%s2 + $0x18] sm:$0xf]
      %v370 = vld [vmem:[%s2 + $0x1c] sm:$0xf]
      %v371 = vld [vmem:[%s2 + $0x20] sm:$0xf]
      %v372 = vld [vmem:[%s2 + $0x24] sm:$0xf]
      %v373 = vld [vmem:[%s2 + $0x28] sm:$0xf]
      %v374 = vld [vmem:[%s2 + $0x2c] sm:$0xf]
      %v375 = vld [vmem:[%s2 + $0x30] sm:$0xf]
      %v376 = vld [vmem:[%s2 + $0x34] sm:$0xf]
      %v377 = vld [vmem:[%s2 + $0x38] sm:$0xf]
      %v378 = vld [vmem:[%s2 + $0x3c] sm:$0xf]
      %v379 = vld [vmem:[%s334 + $0xb8] sm:$0x1]
      %v380 = vld [vmem:[%s2 + $0x40] sm:$0xf]
      %v381 = vld [vmem:[%s2 + $0x44] sm:$0xf]
      %v382 = vld [vmem:[%s2 + $0x48] sm:$0xf]
      %v383 = vld [vmem:[%s2 + $0x4c] sm:$0xf]
      %v384 = vld [vmem:[%s2 + $0x50] sm:$0xf]
      %v385 = vld [vmem:[%s2 + $0x54] sm:$0xf]
      %v386 = vld [vmem:[%s2 + $0x58] sm:$0xf]
      %v387 = vld [vmem:[%s2 + $0x5c] sm:$0xf]
      %v388 = vld [vmem:[%s2 + $0x60] sm:$0xf]
      %v389 = vld [vmem:[%s2 + $0x64] sm:$0xf]
      %v390 = vld [vmem:[%s2 + $0x68] sm:$0xf]
      %v391 = vld [vmem:[%s2 + $0x6c] sm:$0xf]
      %v392 = vld [vmem:[%s2 + $0x70] sm:$0xf]
      %v393 = vld [vmem:[%s2 + $0x74] sm:$0xf]
      %v394 = vld [vmem:[%s2 + $0x78] sm:$0xf]
      %v395 = vld [vmem:[%s2 + $0x7c] sm:$0xf]
      %vm396 = vsmask.f32 7424
      %v398 = vshrl.u32 %v340, 16
      %v400 = vshll.u32 %v340, 16
      %v402 = vrot.slane %v400, 1
      %v403 = vor.u32 %v398, %v402
      %v405 = vshll.u32 %v341, 16
      %v407 = vrot.slane %v405, 1
      %v408 = vsel %vm396, %v403, %v407
      %v409 = vshrl.u32 %v341, 16
      %v411 = vor.u32 %v409, %v407
      %v413 = vshll.u32 %v342, 16
      %v415 = vrot.slane %v413, 1
      %v416 = vsel %vm396, %v411, %v415
      %v417 = vshrl.u32 %v342, 16
      %v419 = vor.u32 %v417, %v415
      %v421 = vshll.u32 %v343, 16
      %v423 = vrot.slane %v421, 1
      %v424 = vsel %vm396, %v419, %v423
      %v425 = vshrl.u32 %v343, 16
      %v427 = vor.u32 %v425, %v423
      %v429 = vshll.u32 %v344, 16
      %v431 = vrot.slane %v429, 1
      %v432 = vsel %vm396, %v427, %v431
      %v433 = vshrl.u32 %v344, 16
      %v435 = vor.u32 %v433, %v431
      %v437 = vshll.u32 %v345, 16
      %v439 = vrot.slane %v437, 1
      %v440 = vsel %vm396, %v435, %v439
      %v441 = vshrl.u32 %v345, 16
      %v443 = vor.u32 %v441, %v439
      %v445 = vshll.u32 %v346, 16
      %v447 = vrot.slane %v445, 1
      %v448 = vsel %vm396, %v443, %v447
      %v449 = vshrl.u32 %v346, 16
      %v451 = vor.u32 %v449, %v447
      %v453 = vshll.u32 %v347, 16
      %v455 = vrot.slane %v453, 1
      %v456 = vsel %vm396, %v451, %v455
      %v457 = vshrl.u32 %v347, 16
      %v459 = vor.u32 %v457, %v455
      %v461 = vshll.u32 %v348, 16
      %v463 = vrot.slane %v461, 1
      %v464 = vsel %vm396, %v459, %v463
      %v465 = vshrl.u32 %v348, 16
      %v467 = vor.u32 %v465, %v463
      %v469 = vshll.u32 %v349, 16
      %v471 = vrot.slane %v469, 1
      %v472 = vsel %vm396, %v467, %v471
      %v473 = vshrl.u32 %v349, 16
      %v475 = vor.u32 %v473, %v471
      %v477 = vshll.u32 %v350, 16
      %v479 = vrot.slane %v477, 1
      %v480 = vsel %vm396, %v475, %v479
      %v481 = vshrl.u32 %v350, 16
      %v483 = vor.u32 %v481, %v479
      %v485 = vshll.u32 %v351, 16
      %v487 = vrot.slane %v485, 1
      %v488 = vsel %vm396, %v483, %v487
      %v489 = vshrl.u32 %v351, 16
      %v491 = vor.u32 %v489, %v487
      %v493 = vshll.u32 %v352, 16
      %v495 = vrot.slane %v493, 1
      %v496 = vsel %vm396, %v491, %v495
      %v497 = vshrl.u32 %v352, 16
      %v499 = vor.u32 %v497, %v495
      %v501 = vshll.u32 %v353, 16
      %v503 = vrot.slane %v501, 1
      %v504 = vsel %vm396, %v499, %v503
      %v505 = vshrl.u32 %v353, 16
      %v507 = vor.u32 %v505, %v503
      %v509 = vshll.u32 %v354, 16
      %v511 = vrot.slane %v509, 1
      %v512 = vsel %vm396, %v507, %v511
      %v513 = vshrl.u32 %v354, 16
      %v515 = vor.u32 %v513, %v511
      %v517 = vshll.u32 %v355, 16
      %v519 = vrot.slane %v517, 1
      %v520 = vsel %vm396, %v515, %v519
      %v521 = vshrl.u32 %v355, 16
      %v523 = vor.u32 %v521, %v519
      %v525 = vshll.u32 %v356, 16
      %v527 = vrot.slane %v525, 1
      %v528 = vsel %vm396, %v523, %v527
      %v529 = vshrl.u32 %v356, 16
      %v531 = vor.u32 %v529, %v527
      %v533 = vshll.u32 %v357, 16
      %v535 = vrot.slane %v533, 1
      %v536 = vsel %vm396, %v531, %v535
      %v537 = vshrl.u32 %v357, 16
      %v539 = vor.u32 %v537, %v535
      %v541 = vshll.u32 %v358, 16
      %v543 = vrot.slane %v541, 1
      %v544 = vsel %vm396, %v539, %v543
      %v545 = vshrl.u32 %v358, 16
      %v547 = vor.u32 %v545, %v543
      %v549 = vshll.u32 %v359, 16
      %v551 = vrot.slane %v549, 1
      %v552 = vsel %vm396, %v547, %v551
      %v553 = vshrl.u32 %v359, 16
      %v555 = vor.u32 %v553, %v551
      %v557 = vshll.u32 %v360, 16
      %v559 = vrot.slane %v557, 1
      %v560 = vsel %vm396, %v555, %v559
      %v561 = vshrl.u32 %v360, 16
      %v563 = vor.u32 %v561, %v559
      %v565 = vshll.u32 %v361, 16
      %v567 = vrot.slane %v565, 1
      %v568 = vsel %vm396, %v563, %v567
      %v569 = vshrl.u32 %v361, 16
      %v571 = vor.u32 %v569, %v567
      %v573 = vshll.u32 %v362, 16
      %v575 = vrot.slane %v573, 1
      %v576 = vsel %vm396, %v571, %v575
      %v577 = vshrl.u32 %v362, 16
      %v579 = vor.u32 %v577, %v575
      %v581 = vshll.u32 %v379, 16
      %v583 = vrot.slane %v581, 1
      %v584 = vsel %vm396, %v579, %v583
      %v624 = vunpack.c.l.b16 %v380
      %v625 = vunpack.c.l.b16 %v381
      %v626 = vunpack.c.l.b16 %v382
      %v627 = vunpack.c.l.b16 %v383
      %v628 = vunpack.c.l.b16 %v384
      %v629 = vunpack.c.l.b16 %v385
      %v630 = vunpack.c.l.b16 %v386
      %v631 = vunpack.c.l.b16 %v387
      %v632 = vunpack.c.l.b16 %v388
      %v633 = vunpack.c.l.b16 %v389
      %v634 = vunpack.c.l.b16 %v390
      %v635 = vunpack.c.l.b16 %v391
      %v636 = vunpack.c.l.b16 %v392
      %v637 = vunpack.c.l.b16 %v393
      %v638 = vunpack.c.l.b16 %v394
      %v639 = vunpack.c.l.b16 %v395
      %v640 = vpack.c.b16 %v625, %v624
      %v641 = vpack.c.b16 %v627, %v626
      %v642 = vpack.c.b16 %v629, %v628
      %v643 = vpack.c.b16 %v631, %v630
      %v644 = vpack.c.b16 %v633, %v632
      %v645 = vpack.c.b16 %v635, %v634
      %v646 = vpack.c.b16 %v637, %v636
      %v647 = vpack.c.b16 %v639, %v638
      %656 = vmatprep.subr.bf16.mxu0 0
      %657 = vmatpush1.bf16.msra.mxu0 %v640
      %658 = vmatprep.subr.bf16.mxu0 0
      %659 = vmatpush1.bf16.msra.mxu0 %v641
      %660 = vmatprep.subr.bf16.mxu0 0
      %661 = vmatpush1.bf16.msra.mxu0 %v642
      %662 = vmatprep.subr.bf16.mxu0 0
      %663 = vmatpush1.bf16.msra.mxu0 %v643
      %664 = vmatprep.subr.bf16.mxu0 0
      %665 = vmatpush1.bf16.msra.mxu0 %v644
      %666 = vmatprep.subr.bf16.mxu0 0
      %667 = vmatpush1.bf16.msra.mxu0 %v645
      %668 = vmatprep.subr.bf16.mxu0 0
      %669 = vmatpush1.bf16.msra.mxu0 %v646
      %670 = vmatprep.subr.bf16.mxu0 0
      %671 = vmatpush1.bf16.msra.mxu0 %v647
      %672 = vmatprep.subr.bf16.mxu0 0
      %673 = vmatpush1.bf16.msra.mxu0 0
      %674 = vmatprep.subr.bf16.mxu0 0
      %675 = vmatpush1.bf16.msra.mxu0 0
      %676 = vmatprep.subr.bf16.mxu0 0
      %677 = vmatpush1.bf16.msra.mxu0 0
      %678 = vmatprep.subr.bf16.mxu0 0
      %679 = vmatpush1.bf16.msra.mxu0 0
      %680 = vmatprep.subr.bf16.mxu0 0
      %681 = vmatpush1.bf16.msra.mxu0 0
      %682 = vmatprep.subr.bf16.mxu0 0
      %683 = vmatpush1.bf16.msra.mxu0 0
      %684 = vmatprep.subr.bf16.mxu0 0
      %685 = vmatpush1.bf16.msra.mxu0 0
      %686 = vmatprep.subr.bf16.mxu0 0
      %687 = vmatpush1.bf16.msra.mxu0 0
      %688 = vmatprep.mubr.bf16.mxu0 0
      %689 = vmatmul.mubr.bf16.gmra.mrb[0].mxu0 %v408
      %v690 = vpop.f32.mrb[0].mxu0
      %v691 = vadd.f32 0.0, %v690
      %v692 = vpop.f32.mrb[0].mxu0
      %v693 = vpop.f32.mrb[0].mxu0
      %v694 = vadd.f32 0.0, %v693
      %v695 = vpop.f32.mrb[0].mxu0
      %696 = vmatprep.mubr.bf16.mxu0 0
      %697 = vmatmul.mubr.bf16.gmra.mrb[0].mxu0 %v416
      %v698 = vpop.f32.mrb[0].mxu0
      %v699 = vadd.f32 0.0, %v698
      %v700 = vpop.f32.mrb[0].mxu0
      %v701 = vpop.f32.mrb[0].mxu0
      %v702 = vadd.f32 0.0, %v701
      %v703 = vpop.f32.mrb[0].mxu0
      %704 = vmatprep.mubr.bf16.mxu0 0
      %705 = vmatmul.mubr.bf16.gmra.mrb[0].mxu0 %v424
      %v706 = vpop.f32.mrb[0].mxu0
      %v707 = vadd.f32 0.0, %v706
      %v708 = vpop.f32.mrb[0].mxu0
      %v709 = vpop.f32.mrb[0].mxu0
      %v710 = vadd.f32 0.0, %v709
      %v711 = vpop.f32.mrb[0].mxu0
      %712 = vmatprep.mubr.bf16.mxu0 0
      %713 = vmatmul.mubr.bf16.gmra.mrb[0].mxu0 %v432
      %v714 = vpop.f32.mrb[0].mxu0
      %v715 = vadd.f32 0.0, %v714
      %v716 = vpop.f32.mrb[0].mxu0
      %v717 = vpop.f32.mrb[0].mxu0
      %v718 = vadd.f32 0.0, %v717
      %v719 = vpop.f32.mrb[0].mxu0
      %720 = vmatprep.mubr.bf16.mxu0 0
      %721 = vmatmul.mubr.bf16.gmra.mrb[0].mxu0 %v440
      %v722 = vpop.f32.mrb[0].mxu0
      %v723 = vadd.f32 0.0, %v722
      %v724 = vpop.f32.mrb[0].mxu0
      %v725 = vpop.f32.mrb[0].mxu0
      %v726 = vadd.f32 0.0, %v725
      %v727 = vpop.f32.mrb[0].mxu0
      %728 = vmatprep.mubr.bf16.mxu0 0
      %729 = vmatmul.mubr.bf16.gmra.mrb[0].mxu0 %v448
      %v730 = vpop.f32.mrb[0].mxu0
      %v731 = vadd.f32 0.0, %v730
      %v732 = vpop.f32.mrb[0].mxu0
      %v733 = vpop.f32.mrb[0].mxu0
      %v734 = vadd.f32 0.0, %v733
      %v735 = vpop.f32.mrb[0].mxu0
      %736 = vmatprep.mubr.bf16.mxu0 0
      %737 = vmatmul.mubr.bf16.gmra.mrb[0].mxu0 %v456
      %v738 = vpop.f32.mrb[0].mxu0
      %v739 = vadd.f32 0.0, %v738
      %v740 = vpop.f32.mrb[0].mxu0
      %v741 = vpop.f32.mrb[0].mxu0
      %v742 = vadd.f32 0.0, %v741
      %v743 = vpop.f32.mrb[0].mxu0
      %744 = vmatprep.mubr.bf16.mxu0 0
      %745 = vmatmul.mubr.bf16.gmra.mrb[0].mxu0 %v464
      %v746 = vpop.f32.mrb[0].mxu0
      %v747 = vadd.f32 0.0, %v746
      %v748 = vpop.f32.mrb[0].mxu0
      %v749 = vpop.f32.mrb[0].mxu0
      %v750 = vadd.f32 0.0, %v749
      %v751 = vpop.f32.mrb[0].mxu0
      %752 = vmatprep.mubr.bf16.mxu0 0
      %753 = vmatmul.mubr.bf16.gmra.mrb[0].mxu0 %v472
      %v754 = vpop.f32.mrb[0].mxu0
      %v755 = vadd.f32 0.0, %v754
      %v756 = vpop.f32.mrb[0].mxu0
      %v757 = vpop.f32.mrb[0].mxu0
      %v758 = vadd.f32 0.0, %v757
      %v759 = vpop.f32.mrb[0].mxu0
      %760 = vmatprep.mubr.bf16.mxu0 0
      %761 = vmatmul.mubr.bf16.gmra.mrb[0].mxu0 %v480
      %v762 = vpop.f32.mrb[0].mxu0
      %v763 = vadd.f32 0.0, %v762
      %v764 = vpop.f32.mrb[0].mxu0
      %v765 = vpop.f32.mrb[0].mxu0
      %v766 = vadd.f32 0.0, %v765
      %v767 = vpop.f32.mrb[0].mxu0
      %768 = vmatprep.mubr.bf16.mxu0 0
      %769 = vmatmul.mubr.bf16.gmra.mrb[0].mxu0 %v488
      %v770 = vpop.f32.mrb[0].mxu0
      %v771 = vadd.f32 0.0, %v770
      %v772 = vpop.f32.mrb[0].mxu0
      %v773 = vpop.f32.mrb[0].mxu0
      %v774 = vadd.f32 0.0, %v773
      %v775 = vpop.f32.mrb[0].mxu0
      %776 = vmatprep.mubr.bf16.mxu0 0
      %777 = vmatmul.mubr.bf16.gmra.mrb[0].mxu0 %v496
      %v778 = vpop.f32.mrb[0].mxu0
      %v779 = vadd.f32 0.0, %v778
      %v780 = vpop.f32.mrb[0].mxu0
      %v781 = vpop.f32.mrb[0].mxu0
      %v782 = vadd.f32 0.0, %v781
      %v783 = vpop.f32.mrb[0].mxu0
      %784 = vmatprep.mubr.bf16.mxu0 0
      %785 = vmatmul.mubr.bf16.gmra.mrb[0].mxu0 %v504
      %v786 = vpop.f32.mrb[0].mxu0
      %v787 = vadd.f32 0.0, %v786
      %v788 = vpop.f32.mrb[0].mxu0
      %v789 = vpop.f32.mrb[0].mxu0
      %v790 = vadd.f32 0.0, %v789
      %v791 = vpop.f32.mrb[0].mxu0
      %792 = vmatprep.mubr.bf16.mxu0 0
      %793 = vmatmul.mubr.bf16.gmra.mrb[0].mxu0 %v512
      %v794 = vpop.f32.mrb[0].mxu0
      %v795 = vadd.f32 0.0, %v794
      %v796 = vpop.f32.mrb[0].mxu0
      %v797 = vpop.f32.mrb[0].mxu0
      %v798 = vadd.f32 0.0, %v797
      %v799 = vpop.f32.mrb[0].mxu0
      %800 = vmatprep.mubr.bf16.mxu0 0
      %801 = vmatmul.mubr.bf16.gmra.mrb[0].mxu0 %v520
      %v802 = vpop.f32.mrb[0].mxu0
      %v803 = vadd.f32 0.0, %v802
      %v804 = vpop.f32.mrb[0].mxu0
      %v805 = vpop.f32.mrb[0].mxu0
      %v806 = vadd.f32 0.0, %v805
      %v807 = vpop.f32.mrb[0].mxu0
      %808 = vmatprep.mubr.bf16.mxu0 0
      %809 = vmatmul.mubr.bf16.gmra.mrb[0].mxu0 %v528
      %v810 = vpop.f32.mrb[0].mxu0
      %v811 = vadd.f32 0.0, %v810
      %v812 = vpop.f32.mrb[0].mxu0
      %v813 = vpop.f32.mrb[0].mxu0
      %v814 = vadd.f32 0.0, %v813
      %v815 = vpop.f32.mrb[0].mxu0
      %816 = vmatprep.mubr.bf16.mxu0 0
      %817 = vmatmul.mubr.bf16.gmra.mrb[0].mxu0 %v536
      %v818 = vpop.f32.mrb[0].mxu0
      %v819 = vadd.f32 0.0, %v818
      %v820 = vpop.f32.mrb[0].mxu0
      %v821 = vpop.f32.mrb[0].mxu0
      %v822 = vadd.f32 0.0, %v821
      %v823 = vpop.f32.mrb[0].mxu0
      %824 = vmatprep.mubr.bf16.mxu0 0
      %825 = vmatmul.mubr.bf16.gmra.mrb[0].mxu0 %v544
      %v826 = vpop.f32.mrb[0].mxu0
      %v827 = vadd.f32 0.0, %v826
      %v828 = vpop.f32.mrb[0].mxu0
      %v829 = vpop.f32.mrb[0].mxu0
      %v830 = vadd.f32 0.0, %v829
      %v831 = vpop.f32.mrb[0].mxu0
      %832 = vmatprep.mubr.bf16.mxu0 0
      %833 = vmatmul.mubr.bf16.gmra.mrb[0].mxu0 %v552
      %v834 = vpop.f32.mrb[0].mxu0
      %v835 = vadd.f32 0.0, %v834
      %v836 = vpop.f32.mrb[0].mxu0
      %v837 = vpop.f32.mrb[0].mxu0
      %v838 = vadd.f32 0.0, %v837
      %v839 = vpop.f32.mrb[0].mxu0
      %840 = vmatprep.mubr.bf16.mxu0 0
      %841 = vmatmul.mubr.bf16.gmra.mrb[0].mxu0 %v560
      %v842 = vpop.f32.mrb[0].mxu0
      %v843 = vadd.f32 0.0, %v842
      %v844 = vpop.f32.mrb[0].mxu0
      %v845 = vpop.f32.mrb[0].mxu0
      %v846 = vadd.f32 0.0, %v845
      %v847 = vpop.f32.mrb[0].mxu0
      %848 = vmatprep.mubr.bf16.mxu0 0
      %849 = vmatmul.mubr.bf16.gmra.mrb[0].mxu0 %v568
      %v850 = vpop.f32.mrb[0].mxu0
      %v851 = vadd.f32 0.0, %v850
      %v852 = vpop.f32.mrb[0].mxu0
      %v853 = vpop.f32.mrb[0].mxu0
      %v854 = vadd.f32 0.0, %v853
      %v855 = vpop.f32.mrb[0].mxu0
      %856 = vmatprep.mubr.bf16.mxu0 0
      %857 = vmatmul.mubr.bf16.gmra.mrb[0].mxu0 %v576
      %v858 = vpop.f32.mrb[0].mxu0
      %v859 = vadd.f32 0.0, %v858
      %v860 = vpop.f32.mrb[0].mxu0
      %v861 = vpop.f32.mrb[0].mxu0
      %v862 = vadd.f32 0.0, %v861
      %v863 = vpop.f32.mrb[0].mxu0
      %864 = vmatprep.mubr.bf16.mxu0 0
      %865 = vmatmul.mubr.bf16.gmra.mrb[0].mxu0 %v584
      %v866 = vpop.f32.mrb[0].mxu0
      %v867 = vadd.f32 0.0, %v866
      %v868 = vpop.f32.mrb[0].mxu0
      %v869 = vpop.f32.mrb[0].mxu0
      %v870 = vadd.f32 0.0, %v869
      %v871 = vpop.f32.mrb[0].mxu0
      %872 = vdwg.mxu0
      %v889 = vunpack.c.l.b16 %v363
      %v890 = vunpack.c.l.b16 %v364
      %v891 = vunpack.c.l.b16 %v365
      %v892 = vunpack.c.l.b16 %v366
      %v893 = vunpack.c.l.b16 %v367
      %v894 = vunpack.c.l.b16 %v368
      %v895 = vunpack.c.l.b16 %v369
      %v896 = vunpack.c.l.b16 %v370
      %v897 = vunpack.c.l.b16 %v371
      %v898 = vunpack.c.l.b16 %v372
      %v899 = vunpack.c.l.b16 %v373
      %v900 = vunpack.c.l.b16 %v374
      %v901 = vunpack.c.l.b16 %v375
      %v902 = vunpack.c.l.b16 %v376
      %v903 = vunpack.c.l.b16 %v377
      %v904 = vunpack.c.l.b16 %v378
      %v905 = vpack.c.b16 %v890, %v889
      %v906 = vpack.c.b16 %v892, %v891
      %v907 = vpack.c.b16 %v894, %v893
      %v908 = vpack.c.b16 %v896, %v895
      %v909 = vpack.c.b16 %v898, %v897
      %v910 = vpack.c.b16 %v900, %v899
      %v911 = vpack.c.b16 %v902, %v901
      %v912 = vpack.c.b16 %v904, %v903
      %921 = vmatprep.subr.bf16.mxu0 0
      %922 = vmatpush1.bf16.msra.mxu0 %v905
      %923 = vmatprep.subr.bf16.mxu0 0
      %924 = vmatpush1.bf16.msra.mxu0 %v906
      %925 = vmatprep.subr.bf16.mxu0 0
      %926 = vmatpush1.bf16.msra.mxu0 %v907
      %927 = vmatprep.subr.bf16.mxu0 0
      %928 = vmatpush1.bf16.msra.mxu0 %v908
      %929 = vmatprep.subr.bf16.mxu0 0
      %930 = vmatpush1.bf16.msra.mxu0 %v909
      %931 = vmatprep.subr.bf16.mxu0 0
      %932 = vmatpush1.bf16.msra.mxu0 %v910
      %933 = vmatprep.subr.bf16.mxu0 0
      %934 = vmatpush1.bf16.msra.mxu0 %v911
      %935 = vmatprep.subr.bf16.mxu0 0
      %936 = vmatpush1.bf16.msra.mxu0 %v912
      %937 = vmatprep.subr.bf16.mxu0 0
      %938 = vmatpush1.bf16.msra.mxu0 0
      %939 = vmatprep.subr.bf16.mxu0 0
      %940 = vmatpush1.bf16.msra.mxu0 0
      %941 = vmatprep.subr.bf16.mxu0 0
      %942 = vmatpush1.bf16.msra.mxu0 0
      %943 = vmatprep.subr.bf16.mxu0 0
      %944 = vmatpush1.bf16.msra.mxu0 0
      %945 = vmatprep.subr.bf16.mxu0 0
      %946 = vmatpush1.bf16.msra.mxu0 0
      %947 = vmatprep.subr.bf16.mxu0 0
      %948 = vmatpush1.bf16.msra.mxu0 0
      %949 = vmatprep.subr.bf16.mxu0 0
      %950 = vmatpush1.bf16.msra.mxu0 0
      %951 = vmatprep.subr.bf16.mxu0 0
      %952 = vmatpush1.bf16.msra.mxu0 0
      %953 = vmatprep.mubr.bf16.mxu0 0
      %954 = vmatmul.mubr.bf16.gmra.mrb[0].mxu0 %v340
      %v955 = vpop.f32.mrb[0].mxu0
      %v956 = vadd.f32 %v691, %v955
      %v957 = vpop.f32.mrb[0].mxu0
      %v958 = vpop.f32.mrb[0].mxu0
      %v959 = vadd.f32 %v694, %v958
      %v960 = vpop.f32.mrb[0].mxu0
      %961 = vmatprep.mubr.bf16.mxu0 0
      %962 = vmatmul.mubr.bf16.gmra.mrb[0].mxu0 %v341
      %v963 = vpop.f32.mrb[0].mxu0
      %v964 = vadd.f32 %v699, %v963
      %v965 = vpop.f32.mrb[0].mxu0
      %v966 = vpop.f32.mrb[0].mxu0
      %v967 = vadd.f32 %v702, %v966
      %v968 = vpop.f32.mrb[0].mxu0
      %969 = vmatprep.mubr.bf16.mxu0 0
      %970 = vmatmul.mubr.bf16.gmra.mrb[0].mxu0 %v342
      %v971 = vpop.f32.mrb[0].mxu0
      %v972 = vadd.f32 %v707, %v971
      %v973 = vpop.f32.mrb[0].mxu0
      %v974 = vpop.f32.mrb[0].mxu0
      %v975 = vadd.f32 %v710, %v974
      %v976 = vpop.f32.mrb[0].mxu0
      %977 = vmatprep.mubr.bf16.mxu0 0
      %978 = vmatmul.mubr.bf16.gmra.mrb[0].mxu0 %v343
      %v979 = vpop.f32.mrb[0].mxu0
      %v980 = vadd.f32 %v715, %v979
      %v981 = vpop.f32.mrb[0].mxu0
      %v982 = vpop.f32.mrb[0].mxu0
      %v983 = vadd.f32 %v718, %v982
      %v984 = vpop.f32.mrb[0].mxu0
      %985 = vmatprep.mubr.bf16.mxu0 0
      %986 = vmatmul.mubr.bf16.gmra.mrb[0].mxu0 %v344
      %v987 = vpop.f32.mrb[0].mxu0
      %v988 = vadd.f32 %v723, %v987
      %v989 = vpop.f32.mrb[0].mxu0
      %v990 = vpop.f32.mrb[0].mxu0
      %v991 = vadd.f32 %v726, %v990
      %v992 = vpop.f32.mrb[0].mxu0
      %993 = vmatprep.mubr.bf16.mxu0 0
      %994 = vmatmul.mubr.bf16.gmra.mrb[0].mxu0 %v345
      %v995 = vpop.f32.mrb[0].mxu0
      %v996 = vadd.f32 %v731, %v995
      %v997 = vpop.f32.mrb[0].mxu0
      %v998 = vpop.f32.mrb[0].mxu0
      %v999 = vadd.f32 %v734, %v998
      %v1000 = vpop.f32.mrb[0].mxu0
      %1001 = vmatprep.mubr.bf16.mxu0 0
      %1002 = vmatmul.mubr.bf16.gmra.mrb[0].mxu0 %v346
      %v1003 = vpop.f32.mrb[0].mxu0
      %v1004 = vadd.f32 %v739, %v1003
      %v1005 = vpop.f32.mrb[0].mxu0
      %v1006 = vpop.f32.mrb[0].mxu0
      %v1007 = vadd.f32 %v742, %v1006
      %v1008 = vpop.f32.mrb[0].mxu0
      %1009 = vmatprep.mubr.bf16.mxu0 0
      %1010 = vmatmul.mubr.bf16.gmra.mrb[0].mxu0 %v347
      %v1011 = vpop.f32.mrb[0].mxu0
      %v1012 = vadd.f32 %v747, %v1011
      %v1013 = vpop.f32.mrb[0].mxu0
      %v1014 = vpop.f32.mrb[0].mxu0
      %v1015 = vadd.f32 %v750, %v1014
      %v1016 = vpop.f32.mrb[0].mxu0
      %1017 = vmatprep.mubr.bf16.mxu0 0
      %1018 = vmatmul.mubr.bf16.gmra.mrb[0].mxu0 %v348
      %v1019 = vpop.f32.mrb[0].mxu0
      %v1020 = vadd.f32 %v755, %v1019
      %v1021 = vpop.f32.mrb[0].mxu0
      %v1022 = vpop.f32.mrb[0].mxu0
      %v1023 = vadd.f32 %v758, %v1022
      %v1024 = vpop.f32.mrb[0].mxu0
      %1025 = vmatprep.mubr.bf16.mxu0 0
      %1026 = vmatmul.mubr.bf16.gmra.mrb[0].mxu0 %v349
      %v1027 = vpop.f32.mrb[0].mxu0
      %v1028 = vadd.f32 %v763, %v1027
      %v1029 = vpop.f32.mrb[0].mxu0
      %v1030 = vpop.f32.mrb[0].mxu0
      %v1031 = vadd.f32 %v766, %v1030
      %v1032 = vpop.f32.mrb[0].mxu0
      %1033 = vmatprep.mubr.bf16.mxu0 0
      %1034 = vmatmul.mubr.bf16.gmra.mrb[0].mxu0 %v350
      %v1035 = vpop.f32.mrb[0].mxu0
      %v1036 = vadd.f32 %v771, %v1035
      %v1037 = vpop.f32.mrb[0].mxu0
      %v1038 = vpop.f32.mrb[0].mxu0
      %v1039 = vadd.f32 %v774, %v1038
      %v1040 = vpop.f32.mrb[0].mxu0
      %1041 = vmatprep.mubr.bf16.mxu0 0
      %1042 = vmatmul.mubr.bf16.gmra.mrb[0].mxu0 %v351
      %v1043 = vpop.f32.mrb[0].mxu0
      %v1044 = vadd.f32 %v779, %v1043
      %v1045 = vpop.f32.mrb[0].mxu0
      %v1046 = vpop.f32.mrb[0].mxu0
      %v1047 = vadd.f32 %v782, %v1046
      %v1048 = vpop.f32.mrb[0].mxu0
      %1049 = vmatprep.mubr.bf16.mxu0 0
      %1050 = vmatmul.mubr.bf16.gmra.mrb[0].mxu0 %v352
      %v1051 = vpop.f32.mrb[0].mxu0
      %v1052 = vadd.f32 %v787, %v1051
      %v1053 = vpop.f32.mrb[0].mxu0
      %v1054 = vpop.f32.mrb[0].mxu0
      %v1055 = vadd.f32 %v790, %v1054
      %v1056 = vpop.f32.mrb[0].mxu0
      %1057 = vmatprep.mubr.bf16.mxu0 0
      %1058 = vmatmul.mubr.bf16.gmra.mrb[0].mxu0 %v353
      %v1059 = vpop.f32.mrb[0].mxu0
      %v1060 = vadd.f32 %v795, %v1059
      %v1061 = vpop.f32.mrb[0].mxu0
      %v1062 = vpop.f32.mrb[0].mxu0
      %v1063 = vadd.f32 %v798, %v1062
      %v1064 = vpop.f32.mrb[0].mxu0
      %1065 = vmatprep.mubr.bf16.mxu0 0
      %1066 = vmatmul.mubr.bf16.gmra.mrb[0].mxu0 %v354
      %v1067 = vpop.f32.mrb[0].mxu0
      %v1068 = vadd.f32 %v803, %v1067
      %v1069 = vpop.f32.mrb[0].mxu0
      %v1070 = vpop.f32.mrb[0].mxu0
      %v1071 = vadd.f32 %v806, %v1070
      %v1072 = vpop.f32.mrb[0].mxu0
      %1073 = vmatprep.mubr.bf16.mxu0 0
      %1074 = vmatmul.mubr.bf16.gmra.mrb[0].mxu0 %v355
      %v1075 = vpop.f32.mrb[0].mxu0
      %v1076 = vadd.f32 %v811, %v1075
      %v1077 = vpop.f32.mrb[0].mxu0
      %v1078 = vpop.f32.mrb[0].mxu0
      %v1079 = vadd.f32 %v814, %v1078
      %v1080 = vpop.f32.mrb[0].mxu0
      %1081 = vmatprep.mubr.bf16.mxu0 0
      %1082 = vmatmul.mubr.bf16.gmra.mrb[0].mxu0 %v356
      %v1083 = vpop.f32.mrb[0].mxu0
      %v1084 = vadd.f32 %v819, %v1083
      %v1085 = vpop.f32.mrb[0].mxu0
      %v1086 = vpop.f32.mrb[0].mxu0
      %v1087 = vadd.f32 %v822, %v1086
      %v1088 = vpop.f32.mrb[0].mxu0
      %1089 = vmatprep.mubr.bf16.mxu0 0
      %1090 = vmatmul.mubr.bf16.gmra.mrb[0].mxu0 %v357
      %v1091 = vpop.f32.mrb[0].mxu0
      %v1092 = vadd.f32 %v827, %v1091
      %v1093 = vpop.f32.mrb[0].mxu0
      %v1094 = vpop.f32.mrb[0].mxu0
      %v1095 = vadd.f32 %v830, %v1094
      %v1096 = vpop.f32.mrb[0].mxu0
      %1097 = vmatprep.mubr.bf16.mxu0 0
      %1098 = vmatmul.mubr.bf16.gmra.mrb[0].mxu0 %v358
      %v1099 = vpop.f32.mrb[0].mxu0
      %v1100 = vadd.f32 %v835, %v1099
      %v1101 = vpop.f32.mrb[0].mxu0
      %v1102 = vpop.f32.mrb[0].mxu0
      %v1103 = vadd.f32 %v838, %v1102
      %v1104 = vpop.f32.mrb[0].mxu0
      %1105 = vmatprep.mubr.bf16.mxu0 0
      %1106 = vmatmul.mubr.bf16.gmra.mrb[0].mxu0 %v359
      %v1107 = vpop.f32.mrb[0].mxu0
      %v1108 = vadd.f32 %v843, %v1107
      %v1109 = vpop.f32.mrb[0].mxu0
      %v1110 = vpop.f32.mrb[0].mxu0
      %v1111 = vadd.f32 %v846, %v1110
      %v1112 = vpop.f32.mrb[0].mxu0
      %1113 = vmatprep.mubr.bf16.mxu0 0
      %1114 = vmatmul.mubr.bf16.gmra.mrb[0].mxu0 %v360
      %v1115 = vpop.f32.mrb[0].mxu0
      %v1116 = vadd.f32 %v851, %v1115
      %v1117 = vpop.f32.mrb[0].mxu0
      %v1118 = vpop.f32.mrb[0].mxu0
      %v1119 = vadd.f32 %v854, %v1118
      %v1120 = vpop.f32.mrb[0].mxu0
      %1121 = vmatprep.mubr.bf16.mxu0 0
      %1122 = vmatmul.mubr.bf16.gmra.mrb[0].mxu0 %v361
      %v1123 = vpop.f32.mrb[0].mxu0
      %v1124 = vadd.f32 %v859, %v1123
      %v1125 = vpop.f32.mrb[0].mxu0
      %v1126 = vpop.f32.mrb[0].mxu0
      %v1127 = vadd.f32 %v862, %v1126
      %v1128 = vpop.f32.mrb[0].mxu0
      %1129 = vmatprep.mubr.bf16.mxu0 0
      %1130 = vmatmul.mubr.bf16.gmra.mrb[0].mxu0 %v362
      %v1131 = vpop.f32.mrb[0].mxu0
      %v1132 = vadd.f32 %v867, %v1131
      %v1133 = vpop.f32.mrb[0].mxu0
      %v1134 = vpop.f32.mrb[0].mxu0
      %v1135 = vadd.f32 %v870, %v1134
      %v1136 = vpop.f32.mrb[0].mxu0
      %1137 = vdwg.mxu0
      %v1138 = vld [vmem:[%s334] sm:$0xfe]
      %v1139 = vld [vmem:[%s2 + $0x80] sm:$0xf]
      %v1140 = vld [vmem:[%s2 + $0x84] sm:$0xf]
      %v1141 = vld [vmem:[%s2 + $0x88] sm:$0xf]
      %v1142 = vld [vmem:[%s2 + $0x8c] sm:$0xf]
      %v1143 = vld [vmem:[%s2 + $0x90] sm:$0xf]
      %v1144 = vld [vmem:[%s2 + $0x94] sm:$0xf]
      %v1145 = vld [vmem:[%s2 + $0x98] sm:$0xf]
      %v1146 = vld [vmem:[%s2 + $0x9c] sm:$0xf]
      %v1147 = vld [vmem:[%s2 + $0xa0] sm:$0xf]
      %v1148 = vld [vmem:[%s2 + $0xa4] sm:$0xf]
      %v1149 = vld [vmem:[%s2 + $0xa8] sm:$0xf]
      %v1150 = vld [vmem:[%s2 + $0xac] sm:$0xf]
      %v1151 = vld [vmem:[%s2 + $0xb0] sm:$0xf]
      %v1152 = vld [vmem:[%s2 + $0xb4] sm:$0xf]
      %v1153 = vld [vmem:[%s2 + $0xb8] sm:$0xf]
      %v1154 = vld [vmem:[%s2 + $0xbc] sm:$0xf]
      %vm1179 = vcmask 1046528
      %v1180 = vrot.slane %v1138, 1
      %v1181 = vrot.slane %v341, 1
      %v1182 = vsel %vm1179, %v1180, %v1181
      %v1183 = vrot.slane %v342, 1
      %v1184 = vsel %vm1179, %v1181, %v1183
      %v1185 = vrot.slane %v343, 1
      %v1186 = vsel %vm1179, %v1183, %v1185
      %v1187 = vrot.slane %v344, 1
      %v1188 = vsel %vm1179, %v1185, %v1187
      %v1189 = vrot.slane %v345, 1
      %v1190 = vsel %vm1179, %v1187, %v1189
      %v1191 = vrot.slane %v346, 1
      %v1192 = vsel %vm1179, %v1189, %v1191
      %v1193 = vrot.slane %v347, 1
      %v1194 = vsel %vm1179, %v1191, %v1193
      %v1195 = vrot.slane %v348, 1
      %v1196 = vsel %vm1179, %v1193, %v1195
      %v1197 = vrot.slane %v349, 1
      %v1198 = vsel %vm1179, %v1195, %v1197
      %v1199 = vrot.slane %v350, 1
      %v1200 = vsel %vm1179, %v1197, %v1199
      %v1201 = vrot.slane %v351, 1
      %v1202 = vsel %vm1179, %v1199, %v1201
      %v1203 = vrot.slane %v352, 1
      %v1204 = vsel %vm1179, %v1201, %v1203
      %v1205 = vrot.slane %v353, 1
      %v1206 = vsel %vm1179, %v1203, %v1205
      %v1207 = vrot.slane %v354, 1
      %v1208 = vsel %vm1179, %v1205, %v1207
      %v1209 = vrot.slane %v355, 1
      %v1210 = vsel %vm1179, %v1207, %v1209
      %v1211 = vrot.slane %v356, 1
      %v1212 = vsel %vm1179, %v1209, %v1211
      %v1213 = vrot.slane %v357, 1
      %v1214 = vsel %vm1179, %v1211, %v1213
      %v1215 = vrot.slane %v358, 1
      %v1216 = vsel %vm1179, %v1213, %v1215
      %v1217 = vrot.slane %v359, 1
      %v1218 = vsel %vm1179, %v1215, %v1217
      %v1219 = vrot.slane %v360, 1
      %v1220 = vsel %vm1179, %v1217, %v1219
      %v1221 = vrot.slane %v361, 1
      %v1222 = vsel %vm1179, %v1219, %v1221
      %v1223 = vrot.slane %v362, 1
      %v1224 = vsel %vm1179, %v1221, %v1223
      %v1225 = vrot.slane %v379, 1
      %v1226 = vsel %vm1179, %v1223, %v1225
      %v1266 = vunpack.c.l.b16 %v1139
      %v1267 = vunpack.c.l.b16 %v1140
      %v1268 = vunpack.c.l.b16 %v1141
      %v1269 = vunpack.c.l.b16 %v1142
      %v1270 = vunpack.c.l.b16 %v1143
      %v1271 = vunpack.c.l.b16 %v1144
      %v1272 = vunpack.c.l.b16 %v1145
      %v1273 = vunpack.c.l.b16 %v1146
      %v1274 = vunpack.c.l.b16 %v1147
      %v1275 = vunpack.c.l.b16 %v1148
      %v1276 = vunpack.c.l.b16 %v1149
      %v1277 = vunpack.c.l.b16 %v1150
      %v1278 = vunpack.c.l.b16 %v1151
      %v1279 = vunpack.c.l.b16 %v1152
      %v1280 = vunpack.c.l.b16 %v1153
      %v1281 = vunpack.c.l.b16 %v1154
      %v1282 = vpack.c.b16 %v1267, %v1266
      %v1283 = vpack.c.b16 %v1269, %v1268
      %v1284 = vpack.c.b16 %v1271, %v1270
      %v1285 = vpack.c.b16 %v1273, %v1272
      %v1286 = vpack.c.b16 %v1275, %v1274
      %v1287 = vpack.c.b16 %v1277, %v1276
      %v1288 = vpack.c.b16 %v1279, %v1278
      %v1289 = vpack.c.b16 %v1281, %v1280
      %1298 = vmatprep.subr.bf16.mxu0 0
      %1299 = vmatpush1.bf16.msra.mxu0 %v1282
      %1300 = vmatprep.subr.bf16.mxu0 0
      %1301 = vmatpush1.bf16.msra.mxu0 %v1283
      %1302 = vmatprep.subr.bf16.mxu0 0
      %1303 = vmatpush1.bf16.msra.mxu0 %v1284
      %1304 = vmatprep.subr.bf16.mxu0 0
      %1305 = vmatpush1.bf16.msra.mxu0 %v1285
      %1306 = vmatprep.subr.bf16.mxu0 0
      %1307 = vmatpush1.bf16.msra.mxu0 %v1286
      %1308 = vmatprep.subr.bf16.mxu0 0
      %1309 = vmatpush1.bf16.msra.mxu0 %v1287
      %1310 = vmatprep.subr.bf16.mxu0 0
      %1311 = vmatpush1.bf16.msra.mxu0 %v1288
      %1312 = vmatprep.subr.bf16.mxu0 0
      %1313 = vmatpush1.bf16.msra.mxu0 %v1289
      %1314 = vmatprep.subr.bf16.mxu0 0
      %1315 = vmatpush1.bf16.msra.mxu0 0
      %1316 = vmatprep.subr.bf16.mxu0 0
      %1317 = vmatpush1.bf16.msra.mxu0 0
      %1318 = vmatprep.subr.bf16.mxu0 0
      %1319 = vmatpush1.bf16.msra.mxu0 0
      %1320 = vmatprep.subr.bf16.mxu0 0
      %1321 = vmatpush1.bf16.msra.mxu0 0
      %1322 = vmatprep.subr.bf16.mxu0 0
      %1323 = vmatpush1.bf16.msra.mxu0 0
      %1324 = vmatprep.subr.bf16.mxu0 0
      %1325 = vmatpush1.bf16.msra.mxu0 0
      %1326 = vmatprep.subr.bf16.mxu0 0
      %1327 = vmatpush1.bf16.msra.mxu0 0
      %1328 = vmatprep.subr.bf16.mxu0 0
      %1329 = vmatpush1.bf16.msra.mxu0 0
      %1330 = vmatprep.mubr.bf16.mxu0 0
      %1331 = vmatmul.mubr.bf16.gmra.mrb[0].mxu0 %v1182
      %v1332 = vpop.f32.mrb[0].mxu0
      %v1333 = vadd.f32 0.0, %v1332
      %v1334 = vpop.f32.mrb[0].mxu0
      %v1335 = vpop.f32.mrb[0].mxu0
      %v1336 = vadd.f32 0.0, %v1335
      %v1337 = vpop.f32.mrb[0].mxu0
      %1338 = vmatprep.mubr.bf16.mxu0 0
      %1339 = vmatmul.mubr.bf16.gmra.mrb[0].mxu0 %v1184
      %v1340 = vpop.f32.mrb[0].mxu0
      %v1341 = vadd.f32 0.0, %v1340
      %v1342 = vpop.f32.mrb[0].mxu0
      %v1343 = vpop.f32.mrb[0].mxu0
      %v1344 = vadd.f32 0.0, %v1343
      %v1345 = vpop.f32.mrb[0].mxu0
      %1346 = vmatprep.mubr.bf16.mxu0 0
      %1347 = vmatmul.mubr.bf16.gmra.mrb[0].mxu0 %v1186
      %v1348 = vpop.f32.mrb[0].mxu0
      %v1349 = vadd.f32 0.0, %v1348
      %v1350 = vpop.f32.mrb[0].mxu0
      %v1351 = vpop.f32.mrb[0].mxu0
      %v1352 = vadd.f32 0.0, %v1351
      %v1353 = vpop.f32.mrb[0].mxu0
      %1354 = vmatprep.mubr.bf16.mxu0 0
      %1355 = vmatmul.mubr.bf16.gmra.mrb[0].mxu0 %v1188
      %v1356 = vpop.f32.mrb[0].mxu0
      %v1357 = vadd.f32 0.0, %v1356
      %v1358 = vpop.f32.mrb[0].mxu0
      %v1359 = vpop.f32.mrb[0].mxu0
      %v1360 = vadd.f32 0.0, %v1359
      %v1361 = vpop.f32.mrb[0].mxu0
      %1362 = vmatprep.mubr.bf16.mxu0 0
      %1363 = vmatmul.mubr.bf16.gmra.mrb[0].mxu0 %v1190
      %v1364 = vpop.f32.mrb[0].mxu0
      %v1365 = vadd.f32 0.0, %v1364
      %v1366 = vpop.f32.mrb[0].mxu0
      %v1367 = vpop.f32.mrb[0].mxu0
      %v1368 = vadd.f32 0.0, %v1367
      %v1369 = vpop.f32.mrb[0].mxu0
      %1370 = vmatprep.mubr.bf16.mxu0 0
      %1371 = vmatmul.mubr.bf16.gmra.mrb[0].mxu0 %v1192
      %v1372 = vpop.f32.mrb[0].mxu0
      %v1373 = vadd.f32 0.0, %v1372
      %v1374 = vpop.f32.mrb[0].mxu0
      %v1375 = vpop.f32.mrb[0].mxu0
      %v1376 = vadd.f32 0.0, %v1375
      %v1377 = vpop.f32.mrb[0].mxu0
      %1378 = vmatprep.mubr.bf16.mxu0 0
      %1379 = vmatmul.mubr.bf16.gmra.mrb[0].mxu0 %v1194
      %v1380 = vpop.f32.mrb[0].mxu0
      %v1381 = vadd.f32 0.0, %v1380
      %v1382 = vpop.f32.mrb[0].mxu0
      %v1383 = vpop.f32.mrb[0].mxu0
      %v1384 = vadd.f32 0.0, %v1383
      %v1385 = vpop.f32.mrb[0].mxu0
      %1386 = vmatprep.mubr.bf16.mxu0 0
      %1387 = vmatmul.mubr.bf16.gmra.mrb[0].mxu0 %v1196
      %v1388 = vpop.f32.mrb[0].mxu0
      %v1389 = vadd.f32 0.0, %v1388
      %v1390 = vpop.f32.mrb[0].mxu0
      %v1391 = vpop.f32.mrb[0].mxu0
      %v1392 = vadd.f32 0.0, %v1391
      %v1393 = vpop.f32.mrb[0].mxu0
      %1394 = vmatprep.mubr.bf16.mxu0 0
      %1395 = vmatmul.mubr.bf16.gmra.mrb[0].mxu0 %v1198
      %v1396 = vpop.f32.mrb[0].mxu0
      %v1397 = vadd.f32 0.0, %v1396
      %v1398 = vpop.f32.mrb[0].mxu0
      %v1399 = vpop.f32.mrb[0].mxu0
      %v1400 = vadd.f32 0.0, %v1399
      %v1401 = vpop.f32.mrb[0].mxu0
      %1402 = vmatprep.mubr.bf16.mxu0 0
      %1403 = vmatmul.mubr.bf16.gmra.mrb[0].mxu0 %v1200
      %v1404 = vpop.f32.mrb[0].mxu0
      %v1405 = vadd.f32 0.0, %v1404
      %v1406 = vpop.f32.mrb[0].mxu0
      %v1407 = vpop.f32.mrb[0].mxu0
      %v1408 = vadd.f32 0.0, %v1407
      %v1409 = vpop.f32.mrb[0].mxu0
      %1410 = vmatprep.mubr.bf16.mxu0 0
      %1411 = vmatmul.mubr.bf16.gmra.mrb[0].mxu0 %v1202
      %v1412 = vpop.f32.mrb[0].mxu0
      %v1413 = vadd.f32 0.0, %v1412
      %v1414 = vpop.f32.mrb[0].mxu0
      %v1415 = vpop.f32.mrb[0].mxu0
      %v1416 = vadd.f32 0.0, %v1415
      %v1417 = vpop.f32.mrb[0].mxu0
      %1418 = vmatprep.mubr.bf16.mxu0 0
      %1419 = vmatmul.mubr.bf16.gmra.mrb[0].mxu0 %v1204
      %v1420 = vpop.f32.mrb[0].mxu0
      %v1421 = vadd.f32 0.0, %v1420
      %v1422 = vpop.f32.mrb[0].mxu0
      %v1423 = vpop.f32.mrb[0].mxu0
      %v1424 = vadd.f32 0.0, %v1423
      %v1425 = vpop.f32.mrb[0].mxu0
      %1426 = vmatprep.mubr.bf16.mxu0 0
      %1427 = vmatmul.mubr.bf16.gmra.mrb[0].mxu0 %v1206
      %v1428 = vpop.f32.mrb[0].mxu0
      %v1429 = vadd.f32 0.0, %v1428
      %v1430 = vpop.f32.mrb[0].mxu0
      %v1431 = vpop.f32.mrb[0].mxu0
      %v1432 = vadd.f32 0.0, %v1431
      %v1433 = vpop.f32.mrb[0].mxu0
      %1434 = vmatprep.mubr.bf16.mxu0 0
      %1435 = vmatmul.mubr.bf16.gmra.mrb[0].mxu0 %v1208
      %v1436 = vpop.f32.mrb[0].mxu0
      %v1437 = vadd.f32 0.0, %v1436
      %v1438 = vpop.f32.mrb[0].mxu0
      %v1439 = vpop.f32.mrb[0].mxu0
      %v1440 = vadd.f32 0.0, %v1439
      %v1441 = vpop.f32.mrb[0].mxu0
      %1442 = vmatprep.mubr.bf16.mxu0 0
      %1443 = vmatmul.mubr.bf16.gmra.mrb[0].mxu0 %v1210
      %v1444 = vpop.f32.mrb[0].mxu0
      %v1445 = vadd.f32 0.0, %v1444
      %v1446 = vpop.f32.mrb[0].mxu0
      %v1447 = vpop.f32.mrb[0].mxu0
      %v1448 = vadd.f32 0.0, %v1447
      %v1449 = vpop.f32.mrb[0].mxu0
      %1450 = vmatprep.mubr.bf16.mxu0 0
      %1451 = vmatmul.mubr.bf16.gmra.mrb[0].mxu0 %v1212
      %v1452 = vpop.f32.mrb[0].mxu0
      %v1453 = vadd.f32 0.0, %v1452
      %v1454 = vpop.f32.mrb[0].mxu0
      %v1455 = vpop.f32.mrb[0].mxu0
      %v1456 = vadd.f32 0.0, %v1455
      %v1457 = vpop.f32.mrb[0].mxu0
      %1458 = vmatprep.mubr.bf16.mxu0 0
      %1459 = vmatmul.mubr.bf16.gmra.mrb[0].mxu0 %v1214
      %v1460 = vpop.f32.mrb[0].mxu0
      %v1461 = vadd.f32 0.0, %v1460
      %v1462 = vpop.f32.mrb[0].mxu0
      %v1463 = vpop.f32.mrb[0].mxu0
      %v1464 = vadd.f32 0.0, %v1463
      %v1465 = vpop.f32.mrb[0].mxu0
      %1466 = vmatprep.mubr.bf16.mxu0 0
      %1467 = vmatmul.mubr.bf16.gmra.mrb[0].mxu0 %v1216
      %v1468 = vpop.f32.mrb[0].mxu0
      %v1469 = vadd.f32 0.0, %v1468
      %v1470 = vpop.f32.mrb[0].mxu0
      %v1471 = vpop.f32.mrb[0].mxu0
      %v1472 = vadd.f32 0.0, %v1471
      %v1473 = vpop.f32.mrb[0].mxu0
      %1474 = vmatprep.mubr.bf16.mxu0 0
      %1475 = vmatmul.mubr.bf16.gmra.mrb[0].mxu0 %v1218
      %v1476 = vpop.f32.mrb[0].mxu0
      %v1477 = vadd.f32 0.0, %v1476
      %v1478 = vpop.f32.mrb[0].mxu0
      %v1479 = vpop.f32.mrb[0].mxu0
      %v1480 = vadd.f32 0.0, %v1479
      %v1481 = vpop.f32.mrb[0].mxu0
      %1482 = vmatprep.mubr.bf16.mxu0 0
      %1483 = vmatmul.mubr.bf16.gmra.mrb[0].mxu0 %v1220
      %v1484 = vpop.f32.mrb[0].mxu0
      %v1485 = vadd.f32 0.0, %v1484
      %v1486 = vpop.f32.mrb[0].mxu0
      %v1487 = vpop.f32.mrb[0].mxu0
      %v1488 = vadd.f32 0.0, %v1487
      %v1489 = vpop.f32.mrb[0].mxu0
      %1490 = vmatprep.mubr.bf16.mxu0 0
      %1491 = vmatmul.mubr.bf16.gmra.mrb[0].mxu0 %v1222
      %v1492 = vpop.f32.mrb[0].mxu0
      %v1493 = vadd.f32 0.0, %v1492
      %v1494 = vpop.f32.mrb[0].mxu0
      %v1495 = vpop.f32.mrb[0].mxu0
      %v1496 = vadd.f32 0.0, %v1495
      %v1497 = vpop.f32.mrb[0].mxu0
      %1498 = vmatprep.mubr.bf16.mxu0 0
      %1499 = vmatmul.mubr.bf16.gmra.mrb[0].mxu0 %v1224
      %v1500 = vpop.f32.mrb[0].mxu0
      %v1501 = vadd.f32 0.0, %v1500
      %v1502 = vpop.f32.mrb[0].mxu0
      %v1503 = vpop.f32.mrb[0].mxu0
      %v1504 = vadd.f32 0.0, %v1503
      %v1505 = vpop.f32.mrb[0].mxu0
      %1506 = vmatprep.mubr.bf16.mxu0 0
      %1507 = vmatmul.mubr.bf16.gmra.mrb[0].mxu0 %v1226
      %v1508 = vpop.f32.mrb[0].mxu0
      %v1509 = vadd.f32 0.0, %v1508
      %v1510 = vpop.f32.mrb[0].mxu0
      %v1511 = vpop.f32.mrb[0].mxu0
      %v1512 = vadd.f32 0.0, %v1511
      %v1513 = vpop.f32.mrb[0].mxu0
      %1514 = vdwg.mxu0
      %v1515 = vadd.f32 %v956, %v1333
      %v1516 = vadd.f32 %v959, %v1336
      %v1517 = vadd.f32 %v964, %v1341
      %v1518 = vadd.f32 %v967, %v1344
      %v1519 = vadd.f32 %v972, %v1349
      %v1520 = vadd.f32 %v975, %v1352
      %v1521 = vadd.f32 %v980, %v1357
      %v1522 = vadd.f32 %v983, %v1360
      %v1523 = vadd.f32 %v988, %v1365
      %v1524 = vadd.f32 %v991, %v1368
      %v1525 = vadd.f32 %v996, %v1373
      %v1526 = vadd.f32 %v999, %v1376
      %v1527 = vadd.f32 %v1004, %v1381
      %v1528 = vadd.f32 %v1007, %v1384
      %v1529 = vadd.f32 %v1012, %v1389
      %v1530 = vadd.f32 %v1015, %v1392
      %v1531 = vadd.f32 %v1020, %v1397
      %v1532 = vadd.f32 %v1023, %v1400
      %v1533 = vadd.f32 %v1028, %v1405
      %v1534 = vadd.f32 %v1031, %v1408
      %v1535 = vadd.f32 %v1036, %v1413
      %v1536 = vadd.f32 %v1039, %v1416
      %v1537 = vadd.f32 %v1044, %v1421
      %v1538 = vadd.f32 %v1047, %v1424
      %v1539 = vadd.f32 %v1052, %v1429
      %v1540 = vadd.f32 %v1055, %v1432
      %v1541 = vadd.f32 %v1060, %v1437
      %v1542 = vadd.f32 %v1063, %v1440
      %v1543 = vadd.f32 %v1068, %v1445
      %v1544 = vadd.f32 %v1071, %v1448
      %v1545 = vadd.f32 %v1076, %v1453
      %v1546 = vadd.f32 %v1079, %v1456
      %v1547 = vadd.f32 %v1084, %v1461
      %v1548 = vadd.f32 %v1087, %v1464
      %v1549 = vadd.f32 %v1092, %v1469
      %v1550 = vadd.f32 %v1095, %v1472
      %v1551 = vadd.f32 %v1100, %v1477
      %v1552 = vadd.f32 %v1103, %v1480
      %v1553 = vadd.f32 %v1108, %v1485
      %v1554 = vadd.f32 %v1111, %v1488
      %v1555 = vadd.f32 %v1116, %v1493
      %v1556 = vadd.f32 %v1119, %v1496
      %v1557 = vadd.f32 %v1124, %v1501
      %v1558 = vadd.f32 %v1127, %v1504
      %v1559 = vadd.f32 %v1132, %v1509
      %v1560 = vadd.f32 %v1135, %v1512
      %v1561 = vld [vmem:[%s334 + $0x8] sm:$0xfc]
      %v1562 = vld [vmem:[%s334 + $0x10] sm:$0xff]
      %v1563 = vld [vmem:[%s334 + $0x18] sm:$0xff]
      %v1564 = vld [vmem:[%s334 + $0x20] sm:$0xff]
      %v1565 = vld [vmem:[%s334 + $0x28] sm:$0xff]
      %v1566 = vld [vmem:[%s334 + $0x30] sm:$0xff]
      %v1567 = vld [vmem:[%s334 + $0x38] sm:$0xff]
      %v1568 = vld [vmem:[%s334 + $0x40] sm:$0xff]
      %v1569 = vld [vmem:[%s334 + $0x48] sm:$0xff]
      %v1570 = vld [vmem:[%s334 + $0x50] sm:$0xff]
      %v1571 = vld [vmem:[%s334 + $0x58] sm:$0xff]
      %v1572 = vld [vmem:[%s334 + $0x60] sm:$0xff]
      %v1573 = vld [vmem:[%s334 + $0x68] sm:$0xff]
      %v1574 = vld [vmem:[%s334 + $0x70] sm:$0xff]
      %v1575 = vld [vmem:[%s334 + $0x78] sm:$0xff]
      %v1576 = vld [vmem:[%s334 + $0x80] sm:$0xff]
      %v1577 = vld [vmem:[%s334 + $0x88] sm:$0xff]
      %v1578 = vld [vmem:[%s334 + $0x90] sm:$0xff]
      %v1579 = vld [vmem:[%s334 + $0x98] sm:$0xff]
      %v1580 = vld [vmem:[%s334 + $0xa0] sm:$0xff]
      %v1581 = vld [vmem:[%s334 + $0xa8] sm:$0xff]
      %v1582 = vld [vmem:[%s334 + $0xb0] sm:$0xff]
      %v1583 = vld [vmem:[%s334 + $0xb8] sm:$0xff]
      %v1584 = vld [vmem:[%s334 + $0xc0] sm:$0x3]
      %v1585 = vld [vmem:[%s2 + $0xc0] sm:$0xf]
      %v1586 = vld [vmem:[%s2 + $0xc4] sm:$0xf]
      %v1587 = vld [vmem:[%s2 + $0xc8] sm:$0xf]
      %v1588 = vld [vmem:[%s2 + $0xcc] sm:$0xf]
      %v1589 = vld [vmem:[%s2 + $0xd0] sm:$0xf]
      %v1590 = vld [vmem:[%s2 + $0xd4] sm:$0xf]
      %v1591 = vld [vmem:[%s2 + $0xd8] sm:$0xf]
      %v1592 = vld [vmem:[%s2 + $0xdc] sm:$0xf]
      %v1593 = vld [vmem:[%s2 + $0xe0] sm:$0xf]
      %v1594 = vld [vmem:[%s2 + $0xe4] sm:$0xf]
      %v1595 = vld [vmem:[%s2 + $0xe8] sm:$0xf]
      %v1596 = vld [vmem:[%s2 + $0xec] sm:$0xf]
      %v1597 = vld [vmem:[%s2 + $0xf0] sm:$0xf]
      %v1598 = vld [vmem:[%s2 + $0xf4] sm:$0xf]
      %v1599 = vld [vmem:[%s2 + $0xf8] sm:$0xf]
      %v1600 = vld [vmem:[%s2 + $0xfc] sm:$0xf]
      %vm1625 = vcmask 1045504
      %v1626 = vrot.slane %v1561, 2
      %v1627 = vrot.slane %v1562, 2
      %v1628 = vsel %vm1625, %v1626, %v1627
      %v1629 = vrot.slane %v1563, 2
      %v1630 = vsel %vm1625, %v1627, %v1629
      %v1631 = vrot.slane %v1564, 2
      %v1632 = vsel %vm1625, %v1629, %v1631
      %v1633 = vrot.slane %v1565, 2
      %v1634 = vsel %vm1625, %v1631, %v1633
      %v1635 = vrot.slane %v1566, 2
      %v1636 = vsel %vm1625, %v1633, %v1635
      %v1637 = vrot.slane %v1567, 2
      %v1638 = vsel %vm1625, %v1635, %v1637
      %v1639 = vrot.slane %v1568, 2
      %v1640 = vsel %vm1625, %v1637, %v1639
      %v1641 = vrot.slane %v1569, 2
      %v1642 = vsel %vm1625, %v1639, %v1641
      %v1643 = vrot.slane %v1570, 2
      %v1644 = vsel %vm1625, %v1641, %v1643
      %v1645 = vrot.slane %v1571, 2
      %v1646 = vsel %vm1625, %v1643, %v1645
      %v1647 = vrot.slane %v1572, 2
      %v1648 = vsel %vm1625, %v1645, %v1647
      %v1649 = vrot.slane %v1573, 2
      %v1650 = vsel %vm1625, %v1647, %v1649
      %v1651 = vrot.slane %v1574, 2
      %v1652 = vsel %vm1625, %v1649, %v1651
      %v1653 = vrot.slane %v1575, 2
      %v1654 = vsel %vm1625, %v1651, %v1653
      %v1655 = vrot.slane %v1576, 2
      %v1656 = vsel %vm1625, %v1653, %v1655
      %v1657 = vrot.slane %v1577, 2
      %v1658 = vsel %vm1625, %v1655, %v1657
      %v1659 = vrot.slane %v1578, 2
      %v1660 = vsel %vm1625, %v1657, %v1659
      %v1661 = vrot.slane %v1579, 2
      %v1662 = vsel %vm1625, %v1659, %v1661
      %v1663 = vrot.slane %v1580, 2
      %v1664 = vsel %vm1625, %v1661, %v1663
      %v1665 = vrot.slane %v1581, 2
      %v1666 = vsel %vm1625, %v1663, %v1665
      %v1667 = vrot.slane %v1582, 2
      %v1668 = vsel %vm1625, %v1665, %v1667
      %v1669 = vrot.slane %v1583, 2
      %v1670 = vsel %vm1625, %v1667, %v1669
      %v1671 = vrot.slane %v1584, 2
      %v1672 = vsel %vm1625, %v1669, %v1671
      %v1712 = vunpack.c.l.b16 %v1585
      %v1713 = vunpack.c.l.b16 %v1586
      %v1714 = vunpack.c.l.b16 %v1587
      %v1715 = vunpack.c.l.b16 %v1588
      %v1716 = vunpack.c.l.b16 %v1589
      %v1717 = vunpack.c.l.b16 %v1590
      %v1718 = vunpack.c.l.b16 %v1591
      %v1719 = vunpack.c.l.b16 %v1592
      %v1720 = vunpack.c.l.b16 %v1593
      %v1721 = vunpack.c.l.b16 %v1594
      %v1722 = vunpack.c.l.b16 %v1595
      %v1723 = vunpack.c.l.b16 %v1596
      %v1724 = vunpack.c.l.b16 %v1597
      %v1725 = vunpack.c.l.b16 %v1598
      %v1726 = vunpack.c.l.b16 %v1599
      %v1727 = vunpack.c.l.b16 %v1600
      %v1728 = vpack.c.b16 %v1713, %v1712
      %v1729 = vpack.c.b16 %v1715, %v1714
      %v1730 = vpack.c.b16 %v1717, %v1716
      %v1731 = vpack.c.b16 %v1719, %v1718
      %v1732 = vpack.c.b16 %v1721, %v1720
      %v1733 = vpack.c.b16 %v1723, %v1722
      %v1734 = vpack.c.b16 %v1725, %v1724
      %v1735 = vpack.c.b16 %v1727, %v1726
      %1744 = vmatprep.subr.bf16.mxu0 0
      %1745 = vmatpush1.bf16.msra.mxu0 %v1728
      %1746 = vmatprep.subr.bf16.mxu0 0
      %1747 = vmatpush1.bf16.msra.mxu0 %v1729
      %1748 = vmatprep.subr.bf16.mxu0 0
      %1749 = vmatpush1.bf16.msra.mxu0 %v1730
      %1750 = vmatprep.subr.bf16.mxu0 0
      %1751 = vmatpush1.bf16.msra.mxu0 %v1731
      %1752 = vmatprep.subr.bf16.mxu0 0
      %1753 = vmatpush1.bf16.msra.mxu0 %v1732
      %1754 = vmatprep.subr.bf16.mxu0 0
      %1755 = vmatpush1.bf16.msra.mxu0 %v1733
      %1756 = vmatprep.subr.bf16.mxu0 0
      %1757 = vmatpush1.bf16.msra.mxu0 %v1734
      %1758 = vmatprep.subr.bf16.mxu0 0
      %1759 = vmatpush1.bf16.msra.mxu0 %v1735
      %1760 = vmatprep.subr.bf16.mxu0 0
      %1761 = vmatpush1.bf16.msra.mxu0 0
      %1762 = vmatprep.subr.bf16.mxu0 0
      %1763 = vmatpush1.bf16.msra.mxu0 0
      %1764 = vmatprep.subr.bf16.mxu0 0
      %1765 = vmatpush1.bf16.msra.mxu0 0
      %1766 = vmatprep.subr.bf16.mxu0 0
      %1767 = vmatpush1.bf16.msra.mxu0 0
      %1768 = vmatprep.subr.bf16.mxu0 0
      %1769 = vmatpush1.bf16.msra.mxu0 0
      %1770 = vmatprep.subr.bf16.mxu0 0
      %1771 = vmatpush1.bf16.msra.mxu0 0
      %1772 = vmatprep.subr.bf16.mxu0 0
      %1773 = vmatpush1.bf16.msra.mxu0 0
      %1774 = vmatprep.subr.bf16.mxu0 0
      %1775 = vmatpush1.bf16.msra.mxu0 0
      %1776 = vmatprep.mubr.bf16.mxu0 0
      %1777 = vmatmul.mubr.bf16.gmra.mrb[0].mxu0 %v1628
      %v1778 = vpop.f32.mrb[0].mxu0
      %v1779 = vadd.f32 0.0, %v1778
      %v1780 = vpop.f32.mrb[0].mxu0
      %v1781 = vpop.f32.mrb[0].mxu0
      %v1782 = vadd.f32 0.0, %v1781
      %v1783 = vpop.f32.mrb[0].mxu0
      %1784 = vmatprep.mubr.bf16.mxu0 0
      %1785 = vmatmul.mubr.bf16.gmra.mrb[0].mxu0 %v1630
      %v1786 = vpop.f32.mrb[0].mxu0
      %v1787 = vadd.f32 0.0, %v1786
      %v1788 = vpop.f32.mrb[0].mxu0
      %v1789 = vpop.f32.mrb[0].mxu0
      %v1790 = vadd.f32 0.0, %v1789
      %v1791 = vpop.f32.mrb[0].mxu0
      %1792 = vmatprep.mubr.bf16.mxu0 0
      %1793 = vmatmul.mubr.bf16.gmra.mrb[0].mxu0 %v1632
      %v1794 = vpop.f32.mrb[0].mxu0
      %v1795 = vadd.f32 0.0, %v1794
      %v1796 = vpop.f32.mrb[0].mxu0
      %v1797 = vpop.f32.mrb[0].mxu0
      %v1798 = vadd.f32 0.0, %v1797
      %v1799 = vpop.f32.mrb[0].mxu0
      %1800 = vmatprep.mubr.bf16.mxu0 0
      %1801 = vmatmul.mubr.bf16.gmra.mrb[0].mxu0 %v1634
      %v1802 = vpop.f32.mrb[0].mxu0
      %v1803 = vadd.f32 0.0, %v1802
      %v1804 = vpop.f32.mrb[0].mxu0
      %v1805 = vpop.f32.mrb[0].mxu0
      %v1806 = vadd.f32 0.0, %v1805
      %v1807 = vpop.f32.mrb[0].mxu0
      %1808 = vmatprep.mubr.bf16.mxu0 0
      %1809 = vmatmul.mubr.bf16.gmra.mrb[0].mxu0 %v1636
      %v1810 = vpop.f32.mrb[0].mxu0
      %v1811 = vadd.f32 0.0, %v1810
      %v1812 = vpop.f32.mrb[0].mxu0
      %v1813 = vpop.f32.mrb[0].mxu0
      %v1814 = vadd.f32 0.0, %v1813
      %v1815 = vpop.f32.mrb[0].mxu0
      %1816 = vmatprep.mubr.bf16.mxu0 0
      %1817 = vmatmul.mubr.bf16.gmra.mrb[0].mxu0 %v1638
      %v1818 = vpop.f32.mrb[0].mxu0
      %v1819 = vadd.f32 0.0, %v1818
      %v1820 = vpop.f32.mrb[0].mxu0
      %v1821 = vpop.f32.mrb[0].mxu0
      %v1822 = vadd.f32 0.0, %v1821
      %v1823 = vpop.f32.mrb[0].mxu0
      %1824 = vmatprep.mubr.bf16.mxu0 0
      %1825 = vmatmul.mubr.bf16.gmra.mrb[0].mxu0 %v1640
      %v1826 = vpop.f32.mrb[0].mxu0
      %v1827 = vadd.f32 0.0, %v1826
      %v1828 = vpop.f32.mrb[0].mxu0
      %v1829 = vpop.f32.mrb[0].mxu0
      %v1830 = vadd.f32 0.0, %v1829
      %v1831 = vpop.f32.mrb[0].mxu0
      %1832 = vmatprep.mubr.bf16.mxu0 0
      %1833 = vmatmul.mubr.bf16.gmra.mrb[0].mxu0 %v1642
      %v1834 = vpop.f32.mrb[0].mxu0
      %v1835 = vadd.f32 0.0, %v1834
      %v1836 = vpop.f32.mrb[0].mxu0
      %v1837 = vpop.f32.mrb[0].mxu0
      %v1838 = vadd.f32 0.0, %v1837
      %v1839 = vpop.f32.mrb[0].mxu0
      %1840 = vmatprep.mubr.bf16.mxu0 0
      %1841 = vmatmul.mubr.bf16.gmra.mrb[0].mxu0 %v1644
      %v1842 = vpop.f32.mrb[0].mxu0
      %v1843 = vadd.f32 0.0, %v1842
      %v1844 = vpop.f32.mrb[0].mxu0
      %v1845 = vpop.f32.mrb[0].mxu0
      %v1846 = vadd.f32 0.0, %v1845
      %v1847 = vpop.f32.mrb[0].mxu0
      %1848 = vmatprep.mubr.bf16.mxu0 0
      %1849 = vmatmul.mubr.bf16.gmra.mrb[0].mxu0 %v1646
      %v1850 = vpop.f32.mrb[0].mxu0
      %v1851 = vadd.f32 0.0, %v1850
      %v1852 = vpop.f32.mrb[0].mxu0
      %v1853 = vpop.f32.mrb[0].mxu0
      %v1854 = vadd.f32 0.0, %v1853
      %v1855 = vpop.f32.mrb[0].mxu0
      %1856 = vmatprep.mubr.bf16.mxu0 0
      %1857 = vmatmul.mubr.bf16.gmra.mrb[0].mxu0 %v1648
      %v1858 = vpop.f32.mrb[0].mxu0
      %v1859 = vadd.f32 0.0, %v1858
      %v1860 = vpop.f32.mrb[0].mxu0
      %v1861 = vpop.f32.mrb[0].mxu0
      %v1862 = vadd.f32 0.0, %v1861
      %v1863 = vpop.f32.mrb[0].mxu0
      %1864 = vmatprep.mubr.bf16.mxu0 0
      %1865 = vmatmul.mubr.bf16.gmra.mrb[0].mxu0 %v1650
      %v1866 = vpop.f32.mrb[0].mxu0
      %v1867 = vadd.f32 0.0, %v1866
      %v1868 = vpop.f32.mrb[0].mxu0
      %v1869 = vpop.f32.mrb[0].mxu0
      %v1870 = vadd.f32 0.0, %v1869
      %v1871 = vpop.f32.mrb[0].mxu0
      %1872 = vmatprep.mubr.bf16.mxu0 0
      %1873 = vmatmul.mubr.bf16.gmra.mrb[0].mxu0 %v1652
      %v1874 = vpop.f32.mrb[0].mxu0
      %v1875 = vadd.f32 0.0, %v1874
      %v1876 = vpop.f32.mrb[0].mxu0
      %v1877 = vpop.f32.mrb[0].mxu0
      %v1878 = vadd.f32 0.0, %v1877
      %v1879 = vpop.f32.mrb[0].mxu0
      %1880 = vmatprep.mubr.bf16.mxu0 0
      %1881 = vmatmul.mubr.bf16.gmra.mrb[0].mxu0 %v1654
      %v1882 = vpop.f32.mrb[0].mxu0
      %v1883 = vadd.f32 0.0, %v1882
      %v1884 = vpop.f32.mrb[0].mxu0
      %v1885 = vpop.f32.mrb[0].mxu0
      %v1886 = vadd.f32 0.0, %v1885
      %v1887 = vpop.f32.mrb[0].mxu0
      %1888 = vmatprep.mubr.bf16.mxu0 0
      %1889 = vmatmul.mubr.bf16.gmra.mrb[0].mxu0 %v1656
      %v1890 = vpop.f32.mrb[0].mxu0
      %v1891 = vadd.f32 0.0, %v1890
      %v1892 = vpop.f32.mrb[0].mxu0
      %v1893 = vpop.f32.mrb[0].mxu0
      %v1894 = vadd.f32 0.0, %v1893
      %v1895 = vpop.f32.mrb[0].mxu0
      %1896 = vmatprep.mubr.bf16.mxu0 0
      %1897 = vmatmul.mubr.bf16.gmra.mrb[0].mxu0 %v1658
      %v1898 = vpop.f32.mrb[0].mxu0
      %v1899 = vadd.f32 0.0, %v1898
      %v1900 = vpop.f32.mrb[0].mxu0
      %v1901 = vpop.f32.mrb[0].mxu0
      %v1902 = vadd.f32 0.0, %v1901
      %v1903 = vpop.f32.mrb[0].mxu0
      %1904 = vmatprep.mubr.bf16.mxu0 0
      %1905 = vmatmul.mubr.bf16.gmra.mrb[0].mxu0 %v1660
      %v1906 = vpop.f32.mrb[0].mxu0
      %v1907 = vadd.f32 0.0, %v1906
      %v1908 = vpop.f32.mrb[0].mxu0
      %v1909 = vpop.f32.mrb[0].mxu0
      %v1910 = vadd.f32 0.0, %v1909
      %v1911 = vpop.f32.mrb[0].mxu0
      %1912 = vmatprep.mubr.bf16.mxu0 0
      %1913 = vmatmul.mubr.bf16.gmra.mrb[0].mxu0 %v1662
      %v1914 = vpop.f32.mrb[0].mxu0
      %v1915 = vadd.f32 0.0, %v1914
      %v1916 = vpop.f32.mrb[0].mxu0
      %v1917 = vpop.f32.mrb[0].mxu0
      %v1918 = vadd.f32 0.0, %v1917
      %v1919 = vpop.f32.mrb[0].mxu0
      %1920 = vmatprep.mubr.bf16.mxu0 0
      %1921 = vmatmul.mubr.bf16.gmra.mrb[0].mxu0 %v1664
      %v1922 = vpop.f32.mrb[0].mxu0
      %v1923 = vadd.f32 0.0, %v1922
      %v1924 = vpop.f32.mrb[0].mxu0
      %v1925 = vpop.f32.mrb[0].mxu0
      %v1926 = vadd.f32 0.0, %v1925
      %v1927 = vpop.f32.mrb[0].mxu0
      %1928 = vmatprep.mubr.bf16.mxu0 0
      %1929 = vmatmul.mubr.bf16.gmra.mrb[0].mxu0 %v1666
      %v1930 = vpop.f32.mrb[0].mxu0
      %v1931 = vadd.f32 0.0, %v1930
      %v1932 = vpop.f32.mrb[0].mxu0
      %v1933 = vpop.f32.mrb[0].mxu0
      %v1934 = vadd.f32 0.0, %v1933
      %v1935 = vpop.f32.mrb[0].mxu0
      %1936 = vmatprep.mubr.bf16.mxu0 0
      %1937 = vmatmul.mubr.bf16.gmra.mrb[0].mxu0 %v1668
      %v1938 = vpop.f32.mrb[0].mxu0
      %v1939 = vadd.f32 0.0, %v1938
      %v1940 = vpop.f32.mrb[0].mxu0
      %v1941 = vpop.f32.mrb[0].mxu0
      %v1942 = vadd.f32 0.0, %v1941
      %v1943 = vpop.f32.mrb[0].mxu0
      %1944 = vmatprep.mubr.bf16.mxu0 0
      %1945 = vmatmul.mubr.bf16.gmra.mrb[0].mxu0 %v1670
      %v1946 = vpop.f32.mrb[0].mxu0
      %v1947 = vadd.f32 0.0, %v1946
      %v1948 = vpop.f32.mrb[0].mxu0
      %v1949 = vpop.f32.mrb[0].mxu0
      %v1950 = vadd.f32 0.0, %v1949
      %v1951 = vpop.f32.mrb[0].mxu0
      %1952 = vmatprep.mubr.bf16.mxu0 0
      %1953 = vmatmul.mubr.bf16.gmra.mrb[0].mxu0 %v1672
      %v1954 = vpop.f32.mrb[0].mxu0
      %v1955 = vadd.f32 0.0, %v1954
      %v1956 = vpop.f32.mrb[0].mxu0
      %v1957 = vpop.f32.mrb[0].mxu0
      %v1958 = vadd.f32 0.0, %v1957
      %v1959 = vpop.f32.mrb[0].mxu0
      %1960 = vdwg.mxu0
      %v1961 = vadd.f32 %v1515, %v1779
      %v1962 = vadd.f32 %v1516, %v1782
      %v1963 = vadd.f32 %v1517, %v1787
      %v1964 = vadd.f32 %v1518, %v1790
      %v1965 = vadd.f32 %v1519, %v1795
      %v1966 = vadd.f32 %v1520, %v1798
      %v1967 = vadd.f32 %v1521, %v1803
      %v1968 = vadd.f32 %v1522, %v1806
      %v1969 = vadd.f32 %v1523, %v1811
      %v1970 = vadd.f32 %v1524, %v1814
      %v1971 = vadd.f32 %v1525, %v1819
      %v1972 = vadd.f32 %v1526, %v1822
      %v1973 = vadd.f32 %v1527, %v1827
      %v1974 = vadd.f32 %v1528, %v1830
      %v1975 = vadd.f32 %v1529, %v1835
      %v1976 = vadd.f32 %v1530, %v1838
      %v1977 = vadd.f32 %v1531, %v1843
      %v1978 = vadd.f32 %v1532, %v1846
      %v1979 = vadd.f32 %v1533, %v1851
      %v1980 = vadd.f32 %v1534, %v1854
      %v1981 = vadd.f32 %v1535, %v1859
      %v1982 = vadd.f32 %v1536, %v1862
      %v1983 = vadd.f32 %v1537, %v1867
      %v1984 = vadd.f32 %v1538, %v1870
      %v1985 = vadd.f32 %v1539, %v1875
      %v1986 = vadd.f32 %v1540, %v1878
      %v1987 = vadd.f32 %v1541, %v1883
      %v1988 = vadd.f32 %v1542, %v1886
      %v1989 = vadd.f32 %v1543, %v1891
      %v1990 = vadd.f32 %v1544, %v1894
      %v1991 = vadd.f32 %v1545, %v1899
      %v1992 = vadd.f32 %v1546, %v1902
      %v1993 = vadd.f32 %v1547, %v1907
      %v1994 = vadd.f32 %v1548, %v1910
      %v1995 = vadd.f32 %v1549, %v1915
      %v1996 = vadd.f32 %v1550, %v1918
      %v1997 = vadd.f32 %v1551, %v1923
      %v1998 = vadd.f32 %v1552, %v1926
      %v1999 = vadd.f32 %v1553, %v1931
      %v2000 = vadd.f32 %v1554, %v1934
      %v2001 = vadd.f32 %v1555, %v1939
      %v2002 = vadd.f32 %v1556, %v1942
      %v2003 = vadd.f32 %v1557, %v1947
      %v2004 = vadd.f32 %v1558, %v1950
      %v2005 = vadd.f32 %v1559, %v1955
      %v2006 = vadd.f32 %v1560, %v1958
      %v2007 = vld [vmem:[%s334 + $0xc0] sm:$0x7]
      %v2008 = vld [vmem:[%s2 + $0x100] sm:$0xf]
      %v2009 = vld [vmem:[%s2 + $0x104] sm:$0xf]
      %v2010 = vld [vmem:[%s2 + $0x108] sm:$0xf]
      %v2011 = vld [vmem:[%s2 + $0x10c] sm:$0xf]
      %v2012 = vld [vmem:[%s2 + $0x110] sm:$0xf]
      %v2013 = vld [vmem:[%s2 + $0x114] sm:$0xf]
      %v2014 = vld [vmem:[%s2 + $0x118] sm:$0xf]
      %v2015 = vld [vmem:[%s2 + $0x11c] sm:$0xf]
      %v2016 = vld [vmem:[%s2 + $0x120] sm:$0xf]
      %v2017 = vld [vmem:[%s2 + $0x124] sm:$0xf]
      %v2018 = vld [vmem:[%s2 + $0x128] sm:$0xf]
      %v2019 = vld [vmem:[%s2 + $0x12c] sm:$0xf]
      %v2020 = vld [vmem:[%s2 + $0x130] sm:$0xf]
      %v2021 = vld [vmem:[%s2 + $0x134] sm:$0xf]
      %v2022 = vld [vmem:[%s2 + $0x138] sm:$0xf]
      %v2023 = vld [vmem:[%s2 + $0x13c] sm:$0xf]
      %vm2024 = vsmask.f32 5376
      %v2026 = vshrl.u32 %v1561, 16
      %v2028 = vrot.slane %v2026, 2
      %v2029 = vshll.u32 %v1561, 16
      %v2031 = vrot.slane %v2029, 3
      %v2032 = vor.u32 %v2028, %v2031
      %v2034 = vshrl.u32 %v1562, 16
      %v2036 = vrot.slane %v2034, 2
      %v2037 = vshll.u32 %v1562, 16
      %v2039 = vrot.slane %v2037, 3
      %v2040 = vor.u32 %v2036, %v2039
      %v2041 = vsel %vm2024, %v2032, %v2040
      %v2043 = vshrl.u32 %v1563, 16
      %v2045 = vrot.slane %v2043, 2
      %v2046 = vshll.u32 %v1563, 16
      %v2048 = vrot.slane %v2046, 3
      %v2049 = vor.u32 %v2045, %v2048
      %v2050 = vsel %vm2024, %v2040, %v2049
      %v2052 = vshrl.u32 %v1564, 16
      %v2054 = vrot.slane %v2052, 2
      %v2055 = vshll.u32 %v1564, 16
      %v2057 = vrot.slane %v2055, 3
      %v2058 = vor.u32 %v2054, %v2057
      %v2059 = vsel %vm2024, %v2049, %v2058
      %v2061 = vshrl.u32 %v1565, 16
      %v2063 = vrot.slane %v2061, 2
      %v2064 = vshll.u32 %v1565, 16
      %v2066 = vrot.slane %v2064, 3
      %v2067 = vor.u32 %v2063, %v2066
      %v2068 = vsel %vm2024, %v2058, %v2067
      %v2070 = vshrl.u32 %v1566, 16
      %v2072 = vrot.slane %v2070, 2
      %v2073 = vshll.u32 %v1566, 16
      %v2075 = vrot.slane %v2073, 3
      %v2076 = vor.u32 %v2072, %v2075
      %v2077 = vsel %vm2024, %v2067, %v2076
      %v2079 = vshrl.u32 %v1567, 16
      %v2081 = vrot.slane %v2079, 2
      %v2082 = vshll.u32 %v1567, 16
      %v2084 = vrot.slane %v2082, 3
      %v2085 = vor.u32 %v2081, %v2084
      %v2086 = vsel %vm2024, %v2076, %v2085
      %v2088 = vshrl.u32 %v1568, 16
      %v2090 = vrot.slane %v2088, 2
      %v2091 = vshll.u32 %v1568, 16
      %v2093 = vrot.slane %v2091, 3
      %v2094 = vor.u32 %v2090, %v2093
      %v2095 = vsel %vm2024, %v2085, %v2094
      %v2097 = vshrl.u32 %v1569, 16
      %v2099 = vrot.slane %v2097, 2
      %v2100 = vshll.u32 %v1569, 16
      %v2102 = vrot.slane %v2100, 3
      %v2103 = vor.u32 %v2099, %v2102
      %v2104 = vsel %vm2024, %v2094, %v2103
      %v2106 = vshrl.u32 %v1570, 16
      %v2108 = vrot.slane %v2106, 2
      %v2109 = vshll.u32 %v1570, 16
      %v2111 = vrot.slane %v2109, 3
      %v2112 = vor.u32 %v2108, %v2111
      %v2113 = vsel %vm2024, %v2103, %v2112
      %v2115 = vshrl.u32 %v1571, 16
      %v2117 = vrot.slane %v2115, 2
      %v2118 = vshll.u32 %v1571, 16
      %v2120 = vrot.slane %v2118, 3
      %v2121 = vor.u32 %v2117, %v2120
      %v2122 = vsel %vm2024, %v2112, %v2121
      %v2124 = vshrl.u32 %v1572, 16
      %v2126 = vrot.slane %v2124, 2
      %v2127 = vshll.u32 %v1572, 16
      %v2129 = vrot.slane %v2127, 3
      %v2130 = vor.u32 %v2126, %v2129
      %v2131 = vsel %vm2024, %v2121, %v2130
      %v2133 = vshrl.u32 %v1573, 16
      %v2135 = vrot.slane %v2133, 2
      %v2136 = vshll.u32 %v1573, 16
      %v2138 = vrot.slane %v2136, 3
      %v2139 = vor.u32 %v2135, %v2138
      %v2140 = vsel %vm2024, %v2130, %v2139
      %v2142 = vshrl.u32 %v1574, 16
      %v2144 = vrot.slane %v2142, 2
      %v2145 = vshll.u32 %v1574, 16
      %v2147 = vrot.slane %v2145, 3
      %v2148 = vor.u32 %v2144, %v2147
      %v2149 = vsel %vm2024, %v2139, %v2148
      %v2151 = vshrl.u32 %v1575, 16
      %v2153 = vrot.slane %v2151, 2
      %v2154 = vshll.u32 %v1575, 16
      %v2156 = vrot.slane %v2154, 3
      %v2157 = vor.u32 %v2153, %v2156
      %v2158 = vsel %vm2024, %v2148, %v2157
      %v2160 = vshrl.u32 %v1576, 16
      %v2162 = vrot.slane %v2160, 2
      %v2163 = vshll.u32 %v1576, 16
      %v2165 = vrot.slane %v2163, 3
      %v2166 = vor.u32 %v2162, %v2165
      %v2167 = vsel %vm2024, %v2157, %v2166
      %v2169 = vshrl.u32 %v1577, 16
      %v2171 = vrot.slane %v2169, 2
      %v2172 = vshll.u32 %v1577, 16
      %v2174 = vrot.slane %v2172, 3
      %v2175 = vor.u32 %v2171, %v2174
      %v2176 = vsel %vm2024, %v2166, %v2175
      %v2178 = vshrl.u32 %v1578, 16
      %v2180 = vrot.slane %v2178, 2
      %v2181 = vshll.u32 %v1578, 16
      %v2183 = vrot.slane %v2181, 3
      %v2184 = vor.u32 %v2180, %v2183
      %v2185 = vsel %vm2024, %v2175, %v2184
      %v2187 = vshrl.u32 %v1579, 16
      %v2189 = vrot.slane %v2187, 2
      %v2190 = vshll.u32 %v1579, 16
      %v2192 = vrot.slane %v2190, 3
      %v2193 = vor.u32 %v2189, %v2192
      %v2194 = vsel %vm2024, %v2184, %v2193
      %v2196 = vshrl.u32 %v1580, 16
      %v2198 = vrot.slane %v2196, 2
      %v2199 = vshll.u32 %v1580, 16
      %v2201 = vrot.slane %v2199, 3
      %v2202 = vor.u32 %v2198, %v2201
      %v2203 = vsel %vm2024, %v2193, %v2202
      %v2205 = vshrl.u32 %v1581, 16
      %v2207 = vrot.slane %v2205, 2
      %v2208 = vshll.u32 %v1581, 16
      %v2210 = vrot.slane %v2208, 3
      %v2211 = vor.u32 %v2207, %v2210
      %v2212 = vsel %vm2024, %v2202, %v2211
      %v2214 = vshrl.u32 %v1582, 16
      %v2216 = vrot.slane %v2214, 2
      %v2217 = vshll.u32 %v1582, 16
      %v2219 = vrot.slane %v2217, 3
      %v2220 = vor.u32 %v2216, %v2219
      %v2221 = vsel %vm2024, %v2211, %v2220
      %v2223 = vshrl.u32 %v1583, 16
      %v2225 = vrot.slane %v2223, 2
      %v2226 = vshll.u32 %v1583, 16
      %v2228 = vrot.slane %v2226, 3
      %v2229 = vor.u32 %v2225, %v2228
      %v2230 = vsel %vm2024, %v2220, %v2229
      %v2232 = vshrl.u32 %v2007, 16
      %v2234 = vrot.slane %v2232, 2
      %v2235 = vshll.u32 %v2007, 16
      %v2237 = vrot.slane %v2235, 3
      %v2238 = vor.u32 %v2234, %v2237
      %v2239 = vsel %vm2024, %v2229, %v2238
      %v2279 = vunpack.c.l.b16 %v2008
      %v2280 = vunpack.c.l.b16 %v2009
      %v2281 = vunpack.c.l.b16 %v2010
      %v2282 = vunpack.c.l.b16 %v2011
      %v2283 = vunpack.c.l.b16 %v2012
      %v2284 = vunpack.c.l.b16 %v2013
      %v2285 = vunpack.c.l.b16 %v2014
      %v2286 = vunpack.c.l.b16 %v2015
      %v2287 = vunpack.c.l.b16 %v2016
      %v2288 = vunpack.c.l.b16 %v2017
      %v2289 = vunpack.c.l.b16 %v2018
      %v2290 = vunpack.c.l.b16 %v2019
      %v2291 = vunpack.c.l.b16 %v2020
      %v2292 = vunpack.c.l.b16 %v2021
      %v2293 = vunpack.c.l.b16 %v2022
      %v2294 = vunpack.c.l.b16 %v2023
      %v2295 = vpack.c.b16 %v2280, %v2279
      %v2296 = vpack.c.b16 %v2282, %v2281
      %v2297 = vpack.c.b16 %v2284, %v2283
      %v2298 = vpack.c.b16 %v2286, %v2285
      %v2299 = vpack.c.b16 %v2288, %v2287
      %v2300 = vpack.c.b16 %v2290, %v2289
      %v2301 = vpack.c.b16 %v2292, %v2291
      %v2302 = vpack.c.b16 %v2294, %v2293
      %2311 = vmatprep.subr.bf16.mxu0 0
      %2312 = vmatpush1.bf16.msra.mxu0 %v2295
      %2313 = vmatprep.subr.bf16.mxu0 0
      %2314 = vmatpush1.bf16.msra.mxu0 %v2296
      %2315 = vmatprep.subr.bf16.mxu0 0
      %2316 = vmatpush1.bf16.msra.mxu0 %v2297
      %2317 = vmatprep.subr.bf16.mxu0 0
      %2318 = vmatpush1.bf16.msra.mxu0 %v2298
      %2319 = vmatprep.subr.bf16.mxu0 0
      %2320 = vmatpush1.bf16.msra.mxu0 %v2299
      %2321 = vmatprep.subr.bf16.mxu0 0
      %2322 = vmatpush1.bf16.msra.mxu0 %v2300
      %2323 = vmatprep.subr.bf16.mxu0 0
      %2324 = vmatpush1.bf16.msra.mxu0 %v2301
      %2325 = vmatprep.subr.bf16.mxu0 0
      %2326 = vmatpush1.bf16.msra.mxu0 %v2302
      %2327 = vmatprep.subr.bf16.mxu0 0
      %2328 = vmatpush1.bf16.msra.mxu0 0
      %2329 = vmatprep.subr.bf16.mxu0 0
      %2330 = vmatpush1.bf16.msra.mxu0 0
      %2331 = vmatprep.subr.bf16.mxu0 0
      %2332 = vmatpush1.bf16.msra.mxu0 0
      %2333 = vmatprep.subr.bf16.mxu0 0
      %2334 = vmatpush1.bf16.msra.mxu0 0
      %2335 = vmatprep.subr.bf16.mxu0 0
      %2336 = vmatpush1.bf16.msra.mxu0 0
      %2337 = vmatprep.subr.bf16.mxu0 0
      %2338 = vmatpush1.bf16.msra.mxu0 0
      %2339 = vmatprep.subr.bf16.mxu0 0
      %2340 = vmatpush1.bf16.msra.mxu0 0
      %2341 = vmatprep.subr.bf16.mxu0 0
      %2342 = vmatpush1.bf16.msra.mxu0 0
      %2343 = vmatprep.mubr.bf16.mxu0 0
      %2344 = vmatmul.mubr.bf16.gmra.mrb[0].mxu0 %v2041
      %v2345 = vpop.f32.mrb[0].mxu0
      %v2346 = vadd.f32 0.0, %v2345
      %v2347 = vpop.f32.mrb[0].mxu0
      %v2348 = vpop.f32.mrb[0].mxu0
      %v2349 = vadd.f32 0.0, %v2348
      %v2350 = vpop.f32.mrb[0].mxu0
      %2351 = vmatprep.mubr.bf16.mxu0 0
      %2352 = vmatmul.mubr.bf16.gmra.mrb[0].mxu0 %v2050
      %v2353 = vpop.f32.mrb[0].mxu0
      %v2354 = vadd.f32 0.0, %v2353
      %v2355 = vpop.f32.mrb[0].mxu0
      %v2356 = vpop.f32.mrb[0].mxu0
      %v2357 = vadd.f32 0.0, %v2356
      %v2358 = vpop.f32.mrb[0].mxu0
      %2359 = vmatprep.mubr.bf16.mxu0 0
      %2360 = vmatmul.mubr.bf16.gmra.mrb[0].mxu0 %v2059
      %v2361 = vpop.f32.mrb[0].mxu0
      %v2362 = vadd.f32 0.0, %v2361
      %v2363 = vpop.f32.mrb[0].mxu0
      %v2364 = vpop.f32.mrb[0].mxu0
      %v2365 = vadd.f32 0.0, %v2364
      %v2366 = vpop.f32.mrb[0].mxu0
      %2367 = vmatprep.mubr.bf16.mxu0 0
      %2368 = vmatmul.mubr.bf16.gmra.mrb[0].mxu0 %v2068
      %v2369 = vpop.f32.mrb[0].mxu0
      %v2370 = vadd.f32 0.0, %v2369
      %v2371 = vpop.f32.mrb[0].mxu0
      %v2372 = vpop.f32.mrb[0].mxu0
      %v2373 = vadd.f32 0.0, %v2372
      %v2374 = vpop.f32.mrb[0].mxu0
      %2375 = vmatprep.mubr.bf16.mxu0 0
      %2376 = vmatmul.mubr.bf16.gmra.mrb[0].mxu0 %v2077
      %v2377 = vpop.f32.mrb[0].mxu0
      %v2378 = vadd.f32 0.0, %v2377
      %v2379 = vpop.f32.mrb[0].mxu0
      %v2380 = vpop.f32.mrb[0].mxu0
      %v2381 = vadd.f32 0.0, %v2380
      %v2382 = vpop.f32.mrb[0].mxu0
      %2383 = vmatprep.mubr.bf16.mxu0 0
      %2384 = vmatmul.mubr.bf16.gmra.mrb[0].mxu0 %v2086
      %v2385 = vpop.f32.mrb[0].mxu0
      %v2386 = vadd.f32 0.0, %v2385
      %v2387 = vpop.f32.mrb[0].mxu0
      %v2388 = vpop.f32.mrb[0].mxu0
      %v2389 = vadd.f32 0.0, %v2388
      %v2390 = vpop.f32.mrb[0].mxu0
      %2391 = vmatprep.mubr.bf16.mxu0 0
      %2392 = vmatmul.mubr.bf16.gmra.mrb[0].mxu0 %v2095
      %v2393 = vpop.f32.mrb[0].mxu0
      %v2394 = vadd.f32 0.0, %v2393
      %v2395 = vpop.f32.mrb[0].mxu0
      %v2396 = vpop.f32.mrb[0].mxu0
      %v2397 = vadd.f32 0.0, %v2396
      %v2398 = vpop.f32.mrb[0].mxu0
      %2399 = vmatprep.mubr.bf16.mxu0 0
      %2400 = vmatmul.mubr.bf16.gmra.mrb[0].mxu0 %v2104
      %v2401 = vpop.f32.mrb[0].mxu0
      %v2402 = vadd.f32 0.0, %v2401
      %v2403 = vpop.f32.mrb[0].mxu0
      %v2404 = vpop.f32.mrb[0].mxu0
      %v2405 = vadd.f32 0.0, %v2404
      %v2406 = vpop.f32.mrb[0].mxu0
      %2407 = vmatprep.mubr.bf16.mxu0 0
      %2408 = vmatmul.mubr.bf16.gmra.mrb[0].mxu0 %v2113
      %v2409 = vpop.f32.mrb[0].mxu0
      %v2410 = vadd.f32 0.0, %v2409
      %v2411 = vpop.f32.mrb[0].mxu0
      %v2412 = vpop.f32.mrb[0].mxu0
      %v2413 = vadd.f32 0.0, %v2412
      %v2414 = vpop.f32.mrb[0].mxu0
      %2415 = vmatprep.mubr.bf16.mxu0 0
      %2416 = vmatmul.mubr.bf16.gmra.mrb[0].mxu0 %v2122
      %v2417 = vpop.f32.mrb[0].mxu0
      %v2418 = vadd.f32 0.0, %v2417
      %v2419 = vpop.f32.mrb[0].mxu0
      %v2420 = vpop.f32.mrb[0].mxu0
      %v2421 = vadd.f32 0.0, %v2420
      %v2422 = vpop.f32.mrb[0].mxu0
      %2423 = vmatprep.mubr.bf16.mxu0 0
      %2424 = vmatmul.mubr.bf16.gmra.mrb[0].mxu0 %v2131
      %v2425 = vpop.f32.mrb[0].mxu0
      %v2426 = vadd.f32 0.0, %v2425
      %v2427 = vpop.f32.mrb[0].mxu0
      %v2428 = vpop.f32.mrb[0].mxu0
      %v2429 = vadd.f32 0.0, %v2428
      %v2430 = vpop.f32.mrb[0].mxu0
      %2431 = vmatprep.mubr.bf16.mxu0 0
      %2432 = vmatmul.mubr.bf16.gmra.mrb[0].mxu0 %v2140
      %v2433 = vpop.f32.mrb[0].mxu0
      %v2434 = vadd.f32 0.0, %v2433
      %v2435 = vpop.f32.mrb[0].mxu0
      %v2436 = vpop.f32.mrb[0].mxu0
      %v2437 = vadd.f32 0.0, %v2436
      %v2438 = vpop.f32.mrb[0].mxu0
      %2439 = vmatprep.mubr.bf16.mxu0 0
      %2440 = vmatmul.mubr.bf16.gmra.mrb[0].mxu0 %v2149
      %v2441 = vpop.f32.mrb[0].mxu0
      %v2442 = vadd.f32 0.0, %v2441
      %v2443 = vpop.f32.mrb[0].mxu0
      %v2444 = vpop.f32.mrb[0].mxu0
      %v2445 = vadd.f32 0.0, %v2444
      %v2446 = vpop.f32.mrb[0].mxu0
      %2447 = vmatprep.mubr.bf16.mxu0 0
      %2448 = vmatmul.mubr.bf16.gmra.mrb[0].mxu0 %v2158
      %v2449 = vpop.f32.mrb[0].mxu0
      %v2450 = vadd.f32 0.0, %v2449
      %v2451 = vpop.f32.mrb[0].mxu0
      %v2452 = vpop.f32.mrb[0].mxu0
      %v2453 = vadd.f32 0.0, %v2452
      %v2454 = vpop.f32.mrb[0].mxu0
      %2455 = vmatprep.mubr.bf16.mxu0 0
      %2456 = vmatmul.mubr.bf16.gmra.mrb[0].mxu0 %v2167
      %v2457 = vpop.f32.mrb[0].mxu0
      %v2458 = vadd.f32 0.0, %v2457
      %v2459 = vpop.f32.mrb[0].mxu0
      %v2460 = vpop.f32.mrb[0].mxu0
      %v2461 = vadd.f32 0.0, %v2460
      %v2462 = vpop.f32.mrb[0].mxu0
      %2463 = vmatprep.mubr.bf16.mxu0 0
      %2464 = vmatmul.mubr.bf16.gmra.mrb[0].mxu0 %v2176
      %v2465 = vpop.f32.mrb[0].mxu0
      %v2466 = vadd.f32 0.0, %v2465
      %v2467 = vpop.f32.mrb[0].mxu0
      %v2468 = vpop.f32.mrb[0].mxu0
      %v2469 = vadd.f32 0.0, %v2468
      %v2470 = vpop.f32.mrb[0].mxu0
      %2471 = vmatprep.mubr.bf16.mxu0 0
      %2472 = vmatmul.mubr.bf16.gmra.mrb[0].mxu0 %v2185
      %v2473 = vpop.f32.mrb[0].mxu0
      %v2474 = vadd.f32 0.0, %v2473
      %v2475 = vpop.f32.mrb[0].mxu0
      %v2476 = vpop.f32.mrb[0].mxu0
      %v2477 = vadd.f32 0.0, %v2476
      %v2478 = vpop.f32.mrb[0].mxu0
      %2479 = vmatprep.mubr.bf16.mxu0 0
      %2480 = vmatmul.mubr.bf16.gmra.mrb[0].mxu0 %v2194
      %v2481 = vpop.f32.mrb[0].mxu0
      %v2482 = vadd.f32 0.0, %v2481
      %v2483 = vpop.f32.mrb[0].mxu0
      %v2484 = vpop.f32.mrb[0].mxu0
      %v2485 = vadd.f32 0.0, %v2484
      %v2486 = vpop.f32.mrb[0].mxu0
      %2487 = vmatprep.mubr.bf16.mxu0 0
      %2488 = vmatmul.mubr.bf16.gmra.mrb[0].mxu0 %v2203
      %v2489 = vpop.f32.mrb[0].mxu0
      %v2490 = vadd.f32 0.0, %v2489
      %v2491 = vpop.f32.mrb[0].mxu0
      %v2492 = vpop.f32.mrb[0].mxu0
      %v2493 = vadd.f32 0.0, %v2492
      %v2494 = vpop.f32.mrb[0].mxu0
      %2495 = vmatprep.mubr.bf16.mxu0 0
      %2496 = vmatmul.mubr.bf16.gmra.mrb[0].mxu0 %v2212
      %v2497 = vpop.f32.mrb[0].mxu0
      %v2498 = vadd.f32 0.0, %v2497
      %v2499 = vpop.f32.mrb[0].mxu0
      %v2500 = vpop.f32.mrb[0].mxu0
      %v2501 = vadd.f32 0.0, %v2500
      %v2502 = vpop.f32.mrb[0].mxu0
      %2503 = vmatprep.mubr.bf16.mxu0 0
      %2504 = vmatmul.mubr.bf16.gmra.mrb[0].mxu0 %v2221
      %v2505 = vpop.f32.mrb[0].mxu0
      %v2506 = vadd.f32 0.0, %v2505
      %v2507 = vpop.f32.mrb[0].mxu0
      %v2508 = vpop.f32.mrb[0].mxu0
      %v2509 = vadd.f32 0.0, %v2508
      %v2510 = vpop.f32.mrb[0].mxu0
      %2511 = vmatprep.mubr.bf16.mxu0 0
      %2512 = vmatmul.mubr.bf16.gmra.mrb[0].mxu0 %v2230
      %v2513 = vpop.f32.mrb[0].mxu0
      %v2514 = vadd.f32 0.0, %v2513
      %v2515 = vpop.f32.mrb[0].mxu0
      %v2516 = vpop.f32.mrb[0].mxu0
      %v2517 = vadd.f32 0.0, %v2516
      %v2518 = vpop.f32.mrb[0].mxu0
      %2519 = vmatprep.mubr.bf16.mxu0 0
      %2520 = vmatmul.mubr.bf16.gmra.mrb[0].mxu0 %v2239
      %v2521 = vpop.f32.mrb[0].mxu0
      %v2522 = vadd.f32 0.0, %v2521
      %v2523 = vpop.f32.mrb[0].mxu0
      %v2524 = vpop.f32.mrb[0].mxu0
      %v2525 = vadd.f32 0.0, %v2524
      %v2526 = vpop.f32.mrb[0].mxu0
      %2527 = vdwg.mxu0
      %v2528 = vadd.f32 %v1961, %v2346
      %v2529 = vadd.f32 %v1962, %v2349
      %v2530 = vadd.f32 %v1963, %v2354
      %v2531 = vadd.f32 %v1964, %v2357
      %v2532 = vadd.f32 %v1965, %v2362
      %v2533 = vadd.f32 %v1966, %v2365
      %v2534 = vadd.f32 %v1967, %v2370
      %v2535 = vadd.f32 %v1968, %v2373
      %v2536 = vadd.f32 %v1969, %v2378
      %v2537 = vadd.f32 %v1970, %v2381
      %v2538 = vadd.f32 %v1971, %v2386
      %v2539 = vadd.f32 %v1972, %v2389
      %v2540 = vadd.f32 %v1973, %v2394
      %v2541 = vadd.f32 %v1974, %v2397
      %v2542 = vadd.f32 %v1975, %v2402
      %v2543 = vadd.f32 %v1976, %v2405
      %v2544 = vadd.f32 %v1977, %v2410
      %v2545 = vadd.f32 %v1978, %v2413
      %v2546 = vadd.f32 %v1979, %v2418
      %v2547 = vadd.f32 %v1980, %v2421
      %v2548 = vadd.f32 %v1981, %v2426
      %v2549 = vadd.f32 %v1982, %v2429
      %v2550 = vadd.f32 %v1983, %v2434
      %v2551 = vadd.f32 %v1984, %v2437
      %v2552 = vadd.f32 %v1985, %v2442
      %v2553 = vadd.f32 %v1986, %v2445
      %v2554 = vadd.f32 %v1987, %v2450
      %v2555 = vadd.f32 %v1988, %v2453
      %v2556 = vadd.f32 %v1989, %v2458
      %v2557 = vadd.f32 %v1990, %v2461
      %v2558 = vadd.f32 %v1991, %v2466
      %v2559 = vadd.f32 %v1992, %v2469
      %v2560 = vadd.f32 %v1993, %v2474
      %v2561 = vadd.f32 %v1994, %v2477
      %v2562 = vadd.f32 %v1995, %v2482
      %v2563 = vadd.f32 %v1996, %v2485
      %v2564 = vadd.f32 %v1997, %v2490
      %v2565 = vadd.f32 %v1998, %v2493
      %v2566 = vadd.f32 %v1999, %v2498
      %v2567 = vadd.f32 %v2000, %v2501
      %v2568 = vadd.f32 %v2001, %v2506
      %v2569 = vadd.f32 %v2002, %v2509
      %v2570 = vadd.f32 %v2003, %v2514
      %v2571 = vadd.f32 %v2004, %v2517
      %v2572 = vadd.f32 %v2005, %v2522
      %v2573 = vadd.f32 %v2006, %v2525
      %v2574 = vld [vmem:[%s334 + $0x8] sm:$0xf8]
      %v2575 = vld [vmem:[%s2 + $0x140] sm:$0xf]
      %v2576 = vld [vmem:[%s2 + $0x144] sm:$0xf]
      %v2577 = vld [vmem:[%s2 + $0x148] sm:$0xf]
      %v2578 = vld [vmem:[%s2 + $0x14c] sm:$0xf]
      %v2579 = vld [vmem:[%s2 + $0x150] sm:$0xf]
      %v2580 = vld [vmem:[%s2 + $0x154] sm:$0xf]
      %v2581 = vld [vmem:[%s2 + $0x158] sm:$0xf]
      %v2582 = vld [vmem:[%s2 + $0x15c] sm:$0xf]
      %v2583 = vld [vmem:[%s2 + $0x160] sm:$0xf]
      %v2584 = vld [vmem:[%s2 + $0x164] sm:$0xf]
      %v2585 = vld [vmem:[%s2 + $0x168] sm:$0xf]
      %v2586 = vld [vmem:[%s2 + $0x16c] sm:$0xf]
      %v2587 = vld [vmem:[%s2 + $0x170] sm:$0xf]
      %v2588 = vld [vmem:[%s2 + $0x174] sm:$0xf]
      %v2589 = vld [vmem:[%s2 + $0x178] sm:$0xf]
      %v2590 = vld [vmem:[%s2 + $0x17c] sm:$0xf]
      %vm2593 = vcmask 1044480
      %v2594 = vrot.slane %v2574, 3
      %v2595 = vrot.slane %v1562, 3
      %v2596 = vsel %vm2593, %v2594, %v2595
      %v2597 = vrot.slane %v1563, 3
      %v2598 = vsel %vm2593, %v2595, %v2597
      %v2599 = vrot.slane %v1564, 3
      %v2600 = vsel %vm2593, %v2597, %v2599
      %v2601 = vrot.slane %v1565, 3
      %v2602 = vsel %vm2593, %v2599, %v2601
      %v2603 = vrot.slane %v1566, 3
      %v2604 = vsel %vm2593, %v2601, %v2603
      %v2605 = vrot.slane %v1567, 3
      %v2606 = vsel %vm2593, %v2603, %v2605
      %v2607 = vrot.slane %v1568, 3
      %v2608 = vsel %vm2593, %v2605, %v2607
      %v2609 = vrot.slane %v1569, 3
      %v2610 = vsel %vm2593, %v2607, %v2609
      %v2611 = vrot.slane %v1570, 3
      %v2612 = vsel %vm2593, %v2609, %v2611
      %v2613 = vrot.slane %v1571, 3
      %v2614 = vsel %vm2593, %v2611, %v2613
      %v2615 = vrot.slane %v1572, 3
      %v2616 = vsel %vm2593, %v2613, %v2615
      %v2617 = vrot.slane %v1573, 3
      %v2618 = vsel %vm2593, %v2615, %v2617
      %v2619 = vrot.slane %v1574, 3
      %v2620 = vsel %vm2593, %v2617, %v2619
      %v2621 = vrot.slane %v1575, 3
      %v2622 = vsel %vm2593, %v2619, %v2621
      %v2623 = vrot.slane %v1576, 3
      %v2624 = vsel %vm2593, %v2621, %v2623
      %v2625 = vrot.slane %v1577, 3
      %v2626 = vsel %vm2593, %v2623, %v2625
      %v2627 = vrot.slane %v1578, 3
      %v2628 = vsel %vm2593, %v2625, %v2627
      %v2629 = vrot.slane %v1579, 3
      %v2630 = vsel %vm2593, %v2627, %v2629
      %v2631 = vrot.slane %v1580, 3
      %v2632 = vsel %vm2593, %v2629, %v2631
      %v2633 = vrot.slane %v1581, 3
      %v2634 = vsel %vm2593, %v2631, %v2633
      %v2635 = vrot.slane %v1582, 3
      %v2636 = vsel %vm2593, %v2633, %v2635
      %v2637 = vrot.slane %v1583, 3
      %v2638 = vsel %vm2593, %v2635, %v2637
      %v2639 = vrot.slane %v2007, 3
      %v2640 = vsel %vm2593, %v2637, %v2639
      %v2680 = vunpack.c.l.b16 %v2575
      %v2681 = vunpack.c.l.b16 %v2576
      %v2682 = vunpack.c.l.b16 %v2577
      %v2683 = vunpack.c.l.b16 %v2578
      %v2684 = vunpack.c.l.b16 %v2579
      %v2685 = vunpack.c.l.b16 %v2580
      %v2686 = vunpack.c.l.b16 %v2581
      %v2687 = vunpack.c.l.b16 %v2582
      %v2688 = vunpack.c.l.b16 %v2583
      %v2689 = vunpack.c.l.b16 %v2584
      %v2690 = vunpack.c.l.b16 %v2585
      %v2691 = vunpack.c.l.b16 %v2586
      %v2692 = vunpack.c.l.b16 %v2587
      %v2693 = vunpack.c.l.b16 %v2588
      %v2694 = vunpack.c.l.b16 %v2589
      %v2695 = vunpack.c.l.b16 %v2590
      %v2696 = vpack.c.b16 %v2681, %v2680
      %v2697 = vpack.c.b16 %v2683, %v2682
      %v2698 = vpack.c.b16 %v2685, %v2684
      %v2699 = vpack.c.b16 %v2687, %v2686
      %v2700 = vpack.c.b16 %v2689, %v2688
      %v2701 = vpack.c.b16 %v2691, %v2690
      %v2702 = vpack.c.b16 %v2693, %v2692
      %v2703 = vpack.c.b16 %v2695, %v2694
      %2712 = vmatprep.subr.bf16.mxu0 0
      %2713 = vmatpush1.bf16.msra.mxu0 %v2696
      %2714 = vmatprep.subr.bf16.mxu0 0
      %2715 = vmatpush1.bf16.msra.mxu0 %v2697
      %2716 = vmatprep.subr.bf16.mxu0 0
      %2717 = vmatpush1.bf16.msra.mxu0 %v2698
      %2718 = vmatprep.subr.bf16.mxu0 0
      %2719 = vmatpush1.bf16.msra.mxu0 %v2699
      %2720 = vmatprep.subr.bf16.mxu0 0
      %2721 = vmatpush1.bf16.msra.mxu0 %v2700
      %2722 = vmatprep.subr.bf16.mxu0 0
      %2723 = vmatpush1.bf16.msra.mxu0 %v2701
      %2724 = vmatprep.subr.bf16.mxu0 0
      %2725 = vmatpush1.bf16.msra.mxu0 %v2702
      %2726 = vmatprep.subr.bf16.mxu0 0
      %2727 = vmatpush1.bf16.msra.mxu0 %v2703
      %2728 = vmatprep.subr.bf16.mxu0 0
      %2729 = vmatpush1.bf16.msra.mxu0 0
      %2730 = vmatprep.subr.bf16.mxu0 0
      %2731 = vmatpush1.bf16.msra.mxu0 0
      %2732 = vmatprep.subr.bf16.mxu0 0
      %2733 = vmatpush1.bf16.msra.mxu0 0
      %2734 = vmatprep.subr.bf16.mxu0 0
      %2735 = vmatpush1.bf16.msra.mxu0 0
      %2736 = vmatprep.subr.bf16.mxu0 0
      %2737 = vmatpush1.bf16.msra.mxu0 0
      %2738 = vmatprep.subr.bf16.mxu0 0
      %2739 = vmatpush1.bf16.msra.mxu0 0
      %2740 = vmatprep.subr.bf16.mxu0 0
      %2741 = vmatpush1.bf16.msra.mxu0 0
      %2742 = vmatprep.subr.bf16.mxu0 0
      %2743 = vmatpush1.bf16.msra.mxu0 0
      %2744 = vmatprep.mubr.bf16.mxu0 0
      %2745 = vmatmul.mubr.bf16.gmra.mrb[0].mxu0 %v2596
      %v2746 = vpop.f32.mrb[0].mxu0
      %v2747 = vadd.f32 0.0, %v2746
      %v2748 = vpop.f32.mrb[0].mxu0
      %v2749 = vpop.f32.mrb[0].mxu0
      %v2750 = vadd.f32 0.0, %v2749
      %v2751 = vpop.f32.mrb[0].mxu0
      %2752 = vmatprep.mubr.bf16.mxu0 0
      %2753 = vmatmul.mubr.bf16.gmra.mrb[0].mxu0 %v2598
      %v2754 = vpop.f32.mrb[0].mxu0
      %v2755 = vadd.f32 0.0, %v2754
      %v2756 = vpop.f32.mrb[0].mxu0
      %v2757 = vpop.f32.mrb[0].mxu0
      %v2758 = vadd.f32 0.0, %v2757
      %v2759 = vpop.f32.mrb[0].mxu0
      %2760 = vmatprep.mubr.bf16.mxu0 0
      %2761 = vmatmul.mubr.bf16.gmra.mrb[0].mxu0 %v2600
      %v2762 = vpop.f32.mrb[0].mxu0
      %v2763 = vadd.f32 0.0, %v2762
      %v2764 = vpop.f32.mrb[0].mxu0
      %v2765 = vpop.f32.mrb[0].mxu0
      %v2766 = vadd.f32 0.0, %v2765
      %v2767 = vpop.f32.mrb[0].mxu0
      %2768 = vmatprep.mubr.bf16.mxu0 0
      %2769 = vmatmul.mubr.bf16.gmra.mrb[0].mxu0 %v2602
      %v2770 = vpop.f32.mrb[0].mxu0
      %v2771 = vadd.f32 0.0, %v2770
      %v2772 = vpop.f32.mrb[0].mxu0
      %v2773 = vpop.f32.mrb[0].mxu0
      %v2774 = vadd.f32 0.0, %v2773
      %v2775 = vpop.f32.mrb[0].mxu0
      %2776 = vmatprep.mubr.bf16.mxu0 0
      %2777 = vmatmul.mubr.bf16.gmra.mrb[0].mxu0 %v2604
      %v2778 = vpop.f32.mrb[0].mxu0
      %v2779 = vadd.f32 0.0, %v2778
      %v2780 = vpop.f32.mrb[0].mxu0
      %v2781 = vpop.f32.mrb[0].mxu0
      %v2782 = vadd.f32 0.0, %v2781
      %v2783 = vpop.f32.mrb[0].mxu0
      %2784 = vmatprep.mubr.bf16.mxu0 0
      %2785 = vmatmul.mubr.bf16.gmra.mrb[0].mxu0 %v2606
      %v2786 = vpop.f32.mrb[0].mxu0
      %v2787 = vadd.f32 0.0, %v2786
      %v2788 = vpop.f32.mrb[0].mxu0
      %v2789 = vpop.f32.mrb[0].mxu0
      %v2790 = vadd.f32 0.0, %v2789
      %v2791 = vpop.f32.mrb[0].mxu0
      %2792 = vmatprep.mubr.bf16.mxu0 0
      %2793 = vmatmul.mubr.bf16.gmra.mrb[0].mxu0 %v2608
      %v2794 = vpop.f32.mrb[0].mxu0
      %v2795 = vadd.f32 0.0, %v2794
      %v2796 = vpop.f32.mrb[0].mxu0
      %v2797 = vpop.f32.mrb[0].mxu0
      %v2798 = vadd.f32 0.0, %v2797
      %v2799 = vpop.f32.mrb[0].mxu0
      %2800 = vmatprep.mubr.bf16.mxu0 0
      %2801 = vmatmul.mubr.bf16.gmra.mrb[0].mxu0 %v2610
      %v2802 = vpop.f32.mrb[0].mxu0
      %v2803 = vadd.f32 0.0, %v2802
      %v2804 = vpop.f32.mrb[0].mxu0
      %v2805 = vpop.f32.mrb[0].mxu0
      %v2806 = vadd.f32 0.0, %v2805
      %v2807 = vpop.f32.mrb[0].mxu0
      %2808 = vmatprep.mubr.bf16.mxu0 0
      %2809 = vmatmul.mubr.bf16.gmra.mrb[0].mxu0 %v2612
      %v2810 = vpop.f32.mrb[0].mxu0
      %v2811 = vadd.f32 0.0, %v2810
      %v2812 = vpop.f32.mrb[0].mxu0
      %v2813 = vpop.f32.mrb[0].mxu0
      %v2814 = vadd.f32 0.0, %v2813
      %v2815 = vpop.f32.mrb[0].mxu0
      %2816 = vmatprep.mubr.bf16.mxu0 0
      %2817 = vmatmul.mubr.bf16.gmra.mrb[0].mxu0 %v2614
      %v2818 = vpop.f32.mrb[0].mxu0
      %v2819 = vadd.f32 0.0, %v2818
      %v2820 = vpop.f32.mrb[0].mxu0
      %v2821 = vpop.f32.mrb[0].mxu0
      %v2822 = vadd.f32 0.0, %v2821
      %v2823 = vpop.f32.mrb[0].mxu0
      %2824 = vmatprep.mubr.bf16.mxu0 0
      %2825 = vmatmul.mubr.bf16.gmra.mrb[0].mxu0 %v2616
      %v2826 = vpop.f32.mrb[0].mxu0
      %v2827 = vadd.f32 0.0, %v2826
      %v2828 = vpop.f32.mrb[0].mxu0
      %v2829 = vpop.f32.mrb[0].mxu0
      %v2830 = vadd.f32 0.0, %v2829
      %v2831 = vpop.f32.mrb[0].mxu0
      %2832 = vmatprep.mubr.bf16.mxu0 0
      %2833 = vmatmul.mubr.bf16.gmra.mrb[0].mxu0 %v2618
      %v2834 = vpop.f32.mrb[0].mxu0
      %v2835 = vadd.f32 0.0, %v2834
      %v2836 = vpop.f32.mrb[0].mxu0
      %v2837 = vpop.f32.mrb[0].mxu0
      %v2838 = vadd.f32 0.0, %v2837
      %v2839 = vpop.f32.mrb[0].mxu0
      %2840 = vmatprep.mubr.bf16.mxu0 0
      %2841 = vmatmul.mubr.bf16.gmra.mrb[0].mxu0 %v2620
      %v2842 = vpop.f32.mrb[0].mxu0
      %v2843 = vadd.f32 0.0, %v2842
      %v2844 = vpop.f32.mrb[0].mxu0
      %v2845 = vpop.f32.mrb[0].mxu0
      %v2846 = vadd.f32 0.0, %v2845
      %v2847 = vpop.f32.mrb[0].mxu0
      %2848 = vmatprep.mubr.bf16.mxu0 0
      %2849 = vmatmul.mubr.bf16.gmra.mrb[0].mxu0 %v2622
      %v2850 = vpop.f32.mrb[0].mxu0
      %v2851 = vadd.f32 0.0, %v2850
      %v2852 = vpop.f32.mrb[0].mxu0
      %v2853 = vpop.f32.mrb[0].mxu0
      %v2854 = vadd.f32 0.0, %v2853
      %v2855 = vpop.f32.mrb[0].mxu0
      %2856 = vmatprep.mubr.bf16.mxu0 0
      %2857 = vmatmul.mubr.bf16.gmra.mrb[0].mxu0 %v2624
      %v2858 = vpop.f32.mrb[0].mxu0
      %v2859 = vadd.f32 0.0, %v2858
      %v2860 = vpop.f32.mrb[0].mxu0
      %v2861 = vpop.f32.mrb[0].mxu0
      %v2862 = vadd.f32 0.0, %v2861
      %v2863 = vpop.f32.mrb[0].mxu0
      %2864 = vmatprep.mubr.bf16.mxu0 0
      %2865 = vmatmul.mubr.bf16.gmra.mrb[0].mxu0 %v2626
      %v2866 = vpop.f32.mrb[0].mxu0
      %v2867 = vadd.f32 0.0, %v2866
      %v2868 = vpop.f32.mrb[0].mxu0
      %v2869 = vpop.f32.mrb[0].mxu0
      %v2870 = vadd.f32 0.0, %v2869
      %v2871 = vpop.f32.mrb[0].mxu0
      %2872 = vmatprep.mubr.bf16.mxu0 0
      %2873 = vmatmul.mubr.bf16.gmra.mrb[0].mxu0 %v2628
      %v2874 = vpop.f32.mrb[0].mxu0
      %v2875 = vadd.f32 0.0, %v2874
      %v2876 = vpop.f32.mrb[0].mxu0
      %v2877 = vpop.f32.mrb[0].mxu0
      %v2878 = vadd.f32 0.0, %v2877
      %v2879 = vpop.f32.mrb[0].mxu0
      %2880 = vmatprep.mubr.bf16.mxu0 0
      %2881 = vmatmul.mubr.bf16.gmra.mrb[0].mxu0 %v2630
      %v2882 = vpop.f32.mrb[0].mxu0
      %v2883 = vadd.f32 0.0, %v2882
      %v2884 = vpop.f32.mrb[0].mxu0
      %v2885 = vpop.f32.mrb[0].mxu0
      %v2886 = vadd.f32 0.0, %v2885
      %v2887 = vpop.f32.mrb[0].mxu0
      %2888 = vmatprep.mubr.bf16.mxu0 0
      %2889 = vmatmul.mubr.bf16.gmra.mrb[0].mxu0 %v2632
      %v2890 = vpop.f32.mrb[0].mxu0
      %v2891 = vadd.f32 0.0, %v2890
      %v2892 = vpop.f32.mrb[0].mxu0
      %v2893 = vpop.f32.mrb[0].mxu0
      %v2894 = vadd.f32 0.0, %v2893
      %v2895 = vpop.f32.mrb[0].mxu0
      %2896 = vmatprep.mubr.bf16.mxu0 0
      %2897 = vmatmul.mubr.bf16.gmra.mrb[0].mxu0 %v2634
      %v2898 = vpop.f32.mrb[0].mxu0
      %v2899 = vadd.f32 0.0, %v2898
      %v2900 = vpop.f32.mrb[0].mxu0
      %v2901 = vpop.f32.mrb[0].mxu0
      %v2902 = vadd.f32 0.0, %v2901
      %v2903 = vpop.f32.mrb[0].mxu0
      %2904 = vmatprep.mubr.bf16.mxu0 0
      %2905 = vmatmul.mubr.bf16.gmra.mrb[0].mxu0 %v2636
      %v2906 = vpop.f32.mrb[0].mxu0
      %v2907 = vadd.f32 0.0, %v2906
      %v2908 = vpop.f32.mrb[0].mxu0
      %v2909 = vpop.f32.mrb[0].mxu0
      %v2910 = vadd.f32 0.0, %v2909
      %v2911 = vpop.f32.mrb[0].mxu0
      %2912 = vmatprep.mubr.bf16.mxu0 0
      %2913 = vmatmul.mubr.bf16.gmra.mrb[0].mxu0 %v2638
      %v2914 = vpop.f32.mrb[0].mxu0
      %v2915 = vadd.f32 0.0, %v2914
      %v2916 = vpop.f32.mrb[0].mxu0
      %v2917 = vpop.f32.mrb[0].mxu0
      %v2918 = vadd.f32 0.0, %v2917
      %v2919 = vpop.f32.mrb[0].mxu0
      %2920 = vmatprep.mubr.bf16.mxu0 0
      %2921 = vmatmul.mubr.bf16.gmra.mrb[0].mxu0 %v2640
      %v2922 = vpop.f32.mrb[0].mxu0
      %v2923 = vadd.f32 0.0, %v2922
      %v2924 = vpop.f32.mrb[0].mxu0
      %v2925 = vpop.f32.mrb[0].mxu0
      %v2926 = vadd.f32 0.0, %v2925
      %v2927 = vpop.f32.mrb[0].mxu0
      %2928 = vdwg.mxu0
      %v2929 = vadd.f32 %v2528, %v2747
      %v2930 = vadd.f32 %v2529, %v2750
      %v2931 = vadd.f32 %v2530, %v2755
      %v2932 = vadd.f32 %v2531, %v2758
      %v2933 = vadd.f32 %v2532, %v2763
      %v2934 = vadd.f32 %v2533, %v2766
      %v2935 = vadd.f32 %v2534, %v2771
      %v2936 = vadd.f32 %v2535, %v2774
      %v2937 = vadd.f32 %v2536, %v2779
      %v2938 = vadd.f32 %v2537, %v2782
      %v2939 = vadd.f32 %v2538, %v2787
      %v2940 = vadd.f32 %v2539, %v2790
      %v2941 = vadd.f32 %v2540, %v2795
      %v2942 = vadd.f32 %v2541, %v2798
      %v2943 = vadd.f32 %v2542, %v2803
      %v2944 = vadd.f32 %v2543, %v2806
      %v2945 = vadd.f32 %v2544, %v2811
      %v2946 = vadd.f32 %v2545, %v2814
      %v2947 = vadd.f32 %v2546, %v2819
      %v2948 = vadd.f32 %v2547, %v2822
      %v2949 = vadd.f32 %v2548, %v2827
      %v2950 = vadd.f32 %v2549, %v2830
      %v2951 = vadd.f32 %v2550, %v2835
      %v2952 = vadd.f32 %v2551, %v2838
      %v2953 = vadd.f32 %v2552, %v2843
      %v2954 = vadd.f32 %v2553, %v2846
      %v2955 = vadd.f32 %v2554, %v2851
      %v2956 = vadd.f32 %v2555, %v2854
      %v2957 = vadd.f32 %v2556, %v2859
      %v2958 = vadd.f32 %v2557, %v2862
      %v2959 = vadd.f32 %v2558, %v2867
      %v2960 = vadd.f32 %v2559, %v2870
      %v2961 = vadd.f32 %v2560, %v2875
      %v2962 = vadd.f32 %v2561, %v2878
      %v2963 = vadd.f32 %v2562, %v2883
      %v2964 = vadd.f32 %v2563, %v2886
      %v2965 = vadd.f32 %v2564, %v2891
      %v2966 = vadd.f32 %v2565, %v2894
      %v2967 = vadd.f32 %v2566, %v2899
      %v2968 = vadd.f32 %v2567, %v2902
      %v2969 = vadd.f32 %v2568, %v2907
      %v2970 = vadd.f32 %v2569, %v2910
      %v2971 = vadd.f32 %v2570, %v2915
      %v2972 = vadd.f32 %v2571, %v2918
      %v2973 = vadd.f32 %v2572, %v2923
      %v2974 = vadd.f32 %v2573, %v2926
      %v2975 = vld [vmem:[%s334 + $0x10] sm:$0xf0]
      %v2976 = vld [vmem:[%s334 + $0x18] sm:$0xff]
      %v2977 = vld [vmem:[%s334 + $0x20] sm:$0xff]
      %v2978 = vld [vmem:[%s334 + $0x28] sm:$0xff]
      %v2979 = vld [vmem:[%s334 + $0x30] sm:$0xff]
      %v2980 = vld [vmem:[%s334 + $0x38] sm:$0xff]
      %v2981 = vld [vmem:[%s334 + $0x40] sm:$0xff]
      %v2982 = vld [vmem:[%s334 + $0x48] sm:$0xff]
      %v2983 = vld [vmem:[%s334 + $0x50] sm:$0xff]
      %v2984 = vld [vmem:[%s334 + $0x58] sm:$0xff]
      %v2985 = vld [vmem:[%s334 + $0x60] sm:$0xff]
      %v2986 = vld [vmem:[%s334 + $0x68] sm:$0xff]
      %v2987 = vld [vmem:[%s334 + $0x70] sm:$0xff]
      %v2988 = vld [vmem:[%s334 + $0x78] sm:$0xff]
      %v2989 = vld [vmem:[%s334 + $0x80] sm:$0xff]
      %v2990 = vld [vmem:[%s334 + $0x88] sm:$0xff]
      %v2991 = vld [vmem:[%s334 + $0x90] sm:$0xff]
      %v2992 = vld [vmem:[%s334 + $0x98] sm:$0xff]
      %v2993 = vld [vmem:[%s334 + $0xa0] sm:$0xff]
      %v2994 = vld [vmem:[%s334 + $0xa8] sm:$0xff]
      %v2995 = vld [vmem:[%s334 + $0xb0] sm:$0xff]
      %v2996 = vld [vmem:[%s334 + $0xb8] sm:$0xff]
      %v2997 = vld [vmem:[%s334 + $0xc0] sm:$0xff]
      %v2998 = vld [vmem:[%s334 + $0xc8] sm:$0xf]
      %v2999 = vld [vmem:[%s2 + $0x180] sm:$0xf]
      %v3000 = vld [vmem:[%s2 + $0x184] sm:$0xf]
      %v3001 = vld [vmem:[%s2 + $0x188] sm:$0xf]
      %v3002 = vld [vmem:[%s2 + $0x18c] sm:$0xf]
      %v3003 = vld [vmem:[%s2 + $0x190] sm:$0xf]
      %v3004 = vld [vmem:[%s2 + $0x194] sm:$0xf]
      %v3005 = vld [vmem:[%s2 + $0x198] sm:$0xf]
      %v3006 = vld [vmem:[%s2 + $0x19c] sm:$0xf]
      %v3007 = vld [vmem:[%s2 + $0x1a0] sm:$0xf]
      %v3008 = vld [vmem:[%s2 + $0x1a4] sm:$0xf]
      %v3009 = vld [vmem:[%s2 + $0x1a8] sm:$0xf]
      %v3010 = vld [vmem:[%s2 + $0x1ac] sm:$0xf]
      %v3011 = vld [vmem:[%s2 + $0x1b0] sm:$0xf]
      %v3012 = vld [vmem:[%s2 + $0x1b4] sm:$0xf]
      %v3013 = vld [vmem:[%s2 + $0x1b8] sm:$0xf]
      %v3014 = vld [vmem:[%s2 + $0x1bc] sm:$0xf]
      %vm3039 = vcmask 1043456
      %v3040 = vrot.slane %v2975, 4
      %v3041 = vrot.slane %v2976, 4
      %v3042 = vsel %vm3039, %v3040, %v3041
      %v3043 = vrot.slane %v2977, 4
      %v3044 = vsel %vm3039, %v3041, %v3043
      %v3045 = vrot.slane %v2978, 4
      %v3046 = vsel %vm3039, %v3043, %v3045
      %v3047 = vrot.slane %v2979, 4
      %v3048 = vsel %vm3039, %v3045, %v3047
      %v3049 = vrot.slane %v2980, 4
      %v3050 = vsel %vm3039, %v3047, %v3049
      %v3051 = vrot.slane %v2981, 4
      %v3052 = vsel %vm3039, %v3049, %v3051
      %v3053 = vrot.slane %v2982, 4
      %v3054 = vsel %vm3039, %v3051, %v3053
      %v3055 = vrot.slane %v2983, 4
      %v3056 = vsel %vm3039, %v3053, %v3055
      %v3057 = vrot.slane %v2984, 4
      %v3058 = vsel %vm3039, %v3055, %v3057
      %v3059 = vrot.slane %v2985, 4
      %v3060 = vsel %vm3039, %v3057, %v3059
      %v3061 = vrot.slane %v2986, 4
      %v3062 = vsel %vm3039, %v3059, %v3061
      %v3063 = vrot.slane %v2987, 4
      %v3064 = vsel %vm3039, %v3061, %v3063
      %v3065 = vrot.slane %v2988, 4
      %v3066 = vsel %vm3039, %v3063, %v3065
      %v3067 = vrot.slane %v2989, 4
      %v3068 = vsel %vm3039, %v3065, %v3067
      %v3069 = vrot.slane %v2990, 4
      %v3070 = vsel %vm3039, %v3067, %v3069
      %v3071 = vrot.slane %v2991, 4
      %v3072 = vsel %vm3039, %v3069, %v3071
      %v3073 = vrot.slane %v2992, 4
      %v3074 = vsel %vm3039, %v3071, %v3073
      %v3075 = vrot.slane %v2993, 4
      %v3076 = vsel %vm3039, %v3073, %v3075
      %v3077 = vrot.slane %v2994, 4
      %v3078 = vsel %vm3039, %v3075, %v3077
      %v3079 = vrot.slane %v2995, 4
      %v3080 = vsel %vm3039, %v3077, %v3079
      %v3081 = vrot.slane %v2996, 4
      %v3082 = vsel %vm3039, %v3079, %v3081
      %v3083 = vrot.slane %v2997, 4
      %v3084 = vsel %vm3039, %v3081, %v3083
      %v3085 = vrot.slane %v2998, 4
      %v3086 = vsel %vm3039, %v3083, %v3085
      %v3126 = vunpack.c.l.b16 %v2999
      %v3127 = vunpack.c.l.b16 %v3000
      %v3128 = vunpack.c.l.b16 %v3001
      %v3129 = vunpack.c.l.b16 %v3002
      %v3130 = vunpack.c.l.b16 %v3003
      %v3131 = vunpack.c.l.b16 %v3004
      %v3132 = vunpack.c.l.b16 %v3005
      %v3133 = vunpack.c.l.b16 %v3006
      %v3134 = vunpack.c.l.b16 %v3007
      %v3135 = vunpack.c.l.b16 %v3008
      %v3136 = vunpack.c.l.b16 %v3009
      %v3137 = vunpack.c.l.b16 %v3010
      %v3138 = vunpack.c.l.b16 %v3011
      %v3139 = vunpack.c.l.b16 %v3012
      %v3140 = vunpack.c.l.b16 %v3013
      %v3141 = vunpack.c.l.b16 %v3014
      %v3142 = vpack.c.b16 %v3127, %v3126
      %v3143 = vpack.c.b16 %v3129, %v3128
      %v3144 = vpack.c.b16 %v3131, %v3130
      %v3145 = vpack.c.b16 %v3133, %v3132
      %v3146 = vpack.c.b16 %v3135, %v3134
      %v3147 = vpack.c.b16 %v3137, %v3136
      %v3148 = vpack.c.b16 %v3139, %v3138
      %v3149 = vpack.c.b16 %v3141, %v3140
      %3158 = vmatprep.subr.bf16.mxu0 0
      %3159 = vmatpush1.bf16.msra.mxu0 %v3142
      %3160 = vmatprep.subr.bf16.mxu0 0
      %3161 = vmatpush1.bf16.msra.mxu0 %v3143
      %3162 = vmatprep.subr.bf16.mxu0 0
      %3163 = vmatpush1.bf16.msra.mxu0 %v3144
      %3164 = vmatprep.subr.bf16.mxu0 0
      %3165 = vmatpush1.bf16.msra.mxu0 %v3145
      %3166 = vmatprep.subr.bf16.mxu0 0
      %3167 = vmatpush1.bf16.msra.mxu0 %v3146
      %3168 = vmatprep.subr.bf16.mxu0 0
      %3169 = vmatpush1.bf16.msra.mxu0 %v3147
      %3170 = vmatprep.subr.bf16.mxu0 0
      %3171 = vmatpush1.bf16.msra.mxu0 %v3148
      %3172 = vmatprep.subr.bf16.mxu0 0
      %3173 = vmatpush1.bf16.msra.mxu0 %v3149
      %3174 = vmatprep.subr.bf16.mxu0 0
      %3175 = vmatpush1.bf16.msra.mxu0 0
      %3176 = vmatprep.subr.bf16.mxu0 0
      %3177 = vmatpush1.bf16.msra.mxu0 0
      %3178 = vmatprep.subr.bf16.mxu0 0
      %3179 = vmatpush1.bf16.msra.mxu0 0
      %3180 = vmatprep.subr.bf16.mxu0 0
      %3181 = vmatpush1.bf16.msra.mxu0 0
      %3182 = vmatprep.subr.bf16.mxu0 0
      %3183 = vmatpush1.bf16.msra.mxu0 0
      %3184 = vmatprep.subr.bf16.mxu0 0
      %3185 = vmatpush1.bf16.msra.mxu0 0
      %3186 = vmatprep.subr.bf16.mxu0 0
      %3187 = vmatpush1.bf16.msra.mxu0 0
      %3188 = vmatprep.subr.bf16.mxu0 0
      %3189 = vmatpush1.bf16.msra.mxu0 0
      %3190 = vmatprep.mubr.bf16.mxu0 0
      %3191 = vmatmul.mubr.bf16.gmra.mrb[0].mxu0 %v3042
      %v3192 = vpop.f32.mrb[0].mxu0
      %v3193 = vadd.f32 0.0, %v3192
      %v3194 = vpop.f32.mrb[0].mxu0
      %v3195 = vpop.f32.mrb[0].mxu0
      %v3196 = vadd.f32 0.0, %v3195
      %v3197 = vpop.f32.mrb[0].mxu0
      %3198 = vmatprep.mubr.bf16.mxu0 0
      %3199 = vmatmul.mubr.bf16.gmra.mrb[0].mxu0 %v3044
      %v3200 = vpop.f32.mrb[0].mxu0
      %v3201 = vadd.f32 0.0, %v3200
      %v3202 = vpop.f32.mrb[0].mxu0
      %v3203 = vpop.f32.mrb[0].mxu0
      %v3204 = vadd.f32 0.0, %v3203
      %v3205 = vpop.f32.mrb[0].mxu0
      %3206 = vmatprep.mubr.bf16.mxu0 0
      %3207 = vmatmul.mubr.bf16.gmra.mrb[0].mxu0 %v3046
      %v3208 = vpop.f32.mrb[0].mxu0
      %v3209 = vadd.f32 0.0, %v3208
      %v3210 = vpop.f32.mrb[0].mxu0
      %v3211 = vpop.f32.mrb[0].mxu0
      %v3212 = vadd.f32 0.0, %v3211
      %v3213 = vpop.f32.mrb[0].mxu0
      %3214 = vmatprep.mubr.bf16.mxu0 0
      %3215 = vmatmul.mubr.bf16.gmra.mrb[0].mxu0 %v3048
      %v3216 = vpop.f32.mrb[0].mxu0
      %v3217 = vadd.f32 0.0, %v3216
      %v3218 = vpop.f32.mrb[0].mxu0
      %v3219 = vpop.f32.mrb[0].mxu0
      %v3220 = vadd.f32 0.0, %v3219
      %v3221 = vpop.f32.mrb[0].mxu0
      %3222 = vmatprep.mubr.bf16.mxu0 0
      %3223 = vmatmul.mubr.bf16.gmra.mrb[0].mxu0 %v3050
      %v3224 = vpop.f32.mrb[0].mxu0
      %v3225 = vadd.f32 0.0, %v3224
      %v3226 = vpop.f32.mrb[0].mxu0
      %v3227 = vpop.f32.mrb[0].mxu0
      %v3228 = vadd.f32 0.0, %v3227
      %v3229 = vpop.f32.mrb[0].mxu0
      %3230 = vmatprep.mubr.bf16.mxu0 0
      %3231 = vmatmul.mubr.bf16.gmra.mrb[0].mxu0 %v3052
      %v3232 = vpop.f32.mrb[0].mxu0
      %v3233 = vadd.f32 0.0, %v3232
      %v3234 = vpop.f32.mrb[0].mxu0
      %v3235 = vpop.f32.mrb[0].mxu0
      %v3236 = vadd.f32 0.0, %v3235
      %v3237 = vpop.f32.mrb[0].mxu0
      %3238 = vmatprep.mubr.bf16.mxu0 0
      %3239 = vmatmul.mubr.bf16.gmra.mrb[0].mxu0 %v3054
      %v3240 = vpop.f32.mrb[0].mxu0
      %v3241 = vadd.f32 0.0, %v3240
      %v3242 = vpop.f32.mrb[0].mxu0
      %v3243 = vpop.f32.mrb[0].mxu0
      %v3244 = vadd.f32 0.0, %v3243
      %v3245 = vpop.f32.mrb[0].mxu0
      %3246 = vmatprep.mubr.bf16.mxu0 0
      %3247 = vmatmul.mubr.bf16.gmra.mrb[0].mxu0 %v3056
      %v3248 = vpop.f32.mrb[0].mxu0
      %v3249 = vadd.f32 0.0, %v3248
      %v3250 = vpop.f32.mrb[0].mxu0
      %v3251 = vpop.f32.mrb[0].mxu0
      %v3252 = vadd.f32 0.0, %v3251
      %v3253 = vpop.f32.mrb[0].mxu0
      %3254 = vmatprep.mubr.bf16.mxu0 0
      %3255 = vmatmul.mubr.bf16.gmra.mrb[0].mxu0 %v3058
      %v3256 = vpop.f32.mrb[0].mxu0
      %v3257 = vadd.f32 0.0, %v3256
      %v3258 = vpop.f32.mrb[0].mxu0
      %v3259 = vpop.f32.mrb[0].mxu0
      %v3260 = vadd.f32 0.0, %v3259
      %v3261 = vpop.f32.mrb[0].mxu0
      %3262 = vmatprep.mubr.bf16.mxu0 0
      %3263 = vmatmul.mubr.bf16.gmra.mrb[0].mxu0 %v3060
      %v3264 = vpop.f32.mrb[0].mxu0
      %v3265 = vadd.f32 0.0, %v3264
      %v3266 = vpop.f32.mrb[0].mxu0
      %v3267 = vpop.f32.mrb[0].mxu0
      %v3268 = vadd.f32 0.0, %v3267
      %v3269 = vpop.f32.mrb[0].mxu0
      %3270 = vmatprep.mubr.bf16.mxu0 0
      %3271 = vmatmul.mubr.bf16.gmra.mrb[0].mxu0 %v3062
      %v3272 = vpop.f32.mrb[0].mxu0
      %v3273 = vadd.f32 0.0, %v3272
      %v3274 = vpop.f32.mrb[0].mxu0
      %v3275 = vpop.f32.mrb[0].mxu0
      %v3276 = vadd.f32 0.0, %v3275
      %v3277 = vpop.f32.mrb[0].mxu0
      %3278 = vmatprep.mubr.bf16.mxu0 0
      %3279 = vmatmul.mubr.bf16.gmra.mrb[0].mxu0 %v3064
      %v3280 = vpop.f32.mrb[0].mxu0
      %v3281 = vadd.f32 0.0, %v3280
      %v3282 = vpop.f32.mrb[0].mxu0
      %v3283 = vpop.f32.mrb[0].mxu0
      %v3284 = vadd.f32 0.0, %v3283
      %v3285 = vpop.f32.mrb[0].mxu0
      %3286 = vmatprep.mubr.bf16.mxu0 0
      %3287 = vmatmul.mubr.bf16.gmra.mrb[0].mxu0 %v3066
      %v3288 = vpop.f32.mrb[0].mxu0
      %v3289 = vadd.f32 0.0, %v3288
      %v3290 = vpop.f32.mrb[0].mxu0
      %v3291 = vpop.f32.mrb[0].mxu0
      %v3292 = vadd.f32 0.0, %v3291
      %v3293 = vpop.f32.mrb[0].mxu0
      %3294 = vmatprep.mubr.bf16.mxu0 0
      %3295 = vmatmul.mubr.bf16.gmra.mrb[0].mxu0 %v3068
      %v3296 = vpop.f32.mrb[0].mxu0
      %v3297 = vadd.f32 0.0, %v3296
      %v3298 = vpop.f32.mrb[0].mxu0
      %v3299 = vpop.f32.mrb[0].mxu0
      %v3300 = vadd.f32 0.0, %v3299
      %v3301 = vpop.f32.mrb[0].mxu0
      %3302 = vmatprep.mubr.bf16.mxu0 0
      %3303 = vmatmul.mubr.bf16.gmra.mrb[0].mxu0 %v3070
      %v3304 = vpop.f32.mrb[0].mxu0
      %v3305 = vadd.f32 0.0, %v3304
      %v3306 = vpop.f32.mrb[0].mxu0
      %v3307 = vpop.f32.mrb[0].mxu0
      %v3308 = vadd.f32 0.0, %v3307
      %v3309 = vpop.f32.mrb[0].mxu0
      %3310 = vmatprep.mubr.bf16.mxu0 0
      %3311 = vmatmul.mubr.bf16.gmra.mrb[0].mxu0 %v3072
      %v3312 = vpop.f32.mrb[0].mxu0
      %v3313 = vadd.f32 0.0, %v3312
      %v3314 = vpop.f32.mrb[0].mxu0
      %v3315 = vpop.f32.mrb[0].mxu0
      %v3316 = vadd.f32 0.0, %v3315
      %v3317 = vpop.f32.mrb[0].mxu0
      %3318 = vmatprep.mubr.bf16.mxu0 0
      %3319 = vmatmul.mubr.bf16.gmra.mrb[0].mxu0 %v3074
      %v3320 = vpop.f32.mrb[0].mxu0
      %v3321 = vadd.f32 0.0, %v3320
      %v3322 = vpop.f32.mrb[0].mxu0
      %v3323 = vpop.f32.mrb[0].mxu0
      %v3324 = vadd.f32 0.0, %v3323
      %v3325 = vpop.f32.mrb[0].mxu0
      %3326 = vmatprep.mubr.bf16.mxu0 0
      %3327 = vmatmul.mubr.bf16.gmra.mrb[0].mxu0 %v3076
      %v3328 = vpop.f32.mrb[0].mxu0
      %v3329 = vadd.f32 0.0, %v3328
      %v3330 = vpop.f32.mrb[0].mxu0
      %v3331 = vpop.f32.mrb[0].mxu0
      %v3332 = vadd.f32 0.0, %v3331
      %v3333 = vpop.f32.mrb[0].mxu0
      %3334 = vmatprep.mubr.bf16.mxu0 0
      %3335 = vmatmul.mubr.bf16.gmra.mrb[0].mxu0 %v3078
      %v3336 = vpop.f32.mrb[0].mxu0
      %v3337 = vadd.f32 0.0, %v3336
      %v3338 = vpop.f32.mrb[0].mxu0
      %v3339 = vpop.f32.mrb[0].mxu0
      %v3340 = vadd.f32 0.0, %v3339
      %v3341 = vpop.f32.mrb[0].mxu0
      %3342 = vmatprep.mubr.bf16.mxu0 0
      %3343 = vmatmul.mubr.bf16.gmra.mrb[0].mxu0 %v3080
      %v3344 = vpop.f32.mrb[0].mxu0
      %v3345 = vadd.f32 0.0, %v3344
      %v3346 = vpop.f32.mrb[0].mxu0
      %v3347 = vpop.f32.mrb[0].mxu0
      %v3348 = vadd.f32 0.0, %v3347
      %v3349 = vpop.f32.mrb[0].mxu0
      %3350 = vmatprep.mubr.bf16.mxu0 0
      %3351 = vmatmul.mubr.bf16.gmra.mrb[0].mxu0 %v3082
      %v3352 = vpop.f32.mrb[0].mxu0
      %v3353 = vadd.f32 0.0, %v3352
      %v3354 = vpop.f32.mrb[0].mxu0
      %v3355 = vpop.f32.mrb[0].mxu0
      %v3356 = vadd.f32 0.0, %v3355
      %v3357 = vpop.f32.mrb[0].mxu0
      %3358 = vmatprep.mubr.bf16.mxu0 0
      %3359 = vmatmul.mubr.bf16.gmra.mrb[0].mxu0 %v3084
      %v3360 = vpop.f32.mrb[0].mxu0
      %v3361 = vadd.f32 0.0, %v3360
      %v3362 = vpop.f32.mrb[0].mxu0
      %v3363 = vpop.f32.mrb[0].mxu0
      %v3364 = vadd.f32 0.0, %v3363
      %v3365 = vpop.f32.mrb[0].mxu0
      %3366 = vmatprep.mubr.bf16.mxu0 0
      %3367 = vmatmul.mubr.bf16.gmra.mrb[0].mxu0 %v3086
      %v3368 = vpop.f32.mrb[0].mxu0
      %v3369 = vadd.f32 0.0, %v3368
      %v3370 = vpop.f32.mrb[0].mxu0
      %v3371 = vpop.f32.mrb[0].mxu0
      %v3372 = vadd.f32 0.0, %v3371
      %v3373 = vpop.f32.mrb[0].mxu0
      %3374 = vdwg.mxu0
      %v3375 = vadd.f32 %v2929, %v3193
      %v3376 = vadd.f32 %v2930, %v3196
      %v3377 = vadd.f32 %v2931, %v3201
      %v3378 = vadd.f32 %v2932, %v3204
      %v3379 = vadd.f32 %v2933, %v3209
      %v3380 = vadd.f32 %v2934, %v3212
      %v3381 = vadd.f32 %v2935, %v3217
      %v3382 = vadd.f32 %v2936, %v3220
      %v3383 = vadd.f32 %v2937, %v3225
      %v3384 = vadd.f32 %v2938, %v3228
      %v3385 = vadd.f32 %v2939, %v3233
      %v3386 = vadd.f32 %v2940, %v3236
      %v3387 = vadd.f32 %v2941, %v3241
      %v3388 = vadd.f32 %v2942, %v3244
      %v3389 = vadd.f32 %v2943, %v3249
      %v3390 = vadd.f32 %v2944, %v3252
      %v3391 = vadd.f32 %v2945, %v3257
      %v3392 = vadd.f32 %v2946, %v3260
      %v3393 = vadd.f32 %v2947, %v3265
      %v3394 = vadd.f32 %v2948, %v3268
      %v3395 = vadd.f32 %v2949, %v3273
      %v3396 = vadd.f32 %v2950, %v3276
      %v3397 = vadd.f32 %v2951, %v3281
      %v3398 = vadd.f32 %v2952, %v3284
      %v3399 = vadd.f32 %v2953, %v3289
      %v3400 = vadd.f32 %v2954, %v3292
      %v3401 = vadd.f32 %v2955, %v3297
      %v3402 = vadd.f32 %v2956, %v3300
      %v3403 = vadd.f32 %v2957, %v3305
      %v3404 = vadd.f32 %v2958, %v3308
      %v3405 = vadd.f32 %v2959, %v3313
      %v3406 = vadd.f32 %v2960, %v3316
      %v3407 = vadd.f32 %v2961, %v3321
      %v3408 = vadd.f32 %v2962, %v3324
      %v3409 = vadd.f32 %v2963, %v3329
      %v3410 = vadd.f32 %v2964, %v3332
      %v3411 = vadd.f32 %v2965, %v3337
      %v3412 = vadd.f32 %v2966, %v3340
      %v3413 = vadd.f32 %v2967, %v3345
      %v3414 = vadd.f32 %v2968, %v3348
      %v3415 = vadd.f32 %v2969, %v3353
      %v3416 = vadd.f32 %v2970, %v3356
      %v3417 = vadd.f32 %v2971, %v3361
      %v3418 = vadd.f32 %v2972, %v3364
      %v3419 = vadd.f32 %v2973, %v3369
      %v3420 = vadd.f32 %v2974, %v3372
      %v3421 = vld [vmem:[%s334 + $0xc8] sm:$0x1f]
      %v3422 = vld [vmem:[%s2 + $0x1c0] sm:$0xf]
      %v3423 = vld [vmem:[%s2 + $0x1c4] sm:$0xf]
      %v3424 = vld [vmem:[%s2 + $0x1c8] sm:$0xf]
      %v3425 = vld [vmem:[%s2 + $0x1cc] sm:$0xf]
      %v3426 = vld [vmem:[%s2 + $0x1d0] sm:$0xf]
      %v3427 = vld [vmem:[%s2 + $0x1d4] sm:$0xf]
      %v3428 = vld [vmem:[%s2 + $0x1d8] sm:$0xf]
      %v3429 = vld [vmem:[%s2 + $0x1dc] sm:$0xf]
      %v3430 = vld [vmem:[%s2 + $0x1e0] sm:$0xf]
      %v3431 = vld [vmem:[%s2 + $0x1e4] sm:$0xf]
      %v3432 = vld [vmem:[%s2 + $0x1e8] sm:$0xf]
      %v3433 = vld [vmem:[%s2 + $0x1ec] sm:$0xf]
      %v3434 = vld [vmem:[%s2 + $0x1f0] sm:$0xf]
      %v3435 = vld [vmem:[%s2 + $0x1f4] sm:$0xf]
      %v3436 = vld [vmem:[%s2 + $0x1f8] sm:$0xf]
      %v3437 = vld [vmem:[%s2 + $0x1fc] sm:$0xf]
      %vm3438 = vsmask.f32 3328
      %v3440 = vshrl.u32 %v2975, 16
      %v3442 = vrot.slane %v3440, 4
      %v3443 = vshll.u32 %v2975, 16
      %v3445 = vrot.slane %v3443, 5
      %v3446 = vor.u32 %v3442, %v3445
      %v3448 = vshrl.u32 %v2976, 16
      %v3450 = vrot.slane %v3448, 4
      %v3451 = vshll.u32 %v2976, 16
      %v3453 = vrot.slane %v3451, 5
      %v3454 = vor.u32 %v3450, %v3453
      %v3455 = vsel %vm3438, %v3446, %v3454
      %v3457 = vshrl.u32 %v2977, 16
      %v3459 = vrot.slane %v3457, 4
      %v3460 = vshll.u32 %v2977, 16
      %v3462 = vrot.slane %v3460, 5
      %v3463 = vor.u32 %v3459, %v3462
      %v3464 = vsel %vm3438, %v3454, %v3463
      %v3466 = vshrl.u32 %v2978, 16
      %v3468 = vrot.slane %v3466, 4
      %v3469 = vshll.u32 %v2978, 16
      %v3471 = vrot.slane %v3469, 5
      %v3472 = vor.u32 %v3468, %v3471
      %v3473 = vsel %vm3438, %v3463, %v3472
      %v3475 = vshrl.u32 %v2979, 16
      %v3477 = vrot.slane %v3475, 4
      %v3478 = vshll.u32 %v2979, 16
      %v3480 = vrot.slane %v3478, 5
      %v3481 = vor.u32 %v3477, %v3480
      %v3482 = vsel %vm3438, %v3472, %v3481
      %v3484 = vshrl.u32 %v2980, 16
      %v3486 = vrot.slane %v3484, 4
      %v3487 = vshll.u32 %v2980, 16
      %v3489 = vrot.slane %v3487, 5
      %v3490 = vor.u32 %v3486, %v3489
      %v3491 = vsel %vm3438, %v3481, %v3490
      %v3493 = vshrl.u32 %v2981, 16
      %v3495 = vrot.slane %v3493, 4
      %v3496 = vshll.u32 %v2981, 16
      %v3498 = vrot.slane %v3496, 5
      %v3499 = vor.u32 %v3495, %v3498
      %v3500 = vsel %vm3438, %v3490, %v3499
      %v3502 = vshrl.u32 %v2982, 16
      %v3504 = vrot.slane %v3502, 4
      %v3505 = vshll.u32 %v2982, 16
      %v3507 = vrot.slane %v3505, 5
      %v3508 = vor.u32 %v3504, %v3507
      %v3509 = vsel %vm3438, %v3499, %v3508
      %v3511 = vshrl.u32 %v2983, 16
      %v3513 = vrot.slane %v3511, 4
      %v3514 = vshll.u32 %v2983, 16
      %v3516 = vrot.slane %v3514, 5
      %v3517 = vor.u32 %v3513, %v3516
      %v3518 = vsel %vm3438, %v3508, %v3517
      %v3520 = vshrl.u32 %v2984, 16
      %v3522 = vrot.slane %v3520, 4
      %v3523 = vshll.u32 %v2984, 16
      %v3525 = vrot.slane %v3523, 5
      %v3526 = vor.u32 %v3522, %v3525
      %v3527 = vsel %vm3438, %v3517, %v3526
      %v3529 = vshrl.u32 %v2985, 16
      %v3531 = vrot.slane %v3529, 4
      %v3532 = vshll.u32 %v2985, 16
      %v3534 = vrot.slane %v3532, 5
      %v3535 = vor.u32 %v3531, %v3534
      %v3536 = vsel %vm3438, %v3526, %v3535
      %v3538 = vshrl.u32 %v2986, 16
      %v3540 = vrot.slane %v3538, 4
      %v3541 = vshll.u32 %v2986, 16
      %v3543 = vrot.slane %v3541, 5
      %v3544 = vor.u32 %v3540, %v3543
      %v3545 = vsel %vm3438, %v3535, %v3544
      %v3547 = vshrl.u32 %v2987, 16
      %v3549 = vrot.slane %v3547, 4
      %v3550 = vshll.u32 %v2987, 16
      %v3552 = vrot.slane %v3550, 5
      %v3553 = vor.u32 %v3549, %v3552
      %v3554 = vsel %vm3438, %v3544, %v3553
      %v3556 = vshrl.u32 %v2988, 16
      %v3558 = vrot.slane %v3556, 4
      %v3559 = vshll.u32 %v2988, 16
      %v3561 = vrot.slane %v3559, 5
      %v3562 = vor.u32 %v3558, %v3561
      %v3563 = vsel %vm3438, %v3553, %v3562
      %v3565 = vshrl.u32 %v2989, 16
      %v3567 = vrot.slane %v3565, 4
      %v3568 = vshll.u32 %v2989, 16
      %v3570 = vrot.slane %v3568, 5
      %v3571 = vor.u32 %v3567, %v3570
      %v3572 = vsel %vm3438, %v3562, %v3571
      %v3574 = vshrl.u32 %v2990, 16
      %v3576 = vrot.slane %v3574, 4
      %v3577 = vshll.u32 %v2990, 16
      %v3579 = vrot.slane %v3577, 5
      %v3580 = vor.u32 %v3576, %v3579
      %v3581 = vsel %vm3438, %v3571, %v3580
      %v3583 = vshrl.u32 %v2991, 16
      %v3585 = vrot.slane %v3583, 4
      %v3586 = vshll.u32 %v2991, 16
      %v3588 = vrot.slane %v3586, 5
      %v3589 = vor.u32 %v3585, %v3588
      %v3590 = vsel %vm3438, %v3580, %v3589
      %v3592 = vshrl.u32 %v2992, 16
      %v3594 = vrot.slane %v3592, 4
      %v3595 = vshll.u32 %v2992, 16
      %v3597 = vrot.slane %v3595, 5
      %v3598 = vor.u32 %v3594, %v3597
      %v3599 = vsel %vm3438, %v3589, %v3598
      %v3601 = vshrl.u32 %v2993, 16
      %v3603 = vrot.slane %v3601, 4
      %v3604 = vshll.u32 %v2993, 16
      %v3606 = vrot.slane %v3604, 5
      %v3607 = vor.u32 %v3603, %v3606
      %v3608 = vsel %vm3438, %v3598, %v3607
      %v3610 = vshrl.u32 %v2994, 16
      %v3612 = vrot.slane %v3610, 4
      %v3613 = vshll.u32 %v2994, 16
      %v3615 = vrot.slane %v3613, 5
      %v3616 = vor.u32 %v3612, %v3615
      %v3617 = vsel %vm3438, %v3607, %v3616
      %v3619 = vshrl.u32 %v2995, 16
      %v3621 = vrot.slane %v3619, 4
      %v3622 = vshll.u32 %v2995, 16
      %v3624 = vrot.slane %v3622, 5
      %v3625 = vor.u32 %v3621, %v3624
      %v3626 = vsel %vm3438, %v3616, %v3625
      %v3628 = vshrl.u32 %v2996, 16
      %v3630 = vrot.slane %v3628, 4
      %v3631 = vshll.u32 %v2996, 16
      %v3633 = vrot.slane %v3631, 5
      %v3634 = vor.u32 %v3630, %v3633
      %v3635 = vsel %vm3438, %v3625, %v3634
      %v3637 = vshrl.u32 %v2997, 16
      %v3639 = vrot.slane %v3637, 4
      %v3640 = vshll.u32 %v2997, 16
      %v3642 = vrot.slane %v3640, 5
      %v3643 = vor.u32 %v3639, %v3642
      %v3644 = vsel %vm3438, %v3634, %v3643
      %v3646 = vshrl.u32 %v3421, 16
      %v3648 = vrot.slane %v3646, 4
      %v3649 = vshll.u32 %v3421, 16
      %v3651 = vrot.slane %v3649, 5
      %v3652 = vor.u32 %v3648, %v3651
      %v3653 = vsel %vm3438, %v3643, %v3652
      %v3693 = vunpack.c.l.b16 %v3422
      %v3694 = vunpack.c.l.b16 %v3423
      %v3695 = vunpack.c.l.b16 %v3424
      %v3696 = vunpack.c.l.b16 %v3425
      %v3697 = vunpack.c.l.b16 %v3426
      %v3698 = vunpack.c.l.b16 %v3427
      %v3699 = vunpack.c.l.b16 %v3428
      %v3700 = vunpack.c.l.b16 %v3429
      %v3701 = vunpack.c.l.b16 %v3430
      %v3702 = vunpack.c.l.b16 %v3431
      %v3703 = vunpack.c.l.b16 %v3432
      %v3704 = vunpack.c.l.b16 %v3433
      %v3705 = vunpack.c.l.b16 %v3434
      %v3706 = vunpack.c.l.b16 %v3435
      %v3707 = vunpack.c.l.b16 %v3436
      %v3708 = vunpack.c.l.b16 %v3437
      %v3709 = vpack.c.b16 %v3694, %v3693
      %v3710 = vpack.c.b16 %v3696, %v3695
      %v3711 = vpack.c.b16 %v3698, %v3697
      %v3712 = vpack.c.b16 %v3700, %v3699
      %v3713 = vpack.c.b16 %v3702, %v3701
      %v3714 = vpack.c.b16 %v3704, %v3703
      %v3715 = vpack.c.b16 %v3706, %v3705
      %v3716 = vpack.c.b16 %v3708, %v3707
      %3725 = vmatprep.subr.bf16.mxu0 0
      %3726 = vmatpush1.bf16.msra.mxu0 %v3709
      %3727 = vmatprep.subr.bf16.mxu0 0
      %3728 = vmatpush1.bf16.msra.mxu0 %v3710
      %3729 = vmatprep.subr.bf16.mxu0 0
      %3730 = vmatpush1.bf16.msra.mxu0 %v3711
      %3731 = vmatprep.subr.bf16.mxu0 0
      %3732 = vmatpush1.bf16.msra.mxu0 %v3712
      %3733 = vmatprep.subr.bf16.mxu0 0
      %3734 = vmatpush1.bf16.msra.mxu0 %v3713
      %3735 = vmatprep.subr.bf16.mxu0 0
      %3736 = vmatpush1.bf16.msra.mxu0 %v3714
      %3737 = vmatprep.subr.bf16.mxu0 0
      %3738 = vmatpush1.bf16.msra.mxu0 %v3715
      %3739 = vmatprep.subr.bf16.mxu0 0
      %3740 = vmatpush1.bf16.msra.mxu0 %v3716
      %3741 = vmatprep.subr.bf16.mxu0 0
      %3742 = vmatpush1.bf16.msra.mxu0 0
      %3743 = vmatprep.subr.bf16.mxu0 0
      %3744 = vmatpush1.bf16.msra.mxu0 0
      %3745 = vmatprep.subr.bf16.mxu0 0
      %3746 = vmatpush1.bf16.msra.mxu0 0
      %3747 = vmatprep.subr.bf16.mxu0 0
      %3748 = vmatpush1.bf16.msra.mxu0 0
      %3749 = vmatprep.subr.bf16.mxu0 0
      %3750 = vmatpush1.bf16.msra.mxu0 0
      %3751 = vmatprep.subr.bf16.mxu0 0
      %3752 = vmatpush1.bf16.msra.mxu0 0
      %3753 = vmatprep.subr.bf16.mxu0 0
      %3754 = vmatpush1.bf16.msra.mxu0 0
      %3755 = vmatprep.subr.bf16.mxu0 0
      %3756 = vmatpush1.bf16.msra.mxu0 0
      %3757 = vmatprep.mubr.bf16.mxu0 0
      %3758 = vmatmul.mubr.bf16.gmra.mrb[0].mxu0 %v3455
      %v3759 = vpop.f32.mrb[0].mxu0
      %v3760 = vadd.f32 0.0, %v3759
      %v3761 = vpop.f32.mrb[0].mxu0
      %v3762 = vpop.f32.mrb[0].mxu0
      %v3763 = vadd.f32 0.0, %v3762
      %v3764 = vpop.f32.mrb[0].mxu0
      %3765 = vmatprep.mubr.bf16.mxu0 0
      %3766 = vmatmul.mubr.bf16.gmra.mrb[0].mxu0 %v3464
      %v3767 = vpop.f32.mrb[0].mxu0
      %v3768 = vadd.f32 0.0, %v3767
      %v3769 = vpop.f32.mrb[0].mxu0
      %v3770 = vpop.f32.mrb[0].mxu0
      %v3771 = vadd.f32 0.0, %v3770
      %v3772 = vpop.f32.mrb[0].mxu0
      %3773 = vmatprep.mubr.bf16.mxu0 0
      %3774 = vmatmul.mubr.bf16.gmra.mrb[0].mxu0 %v3473
      %v3775 = vpop.f32.mrb[0].mxu0
      %v3776 = vadd.f32 0.0, %v3775
      %v3777 = vpop.f32.mrb[0].mxu0
      %v3778 = vpop.f32.mrb[0].mxu0
      %v3779 = vadd.f32 0.0, %v3778
      %v3780 = vpop.f32.mrb[0].mxu0
      %3781 = vmatprep.mubr.bf16.mxu0 0
      %3782 = vmatmul.mubr.bf16.gmra.mrb[0].mxu0 %v3482
      %v3783 = vpop.f32.mrb[0].mxu0
      %v3784 = vadd.f32 0.0, %v3783
      %v3785 = vpop.f32.mrb[0].mxu0
      %v3786 = vpop.f32.mrb[0].mxu0
      %v3787 = vadd.f32 0.0, %v3786
      %v3788 = vpop.f32.mrb[0].mxu0
      %3789 = vmatprep.mubr.bf16.mxu0 0
      %3790 = vmatmul.mubr.bf16.gmra.mrb[0].mxu0 %v3491
      %v3791 = vpop.f32.mrb[0].mxu0
      %v3792 = vadd.f32 0.0, %v3791
      %v3793 = vpop.f32.mrb[0].mxu0
      %v3794 = vpop.f32.mrb[0].mxu0
      %v3795 = vadd.f32 0.0, %v3794
      %v3796 = vpop.f32.mrb[0].mxu0
      %3797 = vmatprep.mubr.bf16.mxu0 0
      %3798 = vmatmul.mubr.bf16.gmra.mrb[0].mxu0 %v3500
      %v3799 = vpop.f32.mrb[0].mxu0
      %v3800 = vadd.f32 0.0, %v3799
      %v3801 = vpop.f32.mrb[0].mxu0
      %v3802 = vpop.f32.mrb[0].mxu0
      %v3803 = vadd.f32 0.0, %v3802
      %v3804 = vpop.f32.mrb[0].mxu0
      %3805 = vmatprep.mubr.bf16.mxu0 0
      %3806 = vmatmul.mubr.bf16.gmra.mrb[0].mxu0 %v3509
      %v3807 = vpop.f32.mrb[0].mxu0
      %v3808 = vadd.f32 0.0, %v3807
      %v3809 = vpop.f32.mrb[0].mxu0
      %v3810 = vpop.f32.mrb[0].mxu0
      %v3811 = vadd.f32 0.0, %v3810
      %v3812 = vpop.f32.mrb[0].mxu0
      %3813 = vmatprep.mubr.bf16.mxu0 0
      %3814 = vmatmul.mubr.bf16.gmra.mrb[0].mxu0 %v3518
      %v3815 = vpop.f32.mrb[0].mxu0
      %v3816 = vadd.f32 0.0, %v3815
      %v3817 = vpop.f32.mrb[0].mxu0
      %v3818 = vpop.f32.mrb[0].mxu0
      %v3819 = vadd.f32 0.0, %v3818
      %v3820 = vpop.f32.mrb[0].mxu0
      %3821 = vmatprep.mubr.bf16.mxu0 0
      %3822 = vmatmul.mubr.bf16.gmra.mrb[0].mxu0 %v3527
      %v3823 = vpop.f32.mrb[0].mxu0
      %v3824 = vadd.f32 0.0, %v3823
      %v3825 = vpop.f32.mrb[0].mxu0
      %v3826 = vpop.f32.mrb[0].mxu0
      %v3827 = vadd.f32 0.0, %v3826
      %v3828 = vpop.f32.mrb[0].mxu0
      %3829 = vmatprep.mubr.bf16.mxu0 0
      %3830 = vmatmul.mubr.bf16.gmra.mrb[0].mxu0 %v3536
      %v3831 = vpop.f32.mrb[0].mxu0
      %v3832 = vadd.f32 0.0, %v3831
      %v3833 = vpop.f32.mrb[0].mxu0
      %v3834 = vpop.f32.mrb[0].mxu0
      %v3835 = vadd.f32 0.0, %v3834
      %v3836 = vpop.f32.mrb[0].mxu0
      %3837 = vmatprep.mubr.bf16.mxu0 0
      %3838 = vmatmul.mubr.bf16.gmra.mrb[0].mxu0 %v3545
      %v3839 = vpop.f32.mrb[0].mxu0
      %v3840 = vadd.f32 0.0, %v3839
      %v3841 = vpop.f32.mrb[0].mxu0
      %v3842 = vpop.f32.mrb[0].mxu0
      %v3843 = vadd.f32 0.0, %v3842
      %v3844 = vpop.f32.mrb[0].mxu0
      %3845 = vmatprep.mubr.bf16.mxu0 0
      %3846 = vmatmul.mubr.bf16.gmra.mrb[0].mxu0 %v3554
      %v3847 = vpop.f32.mrb[0].mxu0
      %v3848 = vadd.f32 0.0, %v3847
      %v3849 = vpop.f32.mrb[0].mxu0
      %v3850 = vpop.f32.mrb[0].mxu0
      %v3851 = vadd.f32 0.0, %v3850
      %v3852 = vpop.f32.mrb[0].mxu0
      %3853 = vmatprep.mubr.bf16.mxu0 0
      %3854 = vmatmul.mubr.bf16.gmra.mrb[0].mxu0 %v3563
      %v3855 = vpop.f32.mrb[0].mxu0
      %v3856 = vadd.f32 0.0, %v3855
      %v3857 = vpop.f32.mrb[0].mxu0
      %v3858 = vpop.f32.mrb[0].mxu0
      %v3859 = vadd.f32 0.0, %v3858
      %v3860 = vpop.f32.mrb[0].mxu0
      %3861 = vmatprep.mubr.bf16.mxu0 0
      %3862 = vmatmul.mubr.bf16.gmra.mrb[0].mxu0 %v3572
      %v3863 = vpop.f32.mrb[0].mxu0
      %v3864 = vadd.f32 0.0, %v3863
      %v3865 = vpop.f32.mrb[0].mxu0
      %v3866 = vpop.f32.mrb[0].mxu0
      %v3867 = vadd.f32 0.0, %v3866
      %v3868 = vpop.f32.mrb[0].mxu0
      %3869 = vmatprep.mubr.bf16.mxu0 0
      %3870 = vmatmul.mubr.bf16.gmra.mrb[0].mxu0 %v3581
      %v3871 = vpop.f32.mrb[0].mxu0
      %v3872 = vadd.f32 0.0, %v3871
      %v3873 = vpop.f32.mrb[0].mxu0
      %v3874 = vpop.f32.mrb[0].mxu0
      %v3875 = vadd.f32 0.0, %v3874
      %v3876 = vpop.f32.mrb[0].mxu0
      %3877 = vmatprep.mubr.bf16.mxu0 0
      %3878 = vmatmul.mubr.bf16.gmra.mrb[0].mxu0 %v3590
      %v3879 = vpop.f32.mrb[0].mxu0
      %v3880 = vadd.f32 0.0, %v3879
      %v3881 = vpop.f32.mrb[0].mxu0
      %v3882 = vpop.f32.mrb[0].mxu0
      %v3883 = vadd.f32 0.0, %v3882
      %v3884 = vpop.f32.mrb[0].mxu0
      %3885 = vmatprep.mubr.bf16.mxu0 0
      %3886 = vmatmul.mubr.bf16.gmra.mrb[0].mxu0 %v3599
      %v3887 = vpop.f32.mrb[0].mxu0
      %v3888 = vadd.f32 0.0, %v3887
      %v3889 = vpop.f32.mrb[0].mxu0
      %v3890 = vpop.f32.mrb[0].mxu0
      %v3891 = vadd.f32 0.0, %v3890
      %v3892 = vpop.f32.mrb[0].mxu0
      %3893 = vmatprep.mubr.bf16.mxu0 0
      %3894 = vmatmul.mubr.bf16.gmra.mrb[0].mxu0 %v3608
      %v3895 = vpop.f32.mrb[0].mxu0
      %v3896 = vadd.f32 0.0, %v3895
      %v3897 = vpop.f32.mrb[0].mxu0
      %v3898 = vpop.f32.mrb[0].mxu0
      %v3899 = vadd.f32 0.0, %v3898
      %v3900 = vpop.f32.mrb[0].mxu0
      %3901 = vmatprep.mubr.bf16.mxu0 0
      %3902 = vmatmul.mubr.bf16.gmra.mrb[0].mxu0 %v3617
      %v3903 = vpop.f32.mrb[0].mxu0
      %v3904 = vadd.f32 0.0, %v3903
      %v3905 = vpop.f32.mrb[0].mxu0
      %v3906 = vpop.f32.mrb[0].mxu0
      %v3907 = vadd.f32 0.0, %v3906
      %v3908 = vpop.f32.mrb[0].mxu0
      %3909 = vmatprep.mubr.bf16.mxu0 0
      %3910 = vmatmul.mubr.bf16.gmra.mrb[0].mxu0 %v3626
      %v3911 = vpop.f32.mrb[0].mxu0
      %v3912 = vadd.f32 0.0, %v3911
      %v3913 = vpop.f32.mrb[0].mxu0
      %v3914 = vpop.f32.mrb[0].mxu0
      %v3915 = vadd.f32 0.0, %v3914
      %v3916 = vpop.f32.mrb[0].mxu0
      %3917 = vmatprep.mubr.bf16.mxu0 0
      %3918 = vmatmul.mubr.bf16.gmra.mrb[0].mxu0 %v3635
      %v3919 = vpop.f32.mrb[0].mxu0
      %v3920 = vadd.f32 0.0, %v3919
      %v3921 = vpop.f32.mrb[0].mxu0
      %v3922 = vpop.f32.mrb[0].mxu0
      %v3923 = vadd.f32 0.0, %v3922
      %v3924 = vpop.f32.mrb[0].mxu0
      %3925 = vmatprep.mubr.bf16.mxu0 0
      %3926 = vmatmul.mubr.bf16.gmra.mrb[0].mxu0 %v3644
      %v3927 = vpop.f32.mrb[0].mxu0
      %v3928 = vadd.f32 0.0, %v3927
      %v3929 = vpop.f32.mrb[0].mxu0
      %v3930 = vpop.f32.mrb[0].mxu0
      %v3931 = vadd.f32 0.0, %v3930
      %v3932 = vpop.f32.mrb[0].mxu0
      %3933 = vmatprep.mubr.bf16.mxu0 0
      %3934 = vmatmul.mubr.bf16.gmra.mrb[0].mxu0 %v3653
      %v3935 = vpop.f32.mrb[0].mxu0
      %v3936 = vadd.f32 0.0, %v3935
      %v3937 = vpop.f32.mrb[0].mxu0
      %v3938 = vpop.f32.mrb[0].mxu0
      %v3939 = vadd.f32 0.0, %v3938
      %v3940 = vpop.f32.mrb[0].mxu0
      %3941 = vdwg.mxu0
      %v3942 = vadd.f32 %v3375, %v3760
      %v3943 = vadd.f32 %v3376, %v3763
      %v3944 = vadd.f32 %v3377, %v3768
      %v3945 = vadd.f32 %v3378, %v3771
      %v3946 = vadd.f32 %v3379, %v3776
      %v3947 = vadd.f32 %v3380, %v3779
      %v3948 = vadd.f32 %v3381, %v3784
      %v3949 = vadd.f32 %v3382, %v3787
      %v3950 = vadd.f32 %v3383, %v3792
      %v3951 = vadd.f32 %v3384, %v3795
      %v3952 = vadd.f32 %v3385, %v3800
      %v3953 = vadd.f32 %v3386, %v3803
      %v3954 = vadd.f32 %v3387, %v3808
      %v3955 = vadd.f32 %v3388, %v3811
      %v3956 = vadd.f32 %v3389, %v3816
      %v3957 = vadd.f32 %v3390, %v3819
      %v3958 = vadd.f32 %v3391, %v3824
      %v3959 = vadd.f32 %v3392, %v3827
      %v3960 = vadd.f32 %v3393, %v3832
      %v3961 = vadd.f32 %v3394, %v3835
      %v3962 = vadd.f32 %v3395, %v3840
      %v3963 = vadd.f32 %v3396, %v3843
      %v3964 = vadd.f32 %v3397, %v3848
      %v3965 = vadd.f32 %v3398, %v3851
      %v3966 = vadd.f32 %v3399, %v3856
      %v3967 = vadd.f32 %v3400, %v3859
      %v3968 = vadd.f32 %v3401, %v3864
      %v3969 = vadd.f32 %v3402, %v3867
      %v3970 = vadd.f32 %v3403, %v3872
      %v3971 = vadd.f32 %v3404, %v3875
      %v3972 = vadd.f32 %v3405, %v3880
      %v3973 = vadd.f32 %v3406, %v3883
      %v3974 = vadd.f32 %v3407, %v3888
      %v3975 = vadd.f32 %v3408, %v3891
      %v3976 = vadd.f32 %v3409, %v3896
      %v3977 = vadd.f32 %v3410, %v3899
      %v3978 = vadd.f32 %v3411, %v3904
      %v3979 = vadd.f32 %v3412, %v3907
      %v3980 = vadd.f32 %v3413, %v3912
      %v3981 = vadd.f32 %v3414, %v3915
      %v3982 = vadd.f32 %v3415, %v3920
      %v3983 = vadd.f32 %v3416, %v3923
      %v3984 = vadd.f32 %v3417, %v3928
      %v3985 = vadd.f32 %v3418, %v3931
      %v3986 = vadd.f32 %v3419, %v3936
      %v3987 = vadd.f32 %v3420, %v3939
      %v3988 = vld [vmem:[%s334 + $0x10] sm:$0xe0]
      %v3989 = vld [vmem:[%s2 + $0x200] sm:$0xf]
      %v3990 = vld [vmem:[%s2 + $0x204] sm:$0xf]
      %v3991 = vld [vmem:[%s2 + $0x208] sm:$0xf]
      %v3992 = vld [vmem:[%s2 + $0x20c] sm:$0xf]
      %v3993 = vld [vmem:[%s2 + $0x210] sm:$0xf]
      %v3994 = vld [vmem:[%s2 + $0x214] sm:$0xf]
      %v3995 = vld [vmem:[%s2 + $0x218] sm:$0xf]
      %v3996 = vld [vmem:[%s2 + $0x21c] sm:$0xf]
      %v3997 = vld [vmem:[%s2 + $0x220] sm:$0xf]
      %v3998 = vld [vmem:[%s2 + $0x224] sm:$0xf]
      %v3999 = vld [vmem:[%s2 + $0x228] sm:$0xf]
      %v4000 = vld [vmem:[%s2 + $0x22c] sm:$0xf]
      %v4001 = vld [vmem:[%s2 + $0x230] sm:$0xf]
      %v4002 = vld [vmem:[%s2 + $0x234] sm:$0xf]
      %v4003 = vld [vmem:[%s2 + $0x238] sm:$0xf]
      %v4004 = vld [vmem:[%s2 + $0x23c] sm:$0xf]
      %vm4007 = vcmask 1042432
      %v4008 = vrot.slane %v3988, 5
      %v4009 = vrot.slane %v2976, 5
      %v4010 = vsel %vm4007, %v4008, %v4009
      %v4011 = vrot.slane %v2977, 5
      %v4012 = vsel %vm4007, %v4009, %v4011
      %v4013 = vrot.slane %v2978, 5
      %v4014 = vsel %vm4007, %v4011, %v4013
      %v4015 = vrot.slane %v2979, 5
      %v4016 = vsel %vm4007, %v4013, %v4015
      %v4017 = vrot.slane %v2980, 5
      %v4018 = vsel %vm4007, %v4015, %v4017
      %v4019 = vrot.slane %v2981, 5
      %v4020 = vsel %vm4007, %v4017, %v4019
      %v4021 = vrot.slane %v2982, 5
      %v4022 = vsel %vm4007, %v4019, %v4021
      %v4023 = vrot.slane %v2983, 5
      %v4024 = vsel %vm4007, %v4021, %v4023
      %v4025 = vrot.slane %v2984, 5
      %v4026 = vsel %vm4007, %v4023, %v4025
      %v4027 = vrot.slane %v2985, 5
      %v4028 = vsel %vm4007, %v4025, %v4027
      %v4029 = vrot.slane %v2986, 5
      %v4030 = vsel %vm4007, %v4027, %v4029
      %v4031 = vrot.slane %v2987, 5
      %v4032 = vsel %vm4007, %v4029, %v4031
      %v4033 = vrot.slane %v2988, 5
      %v4034 = vsel %vm4007, %v4031, %v4033
      %v4035 = vrot.slane %v2989, 5
      %v4036 = vsel %vm4007, %v4033, %v4035
      %v4037 = vrot.slane %v2990, 5
      %v4038 = vsel %vm4007, %v4035, %v4037
      %v4039 = vrot.slane %v2991, 5
      %v4040 = vsel %vm4007, %v4037, %v4039
      %v4041 = vrot.slane %v2992, 5
      %v4042 = vsel %vm4007, %v4039, %v4041
      %v4043 = vrot.slane %v2993, 5
      %v4044 = vsel %vm4007, %v4041, %v4043
      %v4045 = vrot.slane %v2994, 5
      %v4046 = vsel %vm4007, %v4043, %v4045
      %v4047 = vrot.slane %v2995, 5
      %v4048 = vsel %vm4007, %v4045, %v4047
      %v4049 = vrot.slane %v2996, 5
      %v4050 = vsel %vm4007, %v4047, %v4049
      %v4051 = vrot.slane %v2997, 5
      %v4052 = vsel %vm4007, %v4049, %v4051
      %v4053 = vrot.slane %v3421, 5
      %v4054 = vsel %vm4007, %v4051, %v4053
      %v4094 = vunpack.c.l.b16 %v3989
      %v4095 = vunpack.c.l.b16 %v3990
      %v4096 = vunpack.c.l.b16 %v3991
      %v4097 = vunpack.c.l.b16 %v3992
      %v4098 = vunpack.c.l.b16 %v3993
      %v4099 = vunpack.c.l.b16 %v3994
      %v4100 = vunpack.c.l.b16 %v3995
      %v4101 = vunpack.c.l.b16 %v3996
      %v4102 = vunpack.c.l.b16 %v3997
      %v4103 = vunpack.c.l.b16 %v3998
      %v4104 = vunpack.c.l.b16 %v3999
      %v4105 = vunpack.c.l.b16 %v4000
      %v4106 = vunpack.c.l.b16 %v4001
      %v4107 = vunpack.c.l.b16 %v4002
      %v4108 = vunpack.c.l.b16 %v4003
      %v4109 = vunpack.c.l.b16 %v4004
      %v4110 = vpack.c.b16 %v4095, %v4094
      %v4111 = vpack.c.b16 %v4097, %v4096
      %v4112 = vpack.c.b16 %v4099, %v4098
      %v4113 = vpack.c.b16 %v4101, %v4100
      %v4114 = vpack.c.b16 %v4103, %v4102
      %v4115 = vpack.c.b16 %v4105, %v4104
      %v4116 = vpack.c.b16 %v4107, %v4106
      %v4117 = vpack.c.b16 %v4109, %v4108
      %4126 = vmatprep.subr.bf16.mxu0 0
      %4127 = vmatpush1.bf16.msra.mxu0 %v4110
      %4128 = vmatprep.subr.bf16.mxu0 0
      %4129 = vmatpush1.bf16.msra.mxu0 %v4111
      %4130 = vmatprep.subr.bf16.mxu0 0
      %4131 = vmatpush1.bf16.msra.mxu0 %v4112
      %4132 = vmatprep.subr.bf16.mxu0 0
      %4133 = vmatpush1.bf16.msra.mxu0 %v4113
      %4134 = vmatprep.subr.bf16.mxu0 0
      %4135 = vmatpush1.bf16.msra.mxu0 %v4114
      %4136 = vmatprep.subr.bf16.mxu0 0
      %4137 = vmatpush1.bf16.msra.mxu0 %v4115
      %4138 = vmatprep.subr.bf16.mxu0 0
      %4139 = vmatpush1.bf16.msra.mxu0 %v4116
      %4140 = vmatprep.subr.bf16.mxu0 0
      %4141 = vmatpush1.bf16.msra.mxu0 %v4117
      %4142 = vmatprep.subr.bf16.mxu0 0
      %4143 = vmatpush1.bf16.msra.mxu0 0
      %4144 = vmatprep.subr.bf16.mxu0 0
      %4145 = vmatpush1.bf16.msra.mxu0 0
      %4146 = vmatprep.subr.bf16.mxu0 0
      %4147 = vmatpush1.bf16.msra.mxu0 0
      %4148 = vmatprep.subr.bf16.mxu0 0
      %4149 = vmatpush1.bf16.msra.mxu0 0
      %4150 = vmatprep.subr.bf16.mxu0 0
      %4151 = vmatpush1.bf16.msra.mxu0 0
      %4152 = vmatprep.subr.bf16.mxu0 0
      %4153 = vmatpush1.bf16.msra.mxu0 0
      %4154 = vmatprep.subr.bf16.mxu0 0
      %4155 = vmatpush1.bf16.msra.mxu0 0
      %4156 = vmatprep.subr.bf16.mxu0 0
      %4157 = vmatpush1.bf16.msra.mxu0 0
      %4158 = vmatprep.mubr.bf16.mxu0 0
      %4159 = vmatmul.mubr.bf16.gmra.mrb[0].mxu0 %v4010
      %v4160 = vpop.f32.mrb[0].mxu0
      %v4161 = vadd.f32 0.0, %v4160
      %v4162 = vpop.f32.mrb[0].mxu0
      %v4163 = vpop.f32.mrb[0].mxu0
      %v4164 = vadd.f32 0.0, %v4163
      %v4165 = vpop.f32.mrb[0].mxu0
      %4166 = vmatprep.mubr.bf16.mxu0 0
      %4167 = vmatmul.mubr.bf16.gmra.mrb[0].mxu0 %v4012
      %v4168 = vpop.f32.mrb[0].mxu0
      %v4169 = vadd.f32 0.0, %v4168
      %v4170 = vpop.f32.mrb[0].mxu0
      %v4171 = vpop.f32.mrb[0].mxu0
      %v4172 = vadd.f32 0.0, %v4171
      %v4173 = vpop.f32.mrb[0].mxu0
      %4174 = vmatprep.mubr.bf16.mxu0 0
      %4175 = vmatmul.mubr.bf16.gmra.mrb[0].mxu0 %v4014
      %v4176 = vpop.f32.mrb[0].mxu0
      %v4177 = vadd.f32 0.0, %v4176
      %v4178 = vpop.f32.mrb[0].mxu0
      %v4179 = vpop.f32.mrb[0].mxu0
      %v4180 = vadd.f32 0.0, %v4179
      %v4181 = vpop.f32.mrb[0].mxu0
      %4182 = vmatprep.mubr.bf16.mxu0 0
      %4183 = vmatmul.mubr.bf16.gmra.mrb[0].mxu0 %v4016
      %v4184 = vpop.f32.mrb[0].mxu0
      %v4185 = vadd.f32 0.0, %v4184
      %v4186 = vpop.f32.mrb[0].mxu0
      %v4187 = vpop.f32.mrb[0].mxu0
      %v4188 = vadd.f32 0.0, %v4187
      %v4189 = vpop.f32.mrb[0].mxu0
      %4190 = vmatprep.mubr.bf16.mxu0 0
      %4191 = vmatmul.mubr.bf16.gmra.mrb[0].mxu0 %v4018
      %v4192 = vpop.f32.mrb[0].mxu0
      %v4193 = vadd.f32 0.0, %v4192
      %v4194 = vpop.f32.mrb[0].mxu0
      %v4195 = vpop.f32.mrb[0].mxu0
      %v4196 = vadd.f32 0.0, %v4195
      %v4197 = vpop.f32.mrb[0].mxu0
      %4198 = vmatprep.mubr.bf16.mxu0 0
      %4199 = vmatmul.mubr.bf16.gmra.mrb[0].mxu0 %v4020
      %v4200 = vpop.f32.mrb[0].mxu0
      %v4201 = vadd.f32 0.0, %v4200
      %v4202 = vpop.f32.mrb[0].mxu0
      %v4203 = vpop.f32.mrb[0].mxu0
      %v4204 = vadd.f32 0.0, %v4203
      %v4205 = vpop.f32.mrb[0].mxu0
      %4206 = vmatprep.mubr.bf16.mxu0 0
      %4207 = vmatmul.mubr.bf16.gmra.mrb[0].mxu0 %v4022
      %v4208 = vpop.f32.mrb[0].mxu0
      %v4209 = vadd.f32 0.0, %v4208
      %v4210 = vpop.f32.mrb[0].mxu0
      %v4211 = vpop.f32.mrb[0].mxu0
      %v4212 = vadd.f32 0.0, %v4211
      %v4213 = vpop.f32.mrb[0].mxu0
      %4214 = vmatprep.mubr.bf16.mxu0 0
      %4215 = vmatmul.mubr.bf16.gmra.mrb[0].mxu0 %v4024
      %v4216 = vpop.f32.mrb[0].mxu0
      %v4217 = vadd.f32 0.0, %v4216
      %v4218 = vpop.f32.mrb[0].mxu0
      %v4219 = vpop.f32.mrb[0].mxu0
      %v4220 = vadd.f32 0.0, %v4219
      %v4221 = vpop.f32.mrb[0].mxu0
      %4222 = vmatprep.mubr.bf16.mxu0 0
      %4223 = vmatmul.mubr.bf16.gmra.mrb[0].mxu0 %v4026
      %v4224 = vpop.f32.mrb[0].mxu0
      %v4225 = vadd.f32 0.0, %v4224
      %v4226 = vpop.f32.mrb[0].mxu0
      %v4227 = vpop.f32.mrb[0].mxu0
      %v4228 = vadd.f32 0.0, %v4227
      %v4229 = vpop.f32.mrb[0].mxu0
      %4230 = vmatprep.mubr.bf16.mxu0 0
      %4231 = vmatmul.mubr.bf16.gmra.mrb[0].mxu0 %v4028
      %v4232 = vpop.f32.mrb[0].mxu0
      %v4233 = vadd.f32 0.0, %v4232
      %v4234 = vpop.f32.mrb[0].mxu0
      %v4235 = vpop.f32.mrb[0].mxu0
      %v4236 = vadd.f32 0.0, %v4235
      %v4237 = vpop.f32.mrb[0].mxu0
      %4238 = vmatprep.mubr.bf16.mxu0 0
      %4239 = vmatmul.mubr.bf16.gmra.mrb[0].mxu0 %v4030
      %v4240 = vpop.f32.mrb[0].mxu0
      %v4241 = vadd.f32 0.0, %v4240
      %v4242 = vpop.f32.mrb[0].mxu0
      %v4243 = vpop.f32.mrb[0].mxu0
      %v4244 = vadd.f32 0.0, %v4243
      %v4245 = vpop.f32.mrb[0].mxu0
      %4246 = vmatprep.mubr.bf16.mxu0 0
      %4247 = vmatmul.mubr.bf16.gmra.mrb[0].mxu0 %v4032
      %v4248 = vpop.f32.mrb[0].mxu0
      %v4249 = vadd.f32 0.0, %v4248
      %v4250 = vpop.f32.mrb[0].mxu0
      %v4251 = vpop.f32.mrb[0].mxu0
      %v4252 = vadd.f32 0.0, %v4251
      %v4253 = vpop.f32.mrb[0].mxu0
      %4254 = vmatprep.mubr.bf16.mxu0 0
      %4255 = vmatmul.mubr.bf16.gmra.mrb[0].mxu0 %v4034
      %v4256 = vpop.f32.mrb[0].mxu0
      %v4257 = vadd.f32 0.0, %v4256
      %v4258 = vpop.f32.mrb[0].mxu0
      %v4259 = vpop.f32.mrb[0].mxu0
      %v4260 = vadd.f32 0.0, %v4259
      %v4261 = vpop.f32.mrb[0].mxu0
      %4262 = vmatprep.mubr.bf16.mxu0 0
      %4263 = vmatmul.mubr.bf16.gmra.mrb[0].mxu0 %v4036
      %v4264 = vpop.f32.mrb[0].mxu0
      %v4265 = vadd.f32 0.0, %v4264
      %v4266 = vpop.f32.mrb[0].mxu0
      %v4267 = vpop.f32.mrb[0].mxu0
      %v4268 = vadd.f32 0.0, %v4267
      %v4269 = vpop.f32.mrb[0].mxu0
      %4270 = vmatprep.mubr.bf16.mxu0 0
      %4271 = vmatmul.mubr.bf16.gmra.mrb[0].mxu0 %v4038
      %v4272 = vpop.f32.mrb[0].mxu0
      %v4273 = vadd.f32 0.0, %v4272
      %v4274 = vpop.f32.mrb[0].mxu0
      %v4275 = vpop.f32.mrb[0].mxu0
      %v4276 = vadd.f32 0.0, %v4275
      %v4277 = vpop.f32.mrb[0].mxu0
      %4278 = vmatprep.mubr.bf16.mxu0 0
      %4279 = vmatmul.mubr.bf16.gmra.mrb[0].mxu0 %v4040
      %v4280 = vpop.f32.mrb[0].mxu0
      %v4281 = vadd.f32 0.0, %v4280
      %v4282 = vpop.f32.mrb[0].mxu0
      %v4283 = vpop.f32.mrb[0].mxu0
      %v4284 = vadd.f32 0.0, %v4283
      %v4285 = vpop.f32.mrb[0].mxu0
      %4286 = vmatprep.mubr.bf16.mxu0 0
      %4287 = vmatmul.mubr.bf16.gmra.mrb[0].mxu0 %v4042
      %v4288 = vpop.f32.mrb[0].mxu0
      %v4289 = vadd.f32 0.0, %v4288
      %v4290 = vpop.f32.mrb[0].mxu0
      %v4291 = vpop.f32.mrb[0].mxu0
      %v4292 = vadd.f32 0.0, %v4291
      %v4293 = vpop.f32.mrb[0].mxu0
      %4294 = vmatprep.mubr.bf16.mxu0 0
      %4295 = vmatmul.mubr.bf16.gmra.mrb[0].mxu0 %v4044
      %v4296 = vpop.f32.mrb[0].mxu0
      %v4297 = vadd.f32 0.0, %v4296
      %v4298 = vpop.f32.mrb[0].mxu0
      %v4299 = vpop.f32.mrb[0].mxu0
      %v4300 = vadd.f32 0.0, %v4299
      %v4301 = vpop.f32.mrb[0].mxu0
      %4302 = vmatprep.mubr.bf16.mxu0 0
      %4303 = vmatmul.mubr.bf16.gmra.mrb[0].mxu0 %v4046
      %v4304 = vpop.f32.mrb[0].mxu0
      %v4305 = vadd.f32 0.0, %v4304
      %v4306 = vpop.f32.mrb[0].mxu0
      %v4307 = vpop.f32.mrb[0].mxu0
      %v4308 = vadd.f32 0.0, %v4307
      %v4309 = vpop.f32.mrb[0].mxu0
      %4310 = vmatprep.mubr.bf16.mxu0 0
      %4311 = vmatmul.mubr.bf16.gmra.mrb[0].mxu0 %v4048
      %v4312 = vpop.f32.mrb[0].mxu0
      %v4313 = vadd.f32 0.0, %v4312
      %v4314 = vpop.f32.mrb[0].mxu0
      %v4315 = vpop.f32.mrb[0].mxu0
      %v4316 = vadd.f32 0.0, %v4315
      %v4317 = vpop.f32.mrb[0].mxu0
      %4318 = vmatprep.mubr.bf16.mxu0 0
      %4319 = vmatmul.mubr.bf16.gmra.mrb[0].mxu0 %v4050
      %v4320 = vpop.f32.mrb[0].mxu0
      %v4321 = vadd.f32 0.0, %v4320
      %v4322 = vpop.f32.mrb[0].mxu0
      %v4323 = vpop.f32.mrb[0].mxu0
      %v4324 = vadd.f32 0.0, %v4323
      %v4325 = vpop.f32.mrb[0].mxu0
      %4326 = vmatprep.mubr.bf16.mxu0 0
      %4327 = vmatmul.mubr.bf16.gmra.mrb[0].mxu0 %v4052
      %v4328 = vpop.f32.mrb[0].mxu0
      %v4329 = vadd.f32 0.0, %v4328
      %v4330 = vpop.f32.mrb[0].mxu0
      %v4331 = vpop.f32.mrb[0].mxu0
      %v4332 = vadd.f32 0.0, %v4331
      %v4333 = vpop.f32.mrb[0].mxu0
      %4334 = vmatprep.mubr.bf16.mxu0 0
      %4335 = vmatmul.mubr.bf16.gmra.mrb[0].mxu0 %v4054
      %v4336 = vpop.f32.mrb[0].mxu0
      %v4337 = vadd.f32 0.0, %v4336
      %v4338 = vpop.f32.mrb[0].mxu0
      %v4339 = vpop.f32.mrb[0].mxu0
      %v4340 = vadd.f32 0.0, %v4339
      %v4341 = vpop.f32.mrb[0].mxu0
      %4342 = vdwg.mxu0
      %v4343 = vadd.f32 %v3942, %v4161
      %v4344 = vadd.f32 %v3943, %v4164
      %v4345 = vadd.f32 %v3944, %v4169
      %v4346 = vadd.f32 %v3945, %v4172
      %v4347 = vadd.f32 %v3946, %v4177
      %v4348 = vadd.f32 %v3947, %v4180
      %v4349 = vadd.f32 %v3948, %v4185
      %v4350 = vadd.f32 %v3949, %v4188
      %v4351 = vadd.f32 %v3950, %v4193
      %v4352 = vadd.f32 %v3951, %v4196
      %v4353 = vadd.f32 %v3952, %v4201
      %v4354 = vadd.f32 %v3953, %v4204
      %v4355 = vadd.f32 %v3954, %v4209
      %v4356 = vadd.f32 %v3955, %v4212
      %v4357 = vadd.f32 %v3956, %v4217
      %v4358 = vadd.f32 %v3957, %v4220
      %v4359 = vadd.f32 %v3958, %v4225
      %v4360 = vadd.f32 %v3959, %v4228
      %v4361 = vadd.f32 %v3960, %v4233
      %v4362 = vadd.f32 %v3961, %v4236
      %v4363 = vadd.f32 %v3962, %v4241
      %v4364 = vadd.f32 %v3963, %v4244
      %v4365 = vadd.f32 %v3964, %v4249
      %v4366 = vadd.f32 %v3965, %v4252
      %v4367 = vadd.f32 %v3966, %v4257
      %v4368 = vadd.f32 %v3967, %v4260
      %v4369 = vadd.f32 %v3968, %v4265
      %v4370 = vadd.f32 %v3969, %v4268
      %v4371 = vadd.f32 %v3970, %v4273
      %v4372 = vadd.f32 %v3971, %v4276
      %v4373 = vadd.f32 %v3972, %v4281
      %v4374 = vadd.f32 %v3973, %v4284
      %v4375 = vadd.f32 %v3974, %v4289
      %v4376 = vadd.f32 %v3975, %v4292
      %v4377 = vadd.f32 %v3976, %v4297
      %v4378 = vadd.f32 %v3977, %v4300
      %v4379 = vadd.f32 %v3978, %v4305
      %v4380 = vadd.f32 %v3979, %v4308
      %v4381 = vadd.f32 %v3980, %v4313
      %v4382 = vadd.f32 %v3981, %v4316
      %v4383 = vadd.f32 %v3982, %v4321
      %v4384 = vadd.f32 %v3983, %v4324
      %v4385 = vadd.f32 %v3984, %v4329
      %v4386 = vadd.f32 %v3985, %v4332
      %v4387 = vadd.f32 %v3986, %v4337
      %v4388 = vadd.f32 %v3987, %v4340
      %s4389 = smul.u32 %s22, 16
      %s4390 = ssub.s32 %s4389, 1
      %v4391 = vld [vmem:[%s1] sm:$0xff]
      %v4392 = vld [vmem:[%s1 + $0x8] sm:$0xff]
      %v4393 = vld [vmem:[%s1 + $0x10] sm:$0xff]
      %v4394 = vld [vmem:[%s1 + $0x18] sm:$0xff]
      %v4395 = vld [vmem:[%s1 + $0x20] sm:$0xff]
      %v4396 = vld [vmem:[%s1 + $0x28] sm:$0xff]
      %v4397 = vld [vmem:[%s1 + $0x30] sm:$0xff]
      %v4398 = vld [vmem:[%s1 + $0x38] sm:$0xff]
      %v4399 = vld [vmem:[%s1 + $0x40] sm:$0xff]
      %v4400 = vld [vmem:[%s1 + $0x48] sm:$0xff]
      %v4401 = vld [vmem:[%s1 + $0x50] sm:$0xff]
      %v4402 = vld [vmem:[%s1 + $0x58] sm:$0xff]
      %v4403 = vld [vmem:[%s1 + $0x60] sm:$0xff]
      %v4404 = vld [vmem:[%s1 + $0x68] sm:$0xff]
      %v4405 = vld [vmem:[%s1 + $0x70] sm:$0xff]
      %v4406 = vld [vmem:[%s1 + $0x78] sm:$0xff]
      %v4407 = vld [vmem:[%s1 + $0x80] sm:$0xff]
      %v4408 = vld [vmem:[%s1 + $0x88] sm:$0xff]
      %v4409 = vld [vmem:[%s1 + $0x90] sm:$0xff]
      %v4410 = vld [vmem:[%s1 + $0x98] sm:$0xff]
      %v4411 = vld [vmem:[%s1 + $0xa0] sm:$0xff]
      %v4412 = vld [vmem:[%s1 + $0xa8] sm:$0xff]
      %v4413 = vld [vmem:[%s1 + $0xb0] sm:$0xff]
      %v4414 = vld [vmem:[%s1 + $0xb8] sm:$0xff]
      %v4415 = vld [vmem:[%s1 + $0xc0] sm:$0xff]
      %v4416 = vld [vmem:[%s1 + $0xc8] sm:$0xff]
      %v4417 = vld [vmem:[%s1 + $0xd0] sm:$0xff]
      %v4418 = vld [vmem:[%s1 + $0xd8] sm:$0xff]
      %v4419 = vld [vmem:[%s1 + $0xe0] sm:$0xff]
      %v4420 = vld [vmem:[%s1 + $0xe8] sm:$0xff]
      %v4421 = vld [vmem:[%s1 + $0xf0] sm:$0xff]
      %v4422 = vld [vmem:[%s1 + $0xf8] sm:$0xff]
      %v4423 = vld [vmem:[%s1 + $0x100] sm:$0xff]
      %v4424 = vld [vmem:[%s1 + $0x108] sm:$0xff]
      %v4425 = vld [vmem:[%s1 + $0x110] sm:$0xff]
      %v4426 = vld [vmem:[%s1 + $0x118] sm:$0xff]
      %v4427 = vld [vmem:[%s1 + $0x120] sm:$0xff]
      %v4428 = vld [vmem:[%s1 + $0x128] sm:$0xff]
      %v4429 = vld [vmem:[%s1 + $0x130] sm:$0xff]
      %v4430 = vld [vmem:[%s1 + $0x138] sm:$0xff]
      %v4431 = vld [vmem:[%s1 + $0x140] sm:$0xff]
      %v4432 = vld [vmem:[%s1 + $0x148] sm:$0xff]
      %v4433 = vld [vmem:[%s1 + $0x150] sm:$0xff]
      %v4434 = vld [vmem:[%s1 + $0x158] sm:$0xff]
      %v4435 = vld [vmem:[%s1 + $0x160] sm:$0xff]
      %v4436 = vld [vmem:[%s1 + $0x168] sm:$0xff]
      %v4437 = vstv %s4390
      %v4438 = vadd.s32 %v4437, %v4391
      %v4439 = vadd.s32 %v4437, %v4392
      %v4440 = vadd.s32 %v4437, %v4393
      %v4441 = vadd.s32 %v4437, %v4394
      %v4442 = vadd.s32 %v4437, %v4395
      %v4443 = vadd.s32 %v4437, %v4396
      %v4444 = vadd.s32 %v4437, %v4397
      %v4445 = vadd.s32 %v4437, %v4398
      %v4446 = vadd.s32 %v4437, %v4399
      %v4447 = vadd.s32 %v4437, %v4400
      %v4448 = vadd.s32 %v4437, %v4401
      %v4449 = vadd.s32 %v4437, %v4402
      %v4450 = vadd.s32 %v4437, %v4403
      %v4451 = vadd.s32 %v4437, %v4404
      %v4452 = vadd.s32 %v4437, %v4405
      %v4453 = vadd.s32 %v4437, %v4406
      %v4454 = vadd.s32 %v4437, %v4407
      %v4455 = vadd.s32 %v4437, %v4408
      %v4456 = vadd.s32 %v4437, %v4409
      %v4457 = vadd.s32 %v4437, %v4410
      %v4458 = vadd.s32 %v4437, %v4411
      %v4459 = vadd.s32 %v4437, %v4412
      %v4460 = vadd.s32 %v4437, %v4413
      %v4461 = vadd.s32 %v4437, %v4414
      %v4462 = vadd.s32 %v4437, %v4415
      %v4463 = vadd.s32 %v4437, %v4416
      %v4464 = vadd.s32 %v4437, %v4417
      %v4465 = vadd.s32 %v4437, %v4418
      %v4466 = vadd.s32 %v4437, %v4419
      %v4467 = vadd.s32 %v4437, %v4420
      %v4468 = vadd.s32 %v4437, %v4421
      %v4469 = vadd.s32 %v4437, %v4422
      %v4470 = vadd.s32 %v4437, %v4423
      %v4471 = vadd.s32 %v4437, %v4424
      %v4472 = vadd.s32 %v4437, %v4425
      %v4473 = vadd.s32 %v4437, %v4426
      %v4474 = vadd.s32 %v4437, %v4427
      %v4475 = vadd.s32 %v4437, %v4428
      %v4476 = vadd.s32 %v4437, %v4429
      %v4477 = vadd.s32 %v4437, %v4430
      %v4478 = vadd.s32 %v4437, %v4431
      %v4479 = vadd.s32 %v4437, %v4432
      %v4480 = vadd.s32 %v4437, %v4433
      %v4481 = vadd.s32 %v4437, %v4434
      %v4482 = vadd.s32 %v4437, %v4435
      %v4483 = vadd.s32 %v4437, %v4436
      %vm4484 = vcmp.ge.s32.totalorder %v4438, 0
      %vm4485 = vcmp.ge.s32.totalorder %v4439, 0
      %vm4486 = vcmp.ge.s32.totalorder %v4440, 0
      %vm4487 = vcmp.ge.s32.totalorder %v4441, 0
      %vm4488 = vcmp.ge.s32.totalorder %v4442, 0
      %vm4489 = vcmp.ge.s32.totalorder %v4443, 0
      %vm4490 = vcmp.ge.s32.totalorder %v4444, 0
      %vm4491 = vcmp.ge.s32.totalorder %v4445, 0
      %vm4492 = vcmp.ge.s32.totalorder %v4446, 0
      %vm4493 = vcmp.ge.s32.totalorder %v4447, 0
      %vm4494 = vcmp.ge.s32.totalorder %v4448, 0
      %vm4495 = vcmp.ge.s32.totalorder %v4449, 0
      %vm4496 = vcmp.ge.s32.totalorder %v4450, 0
      %vm4497 = vcmp.ge.s32.totalorder %v4451, 0
      %vm4498 = vcmp.ge.s32.totalorder %v4452, 0
      %vm4499 = vcmp.ge.s32.totalorder %v4453, 0
      %vm4500 = vcmp.ge.s32.totalorder %v4454, 0
      %vm4501 = vcmp.ge.s32.totalorder %v4455, 0
      %vm4502 = vcmp.ge.s32.totalorder %v4456, 0
      %vm4503 = vcmp.ge.s32.totalorder %v4457, 0
      %vm4504 = vcmp.ge.s32.totalorder %v4458, 0
      %vm4505 = vcmp.ge.s32.totalorder %v4459, 0
      %vm4506 = vcmp.ge.s32.totalorder %v4460, 0
      %vm4507 = vcmp.ge.s32.totalorder %v4461, 0
      %vm4508 = vcmp.ge.s32.totalorder %v4462, 0
      %vm4509 = vcmp.ge.s32.totalorder %v4463, 0
      %vm4510 = vcmp.ge.s32.totalorder %v4464, 0
      %vm4511 = vcmp.ge.s32.totalorder %v4465, 0
      %vm4512 = vcmp.ge.s32.totalorder %v4466, 0
      %vm4513 = vcmp.ge.s32.totalorder %v4467, 0
      %vm4514 = vcmp.ge.s32.totalorder %v4468, 0
      %vm4515 = vcmp.ge.s32.totalorder %v4469, 0
      %vm4516 = vcmp.ge.s32.totalorder %v4470, 0
      %vm4517 = vcmp.ge.s32.totalorder %v4471, 0
      %vm4518 = vcmp.ge.s32.totalorder %v4472, 0
      %vm4519 = vcmp.ge.s32.totalorder %v4473, 0
      %vm4520 = vcmp.ge.s32.totalorder %v4474, 0
      %vm4521 = vcmp.ge.s32.totalorder %v4475, 0
      %vm4522 = vcmp.ge.s32.totalorder %v4476, 0
      %vm4523 = vcmp.ge.s32.totalorder %v4477, 0
      %vm4524 = vcmp.ge.s32.totalorder %v4478, 0
      %vm4525 = vcmp.ge.s32.totalorder %v4479, 0
      %vm4526 = vcmp.ge.s32.totalorder %v4480, 0
      %vm4527 = vcmp.ge.s32.totalorder %v4481, 0
      %vm4528 = vcmp.ge.s32.totalorder %v4482, 0
      %vm4529 = vcmp.ge.s32.totalorder %v4483, 0
      %vm4530 = vcmp.lt.s32.totalorder %v4438, 16
      %vm4531 = vcmp.lt.s32.totalorder %v4439, 16
      %vm4532 = vcmp.lt.s32.totalorder %v4440, 16
      %vm4533 = vcmp.lt.s32.totalorder %v4441, 16
      %vm4534 = vcmp.lt.s32.totalorder %v4442, 16
      %vm4535 = vcmp.lt.s32.totalorder %v4443, 16
      %vm4536 = vcmp.lt.s32.totalorder %v4444, 16
      %vm4537 = vcmp.lt.s32.totalorder %v4445, 16
      %vm4538 = vcmp.lt.s32.totalorder %v4446, 16
      %vm4539 = vcmp.lt.s32.totalorder %v4447, 16
      %vm4540 = vcmp.lt.s32.totalorder %v4448, 16
      %vm4541 = vcmp.lt.s32.totalorder %v4449, 16
      %vm4542 = vcmp.lt.s32.totalorder %v4450, 16
      %vm4543 = vcmp.lt.s32.totalorder %v4451, 16
      %vm4544 = vcmp.lt.s32.totalorder %v4452, 16
      %vm4545 = vcmp.lt.s32.totalorder %v4453, 16
      %vm4546 = vcmp.lt.s32.totalorder %v4454, 16
      %vm4547 = vcmp.lt.s32.totalorder %v4455, 16
      %vm4548 = vcmp.lt.s32.totalorder %v4456, 16
      %vm4549 = vcmp.lt.s32.totalorder %v4457, 16
      %vm4550 = vcmp.lt.s32.totalorder %v4458, 16
      %vm4551 = vcmp.lt.s32.totalorder %v4459, 16
      %vm4552 = vcmp.lt.s32.totalorder %v4460, 16
      %vm4553 = vcmp.lt.s32.totalorder %v4461, 16
      %vm4554 = vcmp.lt.s32.totalorder %v4462, 16
      %vm4555 = vcmp.lt.s32.totalorder %v4463, 16
      %vm4556 = vcmp.lt.s32.totalorder %v4464, 16
      %vm4557 = vcmp.lt.s32.totalorder %v4465, 16
      %vm4558 = vcmp.lt.s32.totalorder %v4466, 16
      %vm4559 = vcmp.lt.s32.totalorder %v4467, 16
      %vm4560 = vcmp.lt.s32.totalorder %v4468, 16
      %vm4561 = vcmp.lt.s32.totalorder %v4469, 16
      %vm4562 = vcmp.lt.s32.totalorder %v4470, 16
      %vm4563 = vcmp.lt.s32.totalorder %v4471, 16
      %vm4564 = vcmp.lt.s32.totalorder %v4472, 16
      %vm4565 = vcmp.lt.s32.totalorder %v4473, 16
      %vm4566 = vcmp.lt.s32.totalorder %v4474, 16
      %vm4567 = vcmp.lt.s32.totalorder %v4475, 16
      %vm4568 = vcmp.lt.s32.totalorder %v4476, 16
      %vm4569 = vcmp.lt.s32.totalorder %v4477, 16
      %vm4570 = vcmp.lt.s32.totalorder %v4478, 16
      %vm4571 = vcmp.lt.s32.totalorder %v4479, 16
      %vm4572 = vcmp.lt.s32.totalorder %v4480, 16
      %vm4573 = vcmp.lt.s32.totalorder %v4481, 16
      %vm4574 = vcmp.lt.s32.totalorder %v4482, 16
      %vm4575 = vcmp.lt.s32.totalorder %v4483, 16
      %vm4576 = vmand %vm4484, %vm4530
      %vm4577 = vmand %vm4485, %vm4531
      %vm4578 = vmand %vm4486, %vm4532
      %vm4579 = vmand %vm4487, %vm4533
      %vm4580 = vmand %vm4488, %vm4534
      %vm4581 = vmand %vm4489, %vm4535
      %vm4582 = vmand %vm4490, %vm4536
      %vm4583 = vmand %vm4491, %vm4537
      %vm4584 = vmand %vm4492, %vm4538
      %vm4585 = vmand %vm4493, %vm4539
      %vm4586 = vmand %vm4494, %vm4540
      %vm4587 = vmand %vm4495, %vm4541
      %vm4588 = vmand %vm4496, %vm4542
      %vm4589 = vmand %vm4497, %vm4543
      %vm4590 = vmand %vm4498, %vm4544
      %vm4591 = vmand %vm4499, %vm4545
      %vm4592 = vmand %vm4500, %vm4546
      %vm4593 = vmand %vm4501, %vm4547
      %vm4594 = vmand %vm4502, %vm4548
      %vm4595 = vmand %vm4503, %vm4549
      %vm4596 = vmand %vm4504, %vm4550
      %vm4597 = vmand %vm4505, %vm4551
      %vm4598 = vmand %vm4506, %vm4552
      %vm4599 = vmand %vm4507, %vm4553
      %vm4600 = vmand %vm4508, %vm4554
      %vm4601 = vmand %vm4509, %vm4555
      %vm4602 = vmand %vm4510, %vm4556
      %vm4603 = vmand %vm4511, %vm4557
      %vm4604 = vmand %vm4512, %vm4558
      %vm4605 = vmand %vm4513, %vm4559
      %vm4606 = vmand %vm4514, %vm4560
      %vm4607 = vmand %vm4515, %vm4561
      %vm4608 = vmand %vm4516, %vm4562
      %vm4609 = vmand %vm4517, %vm4563
      %vm4610 = vmand %vm4518, %vm4564
      %vm4611 = vmand %vm4519, %vm4565
      %vm4612 = vmand %vm4520, %vm4566
      %vm4613 = vmand %vm4521, %vm4567
      %vm4614 = vmand %vm4522, %vm4568
      %vm4615 = vmand %vm4523, %vm4569
      %vm4616 = vmand %vm4524, %vm4570
      %vm4617 = vmand %vm4525, %vm4571
      %vm4618 = vmand %vm4526, %vm4572
      %vm4619 = vmand %vm4527, %vm4573
      %vm4620 = vmand %vm4528, %vm4574
      %vm4621 = vmand %vm4529, %vm4575
      %v4622 = vsel %vm4576, 1.0, 0.0
      %v4623 = vsel %vm4577, 1.0, 0.0
      %v4624 = vsel %vm4578, 1.0, 0.0
      %v4625 = vsel %vm4579, 1.0, 0.0
      %v4626 = vsel %vm4580, 1.0, 0.0
      %v4627 = vsel %vm4581, 1.0, 0.0
      %v4628 = vsel %vm4582, 1.0, 0.0
      %v4629 = vsel %vm4583, 1.0, 0.0
      %v4630 = vsel %vm4584, 1.0, 0.0
      %v4631 = vsel %vm4585, 1.0, 0.0
      %v4632 = vsel %vm4586, 1.0, 0.0
      %v4633 = vsel %vm4587, 1.0, 0.0
      %v4634 = vsel %vm4588, 1.0, 0.0
      %v4635 = vsel %vm4589, 1.0, 0.0
      %v4636 = vsel %vm4590, 1.0, 0.0
      %v4637 = vsel %vm4591, 1.0, 0.0
      %v4638 = vsel %vm4592, 1.0, 0.0
      %v4639 = vsel %vm4593, 1.0, 0.0
      %v4640 = vsel %vm4594, 1.0, 0.0
      %v4641 = vsel %vm4595, 1.0, 0.0
      %v4642 = vsel %vm4596, 1.0, 0.0
      %v4643 = vsel %vm4597, 1.0, 0.0
      %v4644 = vsel %vm4598, 1.0, 0.0
      %v4645 = vsel %vm4599, 1.0, 0.0
      %v4646 = vsel %vm4600, 1.0, 0.0
      %v4647 = vsel %vm4601, 1.0, 0.0
      %v4648 = vsel %vm4602, 1.0, 0.0
      %v4649 = vsel %vm4603, 1.0, 0.0
      %v4650 = vsel %vm4604, 1.0, 0.0
      %v4651 = vsel %vm4605, 1.0, 0.0
      %v4652 = vsel %vm4606, 1.0, 0.0
      %v4653 = vsel %vm4607, 1.0, 0.0
      %v4654 = vsel %vm4608, 1.0, 0.0
      %v4655 = vsel %vm4609, 1.0, 0.0
      %v4656 = vsel %vm4610, 1.0, 0.0
      %v4657 = vsel %vm4611, 1.0, 0.0
      %v4658 = vsel %vm4612, 1.0, 0.0
      %v4659 = vsel %vm4613, 1.0, 0.0
      %v4660 = vsel %vm4614, 1.0, 0.0
      %v4661 = vsel %vm4615, 1.0, 0.0
      %v4662 = vsel %vm4616, 1.0, 0.0
      %v4663 = vsel %vm4617, 1.0, 0.0
      %v4664 = vsel %vm4618, 1.0, 0.0
      %v4665 = vsel %vm4619, 1.0, 0.0
      %v4666 = vsel %vm4620, 1.0, 0.0
      %v4667 = vsel %vm4621, 1.0, 0.0
      %v4668 = vld [vmem:[%s3] sm:$0x1]
      %v4670 = vlaneseq
      %v4671 = vshrl.u32 %v4670, 7
      %v4672 = vsub.s32 0, %v4671
      %v4673 = vrot.slane %v4668, %v4672
      %v4675 = vadd.f32 %v4343, %v4673
      %v4676 = vadd.f32 %v4344, %v4673
      %v4677 = vadd.f32 %v4345, %v4673
      %v4678 = vadd.f32 %v4346, %v4673
      %v4679 = vadd.f32 %v4347, %v4673
      %v4680 = vadd.f32 %v4348, %v4673
      %v4681 = vadd.f32 %v4349, %v4673
      %v4682 = vadd.f32 %v4350, %v4673
      %v4683 = vadd.f32 %v4351, %v4673
      %v4684 = vadd.f32 %v4352, %v4673
      %v4685 = vadd.f32 %v4353, %v4673
      %v4686 = vadd.f32 %v4354, %v4673
      %v4687 = vadd.f32 %v4355, %v4673
      %v4688 = vadd.f32 %v4356, %v4673
      %v4689 = vadd.f32 %v4357, %v4673
      %v4690 = vadd.f32 %v4358, %v4673
      %v4691 = vadd.f32 %v4359, %v4673
      %v4692 = vadd.f32 %v4360, %v4673
      %v4693 = vadd.f32 %v4361, %v4673
      %v4694 = vadd.f32 %v4362, %v4673
      %v4695 = vadd.f32 %v4363, %v4673
      %v4696 = vadd.f32 %v4364, %v4673
      %v4697 = vadd.f32 %v4365, %v4673
      %v4698 = vadd.f32 %v4366, %v4673
      %v4699 = vadd.f32 %v4367, %v4673
      %v4700 = vadd.f32 %v4368, %v4673
      %v4701 = vadd.f32 %v4369, %v4673
      %v4702 = vadd.f32 %v4370, %v4673
      %v4703 = vadd.f32 %v4371, %v4673
      %v4704 = vadd.f32 %v4372, %v4673
      %v4705 = vadd.f32 %v4373, %v4673
      %v4706 = vadd.f32 %v4374, %v4673
      %v4707 = vadd.f32 %v4375, %v4673
      %v4708 = vadd.f32 %v4376, %v4673
      %v4709 = vadd.f32 %v4377, %v4673
      %v4710 = vadd.f32 %v4378, %v4673
      %v4711 = vadd.f32 %v4379, %v4673
      %v4712 = vadd.f32 %v4380, %v4673
      %v4713 = vadd.f32 %v4381, %v4673
      %v4714 = vadd.f32 %v4382, %v4673
      %v4715 = vadd.f32 %v4383, %v4673
      %v4716 = vadd.f32 %v4384, %v4673
      %v4717 = vadd.f32 %v4385, %v4673
      %v4718 = vadd.f32 %v4386, %v4673
      %v4719 = vadd.f32 %v4387, %v4673
      %v4720 = vadd.f32 %v4388, %v4673
      %v4721 = vmax.f32 %v4675, 0.0
      %v4722 = vmax.f32 %v4676, 0.0
      %v4723 = vmax.f32 %v4677, 0.0
      %v4724 = vmax.f32 %v4678, 0.0
      %v4725 = vmax.f32 %v4679, 0.0
      %v4726 = vmax.f32 %v4680, 0.0
      %v4727 = vmax.f32 %v4681, 0.0
      %v4728 = vmax.f32 %v4682, 0.0
      %v4729 = vmax.f32 %v4683, 0.0
      %v4730 = vmax.f32 %v4684, 0.0
      %v4731 = vmax.f32 %v4685, 0.0
      %v4732 = vmax.f32 %v4686, 0.0
      %v4733 = vmax.f32 %v4687, 0.0
      %v4734 = vmax.f32 %v4688, 0.0
      %v4735 = vmax.f32 %v4689, 0.0
      %v4736 = vmax.f32 %v4690, 0.0
      %v4737 = vmax.f32 %v4691, 0.0
      %v4738 = vmax.f32 %v4692, 0.0
      %v4739 = vmax.f32 %v4693, 0.0
      %v4740 = vmax.f32 %v4694, 0.0
      %v4741 = vmax.f32 %v4695, 0.0
      %v4742 = vmax.f32 %v4696, 0.0
      %v4743 = vmax.f32 %v4697, 0.0
      %v4744 = vmax.f32 %v4698, 0.0
      %v4745 = vmax.f32 %v4699, 0.0
      %v4746 = vmax.f32 %v4700, 0.0
      %v4747 = vmax.f32 %v4701, 0.0
      %v4748 = vmax.f32 %v4702, 0.0
      %v4749 = vmax.f32 %v4703, 0.0
      %v4750 = vmax.f32 %v4704, 0.0
      %v4751 = vmax.f32 %v4705, 0.0
      %v4752 = vmax.f32 %v4706, 0.0
      %v4753 = vmax.f32 %v4707, 0.0
      %v4754 = vmax.f32 %v4708, 0.0
      %v4755 = vmax.f32 %v4709, 0.0
      %v4756 = vmax.f32 %v4710, 0.0
      %v4757 = vmax.f32 %v4711, 0.0
      %v4758 = vmax.f32 %v4712, 0.0
      %v4759 = vmax.f32 %v4713, 0.0
      %v4760 = vmax.f32 %v4714, 0.0
      %v4761 = vmax.f32 %v4715, 0.0
      %v4762 = vmax.f32 %v4716, 0.0
      %v4763 = vmax.f32 %v4717, 0.0
      %v4764 = vmax.f32 %v4718, 0.0
      %v4765 = vmax.f32 %v4719, 0.0
      %v4766 = vmax.f32 %v4720, 0.0
      %4768 = vset.pattern.permute.xlu0 0
      %4769 = vperm.xlu0 %4768, %v4622
      %v4770 = vpop.permute.xlu0 %4769
      %4773 = vset.pattern.permute.xlu0 0
      %4774 = vperm.xlu0 %4773, %v4623
      %v4775 = vpop.permute.xlu0 %4774
      %4778 = vset.pattern.permute.xlu0 0
      %4779 = vperm.xlu0 %4778, %v4624
      %v4780 = vpop.permute.xlu0 %4779
      %4783 = vset.pattern.permute.xlu0 0
      %4784 = vperm.xlu0 %4783, %v4625
      %v4785 = vpop.permute.xlu0 %4784
      %4788 = vset.pattern.permute.xlu0 0
      %4789 = vperm.xlu0 %4788, %v4626
      %v4790 = vpop.permute.xlu0 %4789
      %4793 = vset.pattern.permute.xlu0 0
      %4794 = vperm.xlu0 %4793, %v4627
      %v4795 = vpop.permute.xlu0 %4794
      %4798 = vset.pattern.permute.xlu0 0
      %4799 = vperm.xlu0 %4798, %v4628
      %v4800 = vpop.permute.xlu0 %4799
      %4803 = vset.pattern.permute.xlu0 0
      %4804 = vperm.xlu0 %4803, %v4629
      %v4805 = vpop.permute.xlu0 %4804
      %4808 = vset.pattern.permute.xlu0 0
      %4809 = vperm.xlu0 %4808, %v4630
      %v4810 = vpop.permute.xlu0 %4809
      %4813 = vset.pattern.permute.xlu0 0
      %4814 = vperm.xlu0 %4813, %v4631
      %v4815 = vpop.permute.xlu0 %4814
      %4818 = vset.pattern.permute.xlu0 0
      %4819 = vperm.xlu0 %4818, %v4632
      %v4820 = vpop.permute.xlu0 %4819
      %4823 = vset.pattern.permute.xlu0 0
      %4824 = vperm.xlu0 %4823, %v4633
      %v4825 = vpop.permute.xlu0 %4824
      %4828 = vset.pattern.permute.xlu0 0
      %4829 = vperm.xlu0 %4828, %v4634
      %v4830 = vpop.permute.xlu0 %4829
      %4833 = vset.pattern.permute.xlu0 0
      %4834 = vperm.xlu0 %4833, %v4635
      %v4835 = vpop.permute.xlu0 %4834
      %4838 = vset.pattern.permute.xlu0 0
      %4839 = vperm.xlu0 %4838, %v4636
      %v4840 = vpop.permute.xlu0 %4839
      %4843 = vset.pattern.permute.xlu0 0
      %4844 = vperm.xlu0 %4843, %v4637
      %v4845 = vpop.permute.xlu0 %4844
      %4848 = vset.pattern.permute.xlu0 0
      %4849 = vperm.xlu0 %4848, %v4638
      %v4850 = vpop.permute.xlu0 %4849
      %4853 = vset.pattern.permute.xlu0 0
      %4854 = vperm.xlu0 %4853, %v4639
      %v4855 = vpop.permute.xlu0 %4854
      %4858 = vset.pattern.permute.xlu0 0
      %4859 = vperm.xlu0 %4858, %v4640
      %v4860 = vpop.permute.xlu0 %4859
      %4863 = vset.pattern.permute.xlu0 0
      %4864 = vperm.xlu0 %4863, %v4641
      %v4865 = vpop.permute.xlu0 %4864
      %4868 = vset.pattern.permute.xlu0 0
      %4869 = vperm.xlu0 %4868, %v4642
      %v4870 = vpop.permute.xlu0 %4869
      %4873 = vset.pattern.permute.xlu0 0
      %4874 = vperm.xlu0 %4873, %v4643
      %v4875 = vpop.permute.xlu0 %4874
      %4878 = vset.pattern.permute.xlu0 0
      %4879 = vperm.xlu0 %4878, %v4644
      %v4880 = vpop.permute.xlu0 %4879
      %4883 = vset.pattern.permute.xlu0 0
      %4884 = vperm.xlu0 %4883, %v4645
      %v4885 = vpop.permute.xlu0 %4884
      %4888 = vset.pattern.permute.xlu0 0
      %4889 = vperm.xlu0 %4888, %v4646
      %v4890 = vpop.permute.xlu0 %4889
      %4893 = vset.pattern.permute.xlu0 0
      %4894 = vperm.xlu0 %4893, %v4647
      %v4895 = vpop.permute.xlu0 %4894
      %4898 = vset.pattern.permute.xlu0 0
      %4899 = vperm.xlu0 %4898, %v4648
      %v4900 = vpop.permute.xlu0 %4899
      %4903 = vset.pattern.permute.xlu0 0
      %4904 = vperm.xlu0 %4903, %v4649
      %v4905 = vpop.permute.xlu0 %4904
      %4908 = vset.pattern.permute.xlu0 0
      %4909 = vperm.xlu0 %4908, %v4650
      %v4910 = vpop.permute.xlu0 %4909
      %4913 = vset.pattern.permute.xlu0 0
      %4914 = vperm.xlu0 %4913, %v4651
      %v4915 = vpop.permute.xlu0 %4914
      %4918 = vset.pattern.permute.xlu0 0
      %4919 = vperm.xlu0 %4918, %v4652
      %v4920 = vpop.permute.xlu0 %4919
      %4923 = vset.pattern.permute.xlu0 0
      %4924 = vperm.xlu0 %4923, %v4653
      %v4925 = vpop.permute.xlu0 %4924
      %4928 = vset.pattern.permute.xlu0 0
      %4929 = vperm.xlu0 %4928, %v4654
      %v4930 = vpop.permute.xlu0 %4929
      %4933 = vset.pattern.permute.xlu0 0
      %4934 = vperm.xlu0 %4933, %v4655
      %v4935 = vpop.permute.xlu0 %4934
      %4938 = vset.pattern.permute.xlu0 0
      %4939 = vperm.xlu0 %4938, %v4656
      %v4940 = vpop.permute.xlu0 %4939
      %4943 = vset.pattern.permute.xlu0 0
      %4944 = vperm.xlu0 %4943, %v4657
      %v4945 = vpop.permute.xlu0 %4944
      %4948 = vset.pattern.permute.xlu0 0
      %4949 = vperm.xlu0 %4948, %v4658
      %v4950 = vpop.permute.xlu0 %4949
      %4953 = vset.pattern.permute.xlu0 0
      %4954 = vperm.xlu0 %4953, %v4659
      %v4955 = vpop.permute.xlu0 %4954
      %4958 = vset.pattern.permute.xlu0 0
      %4959 = vperm.xlu0 %4958, %v4660
      %v4960 = vpop.permute.xlu0 %4959
      %4963 = vset.pattern.permute.xlu0 0
      %4964 = vperm.xlu0 %4963, %v4661
      %v4965 = vpop.permute.xlu0 %4964
      %4968 = vset.pattern.permute.xlu0 0
      %4969 = vperm.xlu0 %4968, %v4662
      %v4970 = vpop.permute.xlu0 %4969
      %4973 = vset.pattern.permute.xlu0 0
      %4974 = vperm.xlu0 %4973, %v4663
      %v4975 = vpop.permute.xlu0 %4974
      %4978 = vset.pattern.permute.xlu0 0
      %4979 = vperm.xlu0 %4978, %v4664
      %v4980 = vpop.permute.xlu0 %4979
      %4983 = vset.pattern.permute.xlu0 0
      %4984 = vperm.xlu0 %4983, %v4665
      %v4985 = vpop.permute.xlu0 %4984
      %4988 = vset.pattern.permute.xlu0 0
      %4989 = vperm.xlu0 %4988, %v4666
      %v4990 = vpop.permute.xlu0 %4989
      %4993 = vset.pattern.permute.xlu0 0
      %4994 = vperm.xlu0 %4993, %v4667
      %v4995 = vpop.permute.xlu0 %4994
      %v4997 = vmul.f32 %v4721, %v4770
      %v4998 = vmul.f32 %v4722, %v4775
      %v4999 = vmul.f32 %v4723, %v4780
      %v5000 = vmul.f32 %v4724, %v4785
      %v5001 = vmul.f32 %v4725, %v4790
      %v5002 = vmul.f32 %v4726, %v4795
      %v5003 = vmul.f32 %v4727, %v4800
      %v5004 = vmul.f32 %v4728, %v4805
      %v5005 = vmul.f32 %v4729, %v4810
      %v5006 = vmul.f32 %v4730, %v4815
      %v5007 = vmul.f32 %v4731, %v4820
      %v5008 = vmul.f32 %v4732, %v4825
      %v5009 = vmul.f32 %v4733, %v4830
      %v5010 = vmul.f32 %v4734, %v4835
      %v5011 = vmul.f32 %v4735, %v4840
      %v5012 = vmul.f32 %v4736, %v4845
      %v5013 = vmul.f32 %v4737, %v4850
      %v5014 = vmul.f32 %v4738, %v4855
      %v5015 = vmul.f32 %v4739, %v4860
      %v5016 = vmul.f32 %v4740, %v4865
      %v5017 = vmul.f32 %v4741, %v4870
      %v5018 = vmul.f32 %v4742, %v4875
      %v5019 = vmul.f32 %v4743, %v4880
      %v5020 = vmul.f32 %v4744, %v4885
      %v5021 = vmul.f32 %v4745, %v4890
      %v5022 = vmul.f32 %v4746, %v4895
      %v5023 = vmul.f32 %v4747, %v4900
      %v5024 = vmul.f32 %v4748, %v4905
      %v5025 = vmul.f32 %v4749, %v4910
      %v5026 = vmul.f32 %v4750, %v4915
      %v5027 = vmul.f32 %v4751, %v4920
      %v5028 = vmul.f32 %v4752, %v4925
      %v5029 = vmul.f32 %v4753, %v4930
      %v5030 = vmul.f32 %v4754, %v4935
      %v5031 = vmul.f32 %v4755, %v4940
      %v5032 = vmul.f32 %v4756, %v4945
      %v5033 = vmul.f32 %v4757, %v4950
      %v5034 = vmul.f32 %v4758, %v4955
      %v5035 = vmul.f32 %v4759, %v4960
      %v5036 = vmul.f32 %v4760, %v4965
      %v5037 = vmul.f32 %v4761, %v4970
      %v5038 = vmul.f32 %v4762, %v4975
      %v5039 = vmul.f32 %v4763, %v4980
      %v5040 = vmul.f32 %v4764, %v4985
      %v5041 = vmul.f32 %v4765, %v4990
      %v5042 = vmul.f32 %v4766, %v4995
      %v5043 = vpack.c.bf16 %v4998, %v4997
      %v5044 = vpack.c.bf16 %v5000, %v4999
      %v5045 = vpack.c.bf16 %v5002, %v5001
      %v5046 = vpack.c.bf16 %v5004, %v5003
      %v5047 = vpack.c.bf16 %v5006, %v5005
      %v5048 = vpack.c.bf16 %v5008, %v5007
      %v5049 = vpack.c.bf16 %v5010, %v5009
      %v5050 = vpack.c.bf16 %v5012, %v5011
      %v5051 = vpack.c.bf16 %v5014, %v5013
      %v5052 = vpack.c.bf16 %v5016, %v5015
      %v5053 = vpack.c.bf16 %v5018, %v5017
      %v5054 = vpack.c.bf16 %v5020, %v5019
      %v5055 = vpack.c.bf16 %v5022, %v5021
      %v5056 = vpack.c.bf16 %v5024, %v5023
      %v5057 = vpack.c.bf16 %v5026, %v5025
      %v5058 = vpack.c.bf16 %v5028, %v5027
      %v5059 = vpack.c.bf16 %v5030, %v5029
      %v5060 = vpack.c.bf16 %v5032, %v5031
      %v5061 = vpack.c.bf16 %v5034, %v5033
      %v5062 = vpack.c.bf16 %v5036, %v5035
      %v5063 = vpack.c.bf16 %v5038, %v5037
      %v5064 = vpack.c.bf16 %v5040, %v5039
      %v5065 = vpack.c.bf16 %v5042, %v5041
      %5066 = vst [vmem:[#allocation3] sm:$0xff] %v5043
      %5067 = vst [vmem:[#allocation3 + $0x8] sm:$0xff] %v5044
      %5068 = vst [vmem:[#allocation3 + $0x10] sm:$0xff] %v5045
      %5069 = vst [vmem:[#allocation3 + $0x18] sm:$0xff] %v5046
      %5070 = vst [vmem:[#allocation3 + $0x20] sm:$0xff] %v5047
      %5071 = vst [vmem:[#allocation3 + $0x28] sm:$0xff] %v5048
      %5072 = vst [vmem:[#allocation3 + $0x30] sm:$0xff] %v5049
      %5073 = vst [vmem:[#allocation3 + $0x38] sm:$0xff] %v5050
      %5074 = vst [vmem:[#allocation3 + $0x40] sm:$0xff] %v5051
      %5075 = vst [vmem:[#allocation3 + $0x48] sm:$0xff] %v5052
      %5076 = vst [vmem:[#allocation3 + $0x50] sm:$0xff] %v5053
      %5077 = vst [vmem:[#allocation3 + $0x58] sm:$0xff] %v5054
      %5078 = vst [vmem:[#allocation3 + $0x60] sm:$0xff] %v5055
      %5079 = vst [vmem:[#allocation3 + $0x68] sm:$0xff] %v5056
      %5080 = vst [vmem:[#allocation3 + $0x70] sm:$0xff] %v5057
      %5081 = vst [vmem:[#allocation3 + $0x78] sm:$0xff] %v5058
      %5082 = vst [vmem:[#allocation3 + $0x80] sm:$0xff] %v5059
      %5083 = vst [vmem:[#allocation3 + $0x88] sm:$0xff] %v5060
      %5084 = vst [vmem:[#allocation3 + $0x90] sm:$0xff] %v5061
      %5085 = vst [vmem:[#allocation3 + $0x98] sm:$0xff] %v5062
      %5086 = vst [vmem:[#allocation3 + $0xa0] sm:$0xff] %v5063
      %5087 = vst [vmem:[#allocation3 + $0xa8] sm:$0xff] %v5064
      %5088 = vst [vmem:[#allocation3 + $0xb0] sm:$0xff] %v5065
      %v5089 = vld [vmem:[#allocation3] sm:$0xff]
      %v5090 = vld [vmem:[#allocation3 + $0x8] sm:$0xff]
      %v5091 = vld [vmem:[#allocation3 + $0x10] sm:$0xff]
      %v5092 = vld [vmem:[#allocation3 + $0x18] sm:$0xff]
      %v5093 = vld [vmem:[#allocation3 + $0x20] sm:$0xff]
      %v5094 = vld [vmem:[#allocation3 + $0x28] sm:$0xff]
      %v5095 = vld [vmem:[#allocation3 + $0x30] sm:$0xff]
      %v5096 = vld [vmem:[#allocation3 + $0x38] sm:$0xff]
      %v5097 = vld [vmem:[#allocation3 + $0x40] sm:$0xff]
      %v5098 = vld [vmem:[#allocation3 + $0x48] sm:$0xff]
      %v5099 = vld [vmem:[#allocation3 + $0x50] sm:$0xff]
      %v5100 = vld [vmem:[#allocation3 + $0x58] sm:$0xff]
      %v5101 = vld [vmem:[#allocation3 + $0x60] sm:$0xff]
      %v5102 = vld [vmem:[#allocation3 + $0x68] sm:$0xff]
      %v5103 = vld [vmem:[#allocation3 + $0x70] sm:$0xff]
      %v5104 = vld [vmem:[#allocation3 + $0x78] sm:$0xff]
      %v5105 = vld [vmem:[#allocation3 + $0x80] sm:$0xff]
      %v5106 = vld [vmem:[#allocation3 + $0x88] sm:$0xff]
      %v5107 = vld [vmem:[#allocation3 + $0x90] sm:$0xff]
      %v5108 = vld [vmem:[#allocation3 + $0x98] sm:$0xff]
      %v5109 = vld [vmem:[%s4] sm:$0xf]
      %v5110 = vld [vmem:[%s4 + $0x4] sm:$0xf]
      %v5111 = vld [vmem:[%s4 + $0x8] sm:$0xf]
      %v5112 = vld [vmem:[%s4 + $0xc] sm:$0xf]
      %v5113 = vld [vmem:[%s4 + $0x10] sm:$0xf]
      %v5114 = vld [vmem:[%s4 + $0x14] sm:$0xf]
      %v5115 = vld [vmem:[%s4 + $0x18] sm:$0xf]
      %v5116 = vld [vmem:[%s4 + $0x1c] sm:$0xf]
      %v5117 = vld [vmem:[%s4 + $0x20] sm:$0xf]
      %v5118 = vld [vmem:[%s4 + $0x24] sm:$0xf]
      %v5119 = vld [vmem:[%s4 + $0x28] sm:$0xf]
      %v5120 = vld [vmem:[%s4 + $0x2c] sm:$0xf]
      %v5121 = vld [vmem:[%s4 + $0x30] sm:$0xf]
      %v5122 = vld [vmem:[%s4 + $0x34] sm:$0xf]
      %v5123 = vld [vmem:[%s4 + $0x38] sm:$0xf]
      %v5124 = vld [vmem:[%s4 + $0x3c] sm:$0xf]
      %v5125 = vld [vmem:[#allocation3 + $0xa0] sm:$0x1]
      %v5126 = vld [vmem:[%s4 + $0x40] sm:$0xf]
      %v5127 = vld [vmem:[%s4 + $0x44] sm:$0xf]
      %v5128 = vld [vmem:[%s4 + $0x48] sm:$0xf]
      %v5129 = vld [vmem:[%s4 + $0x4c] sm:$0xf]
      %v5130 = vld [vmem:[%s4 + $0x50] sm:$0xf]
      %v5131 = vld [vmem:[%s4 + $0x54] sm:$0xf]
      %v5132 = vld [vmem:[%s4 + $0x58] sm:$0xf]
      %v5133 = vld [vmem:[%s4 + $0x5c] sm:$0xf]
      %v5134 = vld [vmem:[%s4 + $0x60] sm:$0xf]
      %v5135 = vld [vmem:[%s4 + $0x64] sm:$0xf]
      %v5136 = vld [vmem:[%s4 + $0x68] sm:$0xf]
      %v5137 = vld [vmem:[%s4 + $0x6c] sm:$0xf]
      %v5138 = vld [vmem:[%s4 + $0x70] sm:$0xf]
      %v5139 = vld [vmem:[%s4 + $0x74] sm:$0xf]
      %v5140 = vld [vmem:[%s4 + $0x78] sm:$0xf]
      %v5141 = vld [vmem:[%s4 + $0x7c] sm:$0xf]
      %v5143 = vshrl.u32 %v5089, 16
      %v5145 = vshll.u32 %v5089, 16
      %v5147 = vrot.slane %v5145, 1
      %v5148 = vor.u32 %v5143, %v5147
      %v5150 = vshll.u32 %v5090, 16
      %v5152 = vrot.slane %v5150, 1
      %v5153 = vsel %vm396, %v5148, %v5152
      %v5154 = vshrl.u32 %v5090, 16
      %v5156 = vor.u32 %v5154, %v5152
      %v5158 = vshll.u32 %v5091, 16
      %v5160 = vrot.slane %v5158, 1
      %v5161 = vsel %vm396, %v5156, %v5160
      %v5162 = vshrl.u32 %v5091, 16
      %v5164 = vor.u32 %v5162, %v5160
      %v5166 = vshll.u32 %v5092, 16
      %v5168 = vrot.slane %v5166, 1
      %v5169 = vsel %vm396, %v5164, %v5168
      %v5170 = vshrl.u32 %v5092, 16
      %v5172 = vor.u32 %v5170, %v5168
      %v5174 = vshll.u32 %v5093, 16
      %v5176 = vrot.slane %v5174, 1
      %v5177 = vsel %vm396, %v5172, %v5176
      %v5178 = vshrl.u32 %v5093, 16
      %v5180 = vor.u32 %v5178, %v5176
      %v5182 = vshll.u32 %v5094, 16
      %v5184 = vrot.slane %v5182, 1
      %v5185 = vsel %vm396, %v5180, %v5184
      %v5186 = vshrl.u32 %v5094, 16
      %v5188 = vor.u32 %v5186, %v5184
      %v5190 = vshll.u32 %v5095, 16
      %v5192 = vrot.slane %v5190, 1
      %v5193 = vsel %vm396, %v5188, %v5192
      %v5194 = vshrl.u32 %v5095, 16
      %v5196 = vor.u32 %v5194, %v5192
      %v5198 = vshll.u32 %v5096, 16
      %v5200 = vrot.slane %v5198, 1
      %v5201 = vsel %vm396, %v5196, %v5200
      %v5202 = vshrl.u32 %v5096, 16
      %v5204 = vor.u32 %v5202, %v5200
      %v5206 = vshll.u32 %v5097, 16
      %v5208 = vrot.slane %v5206, 1
      %v5209 = vsel %vm396, %v5204, %v5208
      %v5210 = vshrl.u32 %v5097, 16
      %v5212 = vor.u32 %v5210, %v5208
      %v5214 = vshll.u32 %v5098, 16
      %v5216 = vrot.slane %v5214, 1
      %v5217 = vsel %vm396, %v5212, %v5216
      %v5218 = vshrl.u32 %v5098, 16
      %v5220 = vor.u32 %v5218, %v5216
      %v5222 = vshll.u32 %v5099, 16
      %v5224 = vrot.slane %v5222, 1
      %v5225 = vsel %vm396, %v5220, %v5224
      %v5226 = vshrl.u32 %v5099, 16
      %v5228 = vor.u32 %v5226, %v5224
      %v5230 = vshll.u32 %v5100, 16
      %v5232 = vrot.slane %v5230, 1
      %v5233 = vsel %vm396, %v5228, %v5232
      %v5234 = vshrl.u32 %v5100, 16
      %v5236 = vor.u32 %v5234, %v5232
      %v5238 = vshll.u32 %v5101, 16
      %v5240 = vrot.slane %v5238, 1
      %v5241 = vsel %vm396, %v5236, %v5240
      %v5242 = vshrl.u32 %v5101, 16
      %v5244 = vor.u32 %v5242, %v5240
      %v5246 = vshll.u32 %v5102, 16
      %v5248 = vrot.slane %v5246, 1
      %v5249 = vsel %vm396, %v5244, %v5248
      %v5250 = vshrl.u32 %v5102, 16
      %v5252 = vor.u32 %v5250, %v5248
      %v5254 = vshll.u32 %v5103, 16
      %v5256 = vrot.slane %v5254, 1
      %v5257 = vsel %vm396, %v5252, %v5256
      %v5258 = vshrl.u32 %v5103, 16
      %v5260 = vor.u32 %v5258, %v5256
      %v5262 = vshll.u32 %v5104, 16
      %v5264 = vrot.slane %v5262, 1
      %v5265 = vsel %vm396, %v5260, %v5264
      %v5266 = vshrl.u32 %v5104, 16
      %v5268 = vor.u32 %v5266, %v5264
      %v5270 = vshll.u32 %v5105, 16
      %v5272 = vrot.slane %v5270, 1
      %v5273 = vsel %vm396, %v5268, %v5272
      %v5274 = vshrl.u32 %v5105, 16
      %v5276 = vor.u32 %v5274, %v5272
      %v5278 = vshll.u32 %v5106, 16
      %v5280 = vrot.slane %v5278, 1
      %v5281 = vsel %vm396, %v5276, %v5280
      %v5282 = vshrl.u32 %v5106, 16
      %v5284 = vor.u32 %v5282, %v5280
      %v5286 = vshll.u32 %v5107, 16
      %v5288 = vrot.slane %v5286, 1
      %v5289 = vsel %vm396, %v5284, %v5288
      %v5290 = vshrl.u32 %v5107, 16
      %v5292 = vor.u32 %v5290, %v5288
      %v5294 = vshll.u32 %v5108, 16
      %v5296 = vrot.slane %v5294, 1
      %v5297 = vsel %vm396, %v5292, %v5296
      %v5298 = vshrl.u32 %v5108, 16
      %v5300 = vor.u32 %v5298, %v5296
      %v5302 = vshll.u32 %v5125, 16
      %v5304 = vrot.slane %v5302, 1
      %v5305 = vsel %vm396, %v5300, %v5304
      %v5342 = vunpack.c.l.b16 %v5126
      %v5343 = vunpack.c.l.b16 %v5127
      %v5344 = vunpack.c.l.b16 %v5128
      %v5345 = vunpack.c.l.b16 %v5129
      %v5346 = vunpack.c.l.b16 %v5130
      %v5347 = vunpack.c.l.b16 %v5131
      %v5348 = vunpack.c.l.b16 %v5132
      %v5349 = vunpack.c.l.b16 %v5133
      %v5350 = vunpack.c.l.b16 %v5134
      %v5351 = vunpack.c.l.b16 %v5135
      %v5352 = vunpack.c.l.b16 %v5136
      %v5353 = vunpack.c.l.b16 %v5137
      %v5354 = vunpack.c.l.b16 %v5138
      %v5355 = vunpack.c.l.b16 %v5139
      %v5356 = vunpack.c.l.b16 %v5140
      %v5357 = vunpack.c.l.b16 %v5141
      %v5358 = vpack.c.b16 %v5343, %v5342
      %v5359 = vpack.c.b16 %v5345, %v5344
      %v5360 = vpack.c.b16 %v5347, %v5346
      %v5361 = vpack.c.b16 %v5349, %v5348
      %v5362 = vpack.c.b16 %v5351, %v5350
      %v5363 = vpack.c.b16 %v5353, %v5352
      %v5364 = vpack.c.b16 %v5355, %v5354
      %v5365 = vpack.c.b16 %v5357, %v5356
      %5374 = vmatprep.subr.bf16.mxu0 0
      %5375 = vmatpush1.bf16.msra.mxu0 %v5358
      %5376 = vmatprep.subr.bf16.mxu0 0
      %5377 = vmatpush1.bf16.msra.mxu0 %v5359
      %5378 = vmatprep.subr.bf16.mxu0 0
      %5379 = vmatpush1.bf16.msra.mxu0 %v5360
      %5380 = vmatprep.subr.bf16.mxu0 0
      %5381 = vmatpush1.bf16.msra.mxu0 %v5361
      %5382 = vmatprep.subr.bf16.mxu0 0
      %5383 = vmatpush1.bf16.msra.mxu0 %v5362
      %5384 = vmatprep.subr.bf16.mxu0 0
      %5385 = vmatpush1.bf16.msra.mxu0 %v5363
      %5386 = vmatprep.subr.bf16.mxu0 0
      %5387 = vmatpush1.bf16.msra.mxu0 %v5364
      %5388 = vmatprep.subr.bf16.mxu0 0
      %5389 = vmatpush1.bf16.msra.mxu0 %v5365
      %5390 = vmatprep.subr.bf16.mxu0 0
      %5391 = vmatpush1.bf16.msra.mxu0 0
      %5392 = vmatprep.subr.bf16.mxu0 0
      %5393 = vmatpush1.bf16.msra.mxu0 0
      %5394 = vmatprep.subr.bf16.mxu0 0
      %5395 = vmatpush1.bf16.msra.mxu0 0
      %5396 = vmatprep.subr.bf16.mxu0 0
      %5397 = vmatpush1.bf16.msra.mxu0 0
      %5398 = vmatprep.subr.bf16.mxu0 0
      %5399 = vmatpush1.bf16.msra.mxu0 0
      %5400 = vmatprep.subr.bf16.mxu0 0
      %5401 = vmatpush1.bf16.msra.mxu0 0
      %5402 = vmatprep.subr.bf16.mxu0 0
      %5403 = vmatpush1.bf16.msra.mxu0 0
      %5404 = vmatprep.subr.bf16.mxu0 0
      %5405 = vmatpush1.bf16.msra.mxu0 0
      %5406 = vmatprep.mubr.bf16.mxu0 0
      %5407 = vmatmul.mubr.bf16.gmra.mrb[0].mxu0 %v5153
      %v5408 = vpop.f32.mrb[0].mxu0
      %v5409 = vadd.f32 0.0, %v5408
      %v5410 = vpop.f32.mrb[0].mxu0
      %v5411 = vpop.f32.mrb[0].mxu0
      %v5412 = vadd.f32 0.0, %v5411
      %v5413 = vpop.f32.mrb[0].mxu0
      %5414 = vmatprep.mubr.bf16.mxu0 0
      %5415 = vmatmul.mubr.bf16.gmra.mrb[0].mxu0 %v5161
      %v5416 = vpop.f32.mrb[0].mxu0
      %v5417 = vadd.f32 0.0, %v5416
      %v5418 = vpop.f32.mrb[0].mxu0
      %v5419 = vpop.f32.mrb[0].mxu0
      %v5420 = vadd.f32 0.0, %v5419
      %v5421 = vpop.f32.mrb[0].mxu0
      %5422 = vmatprep.mubr.bf16.mxu0 0
      %5423 = vmatmul.mubr.bf16.gmra.mrb[0].mxu0 %v5169
      %v5424 = vpop.f32.mrb[0].mxu0
      %v5425 = vadd.f32 0.0, %v5424
      %v5426 = vpop.f32.mrb[0].mxu0
      %v5427 = vpop.f32.mrb[0].mxu0
      %v5428 = vadd.f32 0.0, %v5427
      %v5429 = vpop.f32.mrb[0].mxu0
      %5430 = vmatprep.mubr.bf16.mxu0 0
      %5431 = vmatmul.mubr.bf16.gmra.mrb[0].mxu0 %v5177
      %v5432 = vpop.f32.mrb[0].mxu0
      %v5433 = vadd.f32 0.0, %v5432
      %v5434 = vpop.f32.mrb[0].mxu0
      %v5435 = vpop.f32.mrb[0].mxu0
      %v5436 = vadd.f32 0.0, %v5435
      %v5437 = vpop.f32.mrb[0].mxu0
      %5438 = vmatprep.mubr.bf16.mxu0 0
      %5439 = vmatmul.mubr.bf16.gmra.mrb[0].mxu0 %v5185
      %v5440 = vpop.f32.mrb[0].mxu0
      %v5441 = vadd.f32 0.0, %v5440
      %v5442 = vpop.f32.mrb[0].mxu0
      %v5443 = vpop.f32.mrb[0].mxu0
      %v5444 = vadd.f32 0.0, %v5443
      %v5445 = vpop.f32.mrb[0].mxu0
      %5446 = vmatprep.mubr.bf16.mxu0 0
      %5447 = vmatmul.mubr.bf16.gmra.mrb[0].mxu0 %v5193
      %v5448 = vpop.f32.mrb[0].mxu0
      %v5449 = vadd.f32 0.0, %v5448
      %v5450 = vpop.f32.mrb[0].mxu0
      %v5451 = vpop.f32.mrb[0].mxu0
      %v5452 = vadd.f32 0.0, %v5451
      %v5453 = vpop.f32.mrb[0].mxu0
      %5454 = vmatprep.mubr.bf16.mxu0 0
      %5455 = vmatmul.mubr.bf16.gmra.mrb[0].mxu0 %v5201
      %v5456 = vpop.f32.mrb[0].mxu0
      %v5457 = vadd.f32 0.0, %v5456
      %v5458 = vpop.f32.mrb[0].mxu0
      %v5459 = vpop.f32.mrb[0].mxu0
      %v5460 = vadd.f32 0.0, %v5459
      %v5461 = vpop.f32.mrb[0].mxu0
      %5462 = vmatprep.mubr.bf16.mxu0 0
      %5463 = vmatmul.mubr.bf16.gmra.mrb[0].mxu0 %v5209
      %v5464 = vpop.f32.mrb[0].mxu0
      %v5465 = vadd.f32 0.0, %v5464
      %v5466 = vpop.f32.mrb[0].mxu0
      %v5467 = vpop.f32.mrb[0].mxu0
      %v5468 = vadd.f32 0.0, %v5467
      %v5469 = vpop.f32.mrb[0].mxu0
      %5470 = vmatprep.mubr.bf16.mxu0 0
      %5471 = vmatmul.mubr.bf16.gmra.mrb[0].mxu0 %v5217
      %v5472 = vpop.f32.mrb[0].mxu0
      %v5473 = vadd.f32 0.0, %v5472
      %v5474 = vpop.f32.mrb[0].mxu0
      %v5475 = vpop.f32.mrb[0].mxu0
      %v5476 = vadd.f32 0.0, %v5475
      %v5477 = vpop.f32.mrb[0].mxu0
      %5478 = vmatprep.mubr.bf16.mxu0 0
      %5479 = vmatmul.mubr.bf16.gmra.mrb[0].mxu0 %v5225
      %v5480 = vpop.f32.mrb[0].mxu0
      %v5481 = vadd.f32 0.0, %v5480
      %v5482 = vpop.f32.mrb[0].mxu0
      %v5483 = vpop.f32.mrb[0].mxu0
      %v5484 = vadd.f32 0.0, %v5483
      %v5485 = vpop.f32.mrb[0].mxu0
      %5486 = vmatprep.mubr.bf16.mxu0 0
      %5487 = vmatmul.mubr.bf16.gmra.mrb[0].mxu0 %v5233
      %v5488 = vpop.f32.mrb[0].mxu0
      %v5489 = vadd.f32 0.0, %v5488
      %v5490 = vpop.f32.mrb[0].mxu0
      %v5491 = vpop.f32.mrb[0].mxu0
      %v5492 = vadd.f32 0.0, %v5491
      %v5493 = vpop.f32.mrb[0].mxu0
      %5494 = vmatprep.mubr.bf16.mxu0 0
      %5495 = vmatmul.mubr.bf16.gmra.mrb[0].mxu0 %v5241
      %v5496 = vpop.f32.mrb[0].mxu0
      %v5497 = vadd.f32 0.0, %v5496
      %v5498 = vpop.f32.mrb[0].mxu0
      %v5499 = vpop.f32.mrb[0].mxu0
      %v5500 = vadd.f32 0.0, %v5499
      %v5501 = vpop.f32.mrb[0].mxu0
      %5502 = vmatprep.mubr.bf16.mxu0 0
      %5503 = vmatmul.mubr.bf16.gmra.mrb[0].mxu0 %v5249
      %v5504 = vpop.f32.mrb[0].mxu0
      %v5505 = vadd.f32 0.0, %v5504
      %v5506 = vpop.f32.mrb[0].mxu0
      %v5507 = vpop.f32.mrb[0].mxu0
      %v5508 = vadd.f32 0.0, %v5507
      %v5509 = vpop.f32.mrb[0].mxu0
      %5510 = vmatprep.mubr.bf16.mxu0 0
      %5511 = vmatmul.mubr.bf16.gmra.mrb[0].mxu0 %v5257
      %v5512 = vpop.f32.mrb[0].mxu0
      %v5513 = vadd.f32 0.0, %v5512
      %v5514 = vpop.f32.mrb[0].mxu0
      %v5515 = vpop.f32.mrb[0].mxu0
      %v5516 = vadd.f32 0.0, %v5515
      %v5517 = vpop.f32.mrb[0].mxu0
      %5518 = vmatprep.mubr.bf16.mxu0 0
      %5519 = vmatmul.mubr.bf16.gmra.mrb[0].mxu0 %v5265
      %v5520 = vpop.f32.mrb[0].mxu0
      %v5521 = vadd.f32 0.0, %v5520
      %v5522 = vpop.f32.mrb[0].mxu0
      %v5523 = vpop.f32.mrb[0].mxu0
      %v5524 = vadd.f32 0.0, %v5523
      %v5525 = vpop.f32.mrb[0].mxu0
      %5526 = vmatprep.mubr.bf16.mxu0 0
      %5527 = vmatmul.mubr.bf16.gmra.mrb[0].mxu0 %v5273
      %v5528 = vpop.f32.mrb[0].mxu0
      %v5529 = vadd.f32 0.0, %v5528
      %v5530 = vpop.f32.mrb[0].mxu0
      %v5531 = vpop.f32.mrb[0].mxu0
      %v5532 = vadd.f32 0.0, %v5531
      %v5533 = vpop.f32.mrb[0].mxu0
      %5534 = vmatprep.mubr.bf16.mxu0 0
      %5535 = vmatmul.mubr.bf16.gmra.mrb[0].mxu0 %v5281
      %v5536 = vpop.f32.mrb[0].mxu0
      %v5537 = vadd.f32 0.0, %v5536
      %v5538 = vpop.f32.mrb[0].mxu0
      %v5539 = vpop.f32.mrb[0].mxu0
      %v5540 = vadd.f32 0.0, %v5539
      %v5541 = vpop.f32.mrb[0].mxu0
      %5542 = vmatprep.mubr.bf16.mxu0 0
      %5543 = vmatmul.mubr.bf16.gmra.mrb[0].mxu0 %v5289
      %v5544 = vpop.f32.mrb[0].mxu0
      %v5545 = vadd.f32 0.0, %v5544
      %v5546 = vpop.f32.mrb[0].mxu0
      %v5547 = vpop.f32.mrb[0].mxu0
      %v5548 = vadd.f32 0.0, %v5547
      %v5549 = vpop.f32.mrb[0].mxu0
      %5550 = vmatprep.mubr.bf16.mxu0 0
      %5551 = vmatmul.mubr.bf16.gmra.mrb[0].mxu0 %v5297
      %v5552 = vpop.f32.mrb[0].mxu0
      %v5553 = vadd.f32 0.0, %v5552
      %v5554 = vpop.f32.mrb[0].mxu0
      %v5555 = vpop.f32.mrb[0].mxu0
      %v5556 = vadd.f32 0.0, %v5555
      %v5557 = vpop.f32.mrb[0].mxu0
      %5558 = vmatprep.mubr.bf16.mxu0 0
      %5559 = vmatmul.mubr.bf16.gmra.mrb[0].mxu0 %v5305
      %v5560 = vpop.f32.mrb[0].mxu0
      %v5561 = vadd.f32 0.0, %v5560
      %v5562 = vpop.f32.mrb[0].mxu0
      %v5563 = vpop.f32.mrb[0].mxu0
      %v5564 = vadd.f32 0.0, %v5563
      %v5565 = vpop.f32.mrb[0].mxu0
      %5566 = vdwg.mxu0
      %v5583 = vunpack.c.l.b16 %v5109
      %v5584 = vunpack.c.l.b16 %v5110
      %v5585 = vunpack.c.l.b16 %v5111
      %v5586 = vunpack.c.l.b16 %v5112
      %v5587 = vunpack.c.l.b16 %v5113
      %v5588 = vunpack.c.l.b16 %v5114
      %v5589 = vunpack.c.l.b16 %v5115
      %v5590 = vunpack.c.l.b16 %v5116
      %v5591 = vunpack.c.l.b16 %v5117
      %v5592 = vunpack.c.l.b16 %v5118
      %v5593 = vunpack.c.l.b16 %v5119
      %v5594 = vunpack.c.l.b16 %v5120
      %v5595 = vunpack.c.l.b16 %v5121
      %v5596 = vunpack.c.l.b16 %v5122
      %v5597 = vunpack.c.l.b16 %v5123
      %v5598 = vunpack.c.l.b16 %v5124
      %v5599 = vpack.c.b16 %v5584, %v5583
      %v5600 = vpack.c.b16 %v5586, %v5585
      %v5601 = vpack.c.b16 %v5588, %v5587
      %v5602 = vpack.c.b16 %v5590, %v5589
      %v5603 = vpack.c.b16 %v5592, %v5591
      %v5604 = vpack.c.b16 %v5594, %v5593
      %v5605 = vpack.c.b16 %v5596, %v5595
      %v5606 = vpack.c.b16 %v5598, %v5597
      %5615 = vmatprep.subr.bf16.mxu0 0
      %5616 = vmatpush1.bf16.msra.mxu0 %v5599
      %5617 = vmatprep.subr.bf16.mxu0 0
      %5618 = vmatpush1.bf16.msra.mxu0 %v5600
      %5619 = vmatprep.subr.bf16.mxu0 0
      %5620 = vmatpush1.bf16.msra.mxu0 %v5601
      %5621 = vmatprep.subr.bf16.mxu0 0
      %5622 = vmatpush1.bf16.msra.mxu0 %v5602
      %5623 = vmatprep.subr.bf16.mxu0 0
      %5624 = vmatpush1.bf16.msra.mxu0 %v5603
      %5625 = vmatprep.subr.bf16.mxu0 0
      %5626 = vmatpush1.bf16.msra.mxu0 %v5604
      %5627 = vmatprep.subr.bf16.mxu0 0
      %5628 = vmatpush1.bf16.msra.mxu0 %v5605
      %5629 = vmatprep.subr.bf16.mxu0 0
      %5630 = vmatpush1.bf16.msra.mxu0 %v5606
      %5631 = vmatprep.subr.bf16.mxu0 0
      %5632 = vmatpush1.bf16.msra.mxu0 0
      %5633 = vmatprep.subr.bf16.mxu0 0
      %5634 = vmatpush1.bf16.msra.mxu0 0
      %5635 = vmatprep.subr.bf16.mxu0 0
      %5636 = vmatpush1.bf16.msra.mxu0 0
      %5637 = vmatprep.subr.bf16.mxu0 0
      %5638 = vmatpush1.bf16.msra.mxu0 0
      %5639 = vmatprep.subr.bf16.mxu0 0
      %5640 = vmatpush1.bf16.msra.mxu0 0
      %5641 = vmatprep.subr.bf16.mxu0 0
      %5642 = vmatpush1.bf16.msra.mxu0 0
      %5643 = vmatprep.subr.bf16.mxu0 0
      %5644 = vmatpush1.bf16.msra.mxu0 0
      %5645 = vmatprep.subr.bf16.mxu0 0
      %5646 = vmatpush1.bf16.msra.mxu0 0
      %5647 = vmatprep.mubr.bf16.mxu0 0
      %5648 = vmatmul.mubr.bf16.gmra.mrb[0].mxu0 %v5089
      %v5649 = vpop.f32.mrb[0].mxu0
      %v5650 = vadd.f32 %v5409, %v5649
      %v5651 = vpop.f32.mrb[0].mxu0
      %v5652 = vpop.f32.mrb[0].mxu0
      %v5653 = vadd.f32 %v5412, %v5652
      %v5654 = vpop.f32.mrb[0].mxu0
      %5655 = vmatprep.mubr.bf16.mxu0 0
      %5656 = vmatmul.mubr.bf16.gmra.mrb[0].mxu0 %v5090
      %v5657 = vpop.f32.mrb[0].mxu0
      %v5658 = vadd.f32 %v5417, %v5657
      %v5659 = vpop.f32.mrb[0].mxu0
      %v5660 = vpop.f32.mrb[0].mxu0
      %v5661 = vadd.f32 %v5420, %v5660
      %v5662 = vpop.f32.mrb[0].mxu0
      %5663 = vmatprep.mubr.bf16.mxu0 0
      %5664 = vmatmul.mubr.bf16.gmra.mrb[0].mxu0 %v5091
      %v5665 = vpop.f32.mrb[0].mxu0
      %v5666 = vadd.f32 %v5425, %v5665
      %v5667 = vpop.f32.mrb[0].mxu0
      %v5668 = vpop.f32.mrb[0].mxu0
      %v5669 = vadd.f32 %v5428, %v5668
      %v5670 = vpop.f32.mrb[0].mxu0
      %5671 = vmatprep.mubr.bf16.mxu0 0
      %5672 = vmatmul.mubr.bf16.gmra.mrb[0].mxu0 %v5092
      %v5673 = vpop.f32.mrb[0].mxu0
      %v5674 = vadd.f32 %v5433, %v5673
      %v5675 = vpop.f32.mrb[0].mxu0
      %v5676 = vpop.f32.mrb[0].mxu0
      %v5677 = vadd.f32 %v5436, %v5676
      %v5678 = vpop.f32.mrb[0].mxu0
      %5679 = vmatprep.mubr.bf16.mxu0 0
      %5680 = vmatmul.mubr.bf16.gmra.mrb[0].mxu0 %v5093
      %v5681 = vpop.f32.mrb[0].mxu0
      %v5682 = vadd.f32 %v5441, %v5681
      %v5683 = vpop.f32.mrb[0].mxu0
      %v5684 = vpop.f32.mrb[0].mxu0
      %v5685 = vadd.f32 %v5444, %v5684
      %v5686 = vpop.f32.mrb[0].mxu0
      %5687 = vmatprep.mubr.bf16.mxu0 0
      %5688 = vmatmul.mubr.bf16.gmra.mrb[0].mxu0 %v5094
      %v5689 = vpop.f32.mrb[0].mxu0
      %v5690 = vadd.f32 %v5449, %v5689
      %v5691 = vpop.f32.mrb[0].mxu0
      %v5692 = vpop.f32.mrb[0].mxu0
      %v5693 = vadd.f32 %v5452, %v5692
      %v5694 = vpop.f32.mrb[0].mxu0
      %5695 = vmatprep.mubr.bf16.mxu0 0
      %5696 = vmatmul.mubr.bf16.gmra.mrb[0].mxu0 %v5095
      %v5697 = vpop.f32.mrb[0].mxu0
      %v5698 = vadd.f32 %v5457, %v5697
      %v5699 = vpop.f32.mrb[0].mxu0
      %v5700 = vpop.f32.mrb[0].mxu0
      %v5701 = vadd.f32 %v5460, %v5700
      %v5702 = vpop.f32.mrb[0].mxu0
      %5703 = vmatprep.mubr.bf16.mxu0 0
      %5704 = vmatmul.mubr.bf16.gmra.mrb[0].mxu0 %v5096
      %v5705 = vpop.f32.mrb[0].mxu0
      %v5706 = vadd.f32 %v5465, %v5705
      %v5707 = vpop.f32.mrb[0].mxu0
      %v5708 = vpop.f32.mrb[0].mxu0
      %v5709 = vadd.f32 %v5468, %v5708
      %v5710 = vpop.f32.mrb[0].mxu0
      %5711 = vmatprep.mubr.bf16.mxu0 0
      %5712 = vmatmul.mubr.bf16.gmra.mrb[0].mxu0 %v5097
      %v5713 = vpop.f32.mrb[0].mxu0
      %v5714 = vadd.f32 %v5473, %v5713
      %v5715 = vpop.f32.mrb[0].mxu0
      %v5716 = vpop.f32.mrb[0].mxu0
      %v5717 = vadd.f32 %v5476, %v5716
      %v5718 = vpop.f32.mrb[0].mxu0
      %5719 = vmatprep.mubr.bf16.mxu0 0
      %5720 = vmatmul.mubr.bf16.gmra.mrb[0].mxu0 %v5098
      %v5721 = vpop.f32.mrb[0].mxu0
      %v5722 = vadd.f32 %v5481, %v5721
      %v5723 = vpop.f32.mrb[0].mxu0
      %v5724 = vpop.f32.mrb[0].mxu0
      %v5725 = vadd.f32 %v5484, %v5724
      %v5726 = vpop.f32.mrb[0].mxu0
      %5727 = vmatprep.mubr.bf16.mxu0 0
      %5728 = vmatmul.mubr.bf16.gmra.mrb[0].mxu0 %v5099
      %v5729 = vpop.f32.mrb[0].mxu0
      %v5730 = vadd.f32 %v5489, %v5729
      %v5731 = vpop.f32.mrb[0].mxu0
      %v5732 = vpop.f32.mrb[0].mxu0
      %v5733 = vadd.f32 %v5492, %v5732
      %v5734 = vpop.f32.mrb[0].mxu0
      %5735 = vmatprep.mubr.bf16.mxu0 0
      %5736 = vmatmul.mubr.bf16.gmra.mrb[0].mxu0 %v5100
      %v5737 = vpop.f32.mrb[0].mxu0
      %v5738 = vadd.f32 %v5497, %v5737
      %v5739 = vpop.f32.mrb[0].mxu0
      %v5740 = vpop.f32.mrb[0].mxu0
      %v5741 = vadd.f32 %v5500, %v5740
      %v5742 = vpop.f32.mrb[0].mxu0
      %5743 = vmatprep.mubr.bf16.mxu0 0
      %5744 = vmatmul.mubr.bf16.gmra.mrb[0].mxu0 %v5101
      %v5745 = vpop.f32.mrb[0].mxu0
      %v5746 = vadd.f32 %v5505, %v5745
      %v5747 = vpop.f32.mrb[0].mxu0
      %v5748 = vpop.f32.mrb[0].mxu0
      %v5749 = vadd.f32 %v5508, %v5748
      %v5750 = vpop.f32.mrb[0].mxu0
      %5751 = vmatprep.mubr.bf16.mxu0 0
      %5752 = vmatmul.mubr.bf16.gmra.mrb[0].mxu0 %v5102
      %v5753 = vpop.f32.mrb[0].mxu0
      %v5754 = vadd.f32 %v5513, %v5753
      %v5755 = vpop.f32.mrb[0].mxu0
      %v5756 = vpop.f32.mrb[0].mxu0
      %v5757 = vadd.f32 %v5516, %v5756
      %v5758 = vpop.f32.mrb[0].mxu0
      %5759 = vmatprep.mubr.bf16.mxu0 0
      %5760 = vmatmul.mubr.bf16.gmra.mrb[0].mxu0 %v5103
      %v5761 = vpop.f32.mrb[0].mxu0
      %v5762 = vadd.f32 %v5521, %v5761
      %v5763 = vpop.f32.mrb[0].mxu0
      %v5764 = vpop.f32.mrb[0].mxu0
      %v5765 = vadd.f32 %v5524, %v5764
      %v5766 = vpop.f32.mrb[0].mxu0
      %5767 = vmatprep.mubr.bf16.mxu0 0
      %5768 = vmatmul.mubr.bf16.gmra.mrb[0].mxu0 %v5104
      %v5769 = vpop.f32.mrb[0].mxu0
      %v5770 = vadd.f32 %v5529, %v5769
      %v5771 = vpop.f32.mrb[0].mxu0
      %v5772 = vpop.f32.mrb[0].mxu0
      %v5773 = vadd.f32 %v5532, %v5772
      %v5774 = vpop.f32.mrb[0].mxu0
      %5775 = vmatprep.mubr.bf16.mxu0 0
      %5776 = vmatmul.mubr.bf16.gmra.mrb[0].mxu0 %v5105
      %v5777 = vpop.f32.mrb[0].mxu0
      %v5778 = vadd.f32 %v5537, %v5777
      %v5779 = vpop.f32.mrb[0].mxu0
      %v5780 = vpop.f32.mrb[0].mxu0
      %v5781 = vadd.f32 %v5540, %v5780
      %v5782 = vpop.f32.mrb[0].mxu0
      %5783 = vmatprep.mubr.bf16.mxu0 0
      %5784 = vmatmul.mubr.bf16.gmra.mrb[0].mxu0 %v5106
      %v5785 = vpop.f32.mrb[0].mxu0
      %v5786 = vadd.f32 %v5545, %v5785
      %v5787 = vpop.f32.mrb[0].mxu0
      %v5788 = vpop.f32.mrb[0].mxu0
      %v5789 = vadd.f32 %v5548, %v5788
      %v5790 = vpop.f32.mrb[0].mxu0
      %5791 = vmatprep.mubr.bf16.mxu0 0
      %5792 = vmatmul.mubr.bf16.gmra.mrb[0].mxu0 %v5107
      %v5793 = vpop.f32.mrb[0].mxu0
      %v5794 = vadd.f32 %v5553, %v5793
      %v5795 = vpop.f32.mrb[0].mxu0
      %v5796 = vpop.f32.mrb[0].mxu0
      %v5797 = vadd.f32 %v5556, %v5796
      %v5798 = vpop.f32.mrb[0].mxu0
      %5799 = vmatprep.mubr.bf16.mxu0 0
      %5800 = vmatmul.mubr.bf16.gmra.mrb[0].mxu0 %v5108
      %v5801 = vpop.f32.mrb[0].mxu0
      %v5802 = vadd.f32 %v5561, %v5801
      %v5803 = vpop.f32.mrb[0].mxu0
      %v5804 = vpop.f32.mrb[0].mxu0
      %v5805 = vadd.f32 %v5564, %v5804
      %v5806 = vpop.f32.mrb[0].mxu0
      %5807 = vdwg.mxu0
      %v5808 = vld [vmem:[#allocation3] sm:$0xfe]
      %v5809 = vld [vmem:[%s4 + $0x80] sm:$0xf]
      %v5810 = vld [vmem:[%s4 + $0x84] sm:$0xf]
      %v5811 = vld [vmem:[%s4 + $0x88] sm:$0xf]
      %v5812 = vld [vmem:[%s4 + $0x8c] sm:$0xf]
      %v5813 = vld [vmem:[%s4 + $0x90] sm:$0xf]
      %v5814 = vld [vmem:[%s4 + $0x94] sm:$0xf]
      %v5815 = vld [vmem:[%s4 + $0x98] sm:$0xf]
      %v5816 = vld [vmem:[%s4 + $0x9c] sm:$0xf]
      %v5817 = vld [vmem:[%s4 + $0xa0] sm:$0xf]
      %v5818 = vld [vmem:[%s4 + $0xa4] sm:$0xf]
      %v5819 = vld [vmem:[%s4 + $0xa8] sm:$0xf]
      %v5820 = vld [vmem:[%s4 + $0xac] sm:$0xf]
      %v5821 = vld [vmem:[%s4 + $0xb0] sm:$0xf]
      %v5822 = vld [vmem:[%s4 + $0xb4] sm:$0xf]
      %v5823 = vld [vmem:[%s4 + $0xb8] sm:$0xf]
      %v5824 = vld [vmem:[%s4 + $0xbc] sm:$0xf]
      %v5846 = vrot.slane %v5808, 1
      %v5847 = vrot.slane %v5090, 1
      %v5848 = vsel %vm1179, %v5846, %v5847
      %v5849 = vrot.slane %v5091, 1
      %v5850 = vsel %vm1179, %v5847, %v5849
      %v5851 = vrot.slane %v5092, 1
      %v5852 = vsel %vm1179, %v5849, %v5851
      %v5853 = vrot.slane %v5093, 1
      %v5854 = vsel %vm1179, %v5851, %v5853
      %v5855 = vrot.slane %v5094, 1
      %v5856 = vsel %vm1179, %v5853, %v5855
      %v5857 = vrot.slane %v5095, 1
      %v5858 = vsel %vm1179, %v5855, %v5857
      %v5859 = vrot.slane %v5096, 1
      %v5860 = vsel %vm1179, %v5857, %v5859
      %v5861 = vrot.slane %v5097, 1
      %v5862 = vsel %vm1179, %v5859, %v5861
      %v5863 = vrot.slane %v5098, 1
      %v5864 = vsel %vm1179, %v5861, %v5863
      %v5865 = vrot.slane %v5099, 1
      %v5866 = vsel %vm1179, %v5863, %v5865
      %v5867 = vrot.slane %v5100, 1
      %v5868 = vsel %vm1179, %v5865, %v5867
      %v5869 = vrot.slane %v5101, 1
      %v5870 = vsel %vm1179, %v5867, %v5869
      %v5871 = vrot.slane %v5102, 1
      %v5872 = vsel %vm1179, %v5869, %v5871
      %v5873 = vrot.slane %v5103, 1
      %v5874 = vsel %vm1179, %v5871, %v5873
      %v5875 = vrot.slane %v5104, 1
      %v5876 = vsel %vm1179, %v5873, %v5875
      %v5877 = vrot.slane %v5105, 1
      %v5878 = vsel %vm1179, %v5875, %v5877
      %v5879 = vrot.slane %v5106, 1
      %v5880 = vsel %vm1179, %v5877, %v5879
      %v5881 = vrot.slane %v5107, 1
      %v5882 = vsel %vm1179, %v5879, %v5881
      %v5883 = vrot.slane %v5108, 1
      %v5884 = vsel %vm1179, %v5881, %v5883
      %v5885 = vrot.slane %v5125, 1
      %v5886 = vsel %vm1179, %v5883, %v5885
      %v5923 = vunpack.c.l.b16 %v5809
      %v5924 = vunpack.c.l.b16 %v5810
      %v5925 = vunpack.c.l.b16 %v5811
      %v5926 = vunpack.c.l.b16 %v5812
      %v5927 = vunpack.c.l.b16 %v5813
      %v5928 = vunpack.c.l.b16 %v5814
      %v5929 = vunpack.c.l.b16 %v5815
      %v5930 = vunpack.c.l.b16 %v5816
      %v5931 = vunpack.c.l.b16 %v5817
      %v5932 = vunpack.c.l.b16 %v5818
      %v5933 = vunpack.c.l.b16 %v5819
      %v5934 = vunpack.c.l.b16 %v5820
      %v5935 = vunpack.c.l.b16 %v5821
      %v5936 = vunpack.c.l.b16 %v5822
      %v5937 = vunpack.c.l.b16 %v5823
      %v5938 = vunpack.c.l.b16 %v5824
      %v5939 = vpack.c.b16 %v5924, %v5923
      %v5940 = vpack.c.b16 %v5926, %v5925
      %v5941 = vpack.c.b16 %v5928, %v5927
      %v5942 = vpack.c.b16 %v5930, %v5929
      %v5943 = vpack.c.b16 %v5932, %v5931
      %v5944 = vpack.c.b16 %v5934, %v5933
      %v5945 = vpack.c.b16 %v5936, %v5935
      %v5946 = vpack.c.b16 %v5938, %v5937
      %5955 = vmatprep.subr.bf16.mxu0 0
      %5956 = vmatpush1.bf16.msra.mxu0 %v5939
      %5957 = vmatprep.subr.bf16.mxu0 0
      %5958 = vmatpush1.bf16.msra.mxu0 %v5940
      %5959 = vmatprep.subr.bf16.mxu0 0
      %5960 = vmatpush1.bf16.msra.mxu0 %v5941
      %5961 = vmatprep.subr.bf16.mxu0 0
      %5962 = vmatpush1.bf16.msra.mxu0 %v5942
      %5963 = vmatprep.subr.bf16.mxu0 0
      %5964 = vmatpush1.bf16.msra.mxu0 %v5943
      %5965 = vmatprep.subr.bf16.mxu0 0
      %5966 = vmatpush1.bf16.msra.mxu0 %v5944
      %5967 = vmatprep.subr.bf16.mxu0 0
      %5968 = vmatpush1.bf16.msra.mxu0 %v5945
      %5969 = vmatprep.subr.bf16.mxu0 0
      %5970 = vmatpush1.bf16.msra.mxu0 %v5946
      %5971 = vmatprep.subr.bf16.mxu0 0
      %5972 = vmatpush1.bf16.msra.mxu0 0
      %5973 = vmatprep.subr.bf16.mxu0 0
      %5974 = vmatpush1.bf16.msra.mxu0 0
      %5975 = vmatprep.subr.bf16.mxu0 0
      %5976 = vmatpush1.bf16.msra.mxu0 0
      %5977 = vmatprep.subr.bf16.mxu0 0
      %5978 = vmatpush1.bf16.msra.mxu0 0
      %5979 = vmatprep.subr.bf16.mxu0 0
      %5980 = vmatpush1.bf16.msra.mxu0 0
      %5981 = vmatprep.subr.bf16.mxu0 0
      %5982 = vmatpush1.bf16.msra.mxu0 0
      %5983 = vmatprep.subr.bf16.mxu0 0
      %5984 = vmatpush1.bf16.msra.mxu0 0
      %5985 = vmatprep.subr.bf16.mxu0 0
      %5986 = vmatpush1.bf16.msra.mxu0 0
      %5987 = vmatprep.mubr.bf16.mxu0 0
      %5988 = vmatmul.mubr.bf16.gmra.mrb[0].mxu0 %v5848
      %v5989 = vpop.f32.mrb[0].mxu0
      %v5990 = vadd.f32 0.0, %v5989
      %v5991 = vpop.f32.mrb[0].mxu0
      %v5992 = vpop.f32.mrb[0].mxu0
      %v5993 = vadd.f32 0.0, %v5992
      %v5994 = vpop.f32.mrb[0].mxu0
      %5995 = vmatprep.mubr.bf16.mxu0 0
      %5996 = vmatmul.mubr.bf16.gmra.mrb[0].mxu0 %v5850
      %v5997 = vpop.f32.mrb[0].mxu0
      %v5998 = vadd.f32 0.0, %v5997
      %v5999 = vpop.f32.mrb[0].mxu0
      %v6000 = vpop.f32.mrb[0].mxu0
      %v6001 = vadd.f32 0.0, %v6000
      %v6002 = vpop.f32.mrb[0].mxu0
      %6003 = vmatprep.mubr.bf16.mxu0 0
      %6004 = vmatmul.mubr.bf16.gmra.mrb[0].mxu0 %v5852
      %v6005 = vpop.f32.mrb[0].mxu0
      %v6006 = vadd.f32 0.0, %v6005
      %v6007 = vpop.f32.mrb[0].mxu0
      %v6008 = vpop.f32.mrb[0].mxu0
      %v6009 = vadd.f32 0.0, %v6008
      %v6010 = vpop.f32.mrb[0].mxu0
      %6011 = vmatprep.mubr.bf16.mxu0 0
      %6012 = vmatmul.mubr.bf16.gmra.mrb[0].mxu0 %v5854
      %v6013 = vpop.f32.mrb[0].mxu0
      %v6014 = vadd.f32 0.0, %v6013
      %v6015 = vpop.f32.mrb[0].mxu0
      %v6016 = vpop.f32.mrb[0].mxu0
      %v6017 = vadd.f32 0.0, %v6016
      %v6018 = vpop.f32.mrb[0].mxu0
      %6019 = vmatprep.mubr.bf16.mxu0 0
      %6020 = vmatmul.mubr.bf16.gmra.mrb[0].mxu0 %v5856
      %v6021 = vpop.f32.mrb[0].mxu0
      %v6022 = vadd.f32 0.0, %v6021
      %v6023 = vpop.f32.mrb[0].mxu0
      %v6024 = vpop.f32.mrb[0].mxu0
      %v6025 = vadd.f32 0.0, %v6024
      %v6026 = vpop.f32.mrb[0].mxu0
      %6027 = vmatprep.mubr.bf16.mxu0 0
      %6028 = vmatmul.mubr.bf16.gmra.mrb[0].mxu0 %v5858
      %v6029 = vpop.f32.mrb[0].mxu0
      %v6030 = vadd.f32 0.0, %v6029
      %v6031 = vpop.f32.mrb[0].mxu0
      %v6032 = vpop.f32.mrb[0].mxu0
      %v6033 = vadd.f32 0.0, %v6032
      %v6034 = vpop.f32.mrb[0].mxu0
      %6035 = vmatprep.mubr.bf16.mxu0 0
      %6036 = vmatmul.mubr.bf16.gmra.mrb[0].mxu0 %v5860
      %v6037 = vpop.f32.mrb[0].mxu0
      %v6038 = vadd.f32 0.0, %v6037
      %v6039 = vpop.f32.mrb[0].mxu0
      %v6040 = vpop.f32.mrb[0].mxu0
      %v6041 = vadd.f32 0.0, %v6040
      %v6042 = vpop.f32.mrb[0].mxu0
      %6043 = vmatprep.mubr.bf16.mxu0 0
      %6044 = vmatmul.mubr.bf16.gmra.mrb[0].mxu0 %v5862
      %v6045 = vpop.f32.mrb[0].mxu0
      %v6046 = vadd.f32 0.0, %v6045
      %v6047 = vpop.f32.mrb[0].mxu0
      %v6048 = vpop.f32.mrb[0].mxu0
      %v6049 = vadd.f32 0.0, %v6048
      %v6050 = vpop.f32.mrb[0].mxu0
      %6051 = vmatprep.mubr.bf16.mxu0 0
      %6052 = vmatmul.mubr.bf16.gmra.mrb[0].mxu0 %v5864
      %v6053 = vpop.f32.mrb[0].mxu0
      %v6054 = vadd.f32 0.0, %v6053
      %v6055 = vpop.f32.mrb[0].mxu0
      %v6056 = vpop.f32.mrb[0].mxu0
      %v6057 = vadd.f32 0.0, %v6056
      %v6058 = vpop.f32.mrb[0].mxu0
      %6059 = vmatprep.mubr.bf16.mxu0 0
      %6060 = vmatmul.mubr.bf16.gmra.mrb[0].mxu0 %v5866
      %v6061 = vpop.f32.mrb[0].mxu0
      %v6062 = vadd.f32 0.0, %v6061
      %v6063 = vpop.f32.mrb[0].mxu0
      %v6064 = vpop.f32.mrb[0].mxu0
      %v6065 = vadd.f32 0.0, %v6064
      %v6066 = vpop.f32.mrb[0].mxu0
      %6067 = vmatprep.mubr.bf16.mxu0 0
      %6068 = vmatmul.mubr.bf16.gmra.mrb[0].mxu0 %v5868
      %v6069 = vpop.f32.mrb[0].mxu0
      %v6070 = vadd.f32 0.0, %v6069
      %v6071 = vpop.f32.mrb[0].mxu0
      %v6072 = vpop.f32.mrb[0].mxu0
      %v6073 = vadd.f32 0.0, %v6072
      %v6074 = vpop.f32.mrb[0].mxu0
      %6075 = vmatprep.mubr.bf16.mxu0 0
      %6076 = vmatmul.mubr.bf16.gmra.mrb[0].mxu0 %v5870
      %v6077 = vpop.f32.mrb[0].mxu0
      %v6078 = vadd.f32 0.0, %v6077
      %v6079 = vpop.f32.mrb[0].mxu0
      %v6080 = vpop.f32.mrb[0].mxu0
      %v6081 = vadd.f32 0.0, %v6080
      %v6082 = vpop.f32.mrb[0].mxu0
      %6083 = vmatprep.mubr.bf16.mxu0 0
      %6084 = vmatmul.mubr.bf16.gmra.mrb[0].mxu0 %v5872
      %v6085 = vpop.f32.mrb[0].mxu0
      %v6086 = vadd.f32 0.0, %v6085
      %v6087 = vpop.f32.mrb[0].mxu0
      %v6088 = vpop.f32.mrb[0].mxu0
      %v6089 = vadd.f32 0.0, %v6088
      %v6090 = vpop.f32.mrb[0].mxu0
      %6091 = vmatprep.mubr.bf16.mxu0 0
      %6092 = vmatmul.mubr.bf16.gmra.mrb[0].mxu0 %v5874
      %v6093 = vpop.f32.mrb[0].mxu0
      %v6094 = vadd.f32 0.0, %v6093
      %v6095 = vpop.f32.mrb[0].mxu0
      %v6096 = vpop.f32.mrb[0].mxu0
      %v6097 = vadd.f32 0.0, %v6096
      %v6098 = vpop.f32.mrb[0].mxu0
      %6099 = vmatprep.mubr.bf16.mxu0 0
      %6100 = vmatmul.mubr.bf16.gmra.mrb[0].mxu0 %v5876
      %v6101 = vpop.f32.mrb[0].mxu0
      %v6102 = vadd.f32 0.0, %v6101
      %v6103 = vpop.f32.mrb[0].mxu0
      %v6104 = vpop.f32.mrb[0].mxu0
      %v6105 = vadd.f32 0.0, %v6104
      %v6106 = vpop.f32.mrb[0].mxu0
      %6107 = vmatprep.mubr.bf16.mxu0 0
      %6108 = vmatmul.mubr.bf16.gmra.mrb[0].mxu0 %v5878
      %v6109 = vpop.f32.mrb[0].mxu0
      %v6110 = vadd.f32 0.0, %v6109
      %v6111 = vpop.f32.mrb[0].mxu0
      %v6112 = vpop.f32.mrb[0].mxu0
      %v6113 = vadd.f32 0.0, %v6112
      %v6114 = vpop.f32.mrb[0].mxu0
      %6115 = vmatprep.mubr.bf16.mxu0 0
      %6116 = vmatmul.mubr.bf16.gmra.mrb[0].mxu0 %v5880
      %v6117 = vpop.f32.mrb[0].mxu0
      %v6118 = vadd.f32 0.0, %v6117
      %v6119 = vpop.f32.mrb[0].mxu0
      %v6120 = vpop.f32.mrb[0].mxu0
      %v6121 = vadd.f32 0.0, %v6120
      %v6122 = vpop.f32.mrb[0].mxu0
      %6123 = vmatprep.mubr.bf16.mxu0 0
      %6124 = vmatmul.mubr.bf16.gmra.mrb[0].mxu0 %v5882
      %v6125 = vpop.f32.mrb[0].mxu0
      %v6126 = vadd.f32 0.0, %v6125
      %v6127 = vpop.f32.mrb[0].mxu0
      %v6128 = vpop.f32.mrb[0].mxu0
      %v6129 = vadd.f32 0.0, %v6128
      %v6130 = vpop.f32.mrb[0].mxu0
      %6131 = vmatprep.mubr.bf16.mxu0 0
      %6132 = vmatmul.mubr.bf16.gmra.mrb[0].mxu0 %v5884
      %v6133 = vpop.f32.mrb[0].mxu0
      %v6134 = vadd.f32 0.0, %v6133
      %v6135 = vpop.f32.mrb[0].mxu0
      %v6136 = vpop.f32.mrb[0].mxu0
      %v6137 = vadd.f32 0.0, %v6136
      %v6138 = vpop.f32.mrb[0].mxu0
      %6139 = vmatprep.mubr.bf16.mxu0 0
      %6140 = vmatmul.mubr.bf16.gmra.mrb[0].mxu0 %v5886
      %v6141 = vpop.f32.mrb[0].mxu0
      %v6142 = vadd.f32 0.0, %v6141
      %v6143 = vpop.f32.mrb[0].mxu0
      %v6144 = vpop.f32.mrb[0].mxu0
      %v6145 = vadd.f32 0.0, %v6144
      %v6146 = vpop.f32.mrb[0].mxu0
      %6147 = vdwg.mxu0
      %v6148 = vadd.f32 %v5650, %v5990
      %v6149 = vadd.f32 %v5653, %v5993
      %v6150 = vadd.f32 %v5658, %v5998
      %v6151 = vadd.f32 %v5661, %v6001
      %v6152 = vadd.f32 %v5666, %v6006
      %v6153 = vadd.f32 %v5669, %v6009
      %v6154 = vadd.f32 %v5674, %v6014
      %v6155 = vadd.f32 %v5677, %v6017
      %v6156 = vadd.f32 %v5682, %v6022
      %v6157 = vadd.f32 %v5685, %v6025
      %v6158 = vadd.f32 %v5690, %v6030
      %v6159 = vadd.f32 %v5693, %v6033
      %v6160 = vadd.f32 %v5698, %v6038
      %v6161 = vadd.f32 %v5701, %v6041
      %v6162 = vadd.f32 %v5706, %v6046
      %v6163 = vadd.f32 %v5709, %v6049
      %v6164 = vadd.f32 %v5714, %v6054
      %v6165 = vadd.f32 %v5717, %v6057
      %v6166 = vadd.f32 %v5722, %v6062
      %v6167 = vadd.f32 %v5725, %v6065
      %v6168 = vadd.f32 %v5730, %v6070
      %v6169 = vadd.f32 %v5733, %v6073
      %v6170 = vadd.f32 %v5738, %v6078
      %v6171 = vadd.f32 %v5741, %v6081
      %v6172 = vadd.f32 %v5746, %v6086
      %v6173 = vadd.f32 %v5749, %v6089
      %v6174 = vadd.f32 %v5754, %v6094
      %v6175 = vadd.f32 %v5757, %v6097
      %v6176 = vadd.f32 %v5762, %v6102
      %v6177 = vadd.f32 %v5765, %v6105
      %v6178 = vadd.f32 %v5770, %v6110
      %v6179 = vadd.f32 %v5773, %v6113
      %v6180 = vadd.f32 %v5778, %v6118
      %v6181 = vadd.f32 %v5781, %v6121
      %v6182 = vadd.f32 %v5786, %v6126
      %v6183 = vadd.f32 %v5789, %v6129
      %v6184 = vadd.f32 %v5794, %v6134
      %v6185 = vadd.f32 %v5797, %v6137
      %v6186 = vadd.f32 %v5802, %v6142
      %v6187 = vadd.f32 %v5805, %v6145
      %v6188 = vld [vmem:[#allocation3 + $0x8] sm:$0xfc]
      %v6189 = vld [vmem:[#allocation3 + $0x10] sm:$0xff]
      %v6190 = vld [vmem:[#allocation3 + $0x18] sm:$0xff]
      %v6191 = vld [vmem:[#allocation3 + $0x20] sm:$0xff]
      %v6192 = vld [vmem:[#allocation3 + $0x28] sm:$0xff]
      %v6193 = vld [vmem:[#allocation3 + $0x30] sm:$0xff]
      %v6194 = vld [vmem:[#allocation3 + $0x38] sm:$0xff]
      %v6195 = vld [vmem:[#allocation3 + $0x40] sm:$0xff]
      %v6196 = vld [vmem:[#allocation3 + $0x48] sm:$0xff]
      %v6197 = vld [vmem:[#allocation3 + $0x50] sm:$0xff]
      %v6198 = vld [vmem:[#allocation3 + $0x58] sm:$0xff]
      %v6199 = vld [vmem:[#allocation3 + $0x60] sm:$0xff]
      %v6200 = vld [vmem:[#allocation3 + $0x68] sm:$0xff]
      %v6201 = vld [vmem:[#allocation3 + $0x70] sm:$0xff]
      %v6202 = vld [vmem:[#allocation3 + $0x78] sm:$0xff]
      %v6203 = vld [vmem:[#allocation3 + $0x80] sm:$0xff]
      %v6204 = vld [vmem:[#allocation3 + $0x88] sm:$0xff]
      %v6205 = vld [vmem:[#allocation3 + $0x90] sm:$0xff]
      %v6206 = vld [vmem:[#allocation3 + $0x98] sm:$0xff]
      %v6207 = vld [vmem:[#allocation3 + $0xa0] sm:$0xff]
      %v6208 = vld [vmem:[#allocation3 + $0xa8] sm:$0x3]
      %v6209 = vld [vmem:[%s4 + $0xc0] sm:$0xf]
      %v6210 = vld [vmem:[%s4 + $0xc4] sm:$0xf]
      %v6211 = vld [vmem:[%s4 + $0xc8] sm:$0xf]
      %v6212 = vld [vmem:[%s4 + $0xcc] sm:$0xf]
      %v6213 = vld [vmem:[%s4 + $0xd0] sm:$0xf]
      %v6214 = vld [vmem:[%s4 + $0xd4] sm:$0xf]
      %v6215 = vld [vmem:[%s4 + $0xd8] sm:$0xf]
      %v6216 = vld [vmem:[%s4 + $0xdc] sm:$0xf]
      %v6217 = vld [vmem:[%s4 + $0xe0] sm:$0xf]
      %v6218 = vld [vmem:[%s4 + $0xe4] sm:$0xf]
      %v6219 = vld [vmem:[%s4 + $0xe8] sm:$0xf]
      %v6220 = vld [vmem:[%s4 + $0xec] sm:$0xf]
      %v6221 = vld [vmem:[%s4 + $0xf0] sm:$0xf]
      %v6222 = vld [vmem:[%s4 + $0xf4] sm:$0xf]
      %v6223 = vld [vmem:[%s4 + $0xf8] sm:$0xf]
      %v6224 = vld [vmem:[%s4 + $0xfc] sm:$0xf]
      %v6246 = vrot.slane %v6188, 2
      %v6247 = vrot.slane %v6189, 2
      %v6248 = vsel %vm1625, %v6246, %v6247
      %v6249 = vrot.slane %v6190, 2
      %v6250 = vsel %vm1625, %v6247, %v6249
      %v6251 = vrot.slane %v6191, 2
      %v6252 = vsel %vm1625, %v6249, %v6251
      %v6253 = vrot.slane %v6192, 2
      %v6254 = vsel %vm1625, %v6251, %v6253
      %v6255 = vrot.slane %v6193, 2
      %v6256 = vsel %vm1625, %v6253, %v6255
      %v6257 = vrot.slane %v6194, 2
      %v6258 = vsel %vm1625, %v6255, %v6257
      %v6259 = vrot.slane %v6195, 2
      %v6260 = vsel %vm1625, %v6257, %v6259
      %v6261 = vrot.slane %v6196, 2
      %v6262 = vsel %vm1625, %v6259, %v6261
      %v6263 = vrot.slane %v6197, 2
      %v6264 = vsel %vm1625, %v6261, %v6263
      %v6265 = vrot.slane %v6198, 2
      %v6266 = vsel %vm1625, %v6263, %v6265
      %v6267 = vrot.slane %v6199, 2
      %v6268 = vsel %vm1625, %v6265, %v6267
      %v6269 = vrot.slane %v6200, 2
      %v6270 = vsel %vm1625, %v6267, %v6269
      %v6271 = vrot.slane %v6201, 2
      %v6272 = vsel %vm1625, %v6269, %v6271
      %v6273 = vrot.slane %v6202, 2
      %v6274 = vsel %vm1625, %v6271, %v6273
      %v6275 = vrot.slane %v6203, 2
      %v6276 = vsel %vm1625, %v6273, %v6275
      %v6277 = vrot.slane %v6204, 2
      %v6278 = vsel %vm1625, %v6275, %v6277
      %v6279 = vrot.slane %v6205, 2
      %v6280 = vsel %vm1625, %v6277, %v6279
      %v6281 = vrot.slane %v6206, 2
      %v6282 = vsel %vm1625, %v6279, %v6281
      %v6283 = vrot.slane %v6207, 2
      %v6284 = vsel %vm1625, %v6281, %v6283
      %v6285 = vrot.slane %v6208, 2
      %v6286 = vsel %vm1625, %v6283, %v6285
      %v6323 = vunpack.c.l.b16 %v6209
      %v6324 = vunpack.c.l.b16 %v6210
      %v6325 = vunpack.c.l.b16 %v6211
      %v6326 = vunpack.c.l.b16 %v6212
      %v6327 = vunpack.c.l.b16 %v6213
      %v6328 = vunpack.c.l.b16 %v6214
      %v6329 = vunpack.c.l.b16 %v6215
      %v6330 = vunpack.c.l.b16 %v6216
      %v6331 = vunpack.c.l.b16 %v6217
      %v6332 = vunpack.c.l.b16 %v6218
      %v6333 = vunpack.c.l.b16 %v6219
      %v6334 = vunpack.c.l.b16 %v6220
      %v6335 = vunpack.c.l.b16 %v6221
      %v6336 = vunpack.c.l.b16 %v6222
      %v6337 = vunpack.c.l.b16 %v6223
      %v6338 = vunpack.c.l.b16 %v6224
      %v6339 = vpack.c.b16 %v6324, %v6323
      %v6340 = vpack.c.b16 %v6326, %v6325
      %v6341 = vpack.c.b16 %v6328, %v6327
      %v6342 = vpack.c.b16 %v6330, %v6329
      %v6343 = vpack.c.b16 %v6332, %v6331
      %v6344 = vpack.c.b16 %v6334, %v6333
      %v6345 = vpack.c.b16 %v6336, %v6335
      %v6346 = vpack.c.b16 %v6338, %v6337
      %6355 = vmatprep.subr.bf16.mxu0 0
      %6356 = vmatpush1.bf16.msra.mxu0 %v6339
      %6357 = vmatprep.subr.bf16.mxu0 0
      %6358 = vmatpush1.bf16.msra.mxu0 %v6340
      %6359 = vmatprep.subr.bf16.mxu0 0
      %6360 = vmatpush1.bf16.msra.mxu0 %v6341
      %6361 = vmatprep.subr.bf16.mxu0 0
      %6362 = vmatpush1.bf16.msra.mxu0 %v6342
      %6363 = vmatprep.subr.bf16.mxu0 0
      %6364 = vmatpush1.bf16.msra.mxu0 %v6343
      %6365 = vmatprep.subr.bf16.mxu0 0
      %6366 = vmatpush1.bf16.msra.mxu0 %v6344
      %6367 = vmatprep.subr.bf16.mxu0 0
      %6368 = vmatpush1.bf16.msra.mxu0 %v6345
      %6369 = vmatprep.subr.bf16.mxu0 0
      %6370 = vmatpush1.bf16.msra.mxu0 %v6346
      %6371 = vmatprep.subr.bf16.mxu0 0
      %6372 = vmatpush1.bf16.msra.mxu0 0
      %6373 = vmatprep.subr.bf16.mxu0 0
      %6374 = vmatpush1.bf16.msra.mxu0 0
      %6375 = vmatprep.subr.bf16.mxu0 0
      %6376 = vmatpush1.bf16.msra.mxu0 0
      %6377 = vmatprep.subr.bf16.mxu0 0
      %6378 = vmatpush1.bf16.msra.mxu0 0
      %6379 = vmatprep.subr.bf16.mxu0 0
      %6380 = vmatpush1.bf16.msra.mxu0 0
      %6381 = vmatprep.subr.bf16.mxu0 0
      %6382 = vmatpush1.bf16.msra.mxu0 0
      %6383 = vmatprep.subr.bf16.mxu0 0
      %6384 = vmatpush1.bf16.msra.mxu0 0
      %6385 = vmatprep.subr.bf16.mxu0 0
      %6386 = vmatpush1.bf16.msra.mxu0 0
      %6387 = vmatprep.mubr.bf16.mxu0 0
      %6388 = vmatmul.mubr.bf16.gmra.mrb[0].mxu0 %v6248
      %v6389 = vpop.f32.mrb[0].mxu0
      %v6390 = vadd.f32 0.0, %v6389
      %v6391 = vpop.f32.mrb[0].mxu0
      %v6392 = vpop.f32.mrb[0].mxu0
      %v6393 = vadd.f32 0.0, %v6392
      %v6394 = vpop.f32.mrb[0].mxu0
      %6395 = vmatprep.mubr.bf16.mxu0 0
      %6396 = vmatmul.mubr.bf16.gmra.mrb[0].mxu0 %v6250
      %v6397 = vpop.f32.mrb[0].mxu0
      %v6398 = vadd.f32 0.0, %v6397
      %v6399 = vpop.f32.mrb[0].mxu0
      %v6400 = vpop.f32.mrb[0].mxu0
      %v6401 = vadd.f32 0.0, %v6400
      %v6402 = vpop.f32.mrb[0].mxu0
      %6403 = vmatprep.mubr.bf16.mxu0 0
      %6404 = vmatmul.mubr.bf16.gmra.mrb[0].mxu0 %v6252
      %v6405 = vpop.f32.mrb[0].mxu0
      %v6406 = vadd.f32 0.0, %v6405
      %v6407 = vpop.f32.mrb[0].mxu0
      %v6408 = vpop.f32.mrb[0].mxu0
      %v6409 = vadd.f32 0.0, %v6408
      %v6410 = vpop.f32.mrb[0].mxu0
      %6411 = vmatprep.mubr.bf16.mxu0 0
      %6412 = vmatmul.mubr.bf16.gmra.mrb[0].mxu0 %v6254
      %v6413 = vpop.f32.mrb[0].mxu0
      %v6414 = vadd.f32 0.0, %v6413
      %v6415 = vpop.f32.mrb[0].mxu0
      %v6416 = vpop.f32.mrb[0].mxu0
      %v6417 = vadd.f32 0.0, %v6416
      %v6418 = vpop.f32.mrb[0].mxu0
      %6419 = vmatprep.mubr.bf16.mxu0 0
      %6420 = vmatmul.mubr.bf16.gmra.mrb[0].mxu0 %v6256
      %v6421 = vpop.f32.mrb[0].mxu0
      %v6422 = vadd.f32 0.0, %v6421
      %v6423 = vpop.f32.mrb[0].mxu0
      %v6424 = vpop.f32.mrb[0].mxu0
      %v6425 = vadd.f32 0.0, %v6424
      %v6426 = vpop.f32.mrb[0].mxu0
      %6427 = vmatprep.mubr.bf16.mxu0 0
      %6428 = vmatmul.mubr.bf16.gmra.mrb[0].mxu0 %v6258
      %v6429 = vpop.f32.mrb[0].mxu0
      %v6430 = vadd.f32 0.0, %v6429
      %v6431 = vpop.f32.mrb[0].mxu0
      %v6432 = vpop.f32.mrb[0].mxu0
      %v6433 = vadd.f32 0.0, %v6432
      %v6434 = vpop.f32.mrb[0].mxu0
      %6435 = vmatprep.mubr.bf16.mxu0 0
      %6436 = vmatmul.mubr.bf16.gmra.mrb[0].mxu0 %v6260
      %v6437 = vpop.f32.mrb[0].mxu0
      %v6438 = vadd.f32 0.0, %v6437
      %v6439 = vpop.f32.mrb[0].mxu0
      %v6440 = vpop.f32.mrb[0].mxu0
      %v6441 = vadd.f32 0.0, %v6440
      %v6442 = vpop.f32.mrb[0].mxu0
      %6443 = vmatprep.mubr.bf16.mxu0 0
      %6444 = vmatmul.mubr.bf16.gmra.mrb[0].mxu0 %v6262
      %v6445 = vpop.f32.mrb[0].mxu0
      %v6446 = vadd.f32 0.0, %v6445
      %v6447 = vpop.f32.mrb[0].mxu0
      %v6448 = vpop.f32.mrb[0].mxu0
      %v6449 = vadd.f32 0.0, %v6448
      %v6450 = vpop.f32.mrb[0].mxu0
      %6451 = vmatprep.mubr.bf16.mxu0 0
      %6452 = vmatmul.mubr.bf16.gmra.mrb[0].mxu0 %v6264
      %v6453 = vpop.f32.mrb[0].mxu0
      %v6454 = vadd.f32 0.0, %v6453
      %v6455 = vpop.f32.mrb[0].mxu0
      %v6456 = vpop.f32.mrb[0].mxu0
      %v6457 = vadd.f32 0.0, %v6456
      %v6458 = vpop.f32.mrb[0].mxu0
      %6459 = vmatprep.mubr.bf16.mxu0 0
      %6460 = vmatmul.mubr.bf16.gmra.mrb[0].mxu0 %v6266
      %v6461 = vpop.f32.mrb[0].mxu0
      %v6462 = vadd.f32 0.0, %v6461
      %v6463 = vpop.f32.mrb[0].mxu0
      %v6464 = vpop.f32.mrb[0].mxu0
      %v6465 = vadd.f32 0.0, %v6464
      %v6466 = vpop.f32.mrb[0].mxu0
      %6467 = vmatprep.mubr.bf16.mxu0 0
      %6468 = vmatmul.mubr.bf16.gmra.mrb[0].mxu0 %v6268
      %v6469 = vpop.f32.mrb[0].mxu0
      %v6470 = vadd.f32 0.0, %v6469
      %v6471 = vpop.f32.mrb[0].mxu0
      %v6472 = vpop.f32.mrb[0].mxu0
      %v6473 = vadd.f32 0.0, %v6472
      %v6474 = vpop.f32.mrb[0].mxu0
      %6475 = vmatprep.mubr.bf16.mxu0 0
      %6476 = vmatmul.mubr.bf16.gmra.mrb[0].mxu0 %v6270
      %v6477 = vpop.f32.mrb[0].mxu0
      %v6478 = vadd.f32 0.0, %v6477
      %v6479 = vpop.f32.mrb[0].mxu0
      %v6480 = vpop.f32.mrb[0].mxu0
      %v6481 = vadd.f32 0.0, %v6480
      %v6482 = vpop.f32.mrb[0].mxu0
      %6483 = vmatprep.mubr.bf16.mxu0 0
      %6484 = vmatmul.mubr.bf16.gmra.mrb[0].mxu0 %v6272
      %v6485 = vpop.f32.mrb[0].mxu0
      %v6486 = vadd.f32 0.0, %v6485
      %v6487 = vpop.f32.mrb[0].mxu0
      %v6488 = vpop.f32.mrb[0].mxu0
      %v6489 = vadd.f32 0.0, %v6488
      %v6490 = vpop.f32.mrb[0].mxu0
      %6491 = vmatprep.mubr.bf16.mxu0 0
      %6492 = vmatmul.mubr.bf16.gmra.mrb[0].mxu0 %v6274
      %v6493 = vpop.f32.mrb[0].mxu0
      %v6494 = vadd.f32 0.0, %v6493
      %v6495 = vpop.f32.mrb[0].mxu0
      %v6496 = vpop.f32.mrb[0].mxu0
      %v6497 = vadd.f32 0.0, %v6496
      %v6498 = vpop.f32.mrb[0].mxu0
      %6499 = vmatprep.mubr.bf16.mxu0 0
      %6500 = vmatmul.mubr.bf16.gmra.mrb[0].mxu0 %v6276
      %v6501 = vpop.f32.mrb[0].mxu0
      %v6502 = vadd.f32 0.0, %v6501
      %v6503 = vpop.f32.mrb[0].mxu0
      %v6504 = vpop.f32.mrb[0].mxu0
      %v6505 = vadd.f32 0.0, %v6504
      %v6506 = vpop.f32.mrb[0].mxu0
      %6507 = vmatprep.mubr.bf16.mxu0 0
      %6508 = vmatmul.mubr.bf16.gmra.mrb[0].mxu0 %v6278
      %v6509 = vpop.f32.mrb[0].mxu0
      %v6510 = vadd.f32 0.0, %v6509
      %v6511 = vpop.f32.mrb[0].mxu0
      %v6512 = vpop.f32.mrb[0].mxu0
      %v6513 = vadd.f32 0.0, %v6512
      %v6514 = vpop.f32.mrb[0].mxu0
      %6515 = vmatprep.mubr.bf16.mxu0 0
      %6516 = vmatmul.mubr.bf16.gmra.mrb[0].mxu0 %v6280
      %v6517 = vpop.f32.mrb[0].mxu0
      %v6518 = vadd.f32 0.0, %v6517
      %v6519 = vpop.f32.mrb[0].mxu0
      %v6520 = vpop.f32.mrb[0].mxu0
      %v6521 = vadd.f32 0.0, %v6520
      %v6522 = vpop.f32.mrb[0].mxu0
      %6523 = vmatprep.mubr.bf16.mxu0 0
      %6524 = vmatmul.mubr.bf16.gmra.mrb[0].mxu0 %v6282
      %v6525 = vpop.f32.mrb[0].mxu0
      %v6526 = vadd.f32 0.0, %v6525
      %v6527 = vpop.f32.mrb[0].mxu0
      %v6528 = vpop.f32.mrb[0].mxu0
      %v6529 = vadd.f32 0.0, %v6528
      %v6530 = vpop.f32.mrb[0].mxu0
      %6531 = vmatprep.mubr.bf16.mxu0 0
      %6532 = vmatmul.mubr.bf16.gmra.mrb[0].mxu0 %v6284
      %v6533 = vpop.f32.mrb[0].mxu0
      %v6534 = vadd.f32 0.0, %v6533
      %v6535 = vpop.f32.mrb[0].mxu0
      %v6536 = vpop.f32.mrb[0].mxu0
      %v6537 = vadd.f32 0.0, %v6536
      %v6538 = vpop.f32.mrb[0].mxu0
      %6539 = vmatprep.mubr.bf16.mxu0 0
      %6540 = vmatmul.mubr.bf16.gmra.mrb[0].mxu0 %v6286
      %v6541 = vpop.f32.mrb[0].mxu0
      %v6542 = vadd.f32 0.0, %v6541
      %v6543 = vpop.f32.mrb[0].mxu0
      %v6544 = vpop.f32.mrb[0].mxu0
      %v6545 = vadd.f32 0.0, %v6544
      %v6546 = vpop.f32.mrb[0].mxu0
      %6547 = vdwg.mxu0
      %v6548 = vadd.f32 %v6148, %v6390
      %v6549 = vadd.f32 %v6149, %v6393
      %v6550 = vadd.f32 %v6150, %v6398
      %v6551 = vadd.f32 %v6151, %v6401
      %v6552 = vadd.f32 %v6152, %v6406
      %v6553 = vadd.f32 %v6153, %v6409
      %v6554 = vadd.f32 %v6154, %v6414
      %v6555 = vadd.f32 %v6155, %v6417
      %v6556 = vadd.f32 %v6156, %v6422
      %v6557 = vadd.f32 %v6157, %v6425
      %v6558 = vadd.f32 %v6158, %v6430
      %v6559 = vadd.f32 %v6159, %v6433
      %v6560 = vadd.f32 %v6160, %v6438
      %v6561 = vadd.f32 %v6161, %v6441
      %v6562 = vadd.f32 %v6162, %v6446
      %v6563 = vadd.f32 %v6163, %v6449
      %v6564 = vadd.f32 %v6164, %v6454
      %v6565 = vadd.f32 %v6165, %v6457
      %v6566 = vadd.f32 %v6166, %v6462
      %v6567 = vadd.f32 %v6167, %v6465
      %v6568 = vadd.f32 %v6168, %v6470
      %v6569 = vadd.f32 %v6169, %v6473
      %v6570 = vadd.f32 %v6170, %v6478
      %v6571 = vadd.f32 %v6171, %v6481
      %v6572 = vadd.f32 %v6172, %v6486
      %v6573 = vadd.f32 %v6173, %v6489
      %v6574 = vadd.f32 %v6174, %v6494
      %v6575 = vadd.f32 %v6175, %v6497
      %v6576 = vadd.f32 %v6176, %v6502
      %v6577 = vadd.f32 %v6177, %v6505
      %v6578 = vadd.f32 %v6178, %v6510
      %v6579 = vadd.f32 %v6179, %v6513
      %v6580 = vadd.f32 %v6180, %v6518
      %v6581 = vadd.f32 %v6181, %v6521
      %v6582 = vadd.f32 %v6182, %v6526
      %v6583 = vadd.f32 %v6183, %v6529
      %v6584 = vadd.f32 %v6184, %v6534
      %v6585 = vadd.f32 %v6185, %v6537
      %v6586 = vadd.f32 %v6186, %v6542
      %v6587 = vadd.f32 %v6187, %v6545
      %v6588 = vld [vmem:[#allocation3 + $0xa8] sm:$0x7]
      %v6589 = vld [vmem:[%s4 + $0x100] sm:$0xf]
      %v6590 = vld [vmem:[%s4 + $0x104] sm:$0xf]
      %v6591 = vld [vmem:[%s4 + $0x108] sm:$0xf]
      %v6592 = vld [vmem:[%s4 + $0x10c] sm:$0xf]
      %v6593 = vld [vmem:[%s4 + $0x110] sm:$0xf]
      %v6594 = vld [vmem:[%s4 + $0x114] sm:$0xf]
      %v6595 = vld [vmem:[%s4 + $0x118] sm:$0xf]
      %v6596 = vld [vmem:[%s4 + $0x11c] sm:$0xf]
      %v6597 = vld [vmem:[%s4 + $0x120] sm:$0xf]
      %v6598 = vld [vmem:[%s4 + $0x124] sm:$0xf]
      %v6599 = vld [vmem:[%s4 + $0x128] sm:$0xf]
      %v6600 = vld [vmem:[%s4 + $0x12c] sm:$0xf]
      %v6601 = vld [vmem:[%s4 + $0x130] sm:$0xf]
      %v6602 = vld [vmem:[%s4 + $0x134] sm:$0xf]
      %v6603 = vld [vmem:[%s4 + $0x138] sm:$0xf]
      %v6604 = vld [vmem:[%s4 + $0x13c] sm:$0xf]
      %v6606 = vshrl.u32 %v6188, 16
      %v6608 = vrot.slane %v6606, 2
      %v6609 = vshll.u32 %v6188, 16
      %v6611 = vrot.slane %v6609, 3
      %v6612 = vor.u32 %v6608, %v6611
      %v6614 = vshrl.u32 %v6189, 16
      %v6616 = vrot.slane %v6614, 2
      %v6617 = vshll.u32 %v6189, 16
      %v6619 = vrot.slane %v6617, 3
      %v6620 = vor.u32 %v6616, %v6619
      %v6621 = vsel %vm2024, %v6612, %v6620
      %v6623 = vshrl.u32 %v6190, 16
      %v6625 = vrot.slane %v6623, 2
      %v6626 = vshll.u32 %v6190, 16
      %v6628 = vrot.slane %v6626, 3
      %v6629 = vor.u32 %v6625, %v6628
      %v6630 = vsel %vm2024, %v6620, %v6629
      %v6632 = vshrl.u32 %v6191, 16
      %v6634 = vrot.slane %v6632, 2
      %v6635 = vshll.u32 %v6191, 16
      %v6637 = vrot.slane %v6635, 3
      %v6638 = vor.u32 %v6634, %v6637
      %v6639 = vsel %vm2024, %v6629, %v6638
      %v6641 = vshrl.u32 %v6192, 16
      %v6643 = vrot.slane %v6641, 2
      %v6644 = vshll.u32 %v6192, 16
      %v6646 = vrot.slane %v6644, 3
      %v6647 = vor.u32 %v6643, %v6646
      %v6648 = vsel %vm2024, %v6638, %v6647
      %v6650 = vshrl.u32 %v6193, 16
      %v6652 = vrot.slane %v6650, 2
      %v6653 = vshll.u32 %v6193, 16
      %v6655 = vrot.slane %v6653, 3
      %v6656 = vor.u32 %v6652, %v6655
      %v6657 = vsel %vm2024, %v6647, %v6656
      %v6659 = vshrl.u32 %v6194, 16
      %v6661 = vrot.slane %v6659, 2
      %v6662 = vshll.u32 %v6194, 16
      %v6664 = vrot.slane %v6662, 3
      %v6665 = vor.u32 %v6661, %v6664
      %v6666 = vsel %vm2024, %v6656, %v6665
      %v6668 = vshrl.u32 %v6195, 16
      %v6670 = vrot.slane %v6668, 2
      %v6671 = vshll.u32 %v6195, 16
      %v6673 = vrot.slane %v6671, 3
      %v6674 = vor.u32 %v6670, %v6673
      %v6675 = vsel %vm2024, %v6665, %v6674
      %v6677 = vshrl.u32 %v6196, 16
      %v6679 = vrot.slane %v6677, 2
      %v6680 = vshll.u32 %v6196, 16
      %v6682 = vrot.slane %v6680, 3
      %v6683 = vor.u32 %v6679, %v6682
      %v6684 = vsel %vm2024, %v6674, %v6683
      %v6686 = vshrl.u32 %v6197, 16
      %v6688 = vrot.slane %v6686, 2
      %v6689 = vshll.u32 %v6197, 16
      %v6691 = vrot.slane %v6689, 3
      %v6692 = vor.u32 %v6688, %v6691
      %v6693 = vsel %vm2024, %v6683, %v6692
      %v6695 = vshrl.u32 %v6198, 16
      %v6697 = vrot.slane %v6695, 2
      %v6698 = vshll.u32 %v6198, 16
      %v6700 = vrot.slane %v6698, 3
      %v6701 = vor.u32 %v6697, %v6700
      %v6702 = vsel %vm2024, %v6692, %v6701
      %v6704 = vshrl.u32 %v6199, 16
      %v6706 = vrot.slane %v6704, 2
      %v6707 = vshll.u32 %v6199, 16
      %v6709 = vrot.slane %v6707, 3
      %v6710 = vor.u32 %v6706, %v6709
      %v6711 = vsel %vm2024, %v6701, %v6710
      %v6713 = vshrl.u32 %v6200, 16
      %v6715 = vrot.slane %v6713, 2
      %v6716 = vshll.u32 %v6200, 16
      %v6718 = vrot.slane %v6716, 3
      %v6719 = vor.u32 %v6715, %v6718
      %v6720 = vsel %vm2024, %v6710, %v6719
      %v6722 = vshrl.u32 %v6201, 16
      %v6724 = vrot.slane %v6722, 2
      %v6725 = vshll.u32 %v6201, 16
      %v6727 = vrot.slane %v6725, 3
      %v6728 = vor.u32 %v6724, %v6727
      %v6729 = vsel %vm2024, %v6719, %v6728
      %v6731 = vshrl.u32 %v6202, 16
      %v6733 = vrot.slane %v6731, 2
      %v6734 = vshll.u32 %v6202, 16
      %v6736 = vrot.slane %v6734, 3
      %v6737 = vor.u32 %v6733, %v6736
      %v6738 = vsel %vm2024, %v6728, %v6737
      %v6740 = vshrl.u32 %v6203, 16
      %v6742 = vrot.slane %v6740, 2
      %v6743 = vshll.u32 %v6203, 16
      %v6745 = vrot.slane %v6743, 3
      %v6746 = vor.u32 %v6742, %v6745
      %v6747 = vsel %vm2024, %v6737, %v6746
      %v6749 = vshrl.u32 %v6204, 16
      %v6751 = vrot.slane %v6749, 2
      %v6752 = vshll.u32 %v6204, 16
      %v6754 = vrot.slane %v6752, 3
      %v6755 = vor.u32 %v6751, %v6754
      %v6756 = vsel %vm2024, %v6746, %v6755
      %v6758 = vshrl.u32 %v6205, 16
      %v6760 = vrot.slane %v6758, 2
      %v6761 = vshll.u32 %v6205, 16
      %v6763 = vrot.slane %v6761, 3
      %v6764 = vor.u32 %v6760, %v6763
      %v6765 = vsel %vm2024, %v6755, %v6764
      %v6767 = vshrl.u32 %v6206, 16
      %v6769 = vrot.slane %v6767, 2
      %v6770 = vshll.u32 %v6206, 16
      %v6772 = vrot.slane %v6770, 3
      %v6773 = vor.u32 %v6769, %v6772
      %v6774 = vsel %vm2024, %v6764, %v6773
      %v6776 = vshrl.u32 %v6207, 16
      %v6778 = vrot.slane %v6776, 2
      %v6779 = vshll.u32 %v6207, 16
      %v6781 = vrot.slane %v6779, 3
      %v6782 = vor.u32 %v6778, %v6781
      %v6783 = vsel %vm2024, %v6773, %v6782
      %v6785 = vshrl.u32 %v6588, 16
      %v6787 = vrot.slane %v6785, 2
      %v6788 = vshll.u32 %v6588, 16
      %v6790 = vrot.slane %v6788, 3
      %v6791 = vor.u32 %v6787, %v6790
      %v6792 = vsel %vm2024, %v6782, %v6791
      %v6829 = vunpack.c.l.b16 %v6589
      %v6830 = vunpack.c.l.b16 %v6590
      %v6831 = vunpack.c.l.b16 %v6591
      %v6832 = vunpack.c.l.b16 %v6592
      %v6833 = vunpack.c.l.b16 %v6593
      %v6834 = vunpack.c.l.b16 %v6594
      %v6835 = vunpack.c.l.b16 %v6595
      %v6836 = vunpack.c.l.b16 %v6596
      %v6837 = vunpack.c.l.b16 %v6597
      %v6838 = vunpack.c.l.b16 %v6598
      %v6839 = vunpack.c.l.b16 %v6599
      %v6840 = vunpack.c.l.b16 %v6600
      %v6841 = vunpack.c.l.b16 %v6601
      %v6842 = vunpack.c.l.b16 %v6602
      %v6843 = vunpack.c.l.b16 %v6603
      %v6844 = vunpack.c.l.b16 %v6604
      %v6845 = vpack.c.b16 %v6830, %v6829
      %v6846 = vpack.c.b16 %v6832, %v6831
      %v6847 = vpack.c.b16 %v6834, %v6833
      %v6848 = vpack.c.b16 %v6836, %v6835
      %v6849 = vpack.c.b16 %v6838, %v6837
      %v6850 = vpack.c.b16 %v6840, %v6839
      %v6851 = vpack.c.b16 %v6842, %v6841
      %v6852 = vpack.c.b16 %v6844, %v6843
      %6861 = vmatprep.subr.bf16.mxu0 0
      %6862 = vmatpush1.bf16.msra.mxu0 %v6845
      %6863 = vmatprep.subr.bf16.mxu0 0
      %6864 = vmatpush1.bf16.msra.mxu0 %v6846
      %6865 = vmatprep.subr.bf16.mxu0 0
      %6866 = vmatpush1.bf16.msra.mxu0 %v6847
      %6867 = vmatprep.subr.bf16.mxu0 0
      %6868 = vmatpush1.bf16.msra.mxu0 %v6848
      %6869 = vmatprep.subr.bf16.mxu0 0
      %6870 = vmatpush1.bf16.msra.mxu0 %v6849
      %6871 = vmatprep.subr.bf16.mxu0 0
      %6872 = vmatpush1.bf16.msra.mxu0 %v6850
      %6873 = vmatprep.subr.bf16.mxu0 0
      %6874 = vmatpush1.bf16.msra.mxu0 %v6851
      %6875 = vmatprep.subr.bf16.mxu0 0
      %6876 = vmatpush1.bf16.msra.mxu0 %v6852
      %6877 = vmatprep.subr.bf16.mxu0 0
      %6878 = vmatpush1.bf16.msra.mxu0 0
      %6879 = vmatprep.subr.bf16.mxu0 0
      %6880 = vmatpush1.bf16.msra.mxu0 0
      %6881 = vmatprep.subr.bf16.mxu0 0
      %6882 = vmatpush1.bf16.msra.mxu0 0
      %6883 = vmatprep.subr.bf16.mxu0 0
      %6884 = vmatpush1.bf16.msra.mxu0 0
      %6885 = vmatprep.subr.bf16.mxu0 0
      %6886 = vmatpush1.bf16.msra.mxu0 0
      %6887 = vmatprep.subr.bf16.mxu0 0
      %6888 = vmatpush1.bf16.msra.mxu0 0
      %6889 = vmatprep.subr.bf16.mxu0 0
      %6890 = vmatpush1.bf16.msra.mxu0 0
      %6891 = vmatprep.subr.bf16.mxu0 0
      %6892 = vmatpush1.bf16.msra.mxu0 0
      %6893 = vmatprep.mubr.bf16.mxu0 0
      %6894 = vmatmul.mubr.bf16.gmra.mrb[0].mxu0 %v6621
      %v6895 = vpop.f32.mrb[0].mxu0
      %v6896 = vadd.f32 0.0, %v6895
      %v6897 = vpop.f32.mrb[0].mxu0
      %v6898 = vpop.f32.mrb[0].mxu0
      %v6899 = vadd.f32 0.0, %v6898
      %v6900 = vpop.f32.mrb[0].mxu0
      %6901 = vmatprep.mubr.bf16.mxu0 0
      %6902 = vmatmul.mubr.bf16.gmra.mrb[0].mxu0 %v6630
      %v6903 = vpop.f32.mrb[0].mxu0
      %v6904 = vadd.f32 0.0, %v6903
      %v6905 = vpop.f32.mrb[0].mxu0
      %v6906 = vpop.f32.mrb[0].mxu0
      %v6907 = vadd.f32 0.0, %v6906
      %v6908 = vpop.f32.mrb[0].mxu0
      %6909 = vmatprep.mubr.bf16.mxu0 0
      %6910 = vmatmul.mubr.bf16.gmra.mrb[0].mxu0 %v6639
      %v6911 = vpop.f32.mrb[0].mxu0
      %v6912 = vadd.f32 0.0, %v6911
      %v6913 = vpop.f32.mrb[0].mxu0
      %v6914 = vpop.f32.mrb[0].mxu0
      %v6915 = vadd.f32 0.0, %v6914
      %v6916 = vpop.f32.mrb[0].mxu0
      %6917 = vmatprep.mubr.bf16.mxu0 0
      %6918 = vmatmul.mubr.bf16.gmra.mrb[0].mxu0 %v6648
      %v6919 = vpop.f32.mrb[0].mxu0
      %v6920 = vadd.f32 0.0, %v6919
      %v6921 = vpop.f32.mrb[0].mxu0
      %v6922 = vpop.f32.mrb[0].mxu0
      %v6923 = vadd.f32 0.0, %v6922
      %v6924 = vpop.f32.mrb[0].mxu0
      %6925 = vmatprep.mubr.bf16.mxu0 0
      %6926 = vmatmul.mubr.bf16.gmra.mrb[0].mxu0 %v6657
      %v6927 = vpop.f32.mrb[0].mxu0
      %v6928 = vadd.f32 0.0, %v6927
      %v6929 = vpop.f32.mrb[0].mxu0
      %v6930 = vpop.f32.mrb[0].mxu0
      %v6931 = vadd.f32 0.0, %v6930
      %v6932 = vpop.f32.mrb[0].mxu0
      %6933 = vmatprep.mubr.bf16.mxu0 0
      %6934 = vmatmul.mubr.bf16.gmra.mrb[0].mxu0 %v6666
      %v6935 = vpop.f32.mrb[0].mxu0
      %v6936 = vadd.f32 0.0, %v6935
      %v6937 = vpop.f32.mrb[0].mxu0
      %v6938 = vpop.f32.mrb[0].mxu0
      %v6939 = vadd.f32 0.0, %v6938
      %v6940 = vpop.f32.mrb[0].mxu0
      %6941 = vmatprep.mubr.bf16.mxu0 0
      %6942 = vmatmul.mubr.bf16.gmra.mrb[0].mxu0 %v6675
      %v6943 = vpop.f32.mrb[0].mxu0
      %v6944 = vadd.f32 0.0, %v6943
      %v6945 = vpop.f32.mrb[0].mxu0
      %v6946 = vpop.f32.mrb[0].mxu0
      %v6947 = vadd.f32 0.0, %v6946
      %v6948 = vpop.f32.mrb[0].mxu0
      %6949 = vmatprep.mubr.bf16.mxu0 0
      %6950 = vmatmul.mubr.bf16.gmra.mrb[0].mxu0 %v6684
      %v6951 = vpop.f32.mrb[0].mxu0
      %v6952 = vadd.f32 0.0, %v6951
      %v6953 = vpop.f32.mrb[0].mxu0
      %v6954 = vpop.f32.mrb[0].mxu0
      %v6955 = vadd.f32 0.0, %v6954
      %v6956 = vpop.f32.mrb[0].mxu0
      %6957 = vmatprep.mubr.bf16.mxu0 0
      %6958 = vmatmul.mubr.bf16.gmra.mrb[0].mxu0 %v6693
      %v6959 = vpop.f32.mrb[0].mxu0
      %v6960 = vadd.f32 0.0, %v6959
      %v6961 = vpop.f32.mrb[0].mxu0
      %v6962 = vpop.f32.mrb[0].mxu0
      %v6963 = vadd.f32 0.0, %v6962
      %v6964 = vpop.f32.mrb[0].mxu0
      %6965 = vmatprep.mubr.bf16.mxu0 0
      %6966 = vmatmul.mubr.bf16.gmra.mrb[0].mxu0 %v6702
      %v6967 = vpop.f32.mrb[0].mxu0
      %v6968 = vadd.f32 0.0, %v6967
      %v6969 = vpop.f32.mrb[0].mxu0
      %v6970 = vpop.f32.mrb[0].mxu0
      %v6971 = vadd.f32 0.0, %v6970
      %v6972 = vpop.f32.mrb[0].mxu0
      %6973 = vmatprep.mubr.bf16.mxu0 0
      %6974 = vmatmul.mubr.bf16.gmra.mrb[0].mxu0 %v6711
      %v6975 = vpop.f32.mrb[0].mxu0
      %v6976 = vadd.f32 0.0, %v6975
      %v6977 = vpop.f32.mrb[0].mxu0
      %v6978 = vpop.f32.mrb[0].mxu0
      %v6979 = vadd.f32 0.0, %v6978
      %v6980 = vpop.f32.mrb[0].mxu0
      %6981 = vmatprep.mubr.bf16.mxu0 0
      %6982 = vmatmul.mubr.bf16.gmra.mrb[0].mxu0 %v6720
      %v6983 = vpop.f32.mrb[0].mxu0
      %v6984 = vadd.f32 0.0, %v6983
      %v6985 = vpop.f32.mrb[0].mxu0
      %v6986 = vpop.f32.mrb[0].mxu0
      %v6987 = vadd.f32 0.0, %v6986
      %v6988 = vpop.f32.mrb[0].mxu0
      %6989 = vmatprep.mubr.bf16.mxu0 0
      %6990 = vmatmul.mubr.bf16.gmra.mrb[0].mxu0 %v6729
      %v6991 = vpop.f32.mrb[0].mxu0
      %v6992 = vadd.f32 0.0, %v6991
      %v6993 = vpop.f32.mrb[0].mxu0
      %v6994 = vpop.f32.mrb[0].mxu0
      %v6995 = vadd.f32 0.0, %v6994
      %v6996 = vpop.f32.mrb[0].mxu0
      %6997 = vmatprep.mubr.bf16.mxu0 0
      %6998 = vmatmul.mubr.bf16.gmra.mrb[0].mxu0 %v6738
      %v6999 = vpop.f32.mrb[0].mxu0
      %v7000 = vadd.f32 0.0, %v6999
      %v7001 = vpop.f32.mrb[0].mxu0
      %v7002 = vpop.f32.mrb[0].mxu0
      %v7003 = vadd.f32 0.0, %v7002
      %v7004 = vpop.f32.mrb[0].mxu0
      %7005 = vmatprep.mubr.bf16.mxu0 0
      %7006 = vmatmul.mubr.bf16.gmra.mrb[0].mxu0 %v6747
      %v7007 = vpop.f32.mrb[0].mxu0
      %v7008 = vadd.f32 0.0, %v7007
      %v7009 = vpop.f32.mrb[0].mxu0
      %v7010 = vpop.f32.mrb[0].mxu0
      %v7011 = vadd.f32 0.0, %v7010
      %v7012 = vpop.f32.mrb[0].mxu0
      %7013 = vmatprep.mubr.bf16.mxu0 0
      %7014 = vmatmul.mubr.bf16.gmra.mrb[0].mxu0 %v6756
      %v7015 = vpop.f32.mrb[0].mxu0
      %v7016 = vadd.f32 0.0, %v7015
      %v7017 = vpop.f32.mrb[0].mxu0
      %v7018 = vpop.f32.mrb[0].mxu0
      %v7019 = vadd.f32 0.0, %v7018
      %v7020 = vpop.f32.mrb[0].mxu0
      %7021 = vmatprep.mubr.bf16.mxu0 0
      %7022 = vmatmul.mubr.bf16.gmra.mrb[0].mxu0 %v6765
      %v7023 = vpop.f32.mrb[0].mxu0
      %v7024 = vadd.f32 0.0, %v7023
      %v7025 = vpop.f32.mrb[0].mxu0
      %v7026 = vpop.f32.mrb[0].mxu0
      %v7027 = vadd.f32 0.0, %v7026
      %v7028 = vpop.f32.mrb[0].mxu0
      %7029 = vmatprep.mubr.bf16.mxu0 0
      %7030 = vmatmul.mubr.bf16.gmra.mrb[0].mxu0 %v6774
      %v7031 = vpop.f32.mrb[0].mxu0
      %v7032 = vadd.f32 0.0, %v7031
      %v7033 = vpop.f32.mrb[0].mxu0
      %v7034 = vpop.f32.mrb[0].mxu0
      %v7035 = vadd.f32 0.0, %v7034
      %v7036 = vpop.f32.mrb[0].mxu0
      %7037 = vmatprep.mubr.bf16.mxu0 0
      %7038 = vmatmul.mubr.bf16.gmra.mrb[0].mxu0 %v6783
      %v7039 = vpop.f32.mrb[0].mxu0
      %v7040 = vadd.f32 0.0, %v7039
      %v7041 = vpop.f32.mrb[0].mxu0
      %v7042 = vpop.f32.mrb[0].mxu0
      %v7043 = vadd.f32 0.0, %v7042
      %v7044 = vpop.f32.mrb[0].mxu0
      %7045 = vmatprep.mubr.bf16.mxu0 0
      %7046 = vmatmul.mubr.bf16.gmra.mrb[0].mxu0 %v6792
      %v7047 = vpop.f32.mrb[0].mxu0
      %v7048 = vadd.f32 0.0, %v7047
      %v7049 = vpop.f32.mrb[0].mxu0
      %v7050 = vpop.f32.mrb[0].mxu0
      %v7051 = vadd.f32 0.0, %v7050
      %v7052 = vpop.f32.mrb[0].mxu0
      %7053 = vdwg.mxu0
      %v7054 = vadd.f32 %v6548, %v6896
      %v7055 = vadd.f32 %v6549, %v6899
      %v7056 = vadd.f32 %v6550, %v6904
      %v7057 = vadd.f32 %v6551, %v6907
      %v7058 = vadd.f32 %v6552, %v6912
      %v7059 = vadd.f32 %v6553, %v6915
      %v7060 = vadd.f32 %v6554, %v6920
      %v7061 = vadd.f32 %v6555, %v6923
      %v7062 = vadd.f32 %v6556, %v6928
      %v7063 = vadd.f32 %v6557, %v6931
      %v7064 = vadd.f32 %v6558, %v6936
      %v7065 = vadd.f32 %v6559, %v6939
      %v7066 = vadd.f32 %v6560, %v6944
      %v7067 = vadd.f32 %v6561, %v6947
      %v7068 = vadd.f32 %v6562, %v6952
      %v7069 = vadd.f32 %v6563, %v6955
      %v7070 = vadd.f32 %v6564, %v6960
      %v7071 = vadd.f32 %v6565, %v6963
      %v7072 = vadd.f32 %v6566, %v6968
      %v7073 = vadd.f32 %v6567, %v6971
      %v7074 = vadd.f32 %v6568, %v6976
      %v7075 = vadd.f32 %v6569, %v6979
      %v7076 = vadd.f32 %v6570, %v6984
      %v7077 = vadd.f32 %v6571, %v6987
      %v7078 = vadd.f32 %v6572, %v6992
      %v7079 = vadd.f32 %v6573, %v6995
      %v7080 = vadd.f32 %v6574, %v7000
      %v7081 = vadd.f32 %v6575, %v7003
      %v7082 = vadd.f32 %v6576, %v7008
      %v7083 = vadd.f32 %v6577, %v7011
      %v7084 = vadd.f32 %v6578, %v7016
      %v7085 = vadd.f32 %v6579, %v7019
      %v7086 = vadd.f32 %v6580, %v7024
      %v7087 = vadd.f32 %v6581, %v7027
      %v7088 = vadd.f32 %v6582, %v7032
      %v7089 = vadd.f32 %v6583, %v7035
      %v7090 = vadd.f32 %v6584, %v7040
      %v7091 = vadd.f32 %v6585, %v7043
      %v7092 = vadd.f32 %v6586, %v7048
      %v7093 = vadd.f32 %v6587, %v7051
      %v7094 = vld [vmem:[#allocation3 + $0x8] sm:$0xf8]
      %v7095 = vld [vmem:[%s4 + $0x140] sm:$0xf]
      %v7096 = vld [vmem:[%s4 + $0x144] sm:$0xf]
      %v7097 = vld [vmem:[%s4 + $0x148] sm:$0xf]
      %v7098 = vld [vmem:[%s4 + $0x14c] sm:$0xf]
      %v7099 = vld [vmem:[%s4 + $0x150] sm:$0xf]
      %v7100 = vld [vmem:[%s4 + $0x154] sm:$0xf]
      %v7101 = vld [vmem:[%s4 + $0x158] sm:$0xf]
      %v7102 = vld [vmem:[%s4 + $0x15c] sm:$0xf]
      %v7103 = vld [vmem:[%s4 + $0x160] sm:$0xf]
      %v7104 = vld [vmem:[%s4 + $0x164] sm:$0xf]
      %v7105 = vld [vmem:[%s4 + $0x168] sm:$0xf]
      %v7106 = vld [vmem:[%s4 + $0x16c] sm:$0xf]
      %v7107 = vld [vmem:[%s4 + $0x170] sm:$0xf]
      %v7108 = vld [vmem:[%s4 + $0x174] sm:$0xf]
      %v7109 = vld [vmem:[%s4 + $0x178] sm:$0xf]
      %v7110 = vld [vmem:[%s4 + $0x17c] sm:$0xf]
      %v7113 = vrot.slane %v7094, 3
      %v7114 = vrot.slane %v6189, 3
      %v7115 = vsel %vm2593, %v7113, %v7114
      %v7116 = vrot.slane %v6190, 3
      %v7117 = vsel %vm2593, %v7114, %v7116
      %v7118 = vrot.slane %v6191, 3
      %v7119 = vsel %vm2593, %v7116, %v7118
      %v7120 = vrot.slane %v6192, 3
      %v7121 = vsel %vm2593, %v7118, %v7120
      %v7122 = vrot.slane %v6193, 3
      %v7123 = vsel %vm2593, %v7120, %v7122
      %v7124 = vrot.slane %v6194, 3
      %v7125 = vsel %vm2593, %v7122, %v7124
      %v7126 = vrot.slane %v6195, 3
      %v7127 = vsel %vm2593, %v7124, %v7126
      %v7128 = vrot.slane %v6196, 3
      %v7129 = vsel %vm2593, %v7126, %v7128
      %v7130 = vrot.slane %v6197, 3
      %v7131 = vsel %vm2593, %v7128, %v7130
      %v7132 = vrot.slane %v6198, 3
      %v7133 = vsel %vm2593, %v7130, %v7132
      %v7134 = vrot.slane %v6199, 3
      %v7135 = vsel %vm2593, %v7132, %v7134
      %v7136 = vrot.slane %v6200, 3
      %v7137 = vsel %vm2593, %v7134, %v7136
      %v7138 = vrot.slane %v6201, 3
      %v7139 = vsel %vm2593, %v7136, %v7138
      %v7140 = vrot.slane %v6202, 3
      %v7141 = vsel %vm2593, %v7138, %v7140
      %v7142 = vrot.slane %v6203, 3
      %v7143 = vsel %vm2593, %v7140, %v7142
      %v7144 = vrot.slane %v6204, 3
      %v7145 = vsel %vm2593, %v7142, %v7144
      %v7146 = vrot.slane %v6205, 3
      %v7147 = vsel %vm2593, %v7144, %v7146
      %v7148 = vrot.slane %v6206, 3
      %v7149 = vsel %vm2593, %v7146, %v7148
      %v7150 = vrot.slane %v6207, 3
      %v7151 = vsel %vm2593, %v7148, %v7150
      %v7152 = vrot.slane %v6588, 3
      %v7153 = vsel %vm2593, %v7150, %v7152
      %v7190 = vunpack.c.l.b16 %v7095
      %v7191 = vunpack.c.l.b16 %v7096
      %v7192 = vunpack.c.l.b16 %v7097
      %v7193 = vunpack.c.l.b16 %v7098
      %v7194 = vunpack.c.l.b16 %v7099
      %v7195 = vunpack.c.l.b16 %v7100
      %v7196 = vunpack.c.l.b16 %v7101
      %v7197 = vunpack.c.l.b16 %v7102
      %v7198 = vunpack.c.l.b16 %v7103
      %v7199 = vunpack.c.l.b16 %v7104
      %v7200 = vunpack.c.l.b16 %v7105
      %v7201 = vunpack.c.l.b16 %v7106
      %v7202 = vunpack.c.l.b16 %v7107
      %v7203 = vunpack.c.l.b16 %v7108
      %v7204 = vunpack.c.l.b16 %v7109
      %v7205 = vunpack.c.l.b16 %v7110
      %v7206 = vpack.c.b16 %v7191, %v7190
      %v7207 = vpack.c.b16 %v7193, %v7192
      %v7208 = vpack.c.b16 %v7195, %v7194
      %v7209 = vpack.c.b16 %v7197, %v7196
      %v7210 = vpack.c.b16 %v7199, %v7198
      %v7211 = vpack.c.b16 %v7201, %v7200
      %v7212 = vpack.c.b16 %v7203, %v7202
      %v7213 = vpack.c.b16 %v7205, %v7204
      %7222 = vmatprep.subr.bf16.mxu0 0
      %7223 = vmatpush1.bf16.msra.mxu0 %v7206
      %7224 = vmatprep.subr.bf16.mxu0 0
      %7225 = vmatpush1.bf16.msra.mxu0 %v7207
      %7226 = vmatprep.subr.bf16.mxu0 0
      %7227 = vmatpush1.bf16.msra.mxu0 %v7208
      %7228 = vmatprep.subr.bf16.mxu0 0
      %7229 = vmatpush1.bf16.msra.mxu0 %v7209
      %7230 = vmatprep.subr.bf16.mxu0 0
      %7231 = vmatpush1.bf16.msra.mxu0 %v7210
      %7232 = vmatprep.subr.bf16.mxu0 0
      %7233 = vmatpush1.bf16.msra.mxu0 %v7211
      %7234 = vmatprep.subr.bf16.mxu0 0
      %7235 = vmatpush1.bf16.msra.mxu0 %v7212
      %7236 = vmatprep.subr.bf16.mxu0 0
      %7237 = vmatpush1.bf16.msra.mxu0 %v7213
      %7238 = vmatprep.subr.bf16.mxu0 0
      %7239 = vmatpush1.bf16.msra.mxu0 0
      %7240 = vmatprep.subr.bf16.mxu0 0
      %7241 = vmatpush1.bf16.msra.mxu0 0
      %7242 = vmatprep.subr.bf16.mxu0 0
      %7243 = vmatpush1.bf16.msra.mxu0 0
      %7244 = vmatprep.subr.bf16.mxu0 0
      %7245 = vmatpush1.bf16.msra.mxu0 0
      %7246 = vmatprep.subr.bf16.mxu0 0
      %7247 = vmatpush1.bf16.msra.mxu0 0
      %7248 = vmatprep.subr.bf16.mxu0 0
      %7249 = vmatpush1.bf16.msra.mxu0 0
      %7250 = vmatprep.subr.bf16.mxu0 0
      %7251 = vmatpush1.bf16.msra.mxu0 0
      %7252 = vmatprep.subr.bf16.mxu0 0
      %7253 = vmatpush1.bf16.msra.mxu0 0
      %7254 = vmatprep.mubr.bf16.mxu0 0
      %7255 = vmatmul.mubr.bf16.gmra.mrb[0].mxu0 %v7115
      %v7256 = vpop.f32.mrb[0].mxu0
      %v7257 = vadd.f32 0.0, %v7256
      %v7258 = vpop.f32.mrb[0].mxu0
      %v7259 = vpop.f32.mrb[0].mxu0
      %v7260 = vadd.f32 0.0, %v7259
      %v7261 = vpop.f32.mrb[0].mxu0
      %7262 = vmatprep.mubr.bf16.mxu0 0
      %7263 = vmatmul.mubr.bf16.gmra.mrb[0].mxu0 %v7117
      %v7264 = vpop.f32.mrb[0].mxu0
      %v7265 = vadd.f32 0.0, %v7264
      %v7266 = vpop.f32.mrb[0].mxu0
      %v7267 = vpop.f32.mrb[0].mxu0
      %v7268 = vadd.f32 0.0, %v7267
      %v7269 = vpop.f32.mrb[0].mxu0
      %7270 = vmatprep.mubr.bf16.mxu0 0
      %7271 = vmatmul.mubr.bf16.gmra.mrb[0].mxu0 %v7119
      %v7272 = vpop.f32.mrb[0].mxu0
      %v7273 = vadd.f32 0.0, %v7272
      %v7274 = vpop.f32.mrb[0].mxu0
      %v7275 = vpop.f32.mrb[0].mxu0
      %v7276 = vadd.f32 0.0, %v7275
      %v7277 = vpop.f32.mrb[0].mxu0
      %7278 = vmatprep.mubr.bf16.mxu0 0
      %7279 = vmatmul.mubr.bf16.gmra.mrb[0].mxu0 %v7121
      %v7280 = vpop.f32.mrb[0].mxu0
      %v7281 = vadd.f32 0.0, %v7280
      %v7282 = vpop.f32.mrb[0].mxu0
      %v7283 = vpop.f32.mrb[0].mxu0
      %v7284 = vadd.f32 0.0, %v7283
      %v7285 = vpop.f32.mrb[0].mxu0
      %7286 = vmatprep.mubr.bf16.mxu0 0
      %7287 = vmatmul.mubr.bf16.gmra.mrb[0].mxu0 %v7123
      %v7288 = vpop.f32.mrb[0].mxu0
      %v7289 = vadd.f32 0.0, %v7288
      %v7290 = vpop.f32.mrb[0].mxu0
      %v7291 = vpop.f32.mrb[0].mxu0
      %v7292 = vadd.f32 0.0, %v7291
      %v7293 = vpop.f32.mrb[0].mxu0
      %7294 = vmatprep.mubr.bf16.mxu0 0
      %7295 = vmatmul.mubr.bf16.gmra.mrb[0].mxu0 %v7125
      %v7296 = vpop.f32.mrb[0].mxu0
      %v7297 = vadd.f32 0.0, %v7296
      %v7298 = vpop.f32.mrb[0].mxu0
      %v7299 = vpop.f32.mrb[0].mxu0
      %v7300 = vadd.f32 0.0, %v7299
      %v7301 = vpop.f32.mrb[0].mxu0
      %7302 = vmatprep.mubr.bf16.mxu0 0
      %7303 = vmatmul.mubr.bf16.gmra.mrb[0].mxu0 %v7127
      %v7304 = vpop.f32.mrb[0].mxu0
      %v7305 = vadd.f32 0.0, %v7304
      %v7306 = vpop.f32.mrb[0].mxu0
      %v7307 = vpop.f32.mrb[0].mxu0
      %v7308 = vadd.f32 0.0, %v7307
      %v7309 = vpop.f32.mrb[0].mxu0
      %7310 = vmatprep.mubr.bf16.mxu0 0
      %7311 = vmatmul.mubr.bf16.gmra.mrb[0].mxu0 %v7129
      %v7312 = vpop.f32.mrb[0].mxu0
      %v7313 = vadd.f32 0.0, %v7312
      %v7314 = vpop.f32.mrb[0].mxu0
      %v7315 = vpop.f32.mrb[0].mxu0
      %v7316 = vadd.f32 0.0, %v7315
      %v7317 = vpop.f32.mrb[0].mxu0
      %7318 = vmatprep.mubr.bf16.mxu0 0
      %7319 = vmatmul.mubr.bf16.gmra.mrb[0].mxu0 %v7131
      %v7320 = vpop.f32.mrb[0].mxu0
      %v7321 = vadd.f32 0.0, %v7320
      %v7322 = vpop.f32.mrb[0].mxu0
      %v7323 = vpop.f32.mrb[0].mxu0
      %v7324 = vadd.f32 0.0, %v7323
      %v7325 = vpop.f32.mrb[0].mxu0
      %7326 = vmatprep.mubr.bf16.mxu0 0
      %7327 = vmatmul.mubr.bf16.gmra.mrb[0].mxu0 %v7133
      %v7328 = vpop.f32.mrb[0].mxu0
      %v7329 = vadd.f32 0.0, %v7328
      %v7330 = vpop.f32.mrb[0].mxu0
      %v7331 = vpop.f32.mrb[0].mxu0
      %v7332 = vadd.f32 0.0, %v7331
      %v7333 = vpop.f32.mrb[0].mxu0
      %7334 = vmatprep.mubr.bf16.mxu0 0
      %7335 = vmatmul.mubr.bf16.gmra.mrb[0].mxu0 %v7135
      %v7336 = vpop.f32.mrb[0].mxu0
      %v7337 = vadd.f32 0.0, %v7336
      %v7338 = vpop.f32.mrb[0].mxu0
      %v7339 = vpop.f32.mrb[0].mxu0
      %v7340 = vadd.f32 0.0, %v7339
      %v7341 = vpop.f32.mrb[0].mxu0
      %7342 = vmatprep.mubr.bf16.mxu0 0
      %7343 = vmatmul.mubr.bf16.gmra.mrb[0].mxu0 %v7137
      %v7344 = vpop.f32.mrb[0].mxu0
      %v7345 = vadd.f32 0.0, %v7344
      %v7346 = vpop.f32.mrb[0].mxu0
      %v7347 = vpop.f32.mrb[0].mxu0
      %v7348 = vadd.f32 0.0, %v7347
      %v7349 = vpop.f32.mrb[0].mxu0
      %7350 = vmatprep.mubr.bf16.mxu0 0
      %7351 = vmatmul.mubr.bf16.gmra.mrb[0].mxu0 %v7139
      %v7352 = vpop.f32.mrb[0].mxu0
      %v7353 = vadd.f32 0.0, %v7352
      %v7354 = vpop.f32.mrb[0].mxu0
      %v7355 = vpop.f32.mrb[0].mxu0
      %v7356 = vadd.f32 0.0, %v7355
      %v7357 = vpop.f32.mrb[0].mxu0
      %7358 = vmatprep.mubr.bf16.mxu0 0
      %7359 = vmatmul.mubr.bf16.gmra.mrb[0].mxu0 %v7141
      %v7360 = vpop.f32.mrb[0].mxu0
      %v7361 = vadd.f32 0.0, %v7360
      %v7362 = vpop.f32.mrb[0].mxu0
      %v7363 = vpop.f32.mrb[0].mxu0
      %v7364 = vadd.f32 0.0, %v7363
      %v7365 = vpop.f32.mrb[0].mxu0
      %7366 = vmatprep.mubr.bf16.mxu0 0
      %7367 = vmatmul.mubr.bf16.gmra.mrb[0].mxu0 %v7143
      %v7368 = vpop.f32.mrb[0].mxu0
      %v7369 = vadd.f32 0.0, %v7368
      %v7370 = vpop.f32.mrb[0].mxu0
      %v7371 = vpop.f32.mrb[0].mxu0
      %v7372 = vadd.f32 0.0, %v7371
      %v7373 = vpop.f32.mrb[0].mxu0
      %7374 = vmatprep.mubr.bf16.mxu0 0
      %7375 = vmatmul.mubr.bf16.gmra.mrb[0].mxu0 %v7145
      %v7376 = vpop.f32.mrb[0].mxu0
      %v7377 = vadd.f32 0.0, %v7376
      %v7378 = vpop.f32.mrb[0].mxu0
      %v7379 = vpop.f32.mrb[0].mxu0
      %v7380 = vadd.f32 0.0, %v7379
      %v7381 = vpop.f32.mrb[0].mxu0
      %7382 = vmatprep.mubr.bf16.mxu0 0
      %7383 = vmatmul.mubr.bf16.gmra.mrb[0].mxu0 %v7147
      %v7384 = vpop.f32.mrb[0].mxu0
      %v7385 = vadd.f32 0.0, %v7384
      %v7386 = vpop.f32.mrb[0].mxu0
      %v7387 = vpop.f32.mrb[0].mxu0
      %v7388 = vadd.f32 0.0, %v7387
      %v7389 = vpop.f32.mrb[0].mxu0
      %7390 = vmatprep.mubr.bf16.mxu0 0
      %7391 = vmatmul.mubr.bf16.gmra.mrb[0].mxu0 %v7149
      %v7392 = vpop.f32.mrb[0].mxu0
      %v7393 = vadd.f32 0.0, %v7392
      %v7394 = vpop.f32.mrb[0].mxu0
      %v7395 = vpop.f32.mrb[0].mxu0
      %v7396 = vadd.f32 0.0, %v7395
      %v7397 = vpop.f32.mrb[0].mxu0
      %7398 = vmatprep.mubr.bf16.mxu0 0
      %7399 = vmatmul.mubr.bf16.gmra.mrb[0].mxu0 %v7151
      %v7400 = vpop.f32.mrb[0].mxu0
      %v7401 = vadd.f32 0.0, %v7400
      %v7402 = vpop.f32.mrb[0].mxu0
      %v7403 = vpop.f32.mrb[0].mxu0
      %v7404 = vadd.f32 0.0, %v7403
      %v7405 = vpop.f32.mrb[0].mxu0
      %7406 = vmatprep.mubr.bf16.mxu0 0
      %7407 = vmatmul.mubr.bf16.gmra.mrb[0].mxu0 %v7153
      %v7408 = vpop.f32.mrb[0].mxu0
      %v7409 = vadd.f32 0.0, %v7408
      %v7410 = vpop.f32.mrb[0].mxu0
      %v7411 = vpop.f32.mrb[0].mxu0
      %v7412 = vadd.f32 0.0, %v7411
      %v7413 = vpop.f32.mrb[0].mxu0
      %7414 = vdwg.mxu0
      %v7415 = vadd.f32 %v7054, %v7257
      %v7416 = vadd.f32 %v7055, %v7260
      %v7417 = vadd.f32 %v7056, %v7265
      %v7418 = vadd.f32 %v7057, %v7268
      %v7419 = vadd.f32 %v7058, %v7273
      %v7420 = vadd.f32 %v7059, %v7276
      %v7421 = vadd.f32 %v7060, %v7281
      %v7422 = vadd.f32 %v7061, %v7284
      %v7423 = vadd.f32 %v7062, %v7289
      %v7424 = vadd.f32 %v7063, %v7292
      %v7425 = vadd.f32 %v7064, %v7297
      %v7426 = vadd.f32 %v7065, %v7300
      %v7427 = vadd.f32 %v7066, %v7305
      %v7428 = vadd.f32 %v7067, %v7308
      %v7429 = vadd.f32 %v7068, %v7313
      %v7430 = vadd.f32 %v7069, %v7316
      %v7431 = vadd.f32 %v7070, %v7321
      %v7432 = vadd.f32 %v7071, %v7324
      %v7433 = vadd.f32 %v7072, %v7329
      %v7434 = vadd.f32 %v7073, %v7332
      %v7435 = vadd.f32 %v7074, %v7337
      %v7436 = vadd.f32 %v7075, %v7340
      %v7437 = vadd.f32 %v7076, %v7345
      %v7438 = vadd.f32 %v7077, %v7348
      %v7439 = vadd.f32 %v7078, %v7353
      %v7440 = vadd.f32 %v7079, %v7356
      %v7441 = vadd.f32 %v7080, %v7361
      %v7442 = vadd.f32 %v7081, %v7364
      %v7443 = vadd.f32 %v7082, %v7369
      %v7444 = vadd.f32 %v7083, %v7372
      %v7445 = vadd.f32 %v7084, %v7377
      %v7446 = vadd.f32 %v7085, %v7380
      %v7447 = vadd.f32 %v7086, %v7385
      %v7448 = vadd.f32 %v7087, %v7388
      %v7449 = vadd.f32 %v7088, %v7393
      %v7450 = vadd.f32 %v7089, %v7396
      %v7451 = vadd.f32 %v7090, %v7401
      %v7452 = vadd.f32 %v7091, %v7404
      %v7453 = vadd.f32 %v7092, %v7409
      %v7454 = vadd.f32 %v7093, %v7412
      %v7455 = vld [vmem:[#allocation3 + $0x10] sm:$0xf0]
      %v7456 = vld [vmem:[#allocation3 + $0x18] sm:$0xff]
      %v7457 = vld [vmem:[#allocation3 + $0x20] sm:$0xff]
      %v7458 = vld [vmem:[#allocation3 + $0x28] sm:$0xff]
      %v7459 = vld [vmem:[#allocation3 + $0x30] sm:$0xff]
      %v7460 = vld [vmem:[#allocation3 + $0x38] sm:$0xff]
      %v7461 = vld [vmem:[#allocation3 + $0x40] sm:$0xff]
      %v7462 = vld [vmem:[#allocation3 + $0x48] sm:$0xff]
      %v7463 = vld [vmem:[#allocation3 + $0x50] sm:$0xff]
      %v7464 = vld [vmem:[#allocation3 + $0x58] sm:$0xff]
      %v7465 = vld [vmem:[#allocation3 + $0x60] sm:$0xff]
      %v7466 = vld [vmem:[#allocation3 + $0x68] sm:$0xff]
      %v7467 = vld [vmem:[#allocation3 + $0x70] sm:$0xff]
      %v7468 = vld [vmem:[#allocation3 + $0x78] sm:$0xff]
      %v7469 = vld [vmem:[#allocation3 + $0x80] sm:$0xff]
      %v7470 = vld [vmem:[#allocation3 + $0x88] sm:$0xff]
      %v7471 = vld [vmem:[#allocation3 + $0x90] sm:$0xff]
      %v7472 = vld [vmem:[#allocation3 + $0x98] sm:$0xff]
      %v7473 = vld [vmem:[#allocation3 + $0xa0] sm:$0xff]
      %v7474 = vld [vmem:[#allocation3 + $0xa8] sm:$0xff]
      %v7475 = vld [vmem:[#allocation3 + $0xb0] sm:$0xf]
      %v7476 = vld [vmem:[%s4 + $0x180] sm:$0xf]
      %v7477 = vld [vmem:[%s4 + $0x184] sm:$0xf]
      %v7478 = vld [vmem:[%s4 + $0x188] sm:$0xf]
      %v7479 = vld [vmem:[%s4 + $0x18c] sm:$0xf]
      %v7480 = vld [vmem:[%s4 + $0x190] sm:$0xf]
      %v7481 = vld [vmem:[%s4 + $0x194] sm:$0xf]
      %v7482 = vld [vmem:[%s4 + $0x198] sm:$0xf]
      %v7483 = vld [vmem:[%s4 + $0x19c] sm:$0xf]
      %v7484 = vld [vmem:[%s4 + $0x1a0] sm:$0xf]
      %v7485 = vld [vmem:[%s4 + $0x1a4] sm:$0xf]
      %v7486 = vld [vmem:[%s4 + $0x1a8] sm:$0xf]
      %v7487 = vld [vmem:[%s4 + $0x1ac] sm:$0xf]
      %v7488 = vld [vmem:[%s4 + $0x1b0] sm:$0xf]
      %v7489 = vld [vmem:[%s4 + $0x1b4] sm:$0xf]
      %v7490 = vld [vmem:[%s4 + $0x1b8] sm:$0xf]
      %v7491 = vld [vmem:[%s4 + $0x1bc] sm:$0xf]
      %v7513 = vrot.slane %v7455, 4
      %v7514 = vrot.slane %v7456, 4
      %v7515 = vsel %vm3039, %v7513, %v7514
      %v7516 = vrot.slane %v7457, 4
      %v7517 = vsel %vm3039, %v7514, %v7516
      %v7518 = vrot.slane %v7458, 4
      %v7519 = vsel %vm3039, %v7516, %v7518
      %v7520 = vrot.slane %v7459, 4
      %v7521 = vsel %vm3039, %v7518, %v7520
      %v7522 = vrot.slane %v7460, 4
      %v7523 = vsel %vm3039, %v7520, %v7522
      %v7524 = vrot.slane %v7461, 4
      %v7525 = vsel %vm3039, %v7522, %v7524
      %v7526 = vrot.slane %v7462, 4
      %v7527 = vsel %vm3039, %v7524, %v7526
      %v7528 = vrot.slane %v7463, 4
      %v7529 = vsel %vm3039, %v7526, %v7528
      %v7530 = vrot.slane %v7464, 4
      %v7531 = vsel %vm3039, %v7528, %v7530
      %v7532 = vrot.slane %v7465, 4
      %v7533 = vsel %vm3039, %v7530, %v7532
      %v7534 = vrot.slane %v7466, 4
      %v7535 = vsel %vm3039, %v7532, %v7534
      %v7536 = vrot.slane %v7467, 4
      %v7537 = vsel %vm3039, %v7534, %v7536
      %v7538 = vrot.slane %v7468, 4
      %v7539 = vsel %vm3039, %v7536, %v7538
      %v7540 = vrot.slane %v7469, 4
      %v7541 = vsel %vm3039, %v7538, %v7540
      %v7542 = vrot.slane %v7470, 4
      %v7543 = vsel %vm3039, %v7540, %v7542
      %v7544 = vrot.slane %v7471, 4
      %v7545 = vsel %vm3039, %v7542, %v7544
      %v7546 = vrot.slane %v7472, 4
      %v7547 = vsel %vm3039, %v7544, %v7546
      %v7548 = vrot.slane %v7473, 4
      %v7549 = vsel %vm3039, %v7546, %v7548
      %v7550 = vrot.slane %v7474, 4
      %v7551 = vsel %vm3039, %v7548, %v7550
      %v7552 = vrot.slane %v7475, 4
      %v7553 = vsel %vm3039, %v7550, %v7552
      %v7590 = vunpack.c.l.b16 %v7476
      %v7591 = vunpack.c.l.b16 %v7477
      %v7592 = vunpack.c.l.b16 %v7478
      %v7593 = vunpack.c.l.b16 %v7479
      %v7594 = vunpack.c.l.b16 %v7480
      %v7595 = vunpack.c.l.b16 %v7481
      %v7596 = vunpack.c.l.b16 %v7482
      %v7597 = vunpack.c.l.b16 %v7483
      %v7598 = vunpack.c.l.b16 %v7484
      %v7599 = vunpack.c.l.b16 %v7485
      %v7600 = vunpack.c.l.b16 %v7486
      %v7601 = vunpack.c.l.b16 %v7487
      %v7602 = vunpack.c.l.b16 %v7488
      %v7603 = vunpack.c.l.b16 %v7489
      %v7604 = vunpack.c.l.b16 %v7490
      %v7605 = vunpack.c.l.b16 %v7491
      %v7606 = vpack.c.b16 %v7591, %v7590
      %v7607 = vpack.c.b16 %v7593, %v7592
      %v7608 = vpack.c.b16 %v7595, %v7594
      %v7609 = vpack.c.b16 %v7597, %v7596
      %v7610 = vpack.c.b16 %v7599, %v7598
      %v7611 = vpack.c.b16 %v7601, %v7600
      %v7612 = vpack.c.b16 %v7603, %v7602
      %v7613 = vpack.c.b16 %v7605, %v7604
      %7622 = vmatprep.subr.bf16.mxu0 0
      %7623 = vmatpush1.bf16.msra.mxu0 %v7606
      %7624 = vmatprep.subr.bf16.mxu0 0
      %7625 = vmatpush1.bf16.msra.mxu0 %v7607
      %7626 = vmatprep.subr.bf16.mxu0 0
      %7627 = vmatpush1.bf16.msra.mxu0 %v7608
      %7628 = vmatprep.subr.bf16.mxu0 0
      %7629 = vmatpush1.bf16.msra.mxu0 %v7609
      %7630 = vmatprep.subr.bf16.mxu0 0
      %7631 = vmatpush1.bf16.msra.mxu0 %v7610
      %7632 = vmatprep.subr.bf16.mxu0 0
      %7633 = vmatpush1.bf16.msra.mxu0 %v7611
      %7634 = vmatprep.subr.bf16.mxu0 0
      %7635 = vmatpush1.bf16.msra.mxu0 %v7612
      %7636 = vmatprep.subr.bf16.mxu0 0
      %7637 = vmatpush1.bf16.msra.mxu0 %v7613
      %7638 = vmatprep.subr.bf16.mxu0 0
      %7639 = vmatpush1.bf16.msra.mxu0 0
      %7640 = vmatprep.subr.bf16.mxu0 0
      %7641 = vmatpush1.bf16.msra.mxu0 0
      %7642 = vmatprep.subr.bf16.mxu0 0
      %7643 = vmatpush1.bf16.msra.mxu0 0
      %7644 = vmatprep.subr.bf16.mxu0 0
      %7645 = vmatpush1.bf16.msra.mxu0 0
      %7646 = vmatprep.subr.bf16.mxu0 0
      %7647 = vmatpush1.bf16.msra.mxu0 0
      %7648 = vmatprep.subr.bf16.mxu0 0
      %7649 = vmatpush1.bf16.msra.mxu0 0
      %7650 = vmatprep.subr.bf16.mxu0 0
      %7651 = vmatpush1.bf16.msra.mxu0 0
      %7652 = vmatprep.subr.bf16.mxu0 0
      %7653 = vmatpush1.bf16.msra.mxu0 0
      %7654 = vmatprep.mubr.bf16.mxu0 0
      %7655 = vmatmul.mubr.bf16.gmra.mrb[0].mxu0 %v7515
      %v7656 = vpop.f32.mrb[0].mxu0
      %v7657 = vadd.f32 0.0, %v7656
      %v7658 = vpop.f32.mrb[0].mxu0
      %v7659 = vpop.f32.mrb[0].mxu0
      %v7660 = vadd.f32 0.0, %v7659
      %v7661 = vpop.f32.mrb[0].mxu0
      %7662 = vmatprep.mubr.bf16.mxu0 0
      %7663 = vmatmul.mubr.bf16.gmra.mrb[0].mxu0 %v7517
      %v7664 = vpop.f32.mrb[0].mxu0
      %v7665 = vadd.f32 0.0, %v7664
      %v7666 = vpop.f32.mrb[0].mxu0
      %v7667 = vpop.f32.mrb[0].mxu0
      %v7668 = vadd.f32 0.0, %v7667
      %v7669 = vpop.f32.mrb[0].mxu0
      %7670 = vmatprep.mubr.bf16.mxu0 0
      %7671 = vmatmul.mubr.bf16.gmra.mrb[0].mxu0 %v7519
      %v7672 = vpop.f32.mrb[0].mxu0
      %v7673 = vadd.f32 0.0, %v7672
      %v7674 = vpop.f32.mrb[0].mxu0
      %v7675 = vpop.f32.mrb[0].mxu0
      %v7676 = vadd.f32 0.0, %v7675
      %v7677 = vpop.f32.mrb[0].mxu0
      %7678 = vmatprep.mubr.bf16.mxu0 0
      %7679 = vmatmul.mubr.bf16.gmra.mrb[0].mxu0 %v7521
      %v7680 = vpop.f32.mrb[0].mxu0
      %v7681 = vadd.f32 0.0, %v7680
      %v7682 = vpop.f32.mrb[0].mxu0
      %v7683 = vpop.f32.mrb[0].mxu0
      %v7684 = vadd.f32 0.0, %v7683
      %v7685 = vpop.f32.mrb[0].mxu0
      %7686 = vmatprep.mubr.bf16.mxu0 0
      %7687 = vmatmul.mubr.bf16.gmra.mrb[0].mxu0 %v7523
      %v7688 = vpop.f32.mrb[0].mxu0
      %v7689 = vadd.f32 0.0, %v7688
      %v7690 = vpop.f32.mrb[0].mxu0
      %v7691 = vpop.f32.mrb[0].mxu0
      %v7692 = vadd.f32 0.0, %v7691
      %v7693 = vpop.f32.mrb[0].mxu0
      %7694 = vmatprep.mubr.bf16.mxu0 0
      %7695 = vmatmul.mubr.bf16.gmra.mrb[0].mxu0 %v7525
      %v7696 = vpop.f32.mrb[0].mxu0
      %v7697 = vadd.f32 0.0, %v7696
      %v7698 = vpop.f32.mrb[0].mxu0
      %v7699 = vpop.f32.mrb[0].mxu0
      %v7700 = vadd.f32 0.0, %v7699
      %v7701 = vpop.f32.mrb[0].mxu0
      %7702 = vmatprep.mubr.bf16.mxu0 0
      %7703 = vmatmul.mubr.bf16.gmra.mrb[0].mxu0 %v7527
      %v7704 = vpop.f32.mrb[0].mxu0
      %v7705 = vadd.f32 0.0, %v7704
      %v7706 = vpop.f32.mrb[0].mxu0
      %v7707 = vpop.f32.mrb[0].mxu0
      %v7708 = vadd.f32 0.0, %v7707
      %v7709 = vpop.f32.mrb[0].mxu0
      %7710 = vmatprep.mubr.bf16.mxu0 0
      %7711 = vmatmul.mubr.bf16.gmra.mrb[0].mxu0 %v7529
      %v7712 = vpop.f32.mrb[0].mxu0
      %v7713 = vadd.f32 0.0, %v7712
      %v7714 = vpop.f32.mrb[0].mxu0
      %v7715 = vpop.f32.mrb[0].mxu0
      %v7716 = vadd.f32 0.0, %v7715
      %v7717 = vpop.f32.mrb[0].mxu0
      %7718 = vmatprep.mubr.bf16.mxu0 0
      %7719 = vmatmul.mubr.bf16.gmra.mrb[0].mxu0 %v7531
      %v7720 = vpop.f32.mrb[0].mxu0
      %v7721 = vadd.f32 0.0, %v7720
      %v7722 = vpop.f32.mrb[0].mxu0
      %v7723 = vpop.f32.mrb[0].mxu0
      %v7724 = vadd.f32 0.0, %v7723
      %v7725 = vpop.f32.mrb[0].mxu0
      %7726 = vmatprep.mubr.bf16.mxu0 0
      %7727 = vmatmul.mubr.bf16.gmra.mrb[0].mxu0 %v7533
      %v7728 = vpop.f32.mrb[0].mxu0
      %v7729 = vadd.f32 0.0, %v7728
      %v7730 = vpop.f32.mrb[0].mxu0
      %v7731 = vpop.f32.mrb[0].mxu0
      %v7732 = vadd.f32 0.0, %v7731
      %v7733 = vpop.f32.mrb[0].mxu0
      %7734 = vmatprep.mubr.bf16.mxu0 0
      %7735 = vmatmul.mubr.bf16.gmra.mrb[0].mxu0 %v7535
      %v7736 = vpop.f32.mrb[0].mxu0
      %v7737 = vadd.f32 0.0, %v7736
      %v7738 = vpop.f32.mrb[0].mxu0
      %v7739 = vpop.f32.mrb[0].mxu0
      %v7740 = vadd.f32 0.0, %v7739
      %v7741 = vpop.f32.mrb[0].mxu0
      %7742 = vmatprep.mubr.bf16.mxu0 0
      %7743 = vmatmul.mubr.bf16.gmra.mrb[0].mxu0 %v7537
      %v7744 = vpop.f32.mrb[0].mxu0
      %v7745 = vadd.f32 0.0, %v7744
      %v7746 = vpop.f32.mrb[0].mxu0
      %v7747 = vpop.f32.mrb[0].mxu0
      %v7748 = vadd.f32 0.0, %v7747
      %v7749 = vpop.f32.mrb[0].mxu0
      %7750 = vmatprep.mubr.bf16.mxu0 0
      %7751 = vmatmul.mubr.bf16.gmra.mrb[0].mxu0 %v7539
      %v7752 = vpop.f32.mrb[0].mxu0
      %v7753 = vadd.f32 0.0, %v7752
      %v7754 = vpop.f32.mrb[0].mxu0
      %v7755 = vpop.f32.mrb[0].mxu0
      %v7756 = vadd.f32 0.0, %v7755
      %v7757 = vpop.f32.mrb[0].mxu0
      %7758 = vmatprep.mubr.bf16.mxu0 0
      %7759 = vmatmul.mubr.bf16.gmra.mrb[0].mxu0 %v7541
      %v7760 = vpop.f32.mrb[0].mxu0
      %v7761 = vadd.f32 0.0, %v7760
      %v7762 = vpop.f32.mrb[0].mxu0
      %v7763 = vpop.f32.mrb[0].mxu0
      %v7764 = vadd.f32 0.0, %v7763
      %v7765 = vpop.f32.mrb[0].mxu0
      %7766 = vmatprep.mubr.bf16.mxu0 0
      %7767 = vmatmul.mubr.bf16.gmra.mrb[0].mxu0 %v7543
      %v7768 = vpop.f32.mrb[0].mxu0
      %v7769 = vadd.f32 0.0, %v7768
      %v7770 = vpop.f32.mrb[0].mxu0
      %v7771 = vpop.f32.mrb[0].mxu0
      %v7772 = vadd.f32 0.0, %v7771
      %v7773 = vpop.f32.mrb[0].mxu0
      %7774 = vmatprep.mubr.bf16.mxu0 0
      %7775 = vmatmul.mubr.bf16.gmra.mrb[0].mxu0 %v7545
      %v7776 = vpop.f32.mrb[0].mxu0
      %v7777 = vadd.f32 0.0, %v7776
      %v7778 = vpop.f32.mrb[0].mxu0
      %v7779 = vpop.f32.mrb[0].mxu0
      %v7780 = vadd.f32 0.0, %v7779
      %v7781 = vpop.f32.mrb[0].mxu0
      %7782 = vmatprep.mubr.bf16.mxu0 0
      %7783 = vmatmul.mubr.bf16.gmra.mrb[0].mxu0 %v7547
      %v7784 = vpop.f32.mrb[0].mxu0
      %v7785 = vadd.f32 0.0, %v7784
      %v7786 = vpop.f32.mrb[0].mxu0
      %v7787 = vpop.f32.mrb[0].mxu0
      %v7788 = vadd.f32 0.0, %v7787
      %v7789 = vpop.f32.mrb[0].mxu0
      %7790 = vmatprep.mubr.bf16.mxu0 0
      %7791 = vmatmul.mubr.bf16.gmra.mrb[0].mxu0 %v7549
      %v7792 = vpop.f32.mrb[0].mxu0
      %v7793 = vadd.f32 0.0, %v7792
      %v7794 = vpop.f32.mrb[0].mxu0
      %v7795 = vpop.f32.mrb[0].mxu0
      %v7796 = vadd.f32 0.0, %v7795
      %v7797 = vpop.f32.mrb[0].mxu0
      %7798 = vmatprep.mubr.bf16.mxu0 0
      %7799 = vmatmul.mubr.bf16.gmra.mrb[0].mxu0 %v7551
      %v7800 = vpop.f32.mrb[0].mxu0
      %v7801 = vadd.f32 0.0, %v7800
      %v7802 = vpop.f32.mrb[0].mxu0
      %v7803 = vpop.f32.mrb[0].mxu0
      %v7804 = vadd.f32 0.0, %v7803
      %v7805 = vpop.f32.mrb[0].mxu0
      %7806 = vmatprep.mubr.bf16.mxu0 0
      %7807 = vmatmul.mubr.bf16.gmra.mrb[0].mxu0 %v7553
      %v7808 = vpop.f32.mrb[0].mxu0
      %v7809 = vadd.f32 0.0, %v7808
      %v7810 = vpop.f32.mrb[0].mxu0
      %v7811 = vpop.f32.mrb[0].mxu0
      %v7812 = vadd.f32 0.0, %v7811
      %v7813 = vpop.f32.mrb[0].mxu0
      %7814 = vdwg.mxu0
      %v7815 = vadd.f32 %v7415, %v7657
      %v7816 = vadd.f32 %v7416, %v7660
      %v7817 = vadd.f32 %v7417, %v7665
      %v7818 = vadd.f32 %v7418, %v7668
      %v7819 = vadd.f32 %v7419, %v7673
      %v7820 = vadd.f32 %v7420, %v7676
      %v7821 = vadd.f32 %v7421, %v7681
      %v7822 = vadd.f32 %v7422, %v7684
      %v7823 = vadd.f32 %v7423, %v7689
      %v7824 = vadd.f32 %v7424, %v7692
      %v7825 = vadd.f32 %v7425, %v7697
      %v7826 = vadd.f32 %v7426, %v7700
      %v7827 = vadd.f32 %v7427, %v7705
      %v7828 = vadd.f32 %v7428, %v7708
      %v7829 = vadd.f32 %v7429, %v7713
      %v7830 = vadd.f32 %v7430, %v7716
      %v7831 = vadd.f32 %v7431, %v7721
      %v7832 = vadd.f32 %v7432, %v7724
      %v7833 = vadd.f32 %v7433, %v7729
      %v7834 = vadd.f32 %v7434, %v7732
      %v7835 = vadd.f32 %v7435, %v7737
      %v7836 = vadd.f32 %v7436, %v7740
      %v7837 = vadd.f32 %v7437, %v7745
      %v7838 = vadd.f32 %v7438, %v7748
      %v7839 = vadd.f32 %v7439, %v7753
      %v7840 = vadd.f32 %v7440, %v7756
      %v7841 = vadd.f32 %v7441, %v7761
      %v7842 = vadd.f32 %v7442, %v7764
      %v7843 = vadd.f32 %v7443, %v7769
      %v7844 = vadd.f32 %v7444, %v7772
      %v7845 = vadd.f32 %v7445, %v7777
      %v7846 = vadd.f32 %v7446, %v7780
      %v7847 = vadd.f32 %v7447, %v7785
      %v7848 = vadd.f32 %v7448, %v7788
      %v7849 = vadd.f32 %v7449, %v7793
      %v7850 = vadd.f32 %v7450, %v7796
      %v7851 = vadd.f32 %v7451, %v7801
      %v7852 = vadd.f32 %v7452, %v7804
      %v7853 = vadd.f32 %v7453, %v7809
      %v7854 = vadd.f32 %v7454, %v7812
      %v7855 = vld [vmem:[#allocation3 + $0xb0] sm:$0x1f]
      %v7856 = vld [vmem:[%s4 + $0x1c0] sm:$0xf]
      %v7857 = vld [vmem:[%s4 + $0x1c4] sm:$0xf]
      %v7858 = vld [vmem:[%s4 + $0x1c8] sm:$0xf]
      %v7859 = vld [vmem:[%s4 + $0x1cc] sm:$0xf]
      %v7860 = vld [vmem:[%s4 + $0x1d0] sm:$0xf]
      %v7861 = vld [vmem:[%s4 + $0x1d4] sm:$0xf]
      %v7862 = vld [vmem:[%s4 + $0x1d8] sm:$0xf]
      %v7863 = vld [vmem:[%s4 + $0x1dc] sm:$0xf]
      %v7864 = vld [vmem:[%s4 + $0x1e0] sm:$0xf]
      %v7865 = vld [vmem:[%s4 + $0x1e4] sm:$0xf]
      %v7866 = vld [vmem:[%s4 + $0x1e8] sm:$0xf]
      %v7867 = vld [vmem:[%s4 + $0x1ec] sm:$0xf]
      %v7868 = vld [vmem:[%s4 + $0x1f0] sm:$0xf]
      %v7869 = vld [vmem:[%s4 + $0x1f4] sm:$0xf]
      %v7870 = vld [vmem:[%s4 + $0x1f8] sm:$0xf]
      %v7871 = vld [vmem:[%s4 + $0x1fc] sm:$0xf]
      %v7873 = vshrl.u32 %v7455, 16
      %v7875 = vrot.slane %v7873, 4
      %v7876 = vshll.u32 %v7455, 16
      %v7878 = vrot.slane %v7876, 5
      %v7879 = vor.u32 %v7875, %v7878
      %v7881 = vshrl.u32 %v7456, 16
      %v7883 = vrot.slane %v7881, 4
      %v7884 = vshll.u32 %v7456, 16
      %v7886 = vrot.slane %v7884, 5
      %v7887 = vor.u32 %v7883, %v7886
      %v7888 = vsel %vm3438, %v7879, %v7887
      %v7890 = vshrl.u32 %v7457, 16
      %v7892 = vrot.slane %v7890, 4
      %v7893 = vshll.u32 %v7457, 16
      %v7895 = vrot.slane %v7893, 5
      %v7896 = vor.u32 %v7892, %v7895
      %v7897 = vsel %vm3438, %v7887, %v7896
      %v7899 = vshrl.u32 %v7458, 16
      %v7901 = vrot.slane %v7899, 4
      %v7902 = vshll.u32 %v7458, 16
      %v7904 = vrot.slane %v7902, 5
      %v7905 = vor.u32 %v7901, %v7904
      %v7906 = vsel %vm3438, %v7896, %v7905
      %v7908 = vshrl.u32 %v7459, 16
      %v7910 = vrot.slane %v7908, 4
      %v7911 = vshll.u32 %v7459, 16
      %v7913 = vrot.slane %v7911, 5
      %v7914 = vor.u32 %v7910, %v7913
      %v7915 = vsel %vm3438, %v7905, %v7914
      %v7917 = vshrl.u32 %v7460, 16
      %v7919 = vrot.slane %v7917, 4
      %v7920 = vshll.u32 %v7460, 16
      %v7922 = vrot.slane %v7920, 5
      %v7923 = vor.u32 %v7919, %v7922
      %v7924 = vsel %vm3438, %v7914, %v7923
      %v7926 = vshrl.u32 %v7461, 16
      %v7928 = vrot.slane %v7926, 4
      %v7929 = vshll.u32 %v7461, 16
      %v7931 = vrot.slane %v7929, 5
      %v7932 = vor.u32 %v7928, %v7931
      %v7933 = vsel %vm3438, %v7923, %v7932
      %v7935 = vshrl.u32 %v7462, 16
      %v7937 = vrot.slane %v7935, 4
      %v7938 = vshll.u32 %v7462, 16
      %v7940 = vrot.slane %v7938, 5
      %v7941 = vor.u32 %v7937, %v7940
      %v7942 = vsel %vm3438, %v7932, %v7941
      %v7944 = vshrl.u32 %v7463, 16
      %v7946 = vrot.slane %v7944, 4
      %v7947 = vshll.u32 %v7463, 16
      %v7949 = vrot.slane %v7947, 5
      %v7950 = vor.u32 %v7946, %v7949
      %v7951 = vsel %vm3438, %v7941, %v7950
      %v7953 = vshrl.u32 %v7464, 16
      %v7955 = vrot.slane %v7953, 4
      %v7956 = vshll.u32 %v7464, 16
      %v7958 = vrot.slane %v7956, 5
      %v7959 = vor.u32 %v7955, %v7958
      %v7960 = vsel %vm3438, %v7950, %v7959
      %v7962 = vshrl.u32 %v7465, 16
      %v7964 = vrot.slane %v7962, 4
      %v7965 = vshll.u32 %v7465, 16
      %v7967 = vrot.slane %v7965, 5
      %v7968 = vor.u32 %v7964, %v7967
      %v7969 = vsel %vm3438, %v7959, %v7968
      %v7971 = vshrl.u32 %v7466, 16
      %v7973 = vrot.slane %v7971, 4
      %v7974 = vshll.u32 %v7466, 16
      %v7976 = vrot.slane %v7974, 5
      %v7977 = vor.u32 %v7973, %v7976
      %v7978 = vsel %vm3438, %v7968, %v7977
      %v7980 = vshrl.u32 %v7467, 16
      %v7982 = vrot.slane %v7980, 4
      %v7983 = vshll.u32 %v7467, 16
      %v7985 = vrot.slane %v7983, 5
      %v7986 = vor.u32 %v7982, %v7985
      %v7987 = vsel %vm3438, %v7977, %v7986
      %v7989 = vshrl.u32 %v7468, 16
      %v7991 = vrot.slane %v7989, 4
      %v7992 = vshll.u32 %v7468, 16
      %v7994 = vrot.slane %v7992, 5
      %v7995 = vor.u32 %v7991, %v7994
      %v7996 = vsel %vm3438, %v7986, %v7995
      %v7998 = vshrl.u32 %v7469, 16
      %v8000 = vrot.slane %v7998, 4
      %v8001 = vshll.u32 %v7469, 16
      %v8003 = vrot.slane %v8001, 5
      %v8004 = vor.u32 %v8000, %v8003
      %v8005 = vsel %vm3438, %v7995, %v8004
      %v8007 = vshrl.u32 %v7470, 16
      %v8009 = vrot.slane %v8007, 4
      %v8010 = vshll.u32 %v7470, 16
      %v8012 = vrot.slane %v8010, 5
      %v8013 = vor.u32 %v8009, %v8012
      %v8014 = vsel %vm3438, %v8004, %v8013
      %v8016 = vshrl.u32 %v7471, 16
      %v8018 = vrot.slane %v8016, 4
      %v8019 = vshll.u32 %v7471, 16
      %v8021 = vrot.slane %v8019, 5
      %v8022 = vor.u32 %v8018, %v8021
      %v8023 = vsel %vm3438, %v8013, %v8022
      %v8025 = vshrl.u32 %v7472, 16
      %v8027 = vrot.slane %v8025, 4
      %v8028 = vshll.u32 %v7472, 16
      %v8030 = vrot.slane %v8028, 5
      %v8031 = vor.u32 %v8027, %v8030
      %v8032 = vsel %vm3438, %v8022, %v8031
      %v8034 = vshrl.u32 %v7473, 16
      %v8036 = vrot.slane %v8034, 4
      %v8037 = vshll.u32 %v7473, 16
      %v8039 = vrot.slane %v8037, 5
      %v8040 = vor.u32 %v8036, %v8039
      %v8041 = vsel %vm3438, %v8031, %v8040
      %v8043 = vshrl.u32 %v7474, 16
      %v8045 = vrot.slane %v8043, 4
      %v8046 = vshll.u32 %v7474, 16
      %v8048 = vrot.slane %v8046, 5
      %v8049 = vor.u32 %v8045, %v8048
      %v8050 = vsel %vm3438, %v8040, %v8049
      %v8052 = vshrl.u32 %v7855, 16
      %v8054 = vrot.slane %v8052, 4
      %v8055 = vshll.u32 %v7855, 16
      %v8057 = vrot.slane %v8055, 5
      %v8058 = vor.u32 %v8054, %v8057
      %v8059 = vsel %vm3438, %v8049, %v8058
      %v8096 = vunpack.c.l.b16 %v7856
      %v8097 = vunpack.c.l.b16 %v7857
      %v8098 = vunpack.c.l.b16 %v7858
      %v8099 = vunpack.c.l.b16 %v7859
      %v8100 = vunpack.c.l.b16 %v7860
      %v8101 = vunpack.c.l.b16 %v7861
      %v8102 = vunpack.c.l.b16 %v7862
      %v8103 = vunpack.c.l.b16 %v7863
      %v8104 = vunpack.c.l.b16 %v7864
      %v8105 = vunpack.c.l.b16 %v7865
      %v8106 = vunpack.c.l.b16 %v7866
      %v8107 = vunpack.c.l.b16 %v7867
      %v8108 = vunpack.c.l.b16 %v7868
      %v8109 = vunpack.c.l.b16 %v7869
      %v8110 = vunpack.c.l.b16 %v7870
      %v8111 = vunpack.c.l.b16 %v7871
      %v8112 = vpack.c.b16 %v8097, %v8096
      %v8113 = vpack.c.b16 %v8099, %v8098
      %v8114 = vpack.c.b16 %v8101, %v8100
      %v8115 = vpack.c.b16 %v8103, %v8102
      %v8116 = vpack.c.b16 %v8105, %v8104
      %v8117 = vpack.c.b16 %v8107, %v8106
      %v8118 = vpack.c.b16 %v8109, %v8108
      %v8119 = vpack.c.b16 %v8111, %v8110
      %8128 = vmatprep.subr.bf16.mxu0 0
      %8129 = vmatpush1.bf16.msra.mxu0 %v8112
      %8130 = vmatprep.subr.bf16.mxu0 0
      %8131 = vmatpush1.bf16.msra.mxu0 %v8113
      %8132 = vmatprep.subr.bf16.mxu0 0
      %8133 = vmatpush1.bf16.msra.mxu0 %v8114
      %8134 = vmatprep.subr.bf16.mxu0 0
      %8135 = vmatpush1.bf16.msra.mxu0 %v8115
      %8136 = vmatprep.subr.bf16.mxu0 0
      %8137 = vmatpush1.bf16.msra.mxu0 %v8116
      %8138 = vmatprep.subr.bf16.mxu0 0
      %8139 = vmatpush1.bf16.msra.mxu0 %v8117
      %8140 = vmatprep.subr.bf16.mxu0 0
      %8141 = vmatpush1.bf16.msra.mxu0 %v8118
      %8142 = vmatprep.subr.bf16.mxu0 0
      %8143 = vmatpush1.bf16.msra.mxu0 %v8119
      %8144 = vmatprep.subr.bf16.mxu0 0
      %8145 = vmatpush1.bf16.msra.mxu0 0
      %8146 = vmatprep.subr.bf16.mxu0 0
      %8147 = vmatpush1.bf16.msra.mxu0 0
      %8148 = vmatprep.subr.bf16.mxu0 0
      %8149 = vmatpush1.bf16.msra.mxu0 0
      %8150 = vmatprep.subr.bf16.mxu0 0
      %8151 = vmatpush1.bf16.msra.mxu0 0
      %8152 = vmatprep.subr.bf16.mxu0 0
      %8153 = vmatpush1.bf16.msra.mxu0 0
      %8154 = vmatprep.subr.bf16.mxu0 0
      %8155 = vmatpush1.bf16.msra.mxu0 0
      %8156 = vmatprep.subr.bf16.mxu0 0
      %8157 = vmatpush1.bf16.msra.mxu0 0
      %8158 = vmatprep.subr.bf16.mxu0 0
      %8159 = vmatpush1.bf16.msra.mxu0 0
      %8160 = vmatprep.mubr.bf16.mxu0 0
      %8161 = vmatmul.mubr.bf16.gmra.mrb[0].mxu0 %v7888
      %v8162 = vpop.f32.mrb[0].mxu0
      %v8163 = vadd.f32 0.0, %v8162
      %v8164 = vpop.f32.mrb[0].mxu0
      %v8165 = vpop.f32.mrb[0].mxu0
      %v8166 = vadd.f32 0.0, %v8165
      %v8167 = vpop.f32.mrb[0].mxu0
      %8168 = vmatprep.mubr.bf16.mxu0 0
      %8169 = vmatmul.mubr.bf16.gmra.mrb[0].mxu0 %v7897
      %v8170 = vpop.f32.mrb[0].mxu0
      %v8171 = vadd.f32 0.0, %v8170
      %v8172 = vpop.f32.mrb[0].mxu0
      %v8173 = vpop.f32.mrb[0].mxu0
      %v8174 = vadd.f32 0.0, %v8173
      %v8175 = vpop.f32.mrb[0].mxu0
      %8176 = vmatprep.mubr.bf16.mxu0 0
      %8177 = vmatmul.mubr.bf16.gmra.mrb[0].mxu0 %v7906
      %v8178 = vpop.f32.mrb[0].mxu0
      %v8179 = vadd.f32 0.0, %v8178
      %v8180 = vpop.f32.mrb[0].mxu0
      %v8181 = vpop.f32.mrb[0].mxu0
      %v8182 = vadd.f32 0.0, %v8181
      %v8183 = vpop.f32.mrb[0].mxu0
      %8184 = vmatprep.mubr.bf16.mxu0 0
      %8185 = vmatmul.mubr.bf16.gmra.mrb[0].mxu0 %v7915
      %v8186 = vpop.f32.mrb[0].mxu0
      %v8187 = vadd.f32 0.0, %v8186
      %v8188 = vpop.f32.mrb[0].mxu0
      %v8189 = vpop.f32.mrb[0].mxu0
      %v8190 = vadd.f32 0.0, %v8189
      %v8191 = vpop.f32.mrb[0].mxu0
      %8192 = vmatprep.mubr.bf16.mxu0 0
      %8193 = vmatmul.mubr.bf16.gmra.mrb[0].mxu0 %v7924
      %v8194 = vpop.f32.mrb[0].mxu0
      %v8195 = vadd.f32 0.0, %v8194
      %v8196 = vpop.f32.mrb[0].mxu0
      %v8197 = vpop.f32.mrb[0].mxu0
      %v8198 = vadd.f32 0.0, %v8197
      %v8199 = vpop.f32.mrb[0].mxu0
      %8200 = vmatprep.mubr.bf16.mxu0 0
      %8201 = vmatmul.mubr.bf16.gmra.mrb[0].mxu0 %v7933
      %v8202 = vpop.f32.mrb[0].mxu0
      %v8203 = vadd.f32 0.0, %v8202
      %v8204 = vpop.f32.mrb[0].mxu0
      %v8205 = vpop.f32.mrb[0].mxu0
      %v8206 = vadd.f32 0.0, %v8205
      %v8207 = vpop.f32.mrb[0].mxu0
      %8208 = vmatprep.mubr.bf16.mxu0 0
      %8209 = vmatmul.mubr.bf16.gmra.mrb[0].mxu0 %v7942
      %v8210 = vpop.f32.mrb[0].mxu0
      %v8211 = vadd.f32 0.0, %v8210
      %v8212 = vpop.f32.mrb[0].mxu0
      %v8213 = vpop.f32.mrb[0].mxu0
      %v8214 = vadd.f32 0.0, %v8213
      %v8215 = vpop.f32.mrb[0].mxu0
      %8216 = vmatprep.mubr.bf16.mxu0 0
      %8217 = vmatmul.mubr.bf16.gmra.mrb[0].mxu0 %v7951
      %v8218 = vpop.f32.mrb[0].mxu0
      %v8219 = vadd.f32 0.0, %v8218
      %v8220 = vpop.f32.mrb[0].mxu0
      %v8221 = vpop.f32.mrb[0].mxu0
      %v8222 = vadd.f32 0.0, %v8221
      %v8223 = vpop.f32.mrb[0].mxu0
      %8224 = vmatprep.mubr.bf16.mxu0 0
      %8225 = vmatmul.mubr.bf16.gmra.mrb[0].mxu0 %v7960
      %v8226 = vpop.f32.mrb[0].mxu0
      %v8227 = vadd.f32 0.0, %v8226
      %v8228 = vpop.f32.mrb[0].mxu0
      %v8229 = vpop.f32.mrb[0].mxu0
      %v8230 = vadd.f32 0.0, %v8229
      %v8231 = vpop.f32.mrb[0].mxu0
      %8232 = vmatprep.mubr.bf16.mxu0 0
      %8233 = vmatmul.mubr.bf16.gmra.mrb[0].mxu0 %v7969
      %v8234 = vpop.f32.mrb[0].mxu0
      %v8235 = vadd.f32 0.0, %v8234
      %v8236 = vpop.f32.mrb[0].mxu0
      %v8237 = vpop.f32.mrb[0].mxu0
      %v8238 = vadd.f32 0.0, %v8237
      %v8239 = vpop.f32.mrb[0].mxu0
      %8240 = vmatprep.mubr.bf16.mxu0 0
      %8241 = vmatmul.mubr.bf16.gmra.mrb[0].mxu0 %v7978
      %v8242 = vpop.f32.mrb[0].mxu0
      %v8243 = vadd.f32 0.0, %v8242
      %v8244 = vpop.f32.mrb[0].mxu0
      %v8245 = vpop.f32.mrb[0].mxu0
      %v8246 = vadd.f32 0.0, %v8245
      %v8247 = vpop.f32.mrb[0].mxu0
      %8248 = vmatprep.mubr.bf16.mxu0 0
      %8249 = vmatmul.mubr.bf16.gmra.mrb[0].mxu0 %v7987
      %v8250 = vpop.f32.mrb[0].mxu0
      %v8251 = vadd.f32 0.0, %v8250
      %v8252 = vpop.f32.mrb[0].mxu0
      %v8253 = vpop.f32.mrb[0].mxu0
      %v8254 = vadd.f32 0.0, %v8253
      %v8255 = vpop.f32.mrb[0].mxu0
      %8256 = vmatprep.mubr.bf16.mxu0 0
      %8257 = vmatmul.mubr.bf16.gmra.mrb[0].mxu0 %v7996
      %v8258 = vpop.f32.mrb[0].mxu0
      %v8259 = vadd.f32 0.0, %v8258
      %v8260 = vpop.f32.mrb[0].mxu0
      %v8261 = vpop.f32.mrb[0].mxu0
      %v8262 = vadd.f32 0.0, %v8261
      %v8263 = vpop.f32.mrb[0].mxu0
      %8264 = vmatprep.mubr.bf16.mxu0 0
      %8265 = vmatmul.mubr.bf16.gmra.mrb[0].mxu0 %v8005
      %v8266 = vpop.f32.mrb[0].mxu0
      %v8267 = vadd.f32 0.0, %v8266
      %v8268 = vpop.f32.mrb[0].mxu0
      %v8269 = vpop.f32.mrb[0].mxu0
      %v8270 = vadd.f32 0.0, %v8269
      %v8271 = vpop.f32.mrb[0].mxu0
      %8272 = vmatprep.mubr.bf16.mxu0 0
      %8273 = vmatmul.mubr.bf16.gmra.mrb[0].mxu0 %v8014
      %v8274 = vpop.f32.mrb[0].mxu0
      %v8275 = vadd.f32 0.0, %v8274
      %v8276 = vpop.f32.mrb[0].mxu0
      %v8277 = vpop.f32.mrb[0].mxu0
      %v8278 = vadd.f32 0.0, %v8277
      %v8279 = vpop.f32.mrb[0].mxu0
      %8280 = vmatprep.mubr.bf16.mxu0 0
      %8281 = vmatmul.mubr.bf16.gmra.mrb[0].mxu0 %v8023
      %v8282 = vpop.f32.mrb[0].mxu0
      %v8283 = vadd.f32 0.0, %v8282
      %v8284 = vpop.f32.mrb[0].mxu0
      %v8285 = vpop.f32.mrb[0].mxu0
      %v8286 = vadd.f32 0.0, %v8285
      %v8287 = vpop.f32.mrb[0].mxu0
      %8288 = vmatprep.mubr.bf16.mxu0 0
      %8289 = vmatmul.mubr.bf16.gmra.mrb[0].mxu0 %v8032
      %v8290 = vpop.f32.mrb[0].mxu0
      %v8291 = vadd.f32 0.0, %v8290
      %v8292 = vpop.f32.mrb[0].mxu0
      %v8293 = vpop.f32.mrb[0].mxu0
      %v8294 = vadd.f32 0.0, %v8293
      %v8295 = vpop.f32.mrb[0].mxu0
      %8296 = vmatprep.mubr.bf16.mxu0 0
      %8297 = vmatmul.mubr.bf16.gmra.mrb[0].mxu0 %v8041
      %v8298 = vpop.f32.mrb[0].mxu0
      %v8299 = vadd.f32 0.0, %v8298
      %v8300 = vpop.f32.mrb[0].mxu0
      %v8301 = vpop.f32.mrb[0].mxu0
      %v8302 = vadd.f32 0.0, %v8301
      %v8303 = vpop.f32.mrb[0].mxu0
      %8304 = vmatprep.mubr.bf16.mxu0 0
      %8305 = vmatmul.mubr.bf16.gmra.mrb[0].mxu0 %v8050
      %v8306 = vpop.f32.mrb[0].mxu0
      %v8307 = vadd.f32 0.0, %v8306
      %v8308 = vpop.f32.mrb[0].mxu0
      %v8309 = vpop.f32.mrb[0].mxu0
      %v8310 = vadd.f32 0.0, %v8309
      %v8311 = vpop.f32.mrb[0].mxu0
      %8312 = vmatprep.mubr.bf16.mxu0 0
      %8313 = vmatmul.mubr.bf16.gmra.mrb[0].mxu0 %v8059
      %v8314 = vpop.f32.mrb[0].mxu0
      %v8315 = vadd.f32 0.0, %v8314
      %v8316 = vpop.f32.mrb[0].mxu0
      %v8317 = vpop.f32.mrb[0].mxu0
      %v8318 = vadd.f32 0.0, %v8317
      %v8319 = vpop.f32.mrb[0].mxu0
      %8320 = vdwg.mxu0
      %v8321 = vadd.f32 %v7815, %v8163
      %v8322 = vadd.f32 %v7816, %v8166
      %v8323 = vadd.f32 %v7817, %v8171
      %v8324 = vadd.f32 %v7818, %v8174
      %v8325 = vadd.f32 %v7819, %v8179
      %v8326 = vadd.f32 %v7820, %v8182
      %v8327 = vadd.f32 %v7821, %v8187
      %v8328 = vadd.f32 %v7822, %v8190
      %v8329 = vadd.f32 %v7823, %v8195
      %v8330 = vadd.f32 %v7824, %v8198
      %v8331 = vadd.f32 %v7825, %v8203
      %v8332 = vadd.f32 %v7826, %v8206
      %v8333 = vadd.f32 %v7827, %v8211
      %v8334 = vadd.f32 %v7828, %v8214
      %v8335 = vadd.f32 %v7829, %v8219
      %v8336 = vadd.f32 %v7830, %v8222
      %v8337 = vadd.f32 %v7831, %v8227
      %v8338 = vadd.f32 %v7832, %v8230
      %v8339 = vadd.f32 %v7833, %v8235
      %v8340 = vadd.f32 %v7834, %v8238
      %v8341 = vadd.f32 %v7835, %v8243
      %v8342 = vadd.f32 %v7836, %v8246
      %v8343 = vadd.f32 %v7837, %v8251
      %v8344 = vadd.f32 %v7838, %v8254
      %v8345 = vadd.f32 %v7839, %v8259
      %v8346 = vadd.f32 %v7840, %v8262
      %v8347 = vadd.f32 %v7841, %v8267
      %v8348 = vadd.f32 %v7842, %v8270
      %v8349 = vadd.f32 %v7843, %v8275
      %v8350 = vadd.f32 %v7844, %v8278
      %v8351 = vadd.f32 %v7845, %v8283
      %v8352 = vadd.f32 %v7846, %v8286
      %v8353 = vadd.f32 %v7847, %v8291
      %v8354 = vadd.f32 %v7848, %v8294
      %v8355 = vadd.f32 %v7849, %v8299
      %v8356 = vadd.f32 %v7850, %v8302
      %v8357 = vadd.f32 %v7851, %v8307
      %v8358 = vadd.f32 %v7852, %v8310
      %v8359 = vadd.f32 %v7853, %v8315
      %v8360 = vadd.f32 %v7854, %v8318
      %v8361 = vld [vmem:[#allocation3 + $0x10] sm:$0xe0]
      %v8362 = vld [vmem:[%s4 + $0x200] sm:$0xf]
      %v8363 = vld [vmem:[%s4 + $0x204] sm:$0xf]
      %v8364 = vld [vmem:[%s4 + $0x208] sm:$0xf]
      %v8365 = vld [vmem:[%s4 + $0x20c] sm:$0xf]
      %v8366 = vld [vmem:[%s4 + $0x210] sm:$0xf]
      %v8367 = vld [vmem:[%s4 + $0x214] sm:$0xf]
      %v8368 = vld [vmem:[%s4 + $0x218] sm:$0xf]
      %v8369 = vld [vmem:[%s4 + $0x21c] sm:$0xf]
      %v8370 = vld [vmem:[%s4 + $0x220] sm:$0xf]
      %v8371 = vld [vmem:[%s4 + $0x224] sm:$0xf]
      %v8372 = vld [vmem:[%s4 + $0x228] sm:$0xf]
      %v8373 = vld [vmem:[%s4 + $0x22c] sm:$0xf]
      %v8374 = vld [vmem:[%s4 + $0x230] sm:$0xf]
      %v8375 = vld [vmem:[%s4 + $0x234] sm:$0xf]
      %v8376 = vld [vmem:[%s4 + $0x238] sm:$0xf]
      %v8377 = vld [vmem:[%s4 + $0x23c] sm:$0xf]
      %v8380 = vrot.slane %v8361, 5
      %v8381 = vrot.slane %v7456, 5
      %v8382 = vsel %vm4007, %v8380, %v8381
      %v8383 = vrot.slane %v7457, 5
      %v8384 = vsel %vm4007, %v8381, %v8383
      %v8385 = vrot.slane %v7458, 5
      %v8386 = vsel %vm4007, %v8383, %v8385
      %v8387 = vrot.slane %v7459, 5
      %v8388 = vsel %vm4007, %v8385, %v8387
      %v8389 = vrot.slane %v7460, 5
      %v8390 = vsel %vm4007, %v8387, %v8389
      %v8391 = vrot.slane %v7461, 5
      %v8392 = vsel %vm4007, %v8389, %v8391
      %v8393 = vrot.slane %v7462, 5
      %v8394 = vsel %vm4007, %v8391, %v8393
      %v8395 = vrot.slane %v7463, 5
      %v8396 = vsel %vm4007, %v8393, %v8395
      %v8397 = vrot.slane %v7464, 5
      %v8398 = vsel %vm4007, %v8395, %v8397
      %v8399 = vrot.slane %v7465, 5
      %v8400 = vsel %vm4007, %v8397, %v8399
      %v8401 = vrot.slane %v7466, 5
      %v8402 = vsel %vm4007, %v8399, %v8401
      %v8403 = vrot.slane %v7467, 5
      %v8404 = vsel %vm4007, %v8401, %v8403
      %v8405 = vrot.slane %v7468, 5
      %v8406 = vsel %vm4007, %v8403, %v8405
      %v8407 = vrot.slane %v7469, 5
      %v8408 = vsel %vm4007, %v8405, %v8407
      %v8409 = vrot.slane %v7470, 5
      %v8410 = vsel %vm4007, %v8407, %v8409
      %v8411 = vrot.slane %v7471, 5
      %v8412 = vsel %vm4007, %v8409, %v8411
      %v8413 = vrot.slane %v7472, 5
      %v8414 = vsel %vm4007, %v8411, %v8413
      %v8415 = vrot.slane %v7473, 5
      %v8416 = vsel %vm4007, %v8413, %v8415
      %v8417 = vrot.slane %v7474, 5
      %v8418 = vsel %vm4007, %v8415, %v8417
      %v8419 = vrot.slane %v7855, 5
      %v8420 = vsel %vm4007, %v8417, %v8419
      %v8457 = vunpack.c.l.b16 %v8362
      %v8458 = vunpack.c.l.b16 %v8363
      %v8459 = vunpack.c.l.b16 %v8364
      %v8460 = vunpack.c.l.b16 %v8365
      %v8461 = vunpack.c.l.b16 %v8366
      %v8462 = vunpack.c.l.b16 %v8367
      %v8463 = vunpack.c.l.b16 %v8368
      %v8464 = vunpack.c.l.b16 %v8369
      %v8465 = vunpack.c.l.b16 %v8370
      %v8466 = vunpack.c.l.b16 %v8371
      %v8467 = vunpack.c.l.b16 %v8372
      %v8468 = vunpack.c.l.b16 %v8373
      %v8469 = vunpack.c.l.b16 %v8374
      %v8470 = vunpack.c.l.b16 %v8375
      %v8471 = vunpack.c.l.b16 %v8376
      %v8472 = vunpack.c.l.b16 %v8377
      %v8473 = vpack.c.b16 %v8458, %v8457
      %v8474 = vpack.c.b16 %v8460, %v8459
      %v8475 = vpack.c.b16 %v8462, %v8461
      %v8476 = vpack.c.b16 %v8464, %v8463
      %v8477 = vpack.c.b16 %v8466, %v8465
      %v8478 = vpack.c.b16 %v8468, %v8467
      %v8479 = vpack.c.b16 %v8470, %v8469
      %v8480 = vpack.c.b16 %v8472, %v8471
      %8489 = vmatprep.subr.bf16.mxu0 0
      %8490 = vmatpush1.bf16.msra.mxu0 %v8473
      %8491 = vmatprep.subr.bf16.mxu0 0
      %8492 = vmatpush1.bf16.msra.mxu0 %v8474
      %8493 = vmatprep.subr.bf16.mxu0 0
      %8494 = vmatpush1.bf16.msra.mxu0 %v8475
      %8495 = vmatprep.subr.bf16.mxu0 0
      %8496 = vmatpush1.bf16.msra.mxu0 %v8476
      %8497 = vmatprep.subr.bf16.mxu0 0
      %8498 = vmatpush1.bf16.msra.mxu0 %v8477
      %8499 = vmatprep.subr.bf16.mxu0 0
      %8500 = vmatpush1.bf16.msra.mxu0 %v8478
      %8501 = vmatprep.subr.bf16.mxu0 0
      %8502 = vmatpush1.bf16.msra.mxu0 %v8479
      %8503 = vmatprep.subr.bf16.mxu0 0
      %8504 = vmatpush1.bf16.msra.mxu0 %v8480
      %8505 = vmatprep.subr.bf16.mxu0 0
      %8506 = vmatpush1.bf16.msra.mxu0 0
      %8507 = vmatprep.subr.bf16.mxu0 0
      %8508 = vmatpush1.bf16.msra.mxu0 0
      %8509 = vmatprep.subr.bf16.mxu0 0
      %8510 = vmatpush1.bf16.msra.mxu0 0
      %8511 = vmatprep.subr.bf16.mxu0 0
      %8512 = vmatpush1.bf16.msra.mxu0 0
      %8513 = vmatprep.subr.bf16.mxu0 0
      %8514 = vmatpush1.bf16.msra.mxu0 0
      %8515 = vmatprep.subr.bf16.mxu0 0
      %8516 = vmatpush1.bf16.msra.mxu0 0
      %8517 = vmatprep.subr.bf16.mxu0 0
      %8518 = vmatpush1.bf16.msra.mxu0 0
      %8519 = vmatprep.subr.bf16.mxu0 0
      %8520 = vmatpush1.bf16.msra.mxu0 0
      %8521 = vmatprep.mubr.bf16.mxu0 0
      %8522 = vmatmul.mubr.bf16.gmra.mrb[0].mxu0 %v8382
      %v8523 = vpop.f32.mrb[0].mxu0
      %v8524 = vadd.f32 0.0, %v8523
      %v8525 = vpop.f32.mrb[0].mxu0
      %v8526 = vpop.f32.mrb[0].mxu0
      %v8527 = vadd.f32 0.0, %v8526
      %v8528 = vpop.f32.mrb[0].mxu0
      %8529 = vmatprep.mubr.bf16.mxu0 0
      %8530 = vmatmul.mubr.bf16.gmra.mrb[0].mxu0 %v8384
      %v8531 = vpop.f32.mrb[0].mxu0
      %v8532 = vadd.f32 0.0, %v8531
      %v8533 = vpop.f32.mrb[0].mxu0
      %v8534 = vpop.f32.mrb[0].mxu0
      %v8535 = vadd.f32 0.0, %v8534
      %v8536 = vpop.f32.mrb[0].mxu0
      %8537 = vmatprep.mubr.bf16.mxu0 0
      %8538 = vmatmul.mubr.bf16.gmra.mrb[0].mxu0 %v8386
      %v8539 = vpop.f32.mrb[0].mxu0
      %v8540 = vadd.f32 0.0, %v8539
      %v8541 = vpop.f32.mrb[0].mxu0
      %v8542 = vpop.f32.mrb[0].mxu0
      %v8543 = vadd.f32 0.0, %v8542
      %v8544 = vpop.f32.mrb[0].mxu0
      %8545 = vmatprep.mubr.bf16.mxu0 0
      %8546 = vmatmul.mubr.bf16.gmra.mrb[0].mxu0 %v8388
      %v8547 = vpop.f32.mrb[0].mxu0
      %v8548 = vadd.f32 0.0, %v8547
      %v8549 = vpop.f32.mrb[0].mxu0
      %v8550 = vpop.f32.mrb[0].mxu0
      %v8551 = vadd.f32 0.0, %v8550
      %v8552 = vpop.f32.mrb[0].mxu0
      %8553 = vmatprep.mubr.bf16.mxu0 0
      %8554 = vmatmul.mubr.bf16.gmra.mrb[0].mxu0 %v8390
      %v8555 = vpop.f32.mrb[0].mxu0
      %v8556 = vadd.f32 0.0, %v8555
      %v8557 = vpop.f32.mrb[0].mxu0
      %v8558 = vpop.f32.mrb[0].mxu0
      %v8559 = vadd.f32 0.0, %v8558
      %v8560 = vpop.f32.mrb[0].mxu0
      %8561 = vmatprep.mubr.bf16.mxu0 0
      %8562 = vmatmul.mubr.bf16.gmra.mrb[0].mxu0 %v8392
      %v8563 = vpop.f32.mrb[0].mxu0
      %v8564 = vadd.f32 0.0, %v8563
      %v8565 = vpop.f32.mrb[0].mxu0
      %v8566 = vpop.f32.mrb[0].mxu0
      %v8567 = vadd.f32 0.0, %v8566
      %v8568 = vpop.f32.mrb[0].mxu0
      %8569 = vmatprep.mubr.bf16.mxu0 0
      %8570 = vmatmul.mubr.bf16.gmra.mrb[0].mxu0 %v8394
      %v8571 = vpop.f32.mrb[0].mxu0
      %v8572 = vadd.f32 0.0, %v8571
      %v8573 = vpop.f32.mrb[0].mxu0
      %v8574 = vpop.f32.mrb[0].mxu0
      %v8575 = vadd.f32 0.0, %v8574
      %v8576 = vpop.f32.mrb[0].mxu0
      %8577 = vmatprep.mubr.bf16.mxu0 0
      %8578 = vmatmul.mubr.bf16.gmra.mrb[0].mxu0 %v8396
      %v8579 = vpop.f32.mrb[0].mxu0
      %v8580 = vadd.f32 0.0, %v8579
      %v8581 = vpop.f32.mrb[0].mxu0
      %v8582 = vpop.f32.mrb[0].mxu0
      %v8583 = vadd.f32 0.0, %v8582
      %v8584 = vpop.f32.mrb[0].mxu0
      %8585 = vmatprep.mubr.bf16.mxu0 0
      %8586 = vmatmul.mubr.bf16.gmra.mrb[0].mxu0 %v8398
      %v8587 = vpop.f32.mrb[0].mxu0
      %v8588 = vadd.f32 0.0, %v8587
      %v8589 = vpop.f32.mrb[0].mxu0
      %v8590 = vpop.f32.mrb[0].mxu0
      %v8591 = vadd.f32 0.0, %v8590
      %v8592 = vpop.f32.mrb[0].mxu0
      %8593 = vmatprep.mubr.bf16.mxu0 0
      %8594 = vmatmul.mubr.bf16.gmra.mrb[0].mxu0 %v8400
      %v8595 = vpop.f32.mrb[0].mxu0
      %v8596 = vadd.f32 0.0, %v8595
      %v8597 = vpop.f32.mrb[0].mxu0
      %v8598 = vpop.f32.mrb[0].mxu0
      %v8599 = vadd.f32 0.0, %v8598
      %v8600 = vpop.f32.mrb[0].mxu0
      %8601 = vmatprep.mubr.bf16.mxu0 0
      %8602 = vmatmul.mubr.bf16.gmra.mrb[0].mxu0 %v8402
      %v8603 = vpop.f32.mrb[0].mxu0
      %v8604 = vadd.f32 0.0, %v8603
      %v8605 = vpop.f32.mrb[0].mxu0
      %v8606 = vpop.f32.mrb[0].mxu0
      %v8607 = vadd.f32 0.0, %v8606
      %v8608 = vpop.f32.mrb[0].mxu0
      %8609 = vmatprep.mubr.bf16.mxu0 0
      %8610 = vmatmul.mubr.bf16.gmra.mrb[0].mxu0 %v8404
      %v8611 = vpop.f32.mrb[0].mxu0
      %v8612 = vadd.f32 0.0, %v8611
      %v8613 = vpop.f32.mrb[0].mxu0
      %v8614 = vpop.f32.mrb[0].mxu0
      %v8615 = vadd.f32 0.0, %v8614
      %v8616 = vpop.f32.mrb[0].mxu0
      %8617 = vmatprep.mubr.bf16.mxu0 0
      %8618 = vmatmul.mubr.bf16.gmra.mrb[0].mxu0 %v8406
      %v8619 = vpop.f32.mrb[0].mxu0
      %v8620 = vadd.f32 0.0, %v8619
      %v8621 = vpop.f32.mrb[0].mxu0
      %v8622 = vpop.f32.mrb[0].mxu0
      %v8623 = vadd.f32 0.0, %v8622
      %v8624 = vpop.f32.mrb[0].mxu0
      %8625 = vmatprep.mubr.bf16.mxu0 0
      %8626 = vmatmul.mubr.bf16.gmra.mrb[0].mxu0 %v8408
      %v8627 = vpop.f32.mrb[0].mxu0
      %v8628 = vadd.f32 0.0, %v8627
      %v8629 = vpop.f32.mrb[0].mxu0
      %v8630 = vpop.f32.mrb[0].mxu0
      %v8631 = vadd.f32 0.0, %v8630
      %v8632 = vpop.f32.mrb[0].mxu0
      %8633 = vmatprep.mubr.bf16.mxu0 0
      %8634 = vmatmul.mubr.bf16.gmra.mrb[0].mxu0 %v8410
      %v8635 = vpop.f32.mrb[0].mxu0
      %v8636 = vadd.f32 0.0, %v8635
      %v8637 = vpop.f32.mrb[0].mxu0
      %v8638 = vpop.f32.mrb[0].mxu0
      %v8639 = vadd.f32 0.0, %v8638
      %v8640 = vpop.f32.mrb[0].mxu0
      %8641 = vmatprep.mubr.bf16.mxu0 0
      %8642 = vmatmul.mubr.bf16.gmra.mrb[0].mxu0 %v8412
      %v8643 = vpop.f32.mrb[0].mxu0
      %v8644 = vadd.f32 0.0, %v8643
      %v8645 = vpop.f32.mrb[0].mxu0
      %v8646 = vpop.f32.mrb[0].mxu0
      %v8647 = vadd.f32 0.0, %v8646
      %v8648 = vpop.f32.mrb[0].mxu0
      %8649 = vmatprep.mubr.bf16.mxu0 0
      %8650 = vmatmul.mubr.bf16.gmra.mrb[0].mxu0 %v8414
      %v8651 = vpop.f32.mrb[0].mxu0
      %v8652 = vadd.f32 0.0, %v8651
      %v8653 = vpop.f32.mrb[0].mxu0
      %v8654 = vpop.f32.mrb[0].mxu0
      %v8655 = vadd.f32 0.0, %v8654
      %v8656 = vpop.f32.mrb[0].mxu0
      %8657 = vmatprep.mubr.bf16.mxu0 0
      %8658 = vmatmul.mubr.bf16.gmra.mrb[0].mxu0 %v8416
      %v8659 = vpop.f32.mrb[0].mxu0
      %v8660 = vadd.f32 0.0, %v8659
      %v8661 = vpop.f32.mrb[0].mxu0
      %v8662 = vpop.f32.mrb[0].mxu0
      %v8663 = vadd.f32 0.0, %v8662
      %v8664 = vpop.f32.mrb[0].mxu0
      %8665 = vmatprep.mubr.bf16.mxu0 0
      %8666 = vmatmul.mubr.bf16.gmra.mrb[0].mxu0 %v8418
      %v8667 = vpop.f32.mrb[0].mxu0
      %v8668 = vadd.f32 0.0, %v8667
      %v8669 = vpop.f32.mrb[0].mxu0
      %v8670 = vpop.f32.mrb[0].mxu0
      %v8671 = vadd.f32 0.0, %v8670
      %v8672 = vpop.f32.mrb[0].mxu0
      %8673 = vmatprep.mubr.bf16.mxu0 0
      %8674 = vmatmul.mubr.bf16.gmra.mrb[0].mxu0 %v8420
      %v8675 = vpop.f32.mrb[0].mxu0
      %v8676 = vadd.f32 0.0, %v8675
      %v8677 = vpop.f32.mrb[0].mxu0
      %v8678 = vpop.f32.mrb[0].mxu0
      %v8679 = vadd.f32 0.0, %v8678
      %v8680 = vpop.f32.mrb[0].mxu0
      %8681 = vdwg.mxu0
      %v8682 = vadd.f32 %v8321, %v8524
      %v8683 = vadd.f32 %v8322, %v8527
      %v8684 = vadd.f32 %v8323, %v8532
      %v8685 = vadd.f32 %v8324, %v8535
      %v8686 = vadd.f32 %v8325, %v8540
      %v8687 = vadd.f32 %v8326, %v8543
      %v8688 = vadd.f32 %v8327, %v8548
      %v8689 = vadd.f32 %v8328, %v8551
      %v8690 = vadd.f32 %v8329, %v8556
      %v8691 = vadd.f32 %v8330, %v8559
      %v8692 = vadd.f32 %v8331, %v8564
      %v8693 = vadd.f32 %v8332, %v8567
      %v8694 = vadd.f32 %v8333, %v8572
      %v8695 = vadd.f32 %v8334, %v8575
      %v8696 = vadd.f32 %v8335, %v8580
      %v8697 = vadd.f32 %v8336, %v8583
      %v8698 = vadd.f32 %v8337, %v8588
      %v8699 = vadd.f32 %v8338, %v8591
      %v8700 = vadd.f32 %v8339, %v8596
      %v8701 = vadd.f32 %v8340, %v8599
      %v8702 = vadd.f32 %v8341, %v8604
      %v8703 = vadd.f32 %v8342, %v8607
      %v8704 = vadd.f32 %v8343, %v8612
      %v8705 = vadd.f32 %v8344, %v8615
      %v8706 = vadd.f32 %v8345, %v8620
      %v8707 = vadd.f32 %v8346, %v8623
      %v8708 = vadd.f32 %v8347, %v8628
      %v8709 = vadd.f32 %v8348, %v8631
      %v8710 = vadd.f32 %v8349, %v8636
      %v8711 = vadd.f32 %v8350, %v8639
      %v8712 = vadd.f32 %v8351, %v8644
      %v8713 = vadd.f32 %v8352, %v8647
      %v8714 = vadd.f32 %v8353, %v8652
      %v8715 = vadd.f32 %v8354, %v8655
      %v8716 = vadd.f32 %v8355, %v8660
      %v8717 = vadd.f32 %v8356, %v8663
      %v8718 = vadd.f32 %v8357, %v8668
      %v8719 = vadd.f32 %v8358, %v8671
      %v8720 = vadd.f32 %v8359, %v8676
      %v8721 = vadd.f32 %v8360, %v8679
      %v8722 = vld [vmem:[%s334 + $0x10] sm:$0xe0]
      %v8723 = vld [vmem:[%s334 + $0x18] sm:$0xff]
      %v8724 = vld [vmem:[%s334 + $0x20] sm:$0xff]
      %v8725 = vld [vmem:[%s334 + $0x28] sm:$0xff]
      %v8726 = vld [vmem:[%s334 + $0x30] sm:$0xff]
      %v8727 = vld [vmem:[%s334 + $0x38] sm:$0xff]
      %v8728 = vld [vmem:[%s334 + $0x40] sm:$0xff]
      %v8729 = vld [vmem:[%s334 + $0x48] sm:$0xff]
      %v8730 = vld [vmem:[%s334 + $0x50] sm:$0xff]
      %v8731 = vld [vmem:[%s334 + $0x58] sm:$0xff]
      %v8732 = vld [vmem:[%s334 + $0x60] sm:$0xff]
      %v8733 = vld [vmem:[%s334 + $0x68] sm:$0xff]
      %v8734 = vld [vmem:[%s334 + $0x70] sm:$0xff]
      %v8735 = vld [vmem:[%s334 + $0x78] sm:$0xff]
      %v8736 = vld [vmem:[%s334 + $0x80] sm:$0xff]
      %v8737 = vld [vmem:[%s334 + $0x88] sm:$0xff]
      %v8738 = vld [vmem:[%s334 + $0x90] sm:$0xff]
      %v8739 = vld [vmem:[%s334 + $0x98] sm:$0xff]
      %v8740 = vld [vmem:[%s334 + $0xa0] sm:$0xff]
      %v8741 = vld [vmem:[%s334 + $0xa8] sm:$0xff]
      %v8742 = vld [vmem:[%s334 + $0xb0] sm:$0x1f]
      %v8764 = vrot.slane %v8722, 4
      %v8765 = vrot.slane %v8723, 4
      %v8766 = vsel %vm3039, %v8764, %v8765
      %v8767 = vrot.slane %v8724, 4
      %v8768 = vsel %vm3039, %v8765, %v8767
      %v8769 = vrot.slane %v8725, 4
      %v8770 = vsel %vm3039, %v8767, %v8769
      %v8771 = vrot.slane %v8726, 4
      %v8772 = vsel %vm3039, %v8769, %v8771
      %v8773 = vrot.slane %v8727, 4
      %v8774 = vsel %vm3039, %v8771, %v8773
      %v8775 = vrot.slane %v8728, 4
      %v8776 = vsel %vm3039, %v8773, %v8775
      %v8777 = vrot.slane %v8729, 4
      %v8778 = vsel %vm3039, %v8775, %v8777
      %v8779 = vrot.slane %v8730, 4
      %v8780 = vsel %vm3039, %v8777, %v8779
      %v8781 = vrot.slane %v8731, 4
      %v8782 = vsel %vm3039, %v8779, %v8781
      %v8783 = vrot.slane %v8732, 4
      %v8784 = vsel %vm3039, %v8781, %v8783
      %v8785 = vrot.slane %v8733, 4
      %v8786 = vsel %vm3039, %v8783, %v8785
      %v8787 = vrot.slane %v8734, 4
      %v8788 = vsel %vm3039, %v8785, %v8787
      %v8789 = vrot.slane %v8735, 4
      %v8790 = vsel %vm3039, %v8787, %v8789
      %v8791 = vrot.slane %v8736, 4
      %v8792 = vsel %vm3039, %v8789, %v8791
      %v8793 = vrot.slane %v8737, 4
      %v8794 = vsel %vm3039, %v8791, %v8793
      %v8795 = vrot.slane %v8738, 4
      %v8796 = vsel %vm3039, %v8793, %v8795
      %v8797 = vrot.slane %v8739, 4
      %v8798 = vsel %vm3039, %v8795, %v8797
      %v8799 = vrot.slane %v8740, 4
      %v8800 = vsel %vm3039, %v8797, %v8799
      %v8801 = vrot.slane %v8741, 4
      %v8802 = vsel %vm3039, %v8799, %v8801
      %v8803 = vrot.slane %v8742, 4
      %v8804 = vsel %vm3039, %v8801, %v8803
      %v8826 = vunpack.c.l.bf16 %v8766
      %v8827 = vunpack.c.h.bf16 %v8766
      %v8828 = vunpack.c.l.bf16 %v8768
      %v8829 = vunpack.c.h.bf16 %v8768
      %v8830 = vunpack.c.l.bf16 %v8770
      %v8831 = vunpack.c.h.bf16 %v8770
      %v8832 = vunpack.c.l.bf16 %v8772
      %v8833 = vunpack.c.h.bf16 %v8772
      %v8834 = vunpack.c.l.bf16 %v8774
      %v8835 = vunpack.c.h.bf16 %v8774
      %v8836 = vunpack.c.l.bf16 %v8776
      %v8837 = vunpack.c.h.bf16 %v8776
      %v8838 = vunpack.c.l.bf16 %v8778
      %v8839 = vunpack.c.h.bf16 %v8778
      %v8840 = vunpack.c.l.bf16 %v8780
      %v8841 = vunpack.c.h.bf16 %v8780
      %v8842 = vunpack.c.l.bf16 %v8782
      %v8843 = vunpack.c.h.bf16 %v8782
      %v8844 = vunpack.c.l.bf16 %v8784
      %v8845 = vunpack.c.h.bf16 %v8784
      %v8846 = vunpack.c.l.bf16 %v8786
      %v8847 = vunpack.c.h.bf16 %v8786
      %v8848 = vunpack.c.l.bf16 %v8788
      %v8849 = vunpack.c.h.bf16 %v8788
      %v8850 = vunpack.c.l.bf16 %v8790
      %v8851 = vunpack.c.h.bf16 %v8790
      %v8852 = vunpack.c.l.bf16 %v8792
      %v8853 = vunpack.c.h.bf16 %v8792
      %v8854 = vunpack.c.l.bf16 %v8794
      %v8855 = vunpack.c.h.bf16 %v8794
      %v8856 = vunpack.c.l.bf16 %v8796
      %v8857 = vunpack.c.h.bf16 %v8796
      %v8858 = vunpack.c.l.bf16 %v8798
      %v8859 = vunpack.c.h.bf16 %v8798
      %v8860 = vunpack.c.l.bf16 %v8800
      %v8861 = vunpack.c.h.bf16 %v8800
      %v8862 = vunpack.c.l.bf16 %v8802
      %v8863 = vunpack.c.h.bf16 %v8802
      %v8864 = vunpack.c.l.bf16 %v8804
      %v8865 = vunpack.c.h.bf16 %v8804
      %v8866 = vunpack.c.l.bf16 %v8803
      %v8867 = vld [vmem:[%s5] sm:$0x1]
      %v8869 = vlaneseq
      %v8870 = vshrl.u32 %v8869, 7
      %v8871 = vsub.s32 0, %v8870
      %v8872 = vrot.slane %v8867, %v8871
      %v8874 = vadd.f32 %v8682, %v8872
      %v8875 = vadd.f32 %v8683, %v8872
      %v8876 = vadd.f32 %v8684, %v8872
      %v8877 = vadd.f32 %v8685, %v8872
      %v8878 = vadd.f32 %v8686, %v8872
      %v8879 = vadd.f32 %v8687, %v8872
      %v8880 = vadd.f32 %v8688, %v8872
      %v8881 = vadd.f32 %v8689, %v8872
      %v8882 = vadd.f32 %v8690, %v8872
      %v8883 = vadd.f32 %v8691, %v8872
      %v8884 = vadd.f32 %v8692, %v8872
      %v8885 = vadd.f32 %v8693, %v8872
      %v8886 = vadd.f32 %v8694, %v8872
      %v8887 = vadd.f32 %v8695, %v8872
      %v8888 = vadd.f32 %v8696, %v8872
      %v8889 = vadd.f32 %v8697, %v8872
      %v8890 = vadd.f32 %v8698, %v8872
      %v8891 = vadd.f32 %v8699, %v8872
      %v8892 = vadd.f32 %v8700, %v8872
      %v8893 = vadd.f32 %v8701, %v8872
      %v8894 = vadd.f32 %v8702, %v8872
      %v8895 = vadd.f32 %v8703, %v8872
      %v8896 = vadd.f32 %v8704, %v8872
      %v8897 = vadd.f32 %v8705, %v8872
      %v8898 = vadd.f32 %v8706, %v8872
      %v8899 = vadd.f32 %v8707, %v8872
      %v8900 = vadd.f32 %v8708, %v8872
      %v8901 = vadd.f32 %v8709, %v8872
      %v8902 = vadd.f32 %v8710, %v8872
      %v8903 = vadd.f32 %v8711, %v8872
      %v8904 = vadd.f32 %v8712, %v8872
      %v8905 = vadd.f32 %v8713, %v8872
      %v8906 = vadd.f32 %v8714, %v8872
      %v8907 = vadd.f32 %v8715, %v8872
      %v8908 = vadd.f32 %v8716, %v8872
      %v8909 = vadd.f32 %v8717, %v8872
      %v8910 = vadd.f32 %v8718, %v8872
      %v8911 = vadd.f32 %v8719, %v8872
      %v8912 = vadd.f32 %v8720, %v8872
      %v8913 = vadd.f32 %v8721, %v8872
      %vm8955 = vcmask 1045504
      %v8956 = vrot.slane %v8826, 2
      %v8957 = vrot.slane %v8827, 2
      %v8958 = vsel %vm8955, %v8956, %v8957
      %v8959 = vrot.slane %v8828, 2
      %v8960 = vsel %vm8955, %v8957, %v8959
      %v8961 = vrot.slane %v8829, 2
      %v8962 = vsel %vm8955, %v8959, %v8961
      %v8963 = vrot.slane %v8830, 2
      %v8964 = vsel %vm8955, %v8961, %v8963
      %v8965 = vrot.slane %v8831, 2
      %v8966 = vsel %vm8955, %v8963, %v8965
      %v8967 = vrot.slane %v8832, 2
      %v8968 = vsel %vm8955, %v8965, %v8967
      %v8969 = vrot.slane %v8833, 2
      %v8970 = vsel %vm8955, %v8967, %v8969
      %v8971 = vrot.slane %v8834, 2
      %v8972 = vsel %vm8955, %v8969, %v8971
      %v8973 = vrot.slane %v8835, 2
      %v8974 = vsel %vm8955, %v8971, %v8973
      %v8975 = vrot.slane %v8836, 2
      %v8976 = vsel %vm8955, %v8973, %v8975
      %v8977 = vrot.slane %v8837, 2
      %v8978 = vsel %vm8955, %v8975, %v8977
      %v8979 = vrot.slane %v8838, 2
      %v8980 = vsel %vm8955, %v8977, %v8979
      %v8981 = vrot.slane %v8839, 2
      %v8982 = vsel %vm8955, %v8979, %v8981
      %v8983 = vrot.slane %v8840, 2
      %v8984 = vsel %vm8955, %v8981, %v8983
      %v8985 = vrot.slane %v8841, 2
      %v8986 = vsel %vm8955, %v8983, %v8985
      %v8987 = vrot.slane %v8842, 2
      %v8988 = vsel %vm8955, %v8985, %v8987
      %v8989 = vrot.slane %v8843, 2
      %v8990 = vsel %vm8955, %v8987, %v8989
      %v8991 = vrot.slane %v8844, 2
      %v8992 = vsel %vm8955, %v8989, %v8991
      %v8993 = vrot.slane %v8845, 2
      %v8994 = vsel %vm8955, %v8991, %v8993
      %v8995 = vrot.slane %v8846, 2
      %v8996 = vsel %vm8955, %v8993, %v8995
      %v8997 = vrot.slane %v8847, 2
      %v8998 = vsel %vm8955, %v8995, %v8997
      %v8999 = vrot.slane %v8848, 2
      %v9000 = vsel %vm8955, %v8997, %v8999
      %v9001 = vrot.slane %v8849, 2
      %v9002 = vsel %vm8955, %v8999, %v9001
      %v9003 = vrot.slane %v8850, 2
      %v9004 = vsel %vm8955, %v9001, %v9003
      %v9005 = vrot.slane %v8851, 2
      %v9006 = vsel %vm8955, %v9003, %v9005
      %v9007 = vrot.slane %v8852, 2
      %v9008 = vsel %vm8955, %v9005, %v9007
      %v9009 = vrot.slane %v8853, 2
      %v9010 = vsel %vm8955, %v9007, %v9009
      %v9011 = vrot.slane %v8854, 2
      %v9012 = vsel %vm8955, %v9009, %v9011
      %v9013 = vrot.slane %v8855, 2
      %v9014 = vsel %vm8955, %v9011, %v9013
      %v9015 = vrot.slane %v8856, 2
      %v9016 = vsel %vm8955, %v9013, %v9015
      %v9017 = vrot.slane %v8857, 2
      %v9018 = vsel %vm8955, %v9015, %v9017
      %v9019 = vrot.slane %v8858, 2
      %v9020 = vsel %vm8955, %v9017, %v9019
      %v9021 = vrot.slane %v8859, 2
      %v9022 = vsel %vm8955, %v9019, %v9021
      %v9023 = vrot.slane %v8860, 2
      %v9024 = vsel %vm8955, %v9021, %v9023
      %v9025 = vrot.slane %v8861, 2
      %v9026 = vsel %vm8955, %v9023, %v9025
      %v9027 = vrot.slane %v8862, 2
      %v9028 = vsel %vm8955, %v9025, %v9027
      %v9029 = vrot.slane %v8863, 2
      %v9030 = vsel %vm8955, %v9027, %v9029
      %v9031 = vrot.slane %v8864, 2
      %v9032 = vsel %vm8955, %v9029, %v9031
      %v9033 = vrot.slane %v8865, 2
      %v9034 = vsel %vm8955, %v9031, %v9033
      %v9035 = vrot.slane %v8866, 2
      %v9036 = vsel %vm8955, %v9033, %v9035
      %v9077 = vadd.f32 %v8874, %v8958
      %v9078 = vadd.f32 %v8875, %v8960
      %v9079 = vadd.f32 %v8876, %v8962
      %v9080 = vadd.f32 %v8877, %v8964
      %v9081 = vadd.f32 %v8878, %v8966
      %v9082 = vadd.f32 %v8879, %v8968
      %v9083 = vadd.f32 %v8880, %v8970
      %v9084 = vadd.f32 %v8881, %v8972
      %v9085 = vadd.f32 %v8882, %v8974
      %v9086 = vadd.f32 %v8883, %v8976
      %v9087 = vadd.f32 %v8884, %v8978
      %v9088 = vadd.f32 %v8885, %v8980
      %v9089 = vadd.f32 %v8886, %v8982
      %v9090 = vadd.f32 %v8887, %v8984
      %v9091 = vadd.f32 %v8888, %v8986
      %v9092 = vadd.f32 %v8889, %v8988
      %v9093 = vadd.f32 %v8890, %v8990
      %v9094 = vadd.f32 %v8891, %v8992
      %v9095 = vadd.f32 %v8892, %v8994
      %v9096 = vadd.f32 %v8893, %v8996
      %v9097 = vadd.f32 %v8894, %v8998
      %v9098 = vadd.f32 %v8895, %v9000
      %v9099 = vadd.f32 %v8896, %v9002
      %v9100 = vadd.f32 %v8897, %v9004
      %v9101 = vadd.f32 %v8898, %v9006
      %v9102 = vadd.f32 %v8899, %v9008
      %v9103 = vadd.f32 %v8900, %v9010
      %v9104 = vadd.f32 %v8901, %v9012
      %v9105 = vadd.f32 %v8902, %v9014
      %v9106 = vadd.f32 %v8903, %v9016
      %v9107 = vadd.f32 %v8904, %v9018
      %v9108 = vadd.f32 %v8905, %v9020
      %v9109 = vadd.f32 %v8906, %v9022
      %v9110 = vadd.f32 %v8907, %v9024
      %v9111 = vadd.f32 %v8908, %v9026
      %v9112 = vadd.f32 %v8909, %v9028
      %v9113 = vadd.f32 %v8910, %v9030
      %v9114 = vadd.f32 %v8911, %v9032
      %v9115 = vadd.f32 %v8912, %v9034
      %v9116 = vadd.f32 %v8913, %v9036
      %v9117 = vmax.f32 %v9077, 0.0
      %v9118 = vmax.f32 %v9078, 0.0
      %v9119 = vmax.f32 %v9079, 0.0
      %v9120 = vmax.f32 %v9080, 0.0
      %v9121 = vmax.f32 %v9081, 0.0
      %v9122 = vmax.f32 %v9082, 0.0
      %v9123 = vmax.f32 %v9083, 0.0
      %v9124 = vmax.f32 %v9084, 0.0
      %v9125 = vmax.f32 %v9085, 0.0
      %v9126 = vmax.f32 %v9086, 0.0
      %v9127 = vmax.f32 %v9087, 0.0
      %v9128 = vmax.f32 %v9088, 0.0
      %v9129 = vmax.f32 %v9089, 0.0
      %v9130 = vmax.f32 %v9090, 0.0
      %v9131 = vmax.f32 %v9091, 0.0
      %v9132 = vmax.f32 %v9092, 0.0
      %v9133 = vmax.f32 %v9093, 0.0
      %v9134 = vmax.f32 %v9094, 0.0
      %v9135 = vmax.f32 %v9095, 0.0
      %v9136 = vmax.f32 %v9096, 0.0
      %v9137 = vmax.f32 %v9097, 0.0
      %v9138 = vmax.f32 %v9098, 0.0
      %v9139 = vmax.f32 %v9099, 0.0
      %v9140 = vmax.f32 %v9100, 0.0
      %v9141 = vmax.f32 %v9101, 0.0
      %v9142 = vmax.f32 %v9102, 0.0
      %v9143 = vmax.f32 %v9103, 0.0
      %v9144 = vmax.f32 %v9104, 0.0
      %v9145 = vmax.f32 %v9105, 0.0
      %v9146 = vmax.f32 %v9106, 0.0
      %v9147 = vmax.f32 %v9107, 0.0
      %v9148 = vmax.f32 %v9108, 0.0
      %v9149 = vmax.f32 %v9109, 0.0
      %v9150 = vmax.f32 %v9110, 0.0
      %v9151 = vmax.f32 %v9111, 0.0
      %v9152 = vmax.f32 %v9112, 0.0
      %v9153 = vmax.f32 %v9113, 0.0
      %v9154 = vmax.f32 %v9114, 0.0
      %v9155 = vmax.f32 %v9115, 0.0
      %v9156 = vmax.f32 %v9116, 0.0
      %v9157 = vpack.c.bf16 %v9118, %v9117
      %v9158 = vpack.c.bf16 %v9120, %v9119
      %v9159 = vpack.c.bf16 %v9122, %v9121
      %v9160 = vpack.c.bf16 %v9124, %v9123
      %v9161 = vpack.c.bf16 %v9126, %v9125
      %v9162 = vpack.c.bf16 %v9128, %v9127
      %v9163 = vpack.c.bf16 %v9130, %v9129
      %v9164 = vpack.c.bf16 %v9132, %v9131
      %v9165 = vpack.c.bf16 %v9134, %v9133
      %v9166 = vpack.c.bf16 %v9136, %v9135
      %v9167 = vpack.c.bf16 %v9138, %v9137
      %v9168 = vpack.c.bf16 %v9140, %v9139
      %v9169 = vpack.c.bf16 %v9142, %v9141
      %v9170 = vpack.c.bf16 %v9144, %v9143
      %v9171 = vpack.c.bf16 %v9146, %v9145
      %v9172 = vpack.c.bf16 %v9148, %v9147
      %v9173 = vpack.c.bf16 %v9150, %v9149
      %v9174 = vpack.c.bf16 %v9152, %v9151
      %v9175 = vpack.c.bf16 %v9154, %v9153
      %v9176 = vpack.c.bf16 %v9156, %v9155
      %v9197 = vunpack.c.l.b16 %v9157
      %v9198 = vunpack.c.h.b16 %v9157
      %v9199 = vunpack.c.l.b16 %v9158
      %v9200 = vunpack.c.h.b16 %v9158
      %v9201 = vunpack.c.l.b16 %v9159
      %v9202 = vunpack.c.h.b16 %v9159
      %v9203 = vunpack.c.l.b16 %v9160
      %v9204 = vunpack.c.h.b16 %v9160
      %v9205 = vunpack.c.l.b16 %v9161
      %v9206 = vunpack.c.h.b16 %v9161
      %v9207 = vunpack.c.l.b16 %v9162
      %v9208 = vunpack.c.h.b16 %v9162
      %v9209 = vunpack.c.l.b16 %v9163
      %v9210 = vunpack.c.h.b16 %v9163
      %v9211 = vunpack.c.l.b16 %v9164
      %v9212 = vunpack.c.h.b16 %v9164
      %v9213 = vunpack.c.l.b16 %v9165
      %v9214 = vunpack.c.h.b16 %v9165
      %v9215 = vunpack.c.l.b16 %v9166
      %v9216 = vunpack.c.h.b16 %v9166
      %v9217 = vunpack.c.l.b16 %v9167
      %v9218 = vunpack.c.h.b16 %v9167
      %v9219 = vunpack.c.l.b16 %v9168
      %v9220 = vunpack.c.h.b16 %v9168
      %v9221 = vunpack.c.l.b16 %v9169
      %v9222 = vunpack.c.h.b16 %v9169
      %v9223 = vunpack.c.l.b16 %v9170
      %v9224 = vunpack.c.h.b16 %v9170
      %v9225 = vunpack.c.l.b16 %v9171
      %v9226 = vunpack.c.h.b16 %v9171
      %v9227 = vunpack.c.l.b16 %v9172
      %v9228 = vunpack.c.h.b16 %v9172
      %v9229 = vunpack.c.l.b16 %v9173
      %v9230 = vunpack.c.h.b16 %v9173
      %v9231 = vunpack.c.l.b16 %v9174
      %v9232 = vunpack.c.h.b16 %v9174
      %v9233 = vunpack.c.l.b16 %v9175
      %v9234 = vunpack.c.h.b16 %v9175
      %v9235 = vunpack.c.l.b16 %v9176
      %v9236 = vunpack.c.h.b16 %v9176
      %v9237 = vpack.c.b16 %v9197, %v9197
      %v9238 = vpack.c.b16 %v9198, %v9198
      %v9239 = vpack.c.b16 %v9199, %v9199
      %v9240 = vpack.c.b16 %v9200, %v9200
      %v9241 = vpack.c.b16 %v9201, %v9201
      %v9242 = vpack.c.b16 %v9202, %v9202
      %v9243 = vpack.c.b16 %v9203, %v9203
      %v9244 = vpack.c.b16 %v9204, %v9204
      %v9245 = vpack.c.b16 %v9205, %v9205
      %v9246 = vpack.c.b16 %v9206, %v9206
      %v9247 = vpack.c.b16 %v9207, %v9207
      %v9248 = vpack.c.b16 %v9208, %v9208
      %v9249 = vpack.c.b16 %v9209, %v9209
      %v9250 = vpack.c.b16 %v9210, %v9210
      %v9251 = vpack.c.b16 %v9211, %v9211
      %v9252 = vpack.c.b16 %v9212, %v9212
      %v9253 = vpack.c.b16 %v9213, %v9213
      %v9254 = vpack.c.b16 %v9214, %v9214
      %v9255 = vpack.c.b16 %v9215, %v9215
      %v9256 = vpack.c.b16 %v9216, %v9216
      %v9257 = vpack.c.b16 %v9217, %v9217
      %v9258 = vpack.c.b16 %v9218, %v9218
      %v9259 = vpack.c.b16 %v9219, %v9219
      %v9260 = vpack.c.b16 %v9220, %v9220
      %v9261 = vpack.c.b16 %v9221, %v9221
      %v9262 = vpack.c.b16 %v9222, %v9222
      %v9263 = vpack.c.b16 %v9223, %v9223
      %v9264 = vpack.c.b16 %v9224, %v9224
      %v9265 = vpack.c.b16 %v9225, %v9225
      %v9266 = vpack.c.b16 %v9226, %v9226
      %v9267 = vpack.c.b16 %v9227, %v9227
      %v9268 = vpack.c.b16 %v9228, %v9228
      %v9269 = vpack.c.b16 %v9229, %v9229
      %v9270 = vpack.c.b16 %v9230, %v9230
      %v9271 = vpack.c.b16 %v9231, %v9231
      %v9272 = vpack.c.b16 %v9232, %v9232
      %v9273 = vpack.c.b16 %v9233, %v9233
      %v9274 = vpack.c.b16 %v9234, %v9234
      %v9275 = vpack.c.b16 %v9235, %v9235
      %v9276 = vpack.c.b16 %v9236, %v9236
      %9317 = vst [vmem:[%s227] sm:$0xf] %v9237
      %9318 = vst [vmem:[%s227 + $0x4] sm:$0xf] %v9238
      %9319 = vst [vmem:[%s227 + $0x8] sm:$0xf] %v9239
      %9320 = vst [vmem:[%s227 + $0xc] sm:$0xf] %v9240
      %9321 = vst [vmem:[%s227 + $0x10] sm:$0xf] %v9241
      %9322 = vst [vmem:[%s227 + $0x14] sm:$0xf] %v9242
      %9323 = vst [vmem:[%s227 + $0x18] sm:$0xf] %v9243
      %9324 = vst [vmem:[%s227 + $0x1c] sm:$0xf] %v9244
      %9325 = vst [vmem:[%s227 + $0x20] sm:$0xf] %v9245
      %9326 = vst [vmem:[%s227 + $0x24] sm:$0xf] %v9246
      %9327 = vst [vmem:[%s227 + $0x28] sm:$0xf] %v9247
      %9328 = vst [vmem:[%s227 + $0x2c] sm:$0xf] %v9248
      %9329 = vst [vmem:[%s227 + $0x30] sm:$0xf] %v9249
      %9330 = vst [vmem:[%s227 + $0x34] sm:$0xf] %v9250
      %9331 = vst [vmem:[%s227 + $0x38] sm:$0xf] %v9251
      %9332 = vst [vmem:[%s227 + $0x3c] sm:$0xf] %v9252
      %9333 = vst [vmem:[%s227 + $0x40] sm:$0xf] %v9253
      %9334 = vst [vmem:[%s227 + $0x44] sm:$0xf] %v9254
      %9335 = vst [vmem:[%s227 + $0x48] sm:$0xf] %v9255
      %9336 = vst [vmem:[%s227 + $0x4c] sm:$0xf] %v9256
      %9337 = vst [vmem:[%s227 + $0x50] sm:$0xf] %v9257
      %9338 = vst [vmem:[%s227 + $0x54] sm:$0xf] %v9258
      %9339 = vst [vmem:[%s227 + $0x58] sm:$0xf] %v9259
      %9340 = vst [vmem:[%s227 + $0x5c] sm:$0xf] %v9260
      %9341 = vst [vmem:[%s227 + $0x60] sm:$0xf] %v9261
      %9342 = vst [vmem:[%s227 + $0x64] sm:$0xf] %v9262
      %9343 = vst [vmem:[%s227 + $0x68] sm:$0xf] %v9263
      %9344 = vst [vmem:[%s227 + $0x6c] sm:$0xf] %v9264
      %9345 = vst [vmem:[%s227 + $0x70] sm:$0xf] %v9265
      %9346 = vst [vmem:[%s227 + $0x74] sm:$0xf] %v9266
      %9347 = vst [vmem:[%s227 + $0x78] sm:$0xf] %v9267
      %9348 = vst [vmem:[%s227 + $0x7c] sm:$0xf] %v9268
      %9349 = vst [vmem:[%s227 + $0x80] sm:$0xf] %v9269
      %9350 = vst [vmem:[%s227 + $0x84] sm:$0xf] %v9270
      %9351 = vst [vmem:[%s227 + $0x88] sm:$0xf] %v9271
      %9352 = vst [vmem:[%s227 + $0x8c] sm:$0xf] %v9272
      %9353 = vst [vmem:[%s227 + $0x90] sm:$0xf] %v9273
      %9354 = vst [vmem:[%s227 + $0x94] sm:$0xf] %v9274
      %9355 = vst [vmem:[%s227 + $0x98] sm:$0xf] %v9275
      %9356 = vst [vmem:[%s227 + $0x9c] sm:$0xf] %v9276
      %s9357 = smul.u32 40, %s22
      %p9358 = scmp.lt.s32.totalorder %s21, 1
      %s9359 = scalar_select %p9358, %s21, 1
      %p9360 = scmp.lt.s32.totalorder %s9357, 39
      %s9361 = scalar_select %p9360, %s9357, 39
      %s9362 = smul.addr %s9359, 40
      %s9363 = sadd.s32 %s9361, %s9362
      %s9364 = smul.addr %s9363, 4
      %s9365 = scalar_lea.vmem %s6, %s9364
      // Predicated region
      $region79: #{basic_block_forward.1} parent=39 // pred_check
        %p9366 = pneg %p154
      $region80: #{basic_block_forward.1} parent=39 // pred_check_branch
        %9368 = sbr.rel (%p9366) target = $region82
      $region81: #{basic_block_forward.1} parent=39 // pred_region
        %s9369 = smul.u32 40, %s22
      $region82: #{basic_block_forward.1} parent=39 // pred_fallthru
        _
    $region40: #{basic_block_forward.1} parent=5 // pred_fallthru
      _
    %p9370 = scmp.le.s32.totalorder 2, %s12
    // Predicated region
    $region83: #{basic_block_forward.1} parent=5 // pred_check
      %p9371 = pneg %p9370
    $region84: #{basic_block_forward.1} parent=5 // pred_check_branch
      %9373 = sbr.rel (%p9371) target = $region86
    $region85: #{basic_block_forward.1} parent=5 // pred_region
      %s9374 = ssub.s32 %s12, 2
      // Predicated region
      $region87: #{basic_block_forward.1} parent=85 // pred_check
        %p9375 = pneg %p160
      $region88: #{basic_block_forward.1} parent=85 // pred_check_branch
        %9377 = sbr.rel (%p9375) target = $region90
      $region89: #{basic_block_forward.1} parent=85 // pred_region
        %s9378 = smul.u32 40, %s24
        %p9379 = scmp.lt.s32.totalorder %s23, 1
        %s9380 = scalar_select %p9379, %s23, 1
        %p9381 = scmp.lt.s32.totalorder %s9378, 39
        %s9382 = scalar_select %p9381, %s9378, 39
        %s9383 = smul.addr %s9380, 40
        %s9384 = sadd.s32 %s9382, %s9383
        %s9385 = smul.addr %s9384, 4
        %s9386 = scalar_lea.vmem %s6, %s9385
      $region90: #{basic_block_forward.1} parent=85 // pred_fallthru
        _
    $region86: #{basic_block_forward.1} parent=5 // pred_fallthru
      _
  $region6: #{basic_block_forward.1} parent=0 // loop_footer
    %s16 = sadd.s32 1, %s12
  $region7: #{basic_block_forward.1} parent=0 // loop_footer_branch
    %11 = sbr.rel target = $region3
  $region8: #{basic_block_forward.1} parent=0 // loop_exit
    _
  %9387 = vsyncmov [#allocation4]
  %s9388 = vpop.sfrf %9387
  %p9389 = scmp.eq.s32.totalorder %s9388, 0
  %p9390 = pneg %p9389
  %9392 = shalt.err (%p9390)
  %s9393 = scalar_lea.sflag [#allocation4], 1
  %9394 = vsyncmov %s9393
  %s9395 = vpop.sfrf %9394
  %p9396 = scmp.eq.s32.totalorder %s9395, 0
  %p9397 = pneg %p9396
  %9399 = shalt.err (%p9397)

</llo_original>
